<compile_context>
chip_gen: v5e
topology: v5e:2x2
jax: 0.10.0
libtpu: 0.0.40
codegen_flags: <defaults>
</compile_context>

<pallas_src>
import jax
import jax.numpy as jnp
from jax.experimental import pallas as pl
from jax.experimental.pallas import tpu as pltpu

BN_EPS = 1e-5
LANE = 128
MATMUL_DTYPE = jnp.bfloat16  # MXU operands + inter-stage storage; stats/BN stay f32


def _round_up(x, m):
    return (x + m - 1) // m * m


# --------------------------------------------------------------------------
# In-kernel helpers
# --------------------------------------------------------------------------
def _zero_halo(pad_ref):
    """Zero the 1-pixel spatial halo of a (Hp, Wp, C) scratch (interior is
    overwritten every step).  Unconditional: safe under megacore sharding."""
    Hp, Wp, C = pad_ref.shape
    dt = pad_ref.dtype
    row = jnp.zeros((1, Wp, C), dt)
    col = jnp.zeros((Hp, 1, C), dt)
    pad_ref[0:1, :, :] = row
    pad_ref[Hp - 1:Hp, :, :] = row
    pad_ref[:, 0:1, :] = col
    pad_ref[:, Wp - 1:Wp, :] = col


def _channel_stats(acc, n):
    """Per-channel [sum ; centered sum-of-squares] of a (rows, C) f32 block."""
    s = jnp.sum(acc, axis=0, keepdims=True)
    mean = s / n
    m2 = jnp.sum((acc - mean) * (acc - mean), axis=0, keepdims=True)
    return jnp.concatenate([s, m2], axis=0)          # (2, C)


# --------------------------------------------------------------------------
# Kernels
# --------------------------------------------------------------------------
def conv_stats_kernel(x_ref, w_ref, y_ref, stats_ref, pad_ref):
    """Stage-1 conv (pre-BN) + per-image channel stats.

    x_ref    : (1, H, W, Cin)     bf16   unpadded input
    w_ref    : (9*Cin, Cpad)      bf16
    y_ref    : (1, H, W, Cpad)    bf16   conv output (pre-BN)
    stats_ref: (1, 2, Cpad)       f32    rows = [sum, centered sum-of-squares]
    pad_ref  : (H+2, W+2, Cin)    bf16   VMEM scratch (halo-padded input)
    """
    H, W = x_ref.shape[1], x_ref.shape[2]
    Cin = pad_ref.shape[-1]

    _zero_halo(pad_ref)
    pad_ref[1:H + 1, 1:W + 1, :] = x_ref[0]

    # Cin is tiny -> keep the fused K = 9*Cin single-matmul form here.
    taps = [pad_ref[dy:dy + H, dx:dx + W, :].reshape(H * W, Cin)
            for dy in range(3) for dx in range(3)]
    patches = jnp.concatenate(taps, axis=-1)                         # (H*W, 9*Cin)
    acc = jnp.dot(patches, w_ref[...], preferred_element_type=jnp.float32)

    y_ref[0] = acc.reshape(H, W, acc.shape[-1]).astype(y_ref.dtype)
    stats_ref[0] = _channel_stats(acc, H * W)


def bnrelu_conv_stats_kernel(y1_ref, scale_ref, shift_ref, w_ref,
                             y_ref, stats_ref, pad_ref):
    """Fused BN1+ReLU (precomputed affine) + stage-2 conv + channel stats.

    y1_ref   : (1, H, W, Cpad)  bf16   stage-1 conv output (pre-BN)
    scale_ref: (1, Cpad)        f32    gamma1 * rsqrt(var1 + eps)
    shift_ref: (1, Cpad)        f32    beta1  - mean1 * scale1
    w_ref    : (9*Cpad, Cpad)   bf16
    y_ref    : (1, H, W, Cpad)  bf16   stage-2 conv output (pre-BN)
    stats_ref: (1, 2, Cpad)     f32
    pad_ref  : (H+2, W+2, Cpad) bf16   VMEM scratch (halo-padded normalized act.)
    """
    H, W = y1_ref.shape[1], y1_ref.shape[2]
    C = pad_ref.shape[-1]

    # BN1 (per-channel affine from global batch stats) + ReLU, in f32.
    a = jnp.maximum(y1_ref[0].astype(jnp.float32) * scale_ref[...] + shift_ref[...],
                    0.0)

    _zero_halo(pad_ref)
    pad_ref[1:H + 1, 1:W + 1, :] = a.astype(pad_ref.dtype)

    # 9 accumulating matmuls of K = Cpad each -> no (H*W, 9*Cpad) temporary.
    acc = jnp.zeros((H * W, C), jnp.float32)
    for dy in range(3):
        for dx in range(3):
            t = dy * 3 + dx
            tap = pad_ref[dy:dy + H, dx:dx + W, :].reshape(H * W, C)
            acc = acc + jnp.dot(tap, w_ref[t * C:(t + 1) * C, :],
                                preferred_element_type=jnp.float32)

    y_ref[0] = acc.reshape(H, W, C).astype(y_ref.dtype)
    stats_ref[0] = _channel_stats(acc, H * W)


def bnrelu_kernel(y_ref, scale_ref, shift_ref, o_ref):
    """Final BN2 + ReLU; channel padding sliced off in-kernel."""
    C = o_ref.shape[-1]
    y = y_ref[0].astype(jnp.float32)
    o_ref[0] = jnp.maximum(y[..., :C] * scale_ref[0, :C] + shift_ref[0, :C], 0.0)


# --------------------------------------------------------------------------
# Wrapper
# --------------------------------------------------------------------------
def _bn_affine(stats, gamma_pad, beta_pad, n_per_image, n_images):
    """Combine per-image [sum, M2] (N, 2, Cpad) -> BN scale/shift (1, Cpad)
    with the parallel-variance formula (numerically stable)."""
    count = n_per_image * n_images
    sums = stats[:, 0, :]                                     # (N, Cpad)
    m2s = stats[:, 1, :]                                      # (N, Cpad)
    mean_i = sums / n_per_image
    mean = jnp.sum(sums, axis=0) / count
    m2 = jnp.sum(m2s, axis=0) + n_per_image * jnp.sum((mean_i - mean) ** 2, axis=0)
    var = jnp.maximum(m2 / count, 0.0)
    scale = gamma_pad * jax.lax.rsqrt(var + BN_EPS)
    shift = beta_pad - mean * scale
    return (scale.reshape(1, -1).astype(jnp.float32),
            shift.reshape(1, -1).astype(jnp.float32))


def conv_block_forward(x_nchw, params):
    """Equivalent of conv_block.forward (train-mode BN). (N,Cin,H,W)->(N,Cout,H,W)."""
    x = jnp.transpose(x_nchw, (0, 2, 3, 1))          # NCHW -> NHWC
    N, H, W, Cin = x.shape
    Cout = params["w1"].shape[-1]
    Cpad = _round_up(Cout, LANE)                     # lane-dense channel axis
    cpp = pltpu.CompilerParams(dimension_semantics=("parallel",))

    # ---- parameter packing (tiny XLA glue) ----
    # Conv biases are dropped: a per-channel constant added before train-mode
    # BatchNorm is exactly cancelled by the mean subtraction.
    w1 = jnp.pad(params["w1"], ((0, 0), (0, 0), (0, 0), (0, Cpad - Cout)))
    w1 = w1.reshape(9 * Cin, Cpad).astype(MATMUL_DTYPE)
    w2 = jnp.pad(params["w2"], ((0, 0), (0, 0), (0, Cpad - Cout), (0, Cpad - Cout)))
    w2 = w2.reshape(9 * Cpad, Cpad).astype(MATMUL_DTYPE)
    g1 = jnp.pad(params["g1"], (0, Cpad - Cout))
    be1 = jnp.pad(params["be1"], (0, Cpad - Cout))
    g2 = jnp.pad(params["g2"], (0, Cpad - Cout))
    be2 = jnp.pad(params["be2"], (0, Cpad - Cout))

    xb = x.astype(MATMUL_DTYPE)                      # no XLA-side spatial pad

    # ---- stage 1: conv1 + per-image BN stats (grid over batch) ----
    y1, stats1 = pl.pallas_call(
        conv_stats_kernel,
        grid=(N,),
        in_specs=[
            pl.BlockSpec((1, H, W, Cin), lambda n: (n, 0, 0, 0)),
            pl.BlockSpec((9 * Cin, Cpad), lambda n: (0, 0)),
        ],
        out_specs=[
            pl.BlockSpec((1, H, W, Cpad), lambda n: (n, 0, 0, 0)),
            pl.BlockSpec((1, 2, Cpad), lambda n: (n, 0, 0)),
        ],
        out_shape=[
            jax.ShapeDtypeStruct((N, H, W, Cpad), MATMUL_DTYPE),
            jax.ShapeDtypeStruct((N, 2, Cpad), jnp.float32),
        ],
        scratch_shapes=[pltpu.VMEM((H + 2, W + 2, Cin), MATMUL_DTYPE)],
        compiler_params=cpp,
    )(xb, w1)
    scale1, shift1 = _bn_affine(stats1, g1, be1, H * W, N)

    # ---- stage 2: BN1+ReLU fused with conv2 + per-image BN stats ----
    y2, stats2 = pl.pallas_call(
        bnrelu_conv_stats_kernel,
        grid=(N,),
        in_specs=[
            pl.BlockSpec((1, H, W, Cpad), lambda n: (n, 0, 0, 0)),
            pl.BlockSpec((1, Cpad), lambda n: (0, 0)),
            pl.BlockSpec((1, Cpad), lambda n: (0, 0)),
            pl.BlockSpec((9 * Cpad, Cpad), lambda n: (0, 0)),
        ],
        out_specs=[
            pl.BlockSpec((1, H, W, Cpad), lambda n: (n, 0, 0, 0)),
            pl.BlockSpec((1, 2, Cpad), lambda n: (n, 0, 0)),
        ],
        out_shape=[
            jax.ShapeDtypeStruct((N, H, W, Cpad), MATMUL_DTYPE),
            jax.ShapeDtypeStruct((N, 2, Cpad), jnp.float32),
        ],
        scratch_shapes=[pltpu.VMEM((H + 2, W + 2, Cpad), MATMUL_DTYPE)],
        compiler_params=cpp,
    )(y1, scale1, shift1, w2)
    scale2, shift2 = _bn_affine(stats2, g2, be2, H * W, N)

    # ---- final BN2 + ReLU (writes (N,H,W,Cout) directly, no XLA slice) ----
    out = pl.pallas_call(
        bnrelu_kernel,
        grid=(N,),
        in_specs=[
            pl.BlockSpec((1, H, W, Cpad), lambda n: (n, 0, 0, 0)),
            pl.BlockSpec((1, Cpad), lambda n: (0, 0)),
            pl.BlockSpec((1, Cpad), lambda n: (0, 0)),
        ],
        out_specs=pl.BlockSpec((1, H, W, Cout), lambda n: (n, 0, 0, 0)),
        out_shape=jax.ShapeDtypeStruct((N, H, W, Cout), jnp.float32),
        compiler_params=cpp,
    )(y2, scale2, shift2)

    return jnp.transpose(out, (0, 3, 1, 2))          # NHWC -> NCHW


# --------------------------------------------------------------------------
# Parameters (shapes match nn.Conv2d / nn.BatchNorm2d)
# --------------------------------------------------------------------------
def init_params(key, in_ch, out_ch):
    ks = jax.random.split(key, 8)

    def conv_init(k, cin, cout):
        bound = 1.0 / jnp.sqrt(cin * 9.0)
        return jax.random.uniform(k, (3, 3, cin, cout), jnp.float32, -bound, bound)

    return {
        "w1": conv_init(ks[0], in_ch, out_ch),
        "b1": jax.random.uniform(ks[1], (out_ch,), jnp.float32, -0.1, 0.1),
        "g1": 1.0 + 0.1 * jax.random.normal(ks[2], (out_ch,), jnp.float32),
        "be1": 0.1 * jax.random.normal(ks[3], (out_ch,), jnp.float32),
        "w2": conv_init(ks[4], out_ch, out_ch),
        "b2": jax.random.uniform(ks[5], (out_ch,), jnp.float32, -0.1, 0.1),
        "g2": 1.0 + 0.1 * jax.random.normal(ks[6], (out_ch,), jnp.float32),
        "be2": 0.1 * jax.random.normal(ks[7], (out_ch,), jnp.float32),
    }


# --------------------------------------------------------------------------
# Pure-JAX references (with conv bias, two-pass BN) for correctness checks
# --------------------------------------------------------------------------
def _ref_stage(x, w, b, gamma, beta, matmul_dtype, store_dtype):
    y = jax.lax.conv_general_dilated(
        x.astype(matmul_dtype), w.astype(matmul_dtype),
        window_strides=(1, 1), padding="SAME",
        dimension_numbers=("NHWC", "HWIO", "NHWC"),
        preferred_element_type=jnp.float32)
    y = y + b                                # kernel drops this (BN cancels it)
    mean = jnp.mean(y, axis=(0, 1, 2), keepdims=True)
    var = jnp.mean((y - mean) ** 2, axis=(0, 1, 2), keepdims=True)
    if store_dtype is not None:              # emulate bf16 inter-stage storage
        y = y.astype(store_dtype).astype(jnp.float32)
    y = (y - mean) * jax.lax.rsqrt(var + BN_EPS) * gamma + beta
    return jnp.maximum(y, 0.0)


def _ref_forward(x_nchw, p, matmul_dtype=jnp.float32, store_dtype=None):
    x = jnp.transpose(x_nchw, (0, 2, 3, 1))
    h = _ref_stage(x, p["w1"], p["b1"], p["g1"], p["be1"], matmul_dtype, store_dtype)
    h = _ref_stage(h, p["w2"], p["b2"], p["g2"], p["be2"], matmul_dtype, store_dtype)
    return jnp.transpose(h, (0, 3, 1, 2))


if __name__ == "__main__":
    N, in_ch, out_ch, H, W = 2, 4, 8, 16, 16

    key = jax.random.PRNGKey(0)
    k_x, k_p = jax.random.split(key)
    x = jax.random.normal(k_x, (N, in_ch, H, W), jnp.float32)
    params = init_params(k_p, in_ch, out_ch)

    out = jax.block_until_ready(jax.jit(conv_block_forward)(x, params))
    assert out.shape == (N, out_ch, H, W), out.shape

    # Check vs. a reference that emulates the kernel's bf16 matmul operands and
    # bf16 inter-stage storage (remaining diffs: accumulation order, bias
    # cancellation, per-image stat combination).
    ref_q = jax.block_until_ready(_ref_forward(x, params, MATMUL_DTYPE, MATMUL_DTYPE))
    err_q = float(jnp.max(jnp.abs(out - ref_q)))
    assert jnp.allclose(out, ref_q, rtol=2e-2, atol=2e-2), err_q

    # Looser sanity check against the full-f32 reference.
    ref_f32 = jax.block_until_ready(_ref_forward(x, params, jnp.float32, None))
    err_f32 = float(jnp.max(jnp.abs(out - ref_f32)))
    assert jnp.allclose(out, ref_f32, rtol=8e-2, atol=8e-2), err_f32

    print("KERNEL_OK")
</pallas_src>

<mosaic_0001>
module attributes {stable_mosaic.version = 11 : i64} {
  func.func @conv_stats_kernel(%arg0: i32, %arg1: memref<1x16x16x4xbf16, #tpu.memory_space<vmem>>, %arg2: memref<36x128xbf16, #tpu.memory_space<vmem>>, %arg3: memref<1x16x16x128xbf16, #tpu.memory_space<vmem>>, %arg4: memref<1x2x128xf32, #tpu.memory_space<vmem>>, %arg5: memref<18x18x4xbf16, #tpu.memory_space<vmem>>) attributes {dimension_semantics = [#tpu.dimension_semantics<parallel>], iteration_bounds = array<i64: 2>, scalar_prefetch = 0 : i64, scratch_operands = 1 : i64, tpu.core_type = #tpu.core_type<tc>, window_params = [{transform_indices = @transform_0, window_bounds = array<i64: 1, 16, 16, 4>}, {pipeline_mode = #tpu.pipeline_mode<synchronous>, transform_indices = @transform_1, window_bounds = array<i64: 36, 128>}, {transform_indices = @transform_2, window_bounds = array<i64: 1, 16, 16, 128>}, {transform_indices = @transform_3, window_bounds = array<i64: 1, 2, 128>}]} {
    %cst = arith.constant 0.000000e+00 : bf16
    %0 = vector.broadcast %cst : bf16 to vector<1x18x4xbf16>
    %cst_0 = arith.constant 0.000000e+00 : bf16
    %1 = vector.broadcast %cst_0 : bf16 to vector<18x1x4xbf16>
    %c0 = arith.constant 0 : index
    %c0_1 = arith.constant 0 : index
    %c0_2 = arith.constant 0 : index
    %2 = vector.load %arg5[%c0, %c0_1, %c0_2] : memref<18x18x4xbf16, #tpu.memory_space<vmem>>, vector<1x18x4xbf16>
    tpu.vector_store %arg5[%c0, %c0_1, %c0_2], %0 {strides = array<i32>} : memref<18x18x4xbf16, #tpu.memory_space<vmem>>, vector<1x18x4xbf16>,
    %c17 = arith.constant 17 : index
    %c0_3 = arith.constant 0 : index
    %c0_4 = arith.constant 0 : index
    %3 = vector.load %arg5[%c17, %c0_3, %c0_4] : memref<18x18x4xbf16, #tpu.memory_space<vmem>>, vector<1x18x4xbf16>
    tpu.vector_store %arg5[%c17, %c0_3, %c0_4], %0 {strides = array<i32>} : memref<18x18x4xbf16, #tpu.memory_space<vmem>>, vector<1x18x4xbf16>,
    %c0_5 = arith.constant 0 : index
    %c0_6 = arith.constant 0 : index
    %c0_7 = arith.constant 0 : index
    %4 = vector.load %arg5[%c0_5, %c0_6, %c0_7] : memref<18x18x4xbf16, #tpu.memory_space<vmem>>, vector<18x1x4xbf16>
    tpu.vector_store %arg5[%c0_5, %c0_6, %c0_7], %1 {strides = array<i32>} : memref<18x18x4xbf16, #tpu.memory_space<vmem>>, vector<18x1x4xbf16>,
    %c0_8 = arith.constant 0 : index
    %c17_9 = arith.constant 17 : index
    %c0_10 = arith.constant 0 : index
    %5 = vector.load %arg5[%c0_8, %c17_9, %c0_10] : memref<18x18x4xbf16, #tpu.memory_space<vmem>>, vector<18x1x4xbf16>
    tpu.vector_store %arg5[%c0_8, %c17_9, %c0_10], %1 {strides = array<i32>} : memref<18x18x4xbf16, #tpu.memory_space<vmem>>, vector<18x1x4xbf16>,
    %c0_11 = arith.constant 0 : index
    %c0_12 = arith.constant 0 : index
    %c0_13 = arith.constant 0 : index
    %c0_14 = arith.constant 0 : index
    %6 = vector.load %arg1[%c0_11, %c0_12, %c0_13, %c0_14] : memref<1x16x16x4xbf16, #tpu.memory_space<vmem>>, vector<1x16x16x4xbf16>
    %7 = vector.shape_cast %6 : vector<1x16x16x4xbf16> to vector<16x16x4xbf16>
    %c1 = arith.constant 1 : index
    %c1_15 = arith.constant 1 : index
    %c0_16 = arith.constant 0 : index
    %8 = vector.load %arg5[%c1, %c1_15, %c0_16] : memref<18x18x4xbf16, #tpu.memory_space<vmem>>, vector<16x16x4xbf16>
    tpu.vector_store %arg5[%c1, %c1_15, %c0_16], %7 {strides = array<i32>} : memref<18x18x4xbf16, #tpu.memory_space<vmem>>, vector<16x16x4xbf16>,
    %c0_17 = arith.constant 0 : index
    %c0_18 = arith.constant 0 : index
    %c0_19 = arith.constant 0 : index
    %9 = vector.load %arg5[%c0_17, %c0_18, %c0_19] : memref<18x18x4xbf16, #tpu.memory_space<vmem>>, vector<16x16x4xbf16>
    %10 = vector.shape_cast %9 : vector<16x16x4xbf16> to vector<256x4xbf16>
    %c0_20 = arith.constant 0 : index
    %c1_21 = arith.constant 1 : index
    %c0_22 = arith.constant 0 : index
    %11 = vector.load %arg5[%c0_20, %c1_21, %c0_22] : memref<18x18x4xbf16, #tpu.memory_space<vmem>>, vector<16x16x4xbf16>
    %12 = vector.shape_cast %11 : vector<16x16x4xbf16> to vector<256x4xbf16>
    %c0_23 = arith.constant 0 : index
    %c2 = arith.constant 2 : index
    %c0_24 = arith.constant 0 : index
    %13 = vector.load %arg5[%c0_23, %c2, %c0_24] : memref<18x18x4xbf16, #tpu.memory_space<vmem>>, vector<16x16x4xbf16>
    %14 = vector.shape_cast %13 : vector<16x16x4xbf16> to vector<256x4xbf16>
    %c1_25 = arith.constant 1 : index
    %c0_26 = arith.constant 0 : index
    %c0_27 = arith.constant 0 : index
    %15 = vector.load %arg5[%c1_25, %c0_26, %c0_27] : memref<18x18x4xbf16, #tpu.memory_space<vmem>>, vector<16x16x4xbf16>
    %16 = vector.shape_cast %15 : vector<16x16x4xbf16> to vector<256x4xbf16>
    %c1_28 = arith.constant 1 : index
    %c1_29 = arith.constant 1 : index
    %c0_30 = arith.constant 0 : index
    %17 = vector.load %arg5[%c1_28, %c1_29, %c0_30] : memref<18x18x4xbf16, #tpu.memory_space<vmem>>, vector<16x16x4xbf16>
    %18 = vector.shape_cast %17 : vector<16x16x4xbf16> to vector<256x4xbf16>
    %c1_31 = arith.constant 1 : index
    %c2_32 = arith.constant 2 : index
    %c0_33 = arith.constant 0 : index
    %19 = vector.load %arg5[%c1_31, %c2_32, %c0_33] : memref<18x18x4xbf16, #tpu.memory_space<vmem>>, vector<16x16x4xbf16>
    %20 = vector.shape_cast %19 : vector<16x16x4xbf16> to vector<256x4xbf16>
    %c2_34 = arith.constant 2 : index
    %c0_35 = arith.constant 0 : index
    %c0_36 = arith.constant 0 : index
    %21 = vector.load %arg5[%c2_34, %c0_35, %c0_36] : memref<18x18x4xbf16, #tpu.memory_space<vmem>>, vector<16x16x4xbf16>
    %22 = vector.shape_cast %21 : vector<16x16x4xbf16> to vector<256x4xbf16>
    %c2_37 = arith.constant 2 : index
    %c1_38 = arith.constant 1 : index
    %c0_39 = arith.constant 0 : index
    %23 = vector.load %arg5[%c2_37, %c1_38, %c0_39] : memref<18x18x4xbf16, #tpu.memory_space<vmem>>, vector<16x16x4xbf16>
    %24 = vector.shape_cast %23 : vector<16x16x4xbf16> to vector<256x4xbf16>
    %c2_40 = arith.constant 2 : index
    %c2_41 = arith.constant 2 : index
    %c0_42 = arith.constant 0 : index
    %25 = vector.load %arg5[%c2_40, %c2_41, %c0_42] : memref<18x18x4xbf16, #tpu.memory_space<vmem>>, vector<16x16x4xbf16>
    %26 = vector.shape_cast %25 : vector<16x16x4xbf16> to vector<256x4xbf16>
    %27 = tpu.concatenate %10, %12, %14, %16, %18, %20, %22, %24, %26 in 1 : vector<256x4xbf16>, vector<256x4xbf16>, vector<256x4xbf16>, vector<256x4xbf16>, vector<256x4xbf16>, vector<256x4xbf16>, vector<256x4xbf16>, vector<256x4xbf16>, vector<256x4xbf16> -> vector<256x36xbf16>
    %c0_43 = arith.constant 0 : index
    %c0_44 = arith.constant 0 : index
    %28 = vector.load %arg2[%c0_43, %c0_44] : memref<36x128xbf16, #tpu.memory_space<vmem>>, vector<36x128xbf16>
    %cst_45 = arith.constant dense<0.000000e+00> : vector<256x128xf32>
    %29 = tpu.matmul %27, %28, %cst_45 {dimension_numbers = #tpu.dot_dimension_numbers<[1], [0], [0], [1], [0, 0, 1, 1], [], []>} : vector<256x36xbf16>, vector<36x128xbf16>, vector<256x128xf32> -> vector<256x128xf32>
    %30 = vector.shape_cast %29 : vector<256x128xf32> to vector<16x16x128xf32>
    %31 = arith.truncf %30 : vector<16x16x128xf32> to vector<16x16x128xbf16>
    %c0_46 = arith.constant 0 : index
    %c0_47 = arith.constant 0 : index
    %c0_48 = arith.constant 0 : index
    %c0_49 = arith.constant 0 : index
    %32 = vector.load %arg3[%c0_46, %c0_47, %c0_48, %c0_49] : memref<1x16x16x128xbf16, #tpu.memory_space<vmem>>, vector<1x16x16x128xbf16>
    %33 = vector.shape_cast %32 : vector<1x16x16x128xbf16> to vector<16x16x128xbf16>
    %34 = vector.shape_cast %31 : vector<16x16x128xbf16> to vector<1x16x16x128xbf16>
    tpu.vector_store %arg3[%c0_46, %c0_47, %c0_48, %c0_49], %34 {strides = array<i32>} : memref<1x16x16x128xbf16, #tpu.memory_space<vmem>>, vector<1x16x16x128xbf16>,
    %cst_50 = arith.constant dense<0.000000e+00> : vector<128xf32>
    %35 = vector.multi_reduction <add>, %29, %cst_50 [0] : vector<256x128xf32> to vector<128xf32>
    %36 = vector.shape_cast %35 : vector<128xf32> to vector<1x128xf32>
    %cst_51 = arith.constant 2.560000e+02 : f32
    %37 = vector.broadcast %cst_51 : f32 to vector<1x128xf32>
    %38 = arith.divf %36, %37 : vector<1x128xf32>
    %39 = vector.broadcast %38 : vector<1x128xf32> to vector<256x128xf32>
    %40 = arith.subf %29, %39 : vector<256x128xf32>
    %41 = vector.broadcast %38 : vector<1x128xf32> to vector<256x128xf32>
    %42 = arith.subf %29, %41 : vector<256x128xf32>
    %43 = arith.mulf %40, %42 : vector<256x128xf32>
    %cst_52 = arith.constant dense<0.000000e+00> : vector<128xf32>
    %44 = vector.multi_reduction <add>, %43, %cst_52 [0] : vector<256x128xf32> to vector<128xf32>
    %45 = vector.shape_cast %44 : vector<128xf32> to vector<1x128xf32>
    %46 = tpu.concatenate %36, %45 in 0 : vector<1x128xf32>, vector<1x128xf32> -> vector<2x128xf32>
    %c0_53 = arith.constant 0 : index
    %c0_54 = arith.constant 0 : index
    %c0_55 = arith.constant 0 : index
    %47 = vector.load %arg4[%c0_53, %c0_54, %c0_55] : memref<1x2x128xf32, #tpu.memory_space<vmem>>, vector<1x2x128xf32>
    %48 = vector.shape_cast %47 : vector<1x2x128xf32> to vector<2x128xf32>
    %49 = vector.shape_cast %46 : vector<2x128xf32> to vector<1x2x128xf32>
    tpu.vector_store %arg4[%c0_53, %c0_54, %c0_55], %49 {strides = array<i32>} : memref<1x2x128xf32, #tpu.memory_space<vmem>>, vector<1x2x128xf32>,
    return
  }
  func.func @transform_0(%arg0: i32) -> (i32, i32, i32, i32) {
    %c0_i32 = arith.constant 0 : i32
    %c0_i32_0 = arith.constant 0 : i32
    %c0_i32_1 = arith.constant 0 : i32
    %c0_i32_2 = arith.constant 0 : i32
    return %arg0, %c0_i32, %c0_i32_0, %c0_i32_1 : i32, i32, i32, i32
  }
  func.func @transform_1(%arg0: i32) -> (i32, i32) {
    %c0_i32 = arith.constant 0 : i32
    %c0_i32_0 = arith.constant 0 : i32
    %c0_i32_1 = arith.constant 0 : i32
    return %c0_i32, %c0_i32_0 : i32, i32
  }
  func.func @transform_2(%arg0: i32) -> (i32, i32, i32, i32) {
    %c0_i32 = arith.constant 0 : i32
    %c0_i32_0 = arith.constant 0 : i32
    %c0_i32_1 = arith.constant 0 : i32
    %c0_i32_2 = arith.constant 0 : i32
    return %arg0, %c0_i32, %c0_i32_0, %c0_i32_1 : i32, i32, i32, i32
  }
  func.func @transform_3(%arg0: i32) -> (i32, i32, i32) {
    %c0_i32 = arith.constant 0 : i32
    %c0_i32_0 = arith.constant 0 : i32
    %c0_i32_1 = arith.constant 0 : i32
    return %arg0, %c0_i32, %c0_i32_0 : i32, i32, i32
  }
}

module attributes {stable_mosaic.version = 11 : i64} {
  func.func @bnrelu_kernel(%arg0: i32, %arg1: memref<1x16x16x128xbf16, #tpu.memory_space<vmem>>, %arg2: memref<1x128xf32, #tpu.memory_space<vmem>>, %arg3: memref<1x128xf32, #tpu.memory_space<vmem>>, %arg4: memref<1x16x16x8xf32, #tpu.memory_space<vmem>>) attributes {dimension_semantics = [#tpu.dimension_semantics<parallel>], iteration_bounds = array<i64: 2>, scalar_prefetch = 0 : i64, scratch_operands = 0 : i64, tpu.core_type = #tpu.core_type<tc>, window_params = [{transform_indices = @transform_0, window_bounds = array<i64: 1, 16, 16, 128>}, {pipeline_mode = #tpu.pipeline_mode<synchronous>, transform_indices = @transform_1, window_bounds = array<i64: 1, 128>}, {pipeline_mode = #tpu.pipeline_mode<synchronous>, transform_indices = @transform_2, window_bounds = array<i64: 1, 128>}, {transform_indices = @transform_3, window_bounds = array<i64: 1, 16, 16, 8>}]} {
    %c0 = arith.constant 0 : index
    %c0_0 = arith.constant 0 : index
    %c0_1 = arith.constant 0 : index
    %c0_2 = arith.constant 0 : index
    %0 = vector.load %arg1[%c0, %c0_0, %c0_1, %c0_2] : memref<1x16x16x128xbf16, #tpu.memory_space<vmem>>, vector<1x16x16x128xbf16>
    %1 = vector.shape_cast %0 : vector<1x16x16x128xbf16> to vector<16x16x128xbf16>
    %2 = arith.extf %1 : vector<16x16x128xbf16> to vector<16x16x128xf32>
    %3 = vector.extract_strided_slice %2 {offsets = [0, 0, 0], sizes = [16, 16, 8], strides = [1, 1, 1]} : vector<16x16x128xf32> to vector<16x16x8xf32>
    %c0_3 = arith.constant 0 : index
    %c0_4 = arith.constant 0 : index
    %4 = vector.load %arg2[%c0_3, %c0_4] : memref<1x128xf32, #tpu.memory_space<vmem>>, vector<1x8xf32>
    %5 = vector.shape_cast %4 : vector<1x8xf32> to vector<8xf32>
    %6 = vector.shape_cast %5 : vector<8xf32> to vector<1x1x8xf32>
    %7 = vector.broadcast %6 : vector<1x1x8xf32> to vector<16x16x8xf32>
    %8 = arith.mulf %3, %7 : vector<16x16x8xf32>
    %c0_5 = arith.constant 0 : index
    %c0_6 = arith.constant 0 : index
    %9 = vector.load %arg3[%c0_5, %c0_6] : memref<1x128xf32, #tpu.memory_space<vmem>>, vector<1x8xf32>
    %10 = vector.shape_cast %9 : vector<1x8xf32> to vector<8xf32>
    %11 = vector.shape_cast %10 : vector<8xf32> to vector<1x1x8xf32>
    %12 = vector.broadcast %11 : vector<1x1x8xf32> to vector<16x16x8xf32>
    %13 = arith.addf %8, %12 : vector<16x16x8xf32>
    %cst = arith.constant 0.000000e+00 : f32
    %14 = vector.broadcast %cst : f32 to vector<16x16x8xf32>
    %15 = arith.maximumf %13, %14 : vector<16x16x8xf32>
    %c0_7 = arith.constant 0 : index
    %c0_8 = arith.constant 0 : index
    %c0_9 = arith.constant 0 : index
    %c0_10 = arith.constant 0 : index
    %16 = vector.load %arg4[%c0_7, %c0_8, %c0_9, %c0_10] : memref<1x16x16x8xf32, #tpu.memory_space<vmem>>, vector<1x16x16x8xf32>
    %17 = vector.shape_cast %16 : vector<1x16x16x8xf32> to vector<16x16x8xf32>
    %18 = vector.shape_cast %15 : vector<16x16x8xf32> to vector<1x16x16x8xf32>
    tpu.vector_store %arg4[%c0_7, %c0_8, %c0_9, %c0_10], %18 {strides = array<i32>} : memref<1x16x16x8xf32, #tpu.memory_space<vmem>>, vector<1x16x16x8xf32>,
    return
  }
  func.func @transform_0(%arg0: i32) -> (i32, i32, i32, i32) {
    %c0_i32 = arith.constant 0 : i32
    %c0_i32_0 = arith.constant 0 : i32
    %c0_i32_1 = arith.constant 0 : i32
    %c0_i32_2 = arith.constant 0 : i32
    return %arg0, %c0_i32, %c0_i32_0, %c0_i32_1 : i32, i32, i32, i32
  }
  func.func @transform_1(%arg0: i32) -> (i32, i32) {
    %c0_i32 = arith.constant 0 : i32
    %c0_i32_0 = arith.constant 0 : i32
    %c0_i32_1 = arith.constant 0 : i32
    return %c0_i32, %c0_i32_0 : i32, i32
  }
  func.func @transform_2(%arg0: i32) -> (i32, i32) {
    %c0_i32 = arith.constant 0 : i32
    %c0_i32_0 = arith.constant 0 : i32
    %c0_i32_1 = arith.constant 0 : i32
    return %c0_i32, %c0_i32_0 : i32, i32
  }
  func.func @transform_3(%arg0: i32) -> (i32, i32, i32, i32) {
    %c0_i32 = arith.constant 0 : i32
    %c0_i32_0 = arith.constant 0 : i32
    %c0_i32_1 = arith.constant 0 : i32
    %c0_i32_2 = arith.constant 0 : i32
    return %arg0, %c0_i32, %c0_i32_0, %c0_i32_1 : i32, i32, i32, i32
  }
}

module attributes {stable_mosaic.version = 11 : i64} {
  func.func @bnrelu_conv_stats_kernel(%arg0: i32, %arg1: memref<1x16x16x128xbf16, #tpu.memory_space<vmem>>, %arg2: memref<1x128xf32, #tpu.memory_space<vmem>>, %arg3: memref<1x128xf32, #tpu.memory_space<vmem>>, %arg4: memref<1152x128xbf16, #tpu.memory_space<vmem>>, %arg5: memref<1x16x16x128xbf16, #tpu.memory_space<vmem>>, %arg6: memref<1x2x128xf32, #tpu.memory_space<vmem>>, %arg7: memref<18x18x128xbf16, #tpu.memory_space<vmem>>) attributes {dimension_semantics = [#tpu.dimension_semantics<parallel>], iteration_bounds = array<i64: 2>, scalar_prefetch = 0 : i64, scratch_operands = 1 : i64, tpu.core_type = #tpu.core_type<tc>, window_params = [{transform_indices = @transform_0, window_bounds = array<i64: 1, 16, 16, 128>}, {pipeline_mode = #tpu.pipeline_mode<synchronous>, transform_indices = @transform_1, window_bounds = array<i64: 1, 128>}, {pipeline_mode = #tpu.pipeline_mode<synchronous>, transform_indices = @transform_2, window_bounds = array<i64: 1, 128>}, {pipeline_mode = #tpu.pipeline_mode<synchronous>, transform_indices = @transform_3, window_bounds = array<i64: 1152, 128>}, {transform_indices = @transform_4, window_bounds = array<i64: 1, 16, 16, 128>}, {transform_indices = @transform_5, window_bounds = array<i64: 1, 2, 128>}]} {
    %c0 = arith.constant 0 : index
    %c0_0 = arith.constant 0 : index
    %c0_1 = arith.constant 0 : index
    %c0_2 = arith.constant 0 : index
    %0 = vector.load %arg1[%c0, %c0_0, %c0_1, %c0_2] : memref<1x16x16x128xbf16, #tpu.memory_space<vmem>>, vector<1x16x16x128xbf16>
    %1 = vector.shape_cast %0 : vector<1x16x16x128xbf16> to vector<16x16x128xbf16>
    %2 = arith.extf %1 : vector<16x16x128xbf16> to vector<16x16x128xf32>
    %c0_3 = arith.constant 0 : index
    %c0_4 = arith.constant 0 : index
    %3 = vector.load %arg2[%c0_3, %c0_4] : memref<1x128xf32, #tpu.memory_space<vmem>>, vector<1x128xf32>
    %4 = vector.shape_cast %3 : vector<1x128xf32> to vector<1x1x128xf32>
    %5 = vector.broadcast %4 : vector<1x1x128xf32> to vector<16x16x128xf32>
    %6 = arith.mulf %2, %5 : vector<16x16x128xf32>
    %c0_5 = arith.constant 0 : index
    %c0_6 = arith.constant 0 : index
    %7 = vector.load %arg3[%c0_5, %c0_6] : memref<1x128xf32, #tpu.memory_space<vmem>>, vector<1x128xf32>
    %8 = vector.shape_cast %7 : vector<1x128xf32> to vector<1x1x128xf32>
    %9 = vector.broadcast %8 : vector<1x1x128xf32> to vector<16x16x128xf32>
    %10 = arith.addf %6, %9 : vector<16x16x128xf32>
    %cst = arith.constant 0.000000e+00 : f32
    %11 = vector.broadcast %cst : f32 to vector<16x16x128xf32>
    %12 = arith.maximumf %10, %11 : vector<16x16x128xf32>
    %cst_7 = arith.constant 0.000000e+00 : bf16
    %13 = vector.broadcast %cst_7 : bf16 to vector<1x18x128xbf16>
    %cst_8 = arith.constant 0.000000e+00 : bf16
    %14 = vector.broadcast %cst_8 : bf16 to vector<18x1x128xbf16>
    %c0_9 = arith.constant 0 : index
    %c0_10 = arith.constant 0 : index
    %c0_11 = arith.constant 0 : index
    %15 = vector.load %arg7[%c0_9, %c0_10, %c0_11] : memref<18x18x128xbf16, #tpu.memory_space<vmem>>, vector<1x18x128xbf16>
    tpu.vector_store %arg7[%c0_9, %c0_10, %c0_11], %13 {strides = array<i32>} : memref<18x18x128xbf16, #tpu.memory_space<vmem>>, vector<1x18x128xbf16>,
    %c17 = arith.constant 17 : index
    %c0_12 = arith.constant 0 : index
    %c0_13 = arith.constant 0 : index
    %16 = vector.load %arg7[%c17, %c0_12, %c0_13] : memref<18x18x128xbf16, #tpu.memory_space<vmem>>, vector<1x18x128xbf16>
    tpu.vector_store %arg7[%c17, %c0_12, %c0_13], %13 {strides = array<i32>} : memref<18x18x128xbf16, #tpu.memory_space<vmem>>, vector<1x18x128xbf16>,
    %c0_14 = arith.constant 0 : index
    %c0_15 = arith.constant 0 : index
    %c0_16 = arith.constant 0 : index
    %17 = vector.load %arg7[%c0_14, %c0_15, %c0_16] : memref<18x18x128xbf16, #tpu.memory_space<vmem>>, vector<18x1x128xbf16>
    tpu.vector_store %arg7[%c0_14, %c0_15, %c0_16], %14 {strides = array<i32>} : memref<18x18x128xbf16, #tpu.memory_space<vmem>>, vector<18x1x128xbf16>,
    %c0_17 = arith.constant 0 : index
    %c17_18 = arith.constant 17 : index
    %c0_19 = arith.constant 0 : index
    %18 = vector.load %arg7[%c0_17, %c17_18, %c0_19] : memref<18x18x128xbf16, #tpu.memory_space<vmem>>, vector<18x1x128xbf16>
    tpu.vector_store %arg7[%c0_17, %c17_18, %c0_19], %14 {strides = array<i32>} : memref<18x18x128xbf16, #tpu.memory_space<vmem>>, vector<18x1x128xbf16>,
    %19 = arith.truncf %12 : vector<16x16x128xf32> to vector<16x16x128xbf16>
    %c1 = arith.constant 1 : index
    %c1_20 = arith.constant 1 : index
    %c0_21 = arith.constant 0 : index
    %20 = vector.load %arg7[%c1, %c1_20, %c0_21] : memref<18x18x128xbf16, #tpu.memory_space<vmem>>, vector<16x16x128xbf16>
    tpu.vector_store %arg7[%c1, %c1_20, %c0_21], %19 {strides = array<i32>} : memref<18x18x128xbf16, #tpu.memory_space<vmem>>, vector<16x16x128xbf16>,
    %cst_22 = arith.constant 0.000000e+00 : f32
    %21 = vector.broadcast %cst_22 : f32 to vector<256x128xf32>
    %c0_23 = arith.constant 0 : index
    %c0_24 = arith.constant 0 : index
    %c0_25 = arith.constant 0 : index
    %22 = vector.load %arg7[%c0_23, %c0_24, %c0_25] : memref<18x18x128xbf16, #tpu.memory_space<vmem>>, vector<16x16x128xbf16>
    %23 = vector.shape_cast %22 : vector<16x16x128xbf16> to vector<256x128xbf16>
    %c0_26 = arith.constant 0 : index
    %c0_27 = arith.constant 0 : index
    %24 = vector.load %arg4[%c0_26, %c0_27] : memref<1152x128xbf16, #tpu.memory_space<vmem>>, vector<128x128xbf16>
    %cst_28 = arith.constant dense<0.000000e+00> : vector<256x128xf32>
    %25 = tpu.matmul %23, %24, %cst_28 {dimension_numbers = #tpu.dot_dimension_numbers<[1], [0], [0], [1], [0, 0, 1, 1], [], []>} : vector<256x128xbf16>, vector<128x128xbf16>, vector<256x128xf32> -> vector<256x128xf32>
    %26 = arith.addf %21, %25 : vector<256x128xf32>
    %c0_29 = arith.constant 0 : index
    %c1_30 = arith.constant 1 : index
    %c0_31 = arith.constant 0 : index
    %27 = vector.load %arg7[%c0_29, %c1_30, %c0_31] : memref<18x18x128xbf16, #tpu.memory_space<vmem>>, vector<16x16x128xbf16>
    %28 = vector.shape_cast %27 : vector<16x16x128xbf16> to vector<256x128xbf16>
    %c128 = arith.constant 128 : index
    %c0_32 = arith.constant 0 : index
    %29 = vector.load %arg4[%c128, %c0_32] : memref<1152x128xbf16, #tpu.memory_space<vmem>>, vector<128x128xbf16>
    %cst_33 = arith.constant dense<0.000000e+00> : vector<256x128xf32>
    %30 = tpu.matmul %28, %29, %cst_33 {dimension_numbers = #tpu.dot_dimension_numbers<[1], [0], [0], [1], [0, 0, 1, 1], [], []>} : vector<256x128xbf16>, vector<128x128xbf16>, vector<256x128xf32> -> vector<256x128xf32>
    %31 = arith.addf %26, %30 : vector<256x128xf32>
    %c0_34 = arith.constant 0 : index
    %c2 = arith.constant 2 : index
    %c0_35 = arith.constant 0 : index
    %32 = vector.load %arg7[%c0_34, %c2, %c0_35] : memref<18x18x128xbf16, #tpu.memory_space<vmem>>, vector<16x16x128xbf16>
    %33 = vector.shape_cast %32 : vector<16x16x128xbf16> to vector<256x128xbf16>
    %c256 = arith.constant 256 : index
    %c0_36 = arith.constant 0 : index
    %34 = vector.load %arg4[%c256, %c0_36] : memref<1152x128xbf16, #tpu.memory_space<vmem>>, vector<128x128xbf16>
    %cst_37 = arith.constant dense<0.000000e+00> : vector<256x128xf32>
    %35 = tpu.matmul %33, %34, %cst_37 {dimension_numbers = #tpu.dot_dimension_numbers<[1], [0], [0], [1], [0, 0, 1, 1], [], []>} : vector<256x128xbf16>, vector<128x128xbf16>, vector<256x128xf32> -> vector<256x128xf32>
    %36 = arith.addf %31, %35 : vector<256x128xf32>
    %c1_38 = arith.constant 1 : index
    %c0_39 = arith.constant 0 : index
    %c0_40 = arith.constant 0 : index
    %37 = vector.load %arg7[%c1_38, %c0_39, %c0_40] : memref<18x18x128xbf16, #tpu.memory_space<vmem>>, vector<16x16x128xbf16>
    %38 = vector.shape_cast %37 : vector<16x16x128xbf16> to vector<256x128xbf16>
    %c384 = arith.constant 384 : index
    %c0_41 = arith.constant 0 : index
    %39 = vector.load %arg4[%c384, %c0_41] : memref<1152x128xbf16, #tpu.memory_space<vmem>>, vector<128x128xbf16>
    %cst_42 = arith.constant dense<0.000000e+00> : vector<256x128xf32>
    %40 = tpu.matmul %38, %39, %cst_42 {dimension_numbers = #tpu.dot_dimension_numbers<[1], [0], [0], [1], [0, 0, 1, 1], [], []>} : vector<256x128xbf16>, vector<128x128xbf16>, vector<256x128xf32> -> vector<256x128xf32>
    %41 = arith.addf %36, %40 : vector<256x128xf32>
    %c1_43 = arith.constant 1 : index
    %c1_44 = arith.constant 1 : index
    %c0_45 = arith.constant 0 : index
    %42 = vector.load %arg7[%c1_43, %c1_44, %c0_45] : memref<18x18x128xbf16, #tpu.memory_space<vmem>>, vector<16x16x128xbf16>
    %43 = vector.shape_cast %42 : vector<16x16x128xbf16> to vector<256x128xbf16>
    %c512 = arith.constant 512 : index
    %c0_46 = arith.constant 0 : index
    %44 = vector.load %arg4[%c512, %c0_46] : memref<1152x128xbf16, #tpu.memory_space<vmem>>, vector<128x128xbf16>
    %cst_47 = arith.constant dense<0.000000e+00> : vector<256x128xf32>
    %45 = tpu.matmul %43, %44, %cst_47 {dimension_numbers = #tpu.dot_dimension_numbers<[1], [0], [0], [1], [0, 0, 1, 1], [], []>} : vector<256x128xbf16>, vector<128x128xbf16>, vector<256x128xf32> -> vector<256x128xf32>
    %46 = arith.addf %41, %45 : vector<256x128xf32>
    %c1_48 = arith.constant 1 : index
    %c2_49 = arith.constant 2 : index
    %c0_50 = arith.constant 0 : index
    %47 = vector.load %arg7[%c1_48, %c2_49, %c0_50] : memref<18x18x128xbf16, #tpu.memory_space<vmem>>, vector<16x16x128xbf16>
    %48 = vector.shape_cast %47 : vector<16x16x128xbf16> to vector<256x128xbf16>
    %c640 = arith.constant 640 : index
    %c0_51 = arith.constant 0 : index
    %49 = vector.load %arg4[%c640, %c0_51] : memref<1152x128xbf16, #tpu.memory_space<vmem>>, vector<128x128xbf16>
    %cst_52 = arith.constant dense<0.000000e+00> : vector<256x128xf32>
    %50 = tpu.matmul %48, %49, %cst_52 {dimension_numbers = #tpu.dot_dimension_numbers<[1], [0], [0], [1], [0, 0, 1, 1], [], []>} : vector<256x128xbf16>, vector<128x128xbf16>, vector<256x128xf32> -> vector<256x128xf32>
    %51 = arith.addf %46, %50 : vector<256x128xf32>
    %c2_53 = arith.constant 2 : index
    %c0_54 = arith.constant 0 : index
    %c0_55 = arith.constant 0 : index
    %52 = vector.load %arg7[%c2_53, %c0_54, %c0_55] : memref<18x18x128xbf16, #tpu.memory_space<vmem>>, vector<16x16x128xbf16>
    %53 = vector.shape_cast %52 : vector<16x16x128xbf16> to vector<256x128xbf16>
    %c768 = arith.constant 768 : index
    %c0_56 = arith.constant 0 : index
    %54 = vector.load %arg4[%c768, %c0_56] : memref<1152x128xbf16, #tpu.memory_space<vmem>>, vector<128x128xbf16>
    %cst_57 = arith.constant dense<0.000000e+00> : vector<256x128xf32>
    %55 = tpu.matmul %53, %54, %cst_57 {dimension_numbers = #tpu.dot_dimension_numbers<[1], [0], [0], [1], [0, 0, 1, 1], [], []>} : vector<256x128xbf16>, vector<128x128xbf16>, vector<256x128xf32> -> vector<256x128xf32>
    %56 = arith.addf %51, %55 : vector<256x128xf32>
    %c2_58 = arith.constant 2 : index
    %c1_59 = arith.constant 1 : index
    %c0_60 = arith.constant 0 : index
    %57 = vector.load %arg7[%c2_58, %c1_59, %c0_60] : memref<18x18x128xbf16, #tpu.memory_space<vmem>>, vector<16x16x128xbf16>
    %58 = vector.shape_cast %57 : vector<16x16x128xbf16> to vector<256x128xbf16>
    %c896 = arith.constant 896 : index
    %c0_61 = arith.constant 0 : index
    %59 = vector.load %arg4[%c896, %c0_61] : memref<1152x128xbf16, #tpu.memory_space<vmem>>, vector<128x128xbf16>
    %cst_62 = arith.constant dense<0.000000e+00> : vector<256x128xf32>
    %60 = tpu.matmul %58, %59, %cst_62 {dimension_numbers = #tpu.dot_dimension_numbers<[1], [0], [0], [1], [0, 0, 1, 1], [], []>} : vector<256x128xbf16>, vector<128x128xbf16>, vector<256x128xf32> -> vector<256x128xf32>
    %61 = arith.addf %56, %60 : vector<256x128xf32>
    %c2_63 = arith.constant 2 : index
    %c2_64 = arith.constant 2 : index
    %c0_65 = arith.constant 0 : index
    %62 = vector.load %arg7[%c2_63, %c2_64, %c0_65] : memref<18x18x128xbf16, #tpu.memory_space<vmem>>, vector<16x16x128xbf16>
    %63 = vector.shape_cast %62 : vector<16x16x128xbf16> to vector<256x128xbf16>
    %c1024 = arith.constant 1024 : index
    %c0_66 = arith.constant 0 : index
    %64 = vector.load %arg4[%c1024, %c0_66] : memref<1152x128xbf16, #tpu.memory_space<vmem>>, vector<128x128xbf16>
    %cst_67 = arith.constant dense<0.000000e+00> : vector<256x128xf32>
    %65 = tpu.matmul %63, %64, %cst_67 {dimension_numbers = #tpu.dot_dimension_numbers<[1], [0], [0], [1], [0, 0, 1, 1], [], []>} : vector<256x128xbf16>, vector<128x128xbf16>, vector<256x128xf32> -> vector<256x128xf32>
    %66 = arith.addf %61, %65 : vector<256x128xf32>
    %67 = vector.shape_cast %66 : vector<256x128xf32> to vector<16x16x128xf32>
    %68 = arith.truncf %67 : vector<16x16x128xf32> to vector<16x16x128xbf16>
    %c0_68 = arith.constant 0 : index
    %c0_69 = arith.constant 0 : index
    %c0_70 = arith.constant 0 : index
    %c0_71 = arith.constant 0 : index
    %69 = vector.load %arg5[%c0_68, %c0_69, %c0_70, %c0_71] : memref<1x16x16x128xbf16, #tpu.memory_space<vmem>>, vector<1x16x16x128xbf16>
    %70 = vector.shape_cast %69 : vector<1x16x16x128xbf16> to vector<16x16x128xbf16>
    %71 = vector.shape_cast %68 : vector<16x16x128xbf16> to vector<1x16x16x128xbf16>
    tpu.vector_store %arg5[%c0_68, %c0_69, %c0_70, %c0_71], %71 {strides = array<i32>} : memref<1x16x16x128xbf16, #tpu.memory_space<vmem>>, vector<1x16x16x128xbf16>,
    %cst_72 = arith.constant dense<0.000000e+00> : vector<128xf32>
    %72 = vector.multi_reduction <add>, %66, %cst_72 [0] : vector<256x128xf32> to vector<128xf32>
    %73 = vector.shape_cast %72 : vector<128xf32> to vector<1x128xf32>
    %cst_73 = arith.constant 2.560000e+02 : f32
    %74 = vector.broadcast %cst_73 : f32 to vector<1x128xf32>
    %75 = arith.divf %73, %74 : vector<1x128xf32>
    %76 = vector.broadcast %75 : vector<1x128xf32> to vector<256x128xf32>
    %77 = arith.subf %66, %76 : vector<256x128xf32>
    %78 = vector.broadcast %75 : vector<1x128xf32> to vector<256x128xf32>
    %79 = arith.subf %66, %78 : vector<256x128xf32>
    %80 = arith.mulf %77, %79 : vector<256x128xf32>
    %cst_74 = arith.constant dense<0.000000e+00> : vector<128xf32>
    %81 = vector.multi_reduction <add>, %80, %cst_74 [0] : vector<256x128xf32> to vector<128xf32>
    %82 = vector.shape_cast %81 : vector<128xf32> to vector<1x128xf32>
    %83 = tpu.concatenate %73, %82 in 0 : vector<1x128xf32>, vector<1x128xf32> -> vector<2x128xf32>
    %c0_75 = arith.constant 0 : index
    %c0_76 = arith.constant 0 : index
    %c0_77 = arith.constant 0 : index
    %84 = vector.load %arg6[%c0_75, %c0_76, %c0_77] : memref<1x2x128xf32, #tpu.memory_space<vmem>>, vector<1x2x128xf32>
    %85 = vector.shape_cast %84 : vector<1x2x128xf32> to vector<2x128xf32>
    %86 = vector.shape_cast %83 : vector<2x128xf32> to vector<1x2x128xf32>
    tpu.vector_store %arg6[%c0_75, %c0_76, %c0_77], %86 {strides = array<i32>} : memref<1x2x128xf32, #tpu.memory_space<vmem>>, vector<1x2x128xf32>,
    return
  }
  func.func @transform_0(%arg0: i32) -> (i32, i32, i32, i32) {
    %c0_i32 = arith.constant 0 : i32
    %c0_i32_0 = arith.constant 0 : i32
    %c0_i32_1 = arith.constant 0 : i32
    %c0_i32_2 = arith.constant 0 : i32
    return %arg0, %c0_i32, %c0_i32_0, %c0_i32_1 : i32, i32, i32, i32
  }
  func.func @transform_1(%arg0: i32) -> (i32, i32) {
    %c0_i32 = arith.constant 0 : i32
    %c0_i32_0 = arith.constant 0 : i32
    %c0_i32_1 = arith.constant 0 : i32
    return %c0_i32, %c0_i32_0 : i32, i32
  }
  func.func @transform_2(%arg0: i32) -> (i32, i32) {
    %c0_i32 = arith.constant 0 : i32
    %c0_i32_0 = arith.constant 0 : i32
    %c0_i32_1 = arith.constant 0 : i32
    return %c0_i32, %c0_i32_0 : i32, i32
  }
  func.func @transform_3(%arg0: i32) -> (i32, i32) {
    %c0_i32 = arith.constant 0 : i32
    %c0_i32_0 = arith.constant 0 : i32
    %c0_i32_1 = arith.constant 0 : i32
    return %c0_i32, %c0_i32_0 : i32, i32
  }
  func.func @transform_4(%arg0: i32) -> (i32, i32, i32, i32) {
    %c0_i32 = arith.constant 0 : i32
    %c0_i32_0 = arith.constant 0 : i32
    %c0_i32_1 = arith.constant 0 : i32
    %c0_i32_2 = arith.constant 0 : i32
    return %arg0, %c0_i32, %c0_i32_0, %c0_i32_1 : i32, i32, i32, i32
  }
  func.func @transform_5(%arg0: i32) -> (i32, i32, i32) {
    %c0_i32 = arith.constant 0 : i32
    %c0_i32_0 = arith.constant 0 : i32
    %c0_i32_1 = arith.constant 0 : i32
    return %arg0, %c0_i32, %c0_i32_0 : i32, i32, i32
  }
}

</mosaic_0001>

<llo_original>
// kernel: conv_block_forward.5
$region0: #{conv_block_forward.5}
  #allocation0 [shape = 'u32[]', space=smem, size = 0x4, offset = 0x4, fixed_abs, tag = 'smem constant byte address 0x4 - core index']
  #allocation1 [shape = 'u32[72,128]{1,0:T(1,128)}', space=vmem, size = 0x9000, scoped, tag = 'internal scratch']
  %s0 = inlined_call_operand.vmem [shape: bf16[2,16,16,128], index: 0, kind: input, shape index: {}]
  %s1 = inlined_call_operand.vmem [shape: f32[1,128], index: 1, kind: input, shape index: {}]
  %s2 = inlined_call_operand.vmem [shape: f32[1,128], index: 2, kind: input, shape index: {}]
  %s3 = inlined_call_operand.vmem [shape: f32[2,16,16,8], index: 3, kind: output, shape index: {}]
  %s4 = sld [smem:[#allocation0]]
  $region45: #{conv_block_forward.5} parent=0
    _
  %s6 = ssub.s32 1, %s4
  %s7 = scalar_select 0, %s6, %s4
  loop: start=0, step=1, limit=4
  $region2: #{conv_block_forward.5} parent=0 // loop_pre_header
    _
  $region3: #{conv_block_forward.5} parent=0 // loop_header
    %s9 = sphi 0, %s13
    %p10 = scmp.ge.s32.totalorder %s9, 4
    %s19 = sphi 0, %s21
    %s22 = sphi 0, %s19
    %s23 = sphi 0, %s22
    %s39 = sphi 0, %s23
    %s43 = sphi 0, %s43
    %s45 = sphi 0, %s43
    %s46 = sphi 0, %s45
    %s60 = sphi 0, %s46
    %s64 = sphi 0, %s64
    %s66 = sphi 0, %s64
    %s67 = sphi 0, %s66
    %s81 = sphi 0, %s67
    %s87 = sphi 0, %s89
    %s90 = sphi 0, %s87
    %s91 = sphi 0, %s90
    %s107 = sphi 0, %s91
  $region4: #{conv_block_forward.5} parent=0 // loop_header_branch
    %12 = sbr.rel (%p10) target = $region8
  $region5: #{conv_block_forward.5} parent=0 // loop_body
    %s14 = ssub.s32 %s9, 1
    %s15 = ssub.s32 %s9, 2
    %s16 = sadd.s32 %s9, 1
    %s17 = ssub.s32 %s9, %s16
    %p18 = scmp.eq.s32.totalorder %s17, 0
    %s20 = sadd.s32 %s19, 1
    %s21 = scalar_select %p18, %s19, %s20
    %p24 = pneg %p18
    %p25 = scmp.eq.s32.totalorder %s9, 1
    %p26 = por %p24, %p25
    %p27 = scmp.ne.s32.totalorder %s19, %s22
    %p28 = scmp.eq.s32.totalorder %s9, 0
    %p29 = por %p27, %p28
    %p30 = scmp.ne.s32.totalorder %s19, %s22
    %p31 = scmp.eq.s32.totalorder %s14, 1
    %p32 = por %p30, %p31
    %p33 = scmp.ne.s32.totalorder %s22, %s23
    %p34 = scmp.eq.s32.totalorder %s14, 0
    %p35 = por %p33, %p34
    %p36 = scmp.ne.s32.totalorder %s22, %s23
    %p37 = scmp.eq.s32.totalorder %s15, 1
    %p38 = por %p36, %p37
    %p40 = scmp.ne.s32.totalorder %s23, %s39
    %p41 = scmp.eq.s32.totalorder %s15, 0
    %p42 = por %p40, %p41
    %s44 = sadd.s32 %s43, 1
    %p47 = scmp.eq.s32.totalorder %s9, 1
    %p48 = scmp.ne.s32.totalorder %s43, %s45
    %p49 = scmp.eq.s32.totalorder %s9, 0
    %p50 = por %p48, %p49
    %p51 = scmp.ne.s32.totalorder %s43, %s45
    %p52 = scmp.eq.s32.totalorder %s14, 1
    %p53 = por %p51, %p52
    %p54 = scmp.ne.s32.totalorder %s45, %s46
    %p55 = scmp.eq.s32.totalorder %s14, 0
    %p56 = por %p54, %p55
    %p57 = scmp.ne.s32.totalorder %s45, %s46
    %p58 = scmp.eq.s32.totalorder %s15, 1
    %p59 = por %p57, %p58
    %p61 = scmp.ne.s32.totalorder %s46, %s60
    %p62 = scmp.eq.s32.totalorder %s15, 0
    %p63 = por %p61, %p62
    %s65 = sadd.s32 %s64, 1
    %p68 = scmp.eq.s32.totalorder %s9, 1
    %p69 = scmp.ne.s32.totalorder %s64, %s66
    %p70 = scmp.eq.s32.totalorder %s9, 0
    %p71 = por %p69, %p70
    %p72 = scmp.ne.s32.totalorder %s64, %s66
    %p73 = scmp.eq.s32.totalorder %s14, 1
    %p74 = por %p72, %p73
    %p75 = scmp.ne.s32.totalorder %s66, %s67
    %p76 = scmp.eq.s32.totalorder %s14, 0
    %p77 = por %p75, %p76
    %p78 = scmp.ne.s32.totalorder %s66, %s67
    %p79 = scmp.eq.s32.totalorder %s15, 1
    %p80 = por %p78, %p79
    %p82 = scmp.ne.s32.totalorder %s67, %s81
    %p83 = scmp.eq.s32.totalorder %s15, 0
    %p84 = por %p82, %p83
    %s85 = ssub.s32 %s9, %s16
    %p86 = scmp.eq.s32.totalorder %s85, 0
    %s88 = sadd.s32 %s87, 1
    %s89 = scalar_select %p86, %s87, %s88
    %p92 = pneg %p86
    %p93 = scmp.eq.s32.totalorder %s9, 1
    %p94 = por %p92, %p93
    %p95 = scmp.ne.s32.totalorder %s87, %s90
    %p96 = scmp.eq.s32.totalorder %s9, 0
    %p97 = por %p95, %p96
    %p98 = scmp.ne.s32.totalorder %s87, %s90
    %p99 = scmp.eq.s32.totalorder %s14, 1
    %p100 = por %p98, %p99
    %p101 = scmp.ne.s32.totalorder %s90, %s91
    %p102 = scmp.eq.s32.totalorder %s14, 0
    %p103 = por %p101, %p102
    %p104 = scmp.ne.s32.totalorder %s90, %s91
    %p105 = scmp.eq.s32.totalorder %s15, 1
    %p106 = por %p104, %p105
    %p108 = scmp.ne.s32.totalorder %s91, %s107
    %p109 = scmp.eq.s32.totalorder %s15, 0
    %p110 = por %p108, %p109
    %p111 = scmp.le.s32.totalorder 1, %s9
    %p112 = scmp.lt.s32.totalorder %s9, 3
    %p113 = pnand %p111, %p112
    %p114 = pneg %p113
    // Predicated region
    $region9: #{conv_block_forward.5} parent=5 // pred_check
      _
    $region10: #{conv_block_forward.5} parent=5 // pred_check_branch
      %116 = sbr.rel (%p113) target = $region12
    $region11: #{conv_block_forward.5} parent=5 // pred_region
      %s117 = ssub.s32 %s9, 1
      // Predicated region
      $region13: #{conv_block_forward.5} parent=11 // pred_check
        %p118 = pneg %p56
      $region14: #{conv_block_forward.5} parent=11 // pred_check_branch
        %120 = sbr.rel (%p118) target = $region16
      $region15: #{conv_block_forward.5} parent=11 // pred_region
        _
      $region16: #{conv_block_forward.5} parent=11 // pred_fallthru
        _
      // Predicated region
      $region17: #{conv_block_forward.5} parent=11 // pred_check
        %p121 = pneg %p77
      $region18: #{conv_block_forward.5} parent=11 // pred_check_branch
        %123 = sbr.rel (%p121) target = $region20
      $region19: #{conv_block_forward.5} parent=11 // pred_region
        _
      $region20: #{conv_block_forward.5} parent=11 // pred_fallthru
        _
    $region12: #{conv_block_forward.5} parent=5 // pred_fallthru
      _
    %p124 = scmp.lt.s32.totalorder %s9, 2
    // Predicated region
    $region21: #{conv_block_forward.5} parent=5 // pred_check
      %p125 = pneg %p124
    $region22: #{conv_block_forward.5} parent=5 // pred_check_branch
      %127 = sbr.rel (%p125) target = $region24
    $region23: #{conv_block_forward.5} parent=5 // pred_region
      // Predicated region
      $region25: #{conv_block_forward.5} parent=23 // pred_check
        %p128 = pneg %p29
      $region26: #{conv_block_forward.5} parent=23 // pred_check_branch
        %130 = sbr.rel (%p128) target = $region28
      $region27: #{conv_block_forward.5} parent=23 // pred_region
        %p131 = scmp.lt.s32.totalorder %s9, 1
        %s132 = scalar_select %p131, %s9, 1
        %s133 = smul.addr %s132, 32
        %s134 = smul.addr %s133, 4
        %s135 = scalar_lea.vmem %s0, %s134
      $region28: #{conv_block_forward.5} parent=23 // pred_fallthru
        _
    $region24: #{conv_block_forward.5} parent=5 // pred_fallthru
      _
    %p136 = scmp.le.s32.totalorder 1, %s9
    %p137 = scmp.lt.s32.totalorder %s9, 3
    %p138 = pnand %p136, %p137
    %p139 = pneg %p138
    // Predicated region
    $region29: #{conv_block_forward.5} parent=5 // pred_check
      _
    $region30: #{conv_block_forward.5} parent=5 // pred_check_branch
      %141 = sbr.rel (%p138) target = $region32
    $region31: #{conv_block_forward.5} parent=5 // pred_region
      %s142 = ssub.s32 %s9, 1
      %p143 = scmp.lt.s32.totalorder %s14, 1
      %s144 = scalar_select %p143, %s14, 1
      %s145 = smul.addr %s144, 32
      %s146 = smul.addr %s145, 4
      %s147 = scalar_lea.vmem %s0, %s146
      %p148 = pneg %p35
      %p149 = pneg %p32
      %p150 = pneg %p56
      %p151 = pneg %p53
      %p152 = pneg %p77
      %p153 = pneg %p74
      %p154 = pneg %p103
      %p155 = pneg %p100
      %p156 = scmp.lt.s32.totalorder %s14, 1
      %s157 = scalar_select %p156, %s14, 1
      %s158 = smul.addr %s157, 32
      %s159 = smul.addr %s158, 8
      %s160 = scalar_lea.vmem %s3, %s159
      %p161 = scmp.lt.s32.totalorder %s14, 1
      %s162 = scalar_select %p161, %s14, 1
      %s163 = smul.addr %s162, 32
      %s164 = smul.addr %s163, 4
      %s165 = scalar_lea.vmem %s0, %s164
      %p166 = scmp.lt.s32.totalorder %s14, 1
      %s167 = scalar_select %p166, %s14, 1
      %s168 = smul.addr %s167, 32
      %s169 = smul.addr %s168, 8
      %s170 = scalar_lea.vmem %s3, %s169
      %v171 = vld [vmem:[%s165] sm:$0xf]
      %v172 = vld [vmem:[%s165 + $0x4] sm:$0xf]
      %v173 = vld [vmem:[%s165 + $0x8] sm:$0xf]
      %v174 = vld [vmem:[%s165 + $0xc] sm:$0xf]
      %v175 = vld [vmem:[%s165 + $0x10] sm:$0xf]
      %v176 = vld [vmem:[%s165 + $0x14] sm:$0xf]
      %v177 = vld [vmem:[%s165 + $0x18] sm:$0xf]
      %v178 = vld [vmem:[%s165 + $0x1c] sm:$0xf]
      %v179 = vld [vmem:[%s165 + $0x20] sm:$0xf]
      %v180 = vld [vmem:[%s165 + $0x24] sm:$0xf]
      %v181 = vld [vmem:[%s165 + $0x28] sm:$0xf]
      %v182 = vld [vmem:[%s165 + $0x2c] sm:$0xf]
      %v183 = vld [vmem:[%s165 + $0x30] sm:$0xf]
      %v184 = vld [vmem:[%s165 + $0x34] sm:$0xf]
      %v185 = vld [vmem:[%s165 + $0x38] sm:$0xf]
      %v186 = vld [vmem:[%s165 + $0x3c] sm:$0xf]
      %v187 = vld [vmem:[%s165 + $0x40] sm:$0xf]
      %v188 = vld [vmem:[%s165 + $0x44] sm:$0xf]
      %v189 = vld [vmem:[%s165 + $0x48] sm:$0xf]
      %v190 = vld [vmem:[%s165 + $0x4c] sm:$0xf]
      %v191 = vld [vmem:[%s165 + $0x50] sm:$0xf]
      %v192 = vld [vmem:[%s165 + $0x54] sm:$0xf]
      %v193 = vld [vmem:[%s165 + $0x58] sm:$0xf]
      %v194 = vld [vmem:[%s165 + $0x5c] sm:$0xf]
      %v195 = vld [vmem:[%s165 + $0x60] sm:$0xf]
      %v196 = vld [vmem:[%s165 + $0x64] sm:$0xf]
      %v197 = vld [vmem:[%s165 + $0x68] sm:$0xf]
      %v198 = vld [vmem:[%s165 + $0x6c] sm:$0xf]
      %v199 = vld [vmem:[%s165 + $0x70] sm:$0xf]
      %v200 = vld [vmem:[%s165 + $0x74] sm:$0xf]
      %v201 = vld [vmem:[%s165 + $0x78] sm:$0xf]
      %v202 = vld [vmem:[%s165 + $0x7c] sm:$0xf]
      %v203 = vunpack.c.l.bf16 %v171
      %v204 = vunpack.c.l.bf16 %v172
      %v205 = vunpack.c.l.bf16 %v173
      %v206 = vunpack.c.l.bf16 %v174
      %v207 = vunpack.c.l.bf16 %v175
      %v208 = vunpack.c.l.bf16 %v176
      %v209 = vunpack.c.l.bf16 %v177
      %v210 = vunpack.c.l.bf16 %v178
      %v211 = vunpack.c.l.bf16 %v179
      %v212 = vunpack.c.l.bf16 %v180
      %v213 = vunpack.c.l.bf16 %v181
      %v214 = vunpack.c.l.bf16 %v182
      %v215 = vunpack.c.l.bf16 %v183
      %v216 = vunpack.c.l.bf16 %v184
      %v217 = vunpack.c.l.bf16 %v185
      %v218 = vunpack.c.l.bf16 %v186
      %v219 = vunpack.c.l.bf16 %v187
      %v220 = vunpack.c.l.bf16 %v188
      %v221 = vunpack.c.l.bf16 %v189
      %v222 = vunpack.c.l.bf16 %v190
      %v223 = vunpack.c.l.bf16 %v191
      %v224 = vunpack.c.l.bf16 %v192
      %v225 = vunpack.c.l.bf16 %v193
      %v226 = vunpack.c.l.bf16 %v194
      %v227 = vunpack.c.l.bf16 %v195
      %v228 = vunpack.c.l.bf16 %v196
      %v229 = vunpack.c.l.bf16 %v197
      %v230 = vunpack.c.l.bf16 %v198
      %v231 = vunpack.c.l.bf16 %v199
      %v232 = vunpack.c.l.bf16 %v200
      %v233 = vunpack.c.l.bf16 %v201
      %v234 = vunpack.c.l.bf16 %v202
      %v235 = vld [vmem:[%s1] sm:$0x1]
      %v237 = vperm.slane %v235, 0
      %v239 = vmul.f32 %v203, %v237
      %v240 = vmul.f32 %v204, %v237
      %v241 = vmul.f32 %v205, %v237
      %v242 = vmul.f32 %v206, %v237
      %v243 = vmul.f32 %v207, %v237
      %v244 = vmul.f32 %v208, %v237
      %v245 = vmul.f32 %v209, %v237
      %v246 = vmul.f32 %v210, %v237
      %v247 = vmul.f32 %v211, %v237
      %v248 = vmul.f32 %v212, %v237
      %v249 = vmul.f32 %v213, %v237
      %v250 = vmul.f32 %v214, %v237
      %v251 = vmul.f32 %v215, %v237
      %v252 = vmul.f32 %v216, %v237
      %v253 = vmul.f32 %v217, %v237
      %v254 = vmul.f32 %v218, %v237
      %v255 = vmul.f32 %v219, %v237
      %v256 = vmul.f32 %v220, %v237
      %v257 = vmul.f32 %v221, %v237
      %v258 = vmul.f32 %v222, %v237
      %v259 = vmul.f32 %v223, %v237
      %v260 = vmul.f32 %v224, %v237
      %v261 = vmul.f32 %v225, %v237
      %v262 = vmul.f32 %v226, %v237
      %v263 = vmul.f32 %v227, %v237
      %v264 = vmul.f32 %v228, %v237
      %v265 = vmul.f32 %v229, %v237
      %v266 = vmul.f32 %v230, %v237
      %v267 = vmul.f32 %v231, %v237
      %v268 = vmul.f32 %v232, %v237
      %v269 = vmul.f32 %v233, %v237
      %v270 = vmul.f32 %v234, %v237
      %v271 = vld [vmem:[%s2] sm:$0x1]
      %v273 = vperm.slane %v271, 0
      %v275 = vadd.f32 %v239, %v273
      %v276 = vadd.f32 %v240, %v273
      %v277 = vadd.f32 %v241, %v273
      %v278 = vadd.f32 %v242, %v273
      %v279 = vadd.f32 %v243, %v273
      %v280 = vadd.f32 %v244, %v273
      %v281 = vadd.f32 %v245, %v273
      %v282 = vadd.f32 %v246, %v273
      %v283 = vadd.f32 %v247, %v273
      %v284 = vadd.f32 %v248, %v273
      %v285 = vadd.f32 %v249, %v273
      %v286 = vadd.f32 %v250, %v273
      %v287 = vadd.f32 %v251, %v273
      %v288 = vadd.f32 %v252, %v273
      %v289 = vadd.f32 %v253, %v273
      %v290 = vadd.f32 %v254, %v273
      %v291 = vadd.f32 %v255, %v273
      %v292 = vadd.f32 %v256, %v273
      %v293 = vadd.f32 %v257, %v273
      %v294 = vadd.f32 %v258, %v273
      %v295 = vadd.f32 %v259, %v273
      %v296 = vadd.f32 %v260, %v273
      %v297 = vadd.f32 %v261, %v273
      %v298 = vadd.f32 %v262, %v273
      %v299 = vadd.f32 %v263, %v273
      %v300 = vadd.f32 %v264, %v273
      %v301 = vadd.f32 %v265, %v273
      %v302 = vadd.f32 %v266, %v273
      %v303 = vadd.f32 %v267, %v273
      %v304 = vadd.f32 %v268, %v273
      %v305 = vadd.f32 %v269, %v273
      %v306 = vadd.f32 %v270, %v273
      %v307 = vmax.f32 %v275, 0.0
      %v308 = vmax.f32 %v276, 0.0
      %v309 = vmax.f32 %v277, 0.0
      %v310 = vmax.f32 %v278, 0.0
      %v311 = vmax.f32 %v279, 0.0
      %v312 = vmax.f32 %v280, 0.0
      %v313 = vmax.f32 %v281, 0.0
      %v314 = vmax.f32 %v282, 0.0
      %v315 = vmax.f32 %v283, 0.0
      %v316 = vmax.f32 %v284, 0.0
      %v317 = vmax.f32 %v285, 0.0
      %v318 = vmax.f32 %v286, 0.0
      %v319 = vmax.f32 %v287, 0.0
      %v320 = vmax.f32 %v288, 0.0
      %v321 = vmax.f32 %v289, 0.0
      %v322 = vmax.f32 %v290, 0.0
      %v323 = vmax.f32 %v291, 0.0
      %v324 = vmax.f32 %v292, 0.0
      %v325 = vmax.f32 %v293, 0.0
      %v326 = vmax.f32 %v294, 0.0
      %v327 = vmax.f32 %v295, 0.0
      %v328 = vmax.f32 %v296, 0.0
      %v329 = vmax.f32 %v297, 0.0
      %v330 = vmax.f32 %v298, 0.0
      %v331 = vmax.f32 %v299, 0.0
      %v332 = vmax.f32 %v300, 0.0
      %v333 = vmax.f32 %v301, 0.0
      %v334 = vmax.f32 %v302, 0.0
      %v335 = vmax.f32 %v303, 0.0
      %v336 = vmax.f32 %v304, 0.0
      %v337 = vmax.f32 %v305, 0.0
      %v338 = vmax.f32 %v306, 0.0
      %vm339 = vcmask 64512
      %340 = vst.msk [vmem:[%s170] sm:$0xff] %vm339, %v307
      %341 = vst.msk [vmem:[%s170 + $0x8] sm:$0xff] %vm339, %v308
      %342 = vst.msk [vmem:[%s170 + $0x10] sm:$0xff] %vm339, %v309
      %343 = vst.msk [vmem:[%s170 + $0x18] sm:$0xff] %vm339, %v310
      %344 = vst.msk [vmem:[%s170 + $0x20] sm:$0xff] %vm339, %v311
      %345 = vst.msk [vmem:[%s170 + $0x28] sm:$0xff] %vm339, %v312
      %346 = vst.msk [vmem:[%s170 + $0x30] sm:$0xff] %vm339, %v313
      %347 = vst.msk [vmem:[%s170 + $0x38] sm:$0xff] %vm339, %v314
      %348 = vst.msk [vmem:[%s170 + $0x40] sm:$0xff] %vm339, %v315
      %349 = vst.msk [vmem:[%s170 + $0x48] sm:$0xff] %vm339, %v316
      %350 = vst.msk [vmem:[%s170 + $0x50] sm:$0xff] %vm339, %v317
      %351 = vst.msk [vmem:[%s170 + $0x58] sm:$0xff] %vm339, %v318
      %352 = vst.msk [vmem:[%s170 + $0x60] sm:$0xff] %vm339, %v319
      %353 = vst.msk [vmem:[%s170 + $0x68] sm:$0xff] %vm339, %v320
      %354 = vst.msk [vmem:[%s170 + $0x70] sm:$0xff] %vm339, %v321
      %355 = vst.msk [vmem:[%s170 + $0x78] sm:$0xff] %vm339, %v322
      %356 = vst.msk [vmem:[%s170 + $0x80] sm:$0xff] %vm339, %v323
      %357 = vst.msk [vmem:[%s170 + $0x88] sm:$0xff] %vm339, %v324
      %358 = vst.msk [vmem:[%s170 + $0x90] sm:$0xff] %vm339, %v325
      %359 = vst.msk [vmem:[%s170 + $0x98] sm:$0xff] %vm339, %v326
      %360 = vst.msk [vmem:[%s170 + $0xa0] sm:$0xff] %vm339, %v327
      %361 = vst.msk [vmem:[%s170 + $0xa8] sm:$0xff] %vm339, %v328
      %362 = vst.msk [vmem:[%s170 + $0xb0] sm:$0xff] %vm339, %v329
      %363 = vst.msk [vmem:[%s170 + $0xb8] sm:$0xff] %vm339, %v330
      %364 = vst.msk [vmem:[%s170 + $0xc0] sm:$0xff] %vm339, %v331
      %365 = vst.msk [vmem:[%s170 + $0xc8] sm:$0xff] %vm339, %v332
      %366 = vst.msk [vmem:[%s170 + $0xd0] sm:$0xff] %vm339, %v333
      %367 = vst.msk [vmem:[%s170 + $0xd8] sm:$0xff] %vm339, %v334
      %368 = vst.msk [vmem:[%s170 + $0xe0] sm:$0xff] %vm339, %v335
      %369 = vst.msk [vmem:[%s170 + $0xe8] sm:$0xff] %vm339, %v336
      %370 = vst.msk [vmem:[%s170 + $0xf0] sm:$0xff] %vm339, %v337
      %371 = vst.msk [vmem:[%s170 + $0xf8] sm:$0xff] %vm339, %v338
      %p372 = scmp.lt.s32.totalorder %s14, 1
      %s373 = scalar_select %p372, %s14, 1
      %s374 = smul.addr %s373, 32
      %s375 = smul.addr %s374, 8
      %s376 = scalar_lea.vmem %s3, %s375
      // Predicated region
      $region33: #{conv_block_forward.5} parent=31 // pred_check
        %p377 = pneg %p100
      $region34: #{conv_block_forward.5} parent=31 // pred_check_branch
        %379 = sbr.rel (%p377) target = $region36
      $region35: #{conv_block_forward.5} parent=31 // pred_region
        _
      $region36: #{conv_block_forward.5} parent=31 // pred_fallthru
        _
    $region32: #{conv_block_forward.5} parent=5 // pred_fallthru
      _
    %p380 = scmp.le.s32.totalorder 2, %s9
    // Predicated region
    $region37: #{conv_block_forward.5} parent=5 // pred_check
      %p381 = pneg %p380
    $region38: #{conv_block_forward.5} parent=5 // pred_check_branch
      %383 = sbr.rel (%p381) target = $region40
    $region39: #{conv_block_forward.5} parent=5 // pred_region
      %s384 = ssub.s32 %s9, 2
      // Predicated region
      $region41: #{conv_block_forward.5} parent=39 // pred_check
        %p385 = pneg %p106
      $region42: #{conv_block_forward.5} parent=39 // pred_check_branch
        %387 = sbr.rel (%p385) target = $region44
      $region43: #{conv_block_forward.5} parent=39 // pred_region
        %p388 = scmp.lt.s32.totalorder %s15, 1
        %s389 = scalar_select %p388, %s15, 1
        %s390 = smul.addr %s389, 32
        %s391 = smul.addr %s390, 8
        %s392 = scalar_lea.vmem %s3, %s391
      $region44: #{conv_block_forward.5} parent=39 // pred_fallthru
        _
    $region40: #{conv_block_forward.5} parent=5 // pred_fallthru
      _
  $region6: #{conv_block_forward.5} parent=0 // loop_footer
    %s13 = sadd.s32 1, %s9
  $region7: #{conv_block_forward.5} parent=0 // loop_footer_branch
    %8 = sbr.rel target = $region3
  $region8: #{conv_block_forward.5} parent=0 // loop_exit
    _

// kernel: conv_block_forward.3
$region0: #{conv_block_forward.3}
  #allocation0 [shape = 'u32[]', space=smem, size = 0x4, offset = 0x4, fixed_abs, tag = 'smem constant byte address 0x4 - core index']
  #allocation1 [shape = 'u32[72,128]{1,0:T(1,128)}', space=vmem, size = 0x9000, scoped, tag = 'internal scratch']
  #allocation2 [shape = 'bf16[18,18,4]{2,1,0:T(8,128)(2,1)}', space=vmem, size = 0x1b000, scoped, tag = 'scratch operand']
  %s0 = inlined_call_operand.vmem [shape: bf16[2,16,16,4], index: 0, kind: input, shape index: {}]
  %s1 = inlined_call_operand.vmem [shape: bf16[36,128], index: 1, kind: input, shape index: {}]
  %s2 = inlined_call_operand.vmem [shape: bf16[2,16,16,128], index: 2, kind: output, shape index: {0}]
  %s3 = inlined_call_operand.vmem [shape: f32[2,2,128], index: 3, kind: output, shape index: {1}]
  %4 = xla_tuple %s2, %s3
  %s5 = sld [smem:[#allocation0]]
  $region49: #{conv_block_forward.3} parent=0
    _
  %s7 = ssub.s32 1, %s5
  %s8 = scalar_select 0, %s7, %s5
  loop: start=0, step=1, limit=4
  $region2: #{conv_block_forward.3} parent=0 // loop_pre_header
    _
  $region3: #{conv_block_forward.3} parent=0 // loop_header
    %s10 = sphi 0, %s14
    %p11 = scmp.ge.s32.totalorder %s10, 4
    %s20 = sphi 0, %s22
    %s23 = sphi 0, %s20
    %s24 = sphi 0, %s23
    %s40 = sphi 0, %s24
    %s44 = sphi 0, %s44
    %s46 = sphi 0, %s44
    %s47 = sphi 0, %s46
    %s61 = sphi 0, %s47
    %s67 = sphi 0, %s69
    %s70 = sphi 0, %s67
    %s71 = sphi 0, %s70
    %s87 = sphi 0, %s71
    %s93 = sphi 0, %s95
    %s96 = sphi 0, %s93
    %s97 = sphi 0, %s96
    %s113 = sphi 0, %s97
  $region4: #{conv_block_forward.3} parent=0 // loop_header_branch
    %13 = sbr.rel (%p11) target = $region8
  $region5: #{conv_block_forward.3} parent=0 // loop_body
    %s15 = ssub.s32 %s10, 1
    %s16 = ssub.s32 %s10, 2
    %s17 = sadd.s32 %s10, 1
    %s18 = ssub.s32 %s10, %s17
    %p19 = scmp.eq.s32.totalorder %s18, 0
    %s21 = sadd.s32 %s20, 1
    %s22 = scalar_select %p19, %s20, %s21
    %p25 = pneg %p19
    %p26 = scmp.eq.s32.totalorder %s10, 1
    %p27 = por %p25, %p26
    %p28 = scmp.ne.s32.totalorder %s20, %s23
    %p29 = scmp.eq.s32.totalorder %s10, 0
    %p30 = por %p28, %p29
    %p31 = scmp.ne.s32.totalorder %s20, %s23
    %p32 = scmp.eq.s32.totalorder %s15, 1
    %p33 = por %p31, %p32
    %p34 = scmp.ne.s32.totalorder %s23, %s24
    %p35 = scmp.eq.s32.totalorder %s15, 0
    %p36 = por %p34, %p35
    %p37 = scmp.ne.s32.totalorder %s23, %s24
    %p38 = scmp.eq.s32.totalorder %s16, 1
    %p39 = por %p37, %p38
    %p41 = scmp.ne.s32.totalorder %s24, %s40
    %p42 = scmp.eq.s32.totalorder %s16, 0
    %p43 = por %p41, %p42
    %s45 = sadd.s32 %s44, 1
    %p48 = scmp.eq.s32.totalorder %s10, 1
    %p49 = scmp.ne.s32.totalorder %s44, %s46
    %p50 = scmp.eq.s32.totalorder %s10, 0
    %p51 = por %p49, %p50
    %p52 = scmp.ne.s32.totalorder %s44, %s46
    %p53 = scmp.eq.s32.totalorder %s15, 1
    %p54 = por %p52, %p53
    %p55 = scmp.ne.s32.totalorder %s46, %s47
    %p56 = scmp.eq.s32.totalorder %s15, 0
    %p57 = por %p55, %p56
    %p58 = scmp.ne.s32.totalorder %s46, %s47
    %p59 = scmp.eq.s32.totalorder %s16, 1
    %p60 = por %p58, %p59
    %p62 = scmp.ne.s32.totalorder %s47, %s61
    %p63 = scmp.eq.s32.totalorder %s16, 0
    %p64 = por %p62, %p63
    %s65 = ssub.s32 %s10, %s17
    %p66 = scmp.eq.s32.totalorder %s65, 0
    %s68 = sadd.s32 %s67, 1
    %s69 = scalar_select %p66, %s67, %s68
    %p72 = pneg %p66
    %p73 = scmp.eq.s32.totalorder %s10, 1
    %p74 = por %p72, %p73
    %p75 = scmp.ne.s32.totalorder %s67, %s70
    %p76 = scmp.eq.s32.totalorder %s10, 0
    %p77 = por %p75, %p76
    %p78 = scmp.ne.s32.totalorder %s67, %s70
    %p79 = scmp.eq.s32.totalorder %s15, 1
    %p80 = por %p78, %p79
    %p81 = scmp.ne.s32.totalorder %s70, %s71
    %p82 = scmp.eq.s32.totalorder %s15, 0
    %p83 = por %p81, %p82
    %p84 = scmp.ne.s32.totalorder %s70, %s71
    %p85 = scmp.eq.s32.totalorder %s16, 1
    %p86 = por %p84, %p85
    %p88 = scmp.ne.s32.totalorder %s71, %s87
    %p89 = scmp.eq.s32.totalorder %s16, 0
    %p90 = por %p88, %p89
    %s91 = ssub.s32 %s10, %s17
    %p92 = scmp.eq.s32.totalorder %s91, 0
    %s94 = sadd.s32 %s93, 1
    %s95 = scalar_select %p92, %s93, %s94
    %p98 = pneg %p92
    %p99 = scmp.eq.s32.totalorder %s10, 1
    %p100 = por %p98, %p99
    %p101 = scmp.ne.s32.totalorder %s93, %s96
    %p102 = scmp.eq.s32.totalorder %s10, 0
    %p103 = por %p101, %p102
    %p104 = scmp.ne.s32.totalorder %s93, %s96
    %p105 = scmp.eq.s32.totalorder %s15, 1
    %p106 = por %p104, %p105
    %p107 = scmp.ne.s32.totalorder %s96, %s97
    %p108 = scmp.eq.s32.totalorder %s15, 0
    %p109 = por %p107, %p108
    %p110 = scmp.ne.s32.totalorder %s96, %s97
    %p111 = scmp.eq.s32.totalorder %s16, 1
    %p112 = por %p110, %p111
    %p114 = scmp.ne.s32.totalorder %s97, %s113
    %p115 = scmp.eq.s32.totalorder %s16, 0
    %p116 = por %p114, %p115
    %p117 = scmp.le.s32.totalorder 1, %s10
    %p118 = scmp.lt.s32.totalorder %s10, 3
    %p119 = pnand %p117, %p118
    %p120 = pneg %p119
    // Predicated region
    $region9: #{conv_block_forward.3} parent=5 // pred_check
      _
    $region10: #{conv_block_forward.3} parent=5 // pred_check_branch
      %122 = sbr.rel (%p119) target = $region12
    $region11: #{conv_block_forward.3} parent=5 // pred_region
      %s123 = ssub.s32 %s10, 1
      // Predicated region
      $region13: #{conv_block_forward.3} parent=11 // pred_check
        %p124 = pneg %p57
      $region14: #{conv_block_forward.3} parent=11 // pred_check_branch
        %126 = sbr.rel (%p124) target = $region16
      $region15: #{conv_block_forward.3} parent=11 // pred_region
        _
      $region16: #{conv_block_forward.3} parent=11 // pred_fallthru
        _
    $region12: #{conv_block_forward.3} parent=5 // pred_fallthru
      _
    %p127 = scmp.lt.s32.totalorder %s10, 2
    // Predicated region
    $region17: #{conv_block_forward.3} parent=5 // pred_check
      %p128 = pneg %p127
    $region18: #{conv_block_forward.3} parent=5 // pred_check_branch
      %130 = sbr.rel (%p128) target = $region20
    $region19: #{conv_block_forward.3} parent=5 // pred_region
      // Predicated region
      $region21: #{conv_block_forward.3} parent=19 // pred_check
        %p131 = pneg %p30
      $region22: #{conv_block_forward.3} parent=19 // pred_check_branch
        %133 = sbr.rel (%p131) target = $region24
      $region23: #{conv_block_forward.3} parent=19 // pred_region
        %p134 = scmp.lt.s32.totalorder %s10, 1
        %s135 = scalar_select %p134, %s10, 1
        %s136 = smul.addr %s135, 32
        %s137 = smul.addr %s136, 4
        %s138 = scalar_lea.vmem %s0, %s137
      $region24: #{conv_block_forward.3} parent=19 // pred_fallthru
        _
    $region20: #{conv_block_forward.3} parent=5 // pred_fallthru
      _
    %p139 = scmp.le.s32.totalorder 1, %s10
    %p140 = scmp.lt.s32.totalorder %s10, 3
    %p141 = pnand %p139, %p140
    %p142 = pneg %p141
    // Predicated region
    $region25: #{conv_block_forward.3} parent=5 // pred_check
      _
    $region26: #{conv_block_forward.3} parent=5 // pred_check_branch
      %144 = sbr.rel (%p141) target = $region28
    $region27: #{conv_block_forward.3} parent=5 // pred_region
      %s145 = ssub.s32 %s10, 1
      %p146 = scmp.lt.s32.totalorder %s15, 1
      %s147 = scalar_select %p146, %s15, 1
      %s148 = smul.addr %s147, 32
      %s149 = smul.addr %s148, 4
      %s150 = scalar_lea.vmem %s0, %s149
      %p151 = pneg %p36
      %p152 = pneg %p33
      %p153 = pneg %p57
      %p154 = pneg %p54
      %p155 = pneg %p83
      %p156 = pneg %p80
      %p157 = scmp.lt.s32.totalorder %s15, 1
      %s158 = scalar_select %p157, %s15, 1
      %s159 = smul.addr %s158, 32
      %s160 = smul.addr %s159, 4
      %s161 = scalar_lea.vmem %s2, %s160
      %p162 = pneg %p109
      %p163 = pneg %p106
      %p164 = scmp.lt.s32.totalorder %s15, 1
      %s165 = scalar_select %p164, %s15, 1
      %s166 = smul.addr %s165, 2
      %s167 = scalar_lea.vmem %s3, %s166
      %p168 = scmp.lt.s32.totalorder %s15, 1
      %s169 = scalar_select %p168, %s15, 1
      %s170 = smul.addr %s169, 32
      %s171 = smul.addr %s170, 4
      %s172 = scalar_lea.vmem %s0, %s171
      %p173 = scmp.lt.s32.totalorder %s15, 1
      %s174 = scalar_select %p173, %s15, 1
      %s175 = smul.addr %s174, 32
      %s176 = smul.addr %s175, 4
      %s177 = scalar_lea.vmem %s2, %s176
      %p178 = scmp.lt.s32.totalorder %s15, 1
      %s179 = scalar_select %p178, %s15, 1
      %s180 = smul.addr %s179, 2
      %s181 = scalar_lea.vmem %s3, %s180
      %vm183 = vcmask 27648
      %184 = vst.msk [vmem:[#allocation2] sm:$0xf] %vm183, 0
      %185 = vst.msk [vmem:[#allocation2 + $0x4] sm:$0xf] %vm183, 0
      %vm186 = vcmask 24576
      %187 = vst.msk [vmem:[#allocation2 + $0x8] sm:$0x1] %vm186, 0
      %s188 = scalar_lea.vmem [#allocation2], 204
      %189 = vst.msk [vmem:[%s188] sm:$0xf] %vm183, 0
      %190 = vst.msk [vmem:[%s188 + $0x4] sm:$0xf] %vm183, 0
      %191 = vst.msk [vmem:[%s188 + $0x8] sm:$0x1] %vm186, 0
      %vm192 = vcmask 24576
      %vm193 = vsmask.f32 256
      %vm194 = vmand %vm192, %vm193
      %v195 = vld [vmem:[#allocation2] sm:$0x1]
      %v196 = vsel %vm194, 0, %v195
      %197 = vst [vmem:[#allocation2] sm:$0x1] %v196
      %v198 = vld [vmem:[#allocation2 + $0xc] sm:$0x1]
      %v199 = vsel %vm194, 0, %v198
      %200 = vst [vmem:[#allocation2 + $0xc] sm:$0x1] %v199
      %v201 = vld [vmem:[#allocation2 + $0x18] sm:$0x1]
      %v202 = vsel %vm194, 0, %v201
      %203 = vst [vmem:[#allocation2 + $0x18] sm:$0x1] %v202
      %v204 = vld [vmem:[#allocation2 + $0x24] sm:$0x1]
      %v205 = vsel %vm194, 0, %v204
      %206 = vst [vmem:[#allocation2 + $0x24] sm:$0x1] %v205
      %v207 = vld [vmem:[#allocation2 + $0x30] sm:$0x1]
      %v208 = vsel %vm194, 0, %v207
      %209 = vst [vmem:[#allocation2 + $0x30] sm:$0x1] %v208
      %v210 = vld [vmem:[#allocation2 + $0x3c] sm:$0x1]
      %v211 = vsel %vm194, 0, %v210
      %212 = vst [vmem:[#allocation2 + $0x3c] sm:$0x1] %v211
      %v213 = vld [vmem:[#allocation2 + $0x48] sm:$0x1]
      %v214 = vsel %vm194, 0, %v213
      %215 = vst [vmem:[#allocation2 + $0x48] sm:$0x1] %v214
      %v216 = vld [vmem:[#allocation2 + $0x54] sm:$0x1]
      %v217 = vsel %vm194, 0, %v216
      %218 = vst [vmem:[#allocation2 + $0x54] sm:$0x1] %v217
      %v219 = vld [vmem:[#allocation2 + $0x60] sm:$0x1]
      %v220 = vsel %vm194, 0, %v219
      %221 = vst [vmem:[#allocation2 + $0x60] sm:$0x1] %v220
      %v222 = vld [vmem:[#allocation2 + $0x6c] sm:$0x1]
      %v223 = vsel %vm194, 0, %v222
      %224 = vst [vmem:[#allocation2 + $0x6c] sm:$0x1] %v223
      %v225 = vld [vmem:[#allocation2 + $0x78] sm:$0x1]
      %v226 = vsel %vm194, 0, %v225
      %227 = vst [vmem:[#allocation2 + $0x78] sm:$0x1] %v226
      %v228 = vld [vmem:[#allocation2 + $0x84] sm:$0x1]
      %v229 = vsel %vm194, 0, %v228
      %230 = vst [vmem:[#allocation2 + $0x84] sm:$0x1] %v229
      %v231 = vld [vmem:[#allocation2 + $0x90] sm:$0x1]
      %v232 = vsel %vm194, 0, %v231
      %233 = vst [vmem:[#allocation2 + $0x90] sm:$0x1] %v232
      %v234 = vld [vmem:[#allocation2 + $0x9c] sm:$0x1]
      %v235 = vsel %vm194, 0, %v234
      %236 = vst [vmem:[#allocation2 + $0x9c] sm:$0x1] %v235
      %v237 = vld [vmem:[#allocation2 + $0xa8] sm:$0x1]
      %v238 = vsel %vm194, 0, %v237
      %239 = vst [vmem:[#allocation2 + $0xa8] sm:$0x1] %v238
      %v240 = vld [vmem:[#allocation2 + $0xb4] sm:$0x1]
      %v241 = vsel %vm194, 0, %v240
      %242 = vst [vmem:[#allocation2 + $0xb4] sm:$0x1] %v241
      %v243 = vld [vmem:[#allocation2 + $0xc0] sm:$0x1]
      %v244 = vsel %vm194, 0, %v243
      %245 = vst [vmem:[#allocation2 + $0xc0] sm:$0x1] %v244
      %v246 = vld [vmem:[#allocation2 + $0xcc] sm:$0x1]
      %v247 = vsel %vm194, 0, %v246
      %248 = vst [vmem:[#allocation2 + $0xcc] sm:$0x1] %v247
      %vm249 = vsmask.f32 7938
      %vm250 = vmand %vm192, %vm249
      %v251 = vld [vmem:[#allocation2 + $0x8] sm:$0x1]
      %v252 = vsel %vm250, 0, %v251
      %253 = vst [vmem:[#allocation2 + $0x8] sm:$0x1] %v252
      %v254 = vld [vmem:[#allocation2 + $0x14] sm:$0x1]
      %v255 = vsel %vm250, 0, %v254
      %256 = vst [vmem:[#allocation2 + $0x14] sm:$0x1] %v255
      %v257 = vld [vmem:[#allocation2 + $0x20] sm:$0x1]
      %v258 = vsel %vm250, 0, %v257
      %259 = vst [vmem:[#allocation2 + $0x20] sm:$0x1] %v258
      %v260 = vld [vmem:[#allocation2 + $0x2c] sm:$0x1]
      %v261 = vsel %vm250, 0, %v260
      %262 = vst [vmem:[#allocation2 + $0x2c] sm:$0x1] %v261
      %v263 = vld [vmem:[#allocation2 + $0x38] sm:$0x1]
      %v264 = vsel %vm250, 0, %v263
      %265 = vst [vmem:[#allocation2 + $0x38] sm:$0x1] %v264
      %v266 = vld [vmem:[#allocation2 + $0x44] sm:$0x1]
      %v267 = vsel %vm250, 0, %v266
      %268 = vst [vmem:[#allocation2 + $0x44] sm:$0x1] %v267
      %v269 = vld [vmem:[#allocation2 + $0x50] sm:$0x1]
      %v270 = vsel %vm250, 0, %v269
      %271 = vst [vmem:[#allocation2 + $0x50] sm:$0x1] %v270
      %v272 = vld [vmem:[#allocation2 + $0x5c] sm:$0x1]
      %v273 = vsel %vm250, 0, %v272
      %274 = vst [vmem:[#allocation2 + $0x5c] sm:$0x1] %v273
      %v275 = vld [vmem:[#allocation2 + $0x68] sm:$0x1]
      %v276 = vsel %vm250, 0, %v275
      %277 = vst [vmem:[#allocation2 + $0x68] sm:$0x1] %v276
      %v278 = vld [vmem:[#allocation2 + $0x74] sm:$0x1]
      %v279 = vsel %vm250, 0, %v278
      %280 = vst [vmem:[#allocation2 + $0x74] sm:$0x1] %v279
      %v281 = vld [vmem:[#allocation2 + $0x80] sm:$0x1]
      %v282 = vsel %vm250, 0, %v281
      %283 = vst [vmem:[#allocation2 + $0x80] sm:$0x1] %v282
      %v284 = vld [vmem:[#allocation2 + $0x8c] sm:$0x1]
      %v285 = vsel %vm250, 0, %v284
      %286 = vst [vmem:[#allocation2 + $0x8c] sm:$0x1] %v285
      %v287 = vld [vmem:[#allocation2 + $0x98] sm:$0x1]
      %v288 = vsel %vm250, 0, %v287
      %289 = vst [vmem:[#allocation2 + $0x98] sm:$0x1] %v288
      %v290 = vld [vmem:[#allocation2 + $0xa4] sm:$0x1]
      %v291 = vsel %vm250, 0, %v290
      %292 = vst [vmem:[#allocation2 + $0xa4] sm:$0x1] %v291
      %v293 = vld [vmem:[#allocation2 + $0xb0] sm:$0x1]
      %v294 = vsel %vm250, 0, %v293
      %295 = vst [vmem:[#allocation2 + $0xb0] sm:$0x1] %v294
      %v296 = vld [vmem:[#allocation2 + $0xbc] sm:$0x1]
      %v297 = vsel %vm250, 0, %v296
      %298 = vst [vmem:[#allocation2 + $0xbc] sm:$0x1] %v297
      %v299 = vld [vmem:[#allocation2 + $0xc8] sm:$0x1]
      %v300 = vsel %vm250, 0, %v299
      %301 = vst [vmem:[#allocation2 + $0xc8] sm:$0x1] %v300
      %v302 = vld [vmem:[#allocation2 + $0xd4] sm:$0x1]
      %v303 = vsel %vm250, 0, %v302
      %304 = vst [vmem:[#allocation2 + $0xd4] sm:$0x1] %v303
      %v305 = vld [vmem:[%s172] sm:$0xf]
      %v306 = vld [vmem:[%s172 + $0x4] sm:$0xf]
      %v307 = vld [vmem:[%s172 + $0x8] sm:$0xf]
      %v308 = vld [vmem:[%s172 + $0xc] sm:$0xf]
      %v309 = vld [vmem:[%s172 + $0x10] sm:$0xf]
      %v310 = vld [vmem:[%s172 + $0x14] sm:$0xf]
      %v311 = vld [vmem:[%s172 + $0x18] sm:$0xf]
      %v312 = vld [vmem:[%s172 + $0x1c] sm:$0xf]
      %v313 = vld [vmem:[%s172 + $0x20] sm:$0xf]
      %v314 = vld [vmem:[%s172 + $0x24] sm:$0xf]
      %v315 = vld [vmem:[%s172 + $0x28] sm:$0xf]
      %v316 = vld [vmem:[%s172 + $0x2c] sm:$0xf]
      %v317 = vld [vmem:[%s172 + $0x30] sm:$0xf]
      %v318 = vld [vmem:[%s172 + $0x34] sm:$0xf]
      %v319 = vld [vmem:[%s172 + $0x38] sm:$0xf]
      %v320 = vld [vmem:[%s172 + $0x3c] sm:$0xf]
      %v321 = vld [vmem:[%s172 + $0x40] sm:$0xf]
      %v322 = vld [vmem:[%s172 + $0x44] sm:$0xf]
      %v323 = vld [vmem:[%s172 + $0x48] sm:$0xf]
      %v324 = vld [vmem:[%s172 + $0x4c] sm:$0xf]
      %v325 = vld [vmem:[%s172 + $0x50] sm:$0xf]
      %v326 = vld [vmem:[%s172 + $0x54] sm:$0xf]
      %v327 = vld [vmem:[%s172 + $0x58] sm:$0xf]
      %v328 = vld [vmem:[%s172 + $0x5c] sm:$0xf]
      %v329 = vld [vmem:[%s172 + $0x60] sm:$0xf]
      %v330 = vld [vmem:[%s172 + $0x64] sm:$0xf]
      %v331 = vld [vmem:[%s172 + $0x68] sm:$0xf]
      %v332 = vld [vmem:[%s172 + $0x6c] sm:$0xf]
      %v333 = vld [vmem:[%s172 + $0x70] sm:$0xf]
      %v334 = vld [vmem:[%s172 + $0x74] sm:$0xf]
      %v335 = vld [vmem:[%s172 + $0x78] sm:$0xf]
      %v336 = vld [vmem:[%s172 + $0x7c] sm:$0xf]
      %vm337 = vsmask.f32 4368
      %vm338 = vmor %vm193, %vm337
      %v340 = vshrl.u32 %v305, 16
      %v342 = vrot.slane %v340, 7
      %v343 = vshll.u32 %v305, 16
      %v345 = vor.u32 %v342, %v343
      %v346 = vrot.slane %v342, 4
      %v348 = vshrl.u32 %v306, 16
      %v350 = vrot.slane %v348, 7
      %v351 = vshll.u32 %v306, 16
      %v353 = vor.u32 %v350, %v351
      %v354 = vsel %vm338, %v346, %v353
      %v355 = vrot.slane %v350, 4
      %v357 = vshrl.u32 %v307, 16
      %v359 = vrot.slane %v357, 7
      %v360 = vshll.u32 %v307, 16
      %v362 = vor.u32 %v359, %v360
      %v363 = vrot.slane %v359, 4
      %v365 = vshrl.u32 %v308, 16
      %v367 = vrot.slane %v365, 7
      %v368 = vshll.u32 %v308, 16
      %v370 = vor.u32 %v367, %v368
      %v371 = vsel %vm338, %v363, %v370
      %v372 = vrot.slane %v367, 4
      %v374 = vshrl.u32 %v309, 16
      %v376 = vrot.slane %v374, 7
      %v377 = vshll.u32 %v309, 16
      %v379 = vor.u32 %v376, %v377
      %v380 = vrot.slane %v376, 4
      %v382 = vshrl.u32 %v310, 16
      %v384 = vrot.slane %v382, 7
      %v385 = vshll.u32 %v310, 16
      %v387 = vor.u32 %v384, %v385
      %v388 = vsel %vm338, %v380, %v387
      %v389 = vrot.slane %v384, 4
      %v391 = vshrl.u32 %v311, 16
      %v393 = vrot.slane %v391, 7
      %v394 = vshll.u32 %v311, 16
      %v396 = vor.u32 %v393, %v394
      %v397 = vrot.slane %v393, 4
      %v399 = vshrl.u32 %v312, 16
      %v401 = vrot.slane %v399, 7
      %v402 = vshll.u32 %v312, 16
      %v404 = vor.u32 %v401, %v402
      %v405 = vsel %vm338, %v397, %v404
      %v406 = vrot.slane %v401, 4
      %v408 = vshrl.u32 %v313, 16
      %v410 = vrot.slane %v408, 7
      %v411 = vshll.u32 %v313, 16
      %v413 = vor.u32 %v410, %v411
      %v414 = vrot.slane %v410, 4
      %v416 = vshrl.u32 %v314, 16
      %v418 = vrot.slane %v416, 7
      %v419 = vshll.u32 %v314, 16
      %v421 = vor.u32 %v418, %v419
      %v422 = vsel %vm338, %v414, %v421
      %v423 = vrot.slane %v418, 4
      %v425 = vshrl.u32 %v315, 16
      %v427 = vrot.slane %v425, 7
      %v428 = vshll.u32 %v315, 16
      %v430 = vor.u32 %v427, %v428
      %v431 = vrot.slane %v427, 4
      %v433 = vshrl.u32 %v316, 16
      %v435 = vrot.slane %v433, 7
      %v436 = vshll.u32 %v316, 16
      %v438 = vor.u32 %v435, %v436
      %v439 = vsel %vm338, %v431, %v438
      %v440 = vrot.slane %v435, 4
      %v442 = vshrl.u32 %v317, 16
      %v444 = vrot.slane %v442, 7
      %v445 = vshll.u32 %v317, 16
      %v447 = vor.u32 %v444, %v445
      %v448 = vrot.slane %v444, 4
      %v450 = vshrl.u32 %v318, 16
      %v452 = vrot.slane %v450, 7
      %v453 = vshll.u32 %v318, 16
      %v455 = vor.u32 %v452, %v453
      %v456 = vsel %vm338, %v448, %v455
      %v457 = vrot.slane %v452, 4
      %v459 = vshrl.u32 %v319, 16
      %v461 = vrot.slane %v459, 7
      %v462 = vshll.u32 %v319, 16
      %v464 = vor.u32 %v461, %v462
      %v465 = vrot.slane %v461, 4
      %v467 = vshrl.u32 %v320, 16
      %v469 = vrot.slane %v467, 7
      %v470 = vshll.u32 %v320, 16
      %v472 = vor.u32 %v469, %v470
      %v473 = vsel %vm338, %v465, %v472
      %v474 = vrot.slane %v469, 4
      %v476 = vshrl.u32 %v321, 16
      %v478 = vrot.slane %v476, 7
      %v479 = vshll.u32 %v321, 16
      %v481 = vor.u32 %v478, %v479
      %v482 = vrot.slane %v478, 4
      %v484 = vshrl.u32 %v322, 16
      %v486 = vrot.slane %v484, 7
      %v487 = vshll.u32 %v322, 16
      %v489 = vor.u32 %v486, %v487
      %v490 = vsel %vm338, %v482, %v489
      %v491 = vrot.slane %v486, 4
      %v493 = vshrl.u32 %v323, 16
      %v495 = vrot.slane %v493, 7
      %v496 = vshll.u32 %v323, 16
      %v498 = vor.u32 %v495, %v496
      %v499 = vrot.slane %v495, 4
      %v501 = vshrl.u32 %v324, 16
      %v503 = vrot.slane %v501, 7
      %v504 = vshll.u32 %v324, 16
      %v506 = vor.u32 %v503, %v504
      %v507 = vsel %vm338, %v499, %v506
      %v508 = vrot.slane %v503, 4
      %v510 = vshrl.u32 %v325, 16
      %v512 = vrot.slane %v510, 7
      %v513 = vshll.u32 %v325, 16
      %v515 = vor.u32 %v512, %v513
      %v516 = vrot.slane %v512, 4
      %v518 = vshrl.u32 %v326, 16
      %v520 = vrot.slane %v518, 7
      %v521 = vshll.u32 %v326, 16
      %v523 = vor.u32 %v520, %v521
      %v524 = vsel %vm338, %v516, %v523
      %v525 = vrot.slane %v520, 4
      %v527 = vshrl.u32 %v327, 16
      %v529 = vrot.slane %v527, 7
      %v530 = vshll.u32 %v327, 16
      %v532 = vor.u32 %v529, %v530
      %v533 = vrot.slane %v529, 4
      %v535 = vshrl.u32 %v328, 16
      %v537 = vrot.slane %v535, 7
      %v538 = vshll.u32 %v328, 16
      %v540 = vor.u32 %v537, %v538
      %v541 = vsel %vm338, %v533, %v540
      %v542 = vrot.slane %v537, 4
      %v544 = vshrl.u32 %v329, 16
      %v546 = vrot.slane %v544, 7
      %v547 = vshll.u32 %v329, 16
      %v549 = vor.u32 %v546, %v547
      %v550 = vrot.slane %v546, 4
      %v552 = vshrl.u32 %v330, 16
      %v554 = vrot.slane %v552, 7
      %v555 = vshll.u32 %v330, 16
      %v557 = vor.u32 %v554, %v555
      %v558 = vsel %vm338, %v550, %v557
      %v559 = vrot.slane %v554, 4
      %v561 = vshrl.u32 %v331, 16
      %v563 = vrot.slane %v561, 7
      %v564 = vshll.u32 %v331, 16
      %v566 = vor.u32 %v563, %v564
      %v567 = vrot.slane %v563, 4
      %v569 = vshrl.u32 %v332, 16
      %v571 = vrot.slane %v569, 7
      %v572 = vshll.u32 %v332, 16
      %v574 = vor.u32 %v571, %v572
      %v575 = vsel %vm338, %v567, %v574
      %v576 = vrot.slane %v571, 4
      %v578 = vshrl.u32 %v333, 16
      %v580 = vrot.slane %v578, 7
      %v581 = vshll.u32 %v333, 16
      %v583 = vor.u32 %v580, %v581
      %v584 = vrot.slane %v580, 4
      %v586 = vshrl.u32 %v334, 16
      %v588 = vrot.slane %v586, 7
      %v589 = vshll.u32 %v334, 16
      %v591 = vor.u32 %v588, %v589
      %v592 = vsel %vm338, %v584, %v591
      %v593 = vrot.slane %v588, 4
      %v595 = vshrl.u32 %v335, 16
      %v597 = vrot.slane %v595, 7
      %v598 = vshll.u32 %v335, 16
      %v600 = vor.u32 %v597, %v598
      %v601 = vrot.slane %v597, 4
      %v603 = vshrl.u32 %v336, 16
      %v605 = vrot.slane %v603, 7
      %v606 = vshll.u32 %v336, 16
      %v608 = vor.u32 %v605, %v606
      %v609 = vsel %vm338, %v601, %v608
      %v610 = vrot.slane %v605, 4
      %s659 = scalar_lea.vmem [#allocation2], 12
      %vm660 = vcmask 27648
      %vm661 = vmand %vm660, %vm249
      %v662 = vld [vmem:[%s659] sm:$0xf]
      %v663 = vsel %vm661, %v345, %v662
      %664 = vst [vmem:[%s659] sm:$0xf] %v663
      %665 = vst.msk [vmem:[%s659 + $0x4] sm:$0xf] %vm183, %v354
      %v666 = vld [vmem:[%s659 + $0x8] sm:$0x1]
      %v667 = vsel %vm194, %v355, %v666
      %668 = vst [vmem:[%s659 + $0x8] sm:$0x1] %v667
      %v669 = vld [vmem:[%s659 + $0xc] sm:$0xf]
      %v670 = vsel %vm661, %v362, %v669
      %671 = vst [vmem:[%s659 + $0xc] sm:$0xf] %v670
      %672 = vst.msk [vmem:[%s659 + $0x10] sm:$0xf] %vm183, %v371
      %v673 = vld [vmem:[%s659 + $0x14] sm:$0x1]
      %v674 = vsel %vm194, %v372, %v673
      %675 = vst [vmem:[%s659 + $0x14] sm:$0x1] %v674
      %v676 = vld [vmem:[%s659 + $0x18] sm:$0xf]
      %v677 = vsel %vm661, %v379, %v676
      %678 = vst [vmem:[%s659 + $0x18] sm:$0xf] %v677
      %679 = vst.msk [vmem:[%s659 + $0x1c] sm:$0xf] %vm183, %v388
      %v680 = vld [vmem:[%s659 + $0x20] sm:$0x1]
      %v681 = vsel %vm194, %v389, %v680
      %682 = vst [vmem:[%s659 + $0x20] sm:$0x1] %v681
      %v683 = vld [vmem:[%s659 + $0x24] sm:$0xf]
      %v684 = vsel %vm661, %v396, %v683
      %685 = vst [vmem:[%s659 + $0x24] sm:$0xf] %v684
      %686 = vst.msk [vmem:[%s659 + $0x28] sm:$0xf] %vm183, %v405
      %v687 = vld [vmem:[%s659 + $0x2c] sm:$0x1]
      %v688 = vsel %vm194, %v406, %v687
      %689 = vst [vmem:[%s659 + $0x2c] sm:$0x1] %v688
      %v690 = vld [vmem:[%s659 + $0x30] sm:$0xf]
      %v691 = vsel %vm661, %v413, %v690
      %692 = vst [vmem:[%s659 + $0x30] sm:$0xf] %v691
      %693 = vst.msk [vmem:[%s659 + $0x34] sm:$0xf] %vm183, %v422
      %v694 = vld [vmem:[%s659 + $0x38] sm:$0x1]
      %v695 = vsel %vm194, %v423, %v694
      %696 = vst [vmem:[%s659 + $0x38] sm:$0x1] %v695
      %v697 = vld [vmem:[%s659 + $0x3c] sm:$0xf]
      %v698 = vsel %vm661, %v430, %v697
      %699 = vst [vmem:[%s659 + $0x3c] sm:$0xf] %v698
      %700 = vst.msk [vmem:[%s659 + $0x40] sm:$0xf] %vm183, %v439
      %v701 = vld [vmem:[%s659 + $0x44] sm:$0x1]
      %v702 = vsel %vm194, %v440, %v701
      %703 = vst [vmem:[%s659 + $0x44] sm:$0x1] %v702
      %v704 = vld [vmem:[%s659 + $0x48] sm:$0xf]
      %v705 = vsel %vm661, %v447, %v704
      %706 = vst [vmem:[%s659 + $0x48] sm:$0xf] %v705
      %707 = vst.msk [vmem:[%s659 + $0x4c] sm:$0xf] %vm183, %v456
      %v708 = vld [vmem:[%s659 + $0x50] sm:$0x1]
      %v709 = vsel %vm194, %v457, %v708
      %710 = vst [vmem:[%s659 + $0x50] sm:$0x1] %v709
      %v711 = vld [vmem:[%s659 + $0x54] sm:$0xf]
      %v712 = vsel %vm661, %v464, %v711
      %713 = vst [vmem:[%s659 + $0x54] sm:$0xf] %v712
      %714 = vst.msk [vmem:[%s659 + $0x58] sm:$0xf] %vm183, %v473
      %v715 = vld [vmem:[%s659 + $0x5c] sm:$0x1]
      %v716 = vsel %vm194, %v474, %v715
      %717 = vst [vmem:[%s659 + $0x5c] sm:$0x1] %v716
      %v718 = vld [vmem:[%s659 + $0x60] sm:$0xf]
      %v719 = vsel %vm661, %v481, %v718
      %720 = vst [vmem:[%s659 + $0x60] sm:$0xf] %v719
      %721 = vst.msk [vmem:[%s659 + $0x64] sm:$0xf] %vm183, %v490
      %v722 = vld [vmem:[%s659 + $0x68] sm:$0x1]
      %v723 = vsel %vm194, %v491, %v722
      %724 = vst [vmem:[%s659 + $0x68] sm:$0x1] %v723
      %v725 = vld [vmem:[%s659 + $0x6c] sm:$0xf]
      %v726 = vsel %vm661, %v498, %v725
      %727 = vst [vmem:[%s659 + $0x6c] sm:$0xf] %v726
      %728 = vst.msk [vmem:[%s659 + $0x70] sm:$0xf] %vm183, %v507
      %v729 = vld [vmem:[%s659 + $0x74] sm:$0x1]
      %v730 = vsel %vm194, %v508, %v729
      %731 = vst [vmem:[%s659 + $0x74] sm:$0x1] %v730
      %v732 = vld [vmem:[%s659 + $0x78] sm:$0xf]
      %v733 = vsel %vm661, %v515, %v732
      %734 = vst [vmem:[%s659 + $0x78] sm:$0xf] %v733
      %735 = vst.msk [vmem:[%s659 + $0x7c] sm:$0xf] %vm183, %v524
      %v736 = vld [vmem:[%s659 + $0x80] sm:$0x1]
      %v737 = vsel %vm194, %v525, %v736
      %738 = vst [vmem:[%s659 + $0x80] sm:$0x1] %v737
      %v739 = vld [vmem:[%s659 + $0x84] sm:$0xf]
      %v740 = vsel %vm661, %v532, %v739
      %741 = vst [vmem:[%s659 + $0x84] sm:$0xf] %v740
      %742 = vst.msk [vmem:[%s659 + $0x88] sm:$0xf] %vm183, %v541
      %v743 = vld [vmem:[%s659 + $0x8c] sm:$0x1]
      %v744 = vsel %vm194, %v542, %v743
      %745 = vst [vmem:[%s659 + $0x8c] sm:$0x1] %v744
      %v746 = vld [vmem:[%s659 + $0x90] sm:$0xf]
      %v747 = vsel %vm661, %v549, %v746
      %748 = vst [vmem:[%s659 + $0x90] sm:$0xf] %v747
      %749 = vst.msk [vmem:[%s659 + $0x94] sm:$0xf] %vm183, %v558
      %v750 = vld [vmem:[%s659 + $0x98] sm:$0x1]
      %v751 = vsel %vm194, %v559, %v750
      %752 = vst [vmem:[%s659 + $0x98] sm:$0x1] %v751
      %v753 = vld [vmem:[%s659 + $0x9c] sm:$0xf]
      %v754 = vsel %vm661, %v566, %v753
      %755 = vst [vmem:[%s659 + $0x9c] sm:$0xf] %v754
      %756 = vst.msk [vmem:[%s659 + $0xa0] sm:$0xf] %vm183, %v575
      %v757 = vld [vmem:[%s659 + $0xa4] sm:$0x1]
      %v758 = vsel %vm194, %v576, %v757
      %759 = vst [vmem:[%s659 + $0xa4] sm:$0x1] %v758
      %v760 = vld [vmem:[%s659 + $0xa8] sm:$0xf]
      %v761 = vsel %vm661, %v583, %v760
      %762 = vst [vmem:[%s659 + $0xa8] sm:$0xf] %v761
      %763 = vst.msk [vmem:[%s659 + $0xac] sm:$0xf] %vm183, %v592
      %v764 = vld [vmem:[%s659 + $0xb0] sm:$0x1]
      %v765 = vsel %vm194, %v593, %v764
      %766 = vst [vmem:[%s659 + $0xb0] sm:$0x1] %v765
      %v767 = vld [vmem:[%s659 + $0xb4] sm:$0xf]
      %v768 = vsel %vm661, %v600, %v767
      %769 = vst [vmem:[%s659 + $0xb4] sm:$0xf] %v768
      %770 = vst.msk [vmem:[%s659 + $0xb8] sm:$0xf] %vm183, %v609
      %v771 = vld [vmem:[%s659 + $0xbc] sm:$0x1]
      %v772 = vsel %vm194, %v610, %v771
      %773 = vst [vmem:[%s659 + $0xbc] sm:$0x1] %v772
      %v774 = vld [vmem:[#allocation2] sm:$0xf]
      %v775 = vld [vmem:[#allocation2 + $0x4] sm:$0xf]
      %v776 = vld [vmem:[#allocation2 + $0xc] sm:$0xf]
      %v777 = vld [vmem:[#allocation2 + $0x10] sm:$0xf]
      %v778 = vld [vmem:[#allocation2 + $0x18] sm:$0xf]
      %v779 = vld [vmem:[#allocation2 + $0x1c] sm:$0xf]
      %v780 = vld [vmem:[#allocation2 + $0x24] sm:$0xf]
      %v781 = vld [vmem:[#allocation2 + $0x28] sm:$0xf]
      %v782 = vld [vmem:[#allocation2 + $0x30] sm:$0xf]
      %v783 = vld [vmem:[#allocation2 + $0x34] sm:$0xf]
      %v784 = vld [vmem:[#allocation2 + $0x3c] sm:$0xf]
      %v785 = vld [vmem:[#allocation2 + $0x40] sm:$0xf]
      %v786 = vld [vmem:[#allocation2 + $0x48] sm:$0xf]
      %v787 = vld [vmem:[#allocation2 + $0x4c] sm:$0xf]
      %v788 = vld [vmem:[#allocation2 + $0x54] sm:$0xf]
      %v789 = vld [vmem:[#allocation2 + $0x58] sm:$0xf]
      %v790 = vld [vmem:[#allocation2 + $0x60] sm:$0xf]
      %v791 = vld [vmem:[#allocation2 + $0x64] sm:$0xf]
      %v792 = vld [vmem:[#allocation2 + $0x6c] sm:$0xf]
      %v793 = vld [vmem:[#allocation2 + $0x70] sm:$0xf]
      %v794 = vld [vmem:[#allocation2 + $0x78] sm:$0xf]
      %v795 = vld [vmem:[#allocation2 + $0x7c] sm:$0xf]
      %v796 = vld [vmem:[#allocation2 + $0x84] sm:$0xf]
      %v797 = vld [vmem:[#allocation2 + $0x88] sm:$0xf]
      %v798 = vld [vmem:[#allocation2 + $0x90] sm:$0xf]
      %v799 = vld [vmem:[#allocation2 + $0x94] sm:$0xf]
      %v800 = vld [vmem:[#allocation2 + $0x9c] sm:$0xf]
      %v801 = vld [vmem:[#allocation2 + $0xa0] sm:$0xf]
      %v802 = vld [vmem:[#allocation2 + $0xa8] sm:$0xf]
      %v803 = vld [vmem:[#allocation2 + $0xac] sm:$0xf]
      %v804 = vld [vmem:[#allocation2 + $0xb4] sm:$0xf]
      %v805 = vld [vmem:[#allocation2 + $0xb8] sm:$0xf]
      %v806 = vld [vmem:[#allocation2 + $0x8] sm:$0x1]
      %v807 = vld [vmem:[#allocation2 + $0x14] sm:$0x1]
      %v808 = vld [vmem:[#allocation2 + $0x20] sm:$0x1]
      %v809 = vld [vmem:[#allocation2 + $0x2c] sm:$0x1]
      %v810 = vld [vmem:[#allocation2 + $0x38] sm:$0x1]
      %v811 = vld [vmem:[#allocation2 + $0x44] sm:$0x1]
      %v812 = vld [vmem:[#allocation2 + $0x50] sm:$0x1]
      %v813 = vld [vmem:[#allocation2 + $0x5c] sm:$0x1]
      %v814 = vld [vmem:[#allocation2 + $0x68] sm:$0x1]
      %v815 = vld [vmem:[#allocation2 + $0x74] sm:$0x1]
      %v816 = vld [vmem:[#allocation2 + $0x80] sm:$0x1]
      %v817 = vld [vmem:[#allocation2 + $0x8c] sm:$0x1]
      %v818 = vld [vmem:[#allocation2 + $0x98] sm:$0x1]
      %v819 = vld [vmem:[#allocation2 + $0xa4] sm:$0x1]
      %v820 = vld [vmem:[#allocation2 + $0xb0] sm:$0x1]
      %v821 = vld [vmem:[#allocation2 + $0xbc] sm:$0x1]
      %vm822 = vsmask.f32 3328
      %vm823 = vsmask.f32 7440
      %vm824 = vmor %vm822, %vm823
      %v826 = vshrl.u32 %v774, 16
      %v828 = vrot.slane %v826, 4
      %v829 = vshll.u32 %v774, 16
      %v831 = vrot.slane %v829, 5
      %v832 = vor.u32 %v828, %v831
      %v833 = vrot.slane %v832, 4
      %v835 = vshll.u32 %v775, 16
      %v837 = vrot.slane %v835, 5
      %v838 = vsel %vm824, %v833, %v837
      %v839 = vshrl.u32 %v775, 16
      %v841 = vrot.slane %v839, 4
      %v842 = vor.u32 %v841, %v837
      %v843 = vrot.slane %v842, 4
      %v845 = vshll.u32 %v806, 16
      %v847 = vrot.slane %v845, 5
      %v848 = vsel %vm824, %v843, %v847
      %v850 = vshrl.u32 %v776, 16
      %v852 = vrot.slane %v850, 4
      %v853 = vshll.u32 %v776, 16
      %v855 = vrot.slane %v853, 5
      %v856 = vor.u32 %v852, %v855
      %v857 = vrot.slane %v856, 4
      %v859 = vshll.u32 %v777, 16
      %v861 = vrot.slane %v859, 5
      %v862 = vsel %vm824, %v857, %v861
      %v863 = vshrl.u32 %v777, 16
      %v865 = vrot.slane %v863, 4
      %v866 = vor.u32 %v865, %v861
      %v867 = vrot.slane %v866, 4
      %v869 = vshll.u32 %v807, 16
      %v871 = vrot.slane %v869, 5
      %v872 = vsel %vm824, %v867, %v871
      %v874 = vshrl.u32 %v778, 16
      %v876 = vrot.slane %v874, 4
      %v877 = vshll.u32 %v778, 16
      %v879 = vrot.slane %v877, 5
      %v880 = vor.u32 %v876, %v879
      %v881 = vrot.slane %v880, 4
      %v883 = vshll.u32 %v779, 16
      %v885 = vrot.slane %v883, 5
      %v886 = vsel %vm824, %v881, %v885
      %v887 = vshrl.u32 %v779, 16
      %v889 = vrot.slane %v887, 4
      %v890 = vor.u32 %v889, %v885
      %v891 = vrot.slane %v890, 4
      %v893 = vshll.u32 %v808, 16
      %v895 = vrot.slane %v893, 5
      %v896 = vsel %vm824, %v891, %v895
      %v898 = vshrl.u32 %v780, 16
      %v900 = vrot.slane %v898, 4
      %v901 = vshll.u32 %v780, 16
      %v903 = vrot.slane %v901, 5
      %v904 = vor.u32 %v900, %v903
      %v905 = vrot.slane %v904, 4
      %v907 = vshll.u32 %v781, 16
      %v909 = vrot.slane %v907, 5
      %v910 = vsel %vm824, %v905, %v909
      %v911 = vshrl.u32 %v781, 16
      %v913 = vrot.slane %v911, 4
      %v914 = vor.u32 %v913, %v909
      %v915 = vrot.slane %v914, 4
      %v917 = vshll.u32 %v809, 16
      %v919 = vrot.slane %v917, 5
      %v920 = vsel %vm824, %v915, %v919
      %v922 = vshrl.u32 %v782, 16
      %v924 = vrot.slane %v922, 4
      %v925 = vshll.u32 %v782, 16
      %v927 = vrot.slane %v925, 5
      %v928 = vor.u32 %v924, %v927
      %v929 = vrot.slane %v928, 4
      %v931 = vshll.u32 %v783, 16
      %v933 = vrot.slane %v931, 5
      %v934 = vsel %vm824, %v929, %v933
      %v935 = vshrl.u32 %v783, 16
      %v937 = vrot.slane %v935, 4
      %v938 = vor.u32 %v937, %v933
      %v939 = vrot.slane %v938, 4
      %v941 = vshll.u32 %v810, 16
      %v943 = vrot.slane %v941, 5
      %v944 = vsel %vm824, %v939, %v943
      %v946 = vshrl.u32 %v784, 16
      %v948 = vrot.slane %v946, 4
      %v949 = vshll.u32 %v784, 16
      %v951 = vrot.slane %v949, 5
      %v952 = vor.u32 %v948, %v951
      %v953 = vrot.slane %v952, 4
      %v955 = vshll.u32 %v785, 16
      %v957 = vrot.slane %v955, 5
      %v958 = vsel %vm824, %v953, %v957
      %v959 = vshrl.u32 %v785, 16
      %v961 = vrot.slane %v959, 4
      %v962 = vor.u32 %v961, %v957
      %v963 = vrot.slane %v962, 4
      %v965 = vshll.u32 %v811, 16
      %v967 = vrot.slane %v965, 5
      %v968 = vsel %vm824, %v963, %v967
      %v970 = vshrl.u32 %v786, 16
      %v972 = vrot.slane %v970, 4
      %v973 = vshll.u32 %v786, 16
      %v975 = vrot.slane %v973, 5
      %v976 = vor.u32 %v972, %v975
      %v977 = vrot.slane %v976, 4
      %v979 = vshll.u32 %v787, 16
      %v981 = vrot.slane %v979, 5
      %v982 = vsel %vm824, %v977, %v981
      %v983 = vshrl.u32 %v787, 16
      %v985 = vrot.slane %v983, 4
      %v986 = vor.u32 %v985, %v981
      %v987 = vrot.slane %v986, 4
      %v989 = vshll.u32 %v812, 16
      %v991 = vrot.slane %v989, 5
      %v992 = vsel %vm824, %v987, %v991
      %v994 = vshrl.u32 %v788, 16
      %v996 = vrot.slane %v994, 4
      %v997 = vshll.u32 %v788, 16
      %v999 = vrot.slane %v997, 5
      %v1000 = vor.u32 %v996, %v999
      %v1001 = vrot.slane %v1000, 4
      %v1003 = vshll.u32 %v789, 16
      %v1005 = vrot.slane %v1003, 5
      %v1006 = vsel %vm824, %v1001, %v1005
      %v1007 = vshrl.u32 %v789, 16
      %v1009 = vrot.slane %v1007, 4
      %v1010 = vor.u32 %v1009, %v1005
      %v1011 = vrot.slane %v1010, 4
      %v1013 = vshll.u32 %v813, 16
      %v1015 = vrot.slane %v1013, 5
      %v1016 = vsel %vm824, %v1011, %v1015
      %v1018 = vshrl.u32 %v790, 16
      %v1020 = vrot.slane %v1018, 4
      %v1021 = vshll.u32 %v790, 16
      %v1023 = vrot.slane %v1021, 5
      %v1024 = vor.u32 %v1020, %v1023
      %v1025 = vrot.slane %v1024, 4
      %v1027 = vshll.u32 %v791, 16
      %v1029 = vrot.slane %v1027, 5
      %v1030 = vsel %vm824, %v1025, %v1029
      %v1031 = vshrl.u32 %v791, 16
      %v1033 = vrot.slane %v1031, 4
      %v1034 = vor.u32 %v1033, %v1029
      %v1035 = vrot.slane %v1034, 4
      %v1037 = vshll.u32 %v814, 16
      %v1039 = vrot.slane %v1037, 5
      %v1040 = vsel %vm824, %v1035, %v1039
      %v1042 = vshrl.u32 %v792, 16
      %v1044 = vrot.slane %v1042, 4
      %v1045 = vshll.u32 %v792, 16
      %v1047 = vrot.slane %v1045, 5
      %v1048 = vor.u32 %v1044, %v1047
      %v1049 = vrot.slane %v1048, 4
      %v1051 = vshll.u32 %v793, 16
      %v1053 = vrot.slane %v1051, 5
      %v1054 = vsel %vm824, %v1049, %v1053
      %v1055 = vshrl.u32 %v793, 16
      %v1057 = vrot.slane %v1055, 4
      %v1058 = vor.u32 %v1057, %v1053
      %v1059 = vrot.slane %v1058, 4
      %v1061 = vshll.u32 %v815, 16
      %v1063 = vrot.slane %v1061, 5
      %v1064 = vsel %vm824, %v1059, %v1063
      %v1066 = vshrl.u32 %v794, 16
      %v1068 = vrot.slane %v1066, 4
      %v1069 = vshll.u32 %v794, 16
      %v1071 = vrot.slane %v1069, 5
      %v1072 = vor.u32 %v1068, %v1071
      %v1073 = vrot.slane %v1072, 4
      %v1075 = vshll.u32 %v795, 16
      %v1077 = vrot.slane %v1075, 5
      %v1078 = vsel %vm824, %v1073, %v1077
      %v1079 = vshrl.u32 %v795, 16
      %v1081 = vrot.slane %v1079, 4
      %v1082 = vor.u32 %v1081, %v1077
      %v1083 = vrot.slane %v1082, 4
      %v1085 = vshll.u32 %v816, 16
      %v1087 = vrot.slane %v1085, 5
      %v1088 = vsel %vm824, %v1083, %v1087
      %v1090 = vshrl.u32 %v796, 16
      %v1092 = vrot.slane %v1090, 4
      %v1093 = vshll.u32 %v796, 16
      %v1095 = vrot.slane %v1093, 5
      %v1096 = vor.u32 %v1092, %v1095
      %v1097 = vrot.slane %v1096, 4
      %v1099 = vshll.u32 %v797, 16
      %v1101 = vrot.slane %v1099, 5
      %v1102 = vsel %vm824, %v1097, %v1101
      %v1103 = vshrl.u32 %v797, 16
      %v1105 = vrot.slane %v1103, 4
      %v1106 = vor.u32 %v1105, %v1101
      %v1107 = vrot.slane %v1106, 4
      %v1109 = vshll.u32 %v817, 16
      %v1111 = vrot.slane %v1109, 5
      %v1112 = vsel %vm824, %v1107, %v1111
      %v1114 = vshrl.u32 %v798, 16
      %v1116 = vrot.slane %v1114, 4
      %v1117 = vshll.u32 %v798, 16
      %v1119 = vrot.slane %v1117, 5
      %v1120 = vor.u32 %v1116, %v1119
      %v1121 = vrot.slane %v1120, 4
      %v1123 = vshll.u32 %v799, 16
      %v1125 = vrot.slane %v1123, 5
      %v1126 = vsel %vm824, %v1121, %v1125
      %v1127 = vshrl.u32 %v799, 16
      %v1129 = vrot.slane %v1127, 4
      %v1130 = vor.u32 %v1129, %v1125
      %v1131 = vrot.slane %v1130, 4
      %v1133 = vshll.u32 %v818, 16
      %v1135 = vrot.slane %v1133, 5
      %v1136 = vsel %vm824, %v1131, %v1135
      %v1138 = vshrl.u32 %v800, 16
      %v1140 = vrot.slane %v1138, 4
      %v1141 = vshll.u32 %v800, 16
      %v1143 = vrot.slane %v1141, 5
      %v1144 = vor.u32 %v1140, %v1143
      %v1145 = vrot.slane %v1144, 4
      %v1147 = vshll.u32 %v801, 16
      %v1149 = vrot.slane %v1147, 5
      %v1150 = vsel %vm824, %v1145, %v1149
      %v1151 = vshrl.u32 %v801, 16
      %v1153 = vrot.slane %v1151, 4
      %v1154 = vor.u32 %v1153, %v1149
      %v1155 = vrot.slane %v1154, 4
      %v1157 = vshll.u32 %v819, 16
      %v1159 = vrot.slane %v1157, 5
      %v1160 = vsel %vm824, %v1155, %v1159
      %v1162 = vshrl.u32 %v802, 16
      %v1164 = vrot.slane %v1162, 4
      %v1165 = vshll.u32 %v802, 16
      %v1167 = vrot.slane %v1165, 5
      %v1168 = vor.u32 %v1164, %v1167
      %v1169 = vrot.slane %v1168, 4
      %v1171 = vshll.u32 %v803, 16
      %v1173 = vrot.slane %v1171, 5
      %v1174 = vsel %vm824, %v1169, %v1173
      %v1175 = vshrl.u32 %v803, 16
      %v1177 = vrot.slane %v1175, 4
      %v1178 = vor.u32 %v1177, %v1173
      %v1179 = vrot.slane %v1178, 4
      %v1181 = vshll.u32 %v820, 16
      %v1183 = vrot.slane %v1181, 5
      %v1184 = vsel %vm824, %v1179, %v1183
      %v1186 = vshrl.u32 %v804, 16
      %v1188 = vrot.slane %v1186, 4
      %v1189 = vshll.u32 %v804, 16
      %v1191 = vrot.slane %v1189, 5
      %v1192 = vor.u32 %v1188, %v1191
      %v1193 = vrot.slane %v1192, 4
      %v1195 = vshll.u32 %v805, 16
      %v1197 = vrot.slane %v1195, 5
      %v1198 = vsel %vm824, %v1193, %v1197
      %v1199 = vshrl.u32 %v805, 16
      %v1201 = vrot.slane %v1199, 4
      %v1202 = vor.u32 %v1201, %v1197
      %v1203 = vrot.slane %v1202, 4
      %v1205 = vshll.u32 %v821, 16
      %v1207 = vrot.slane %v1205, 5
      %v1208 = vsel %vm824, %v1203, %v1207
      %v1209 = vld [vmem:[#allocation2] sm:$0xe]
      %v1210 = vld [vmem:[#allocation2 + $0xc] sm:$0xe]
      %v1211 = vld [vmem:[#allocation2 + $0x18] sm:$0xe]
      %v1212 = vld [vmem:[#allocation2 + $0x24] sm:$0xe]
      %v1213 = vld [vmem:[#allocation2 + $0x30] sm:$0xe]
      %v1214 = vld [vmem:[#allocation2 + $0x3c] sm:$0xe]
      %v1215 = vld [vmem:[#allocation2 + $0x48] sm:$0xe]
      %v1216 = vld [vmem:[#allocation2 + $0x54] sm:$0xe]
      %v1217 = vld [vmem:[#allocation2 + $0x60] sm:$0xe]
      %v1218 = vld [vmem:[#allocation2 + $0x6c] sm:$0xe]
      %v1219 = vld [vmem:[#allocation2 + $0x78] sm:$0xe]
      %v1220 = vld [vmem:[#allocation2 + $0x84] sm:$0xe]
      %v1221 = vld [vmem:[#allocation2 + $0x90] sm:$0xe]
      %v1222 = vld [vmem:[#allocation2 + $0x9c] sm:$0xe]
      %v1223 = vld [vmem:[#allocation2 + $0xa8] sm:$0xe]
      %v1224 = vld [vmem:[#allocation2 + $0xb4] sm:$0xe]
      %vm1273 = vcmask 1042432
      %vm1274 = vcmask 1046532
      %vm1275 = vmor %vm1273, %vm1274
      %v1276 = vrot.slane %v1209, 5
      %v1277 = vrot.slane %v1276, 4
      %v1278 = vrot.slane %v775, 5
      %v1279 = vsel %vm1275, %v1277, %v1278
      %v1280 = vrot.slane %v1278, 4
      %v1281 = vrot.slane %v806, 5
      %v1282 = vsel %vm1275, %v1280, %v1281
      %v1283 = vrot.slane %v1210, 5
      %v1284 = vrot.slane %v1283, 4
      %v1285 = vrot.slane %v777, 5
      %v1286 = vsel %vm1275, %v1284, %v1285
      %v1287 = vrot.slane %v1285, 4
      %v1288 = vrot.slane %v807, 5
      %v1289 = vsel %vm1275, %v1287, %v1288
      %v1290 = vrot.slane %v1211, 5
      %v1291 = vrot.slane %v1290, 4
      %v1292 = vrot.slane %v779, 5
      %v1293 = vsel %vm1275, %v1291, %v1292
      %v1294 = vrot.slane %v1292, 4
      %v1295 = vrot.slane %v808, 5
      %v1296 = vsel %vm1275, %v1294, %v1295
      %v1297 = vrot.slane %v1212, 5
      %v1298 = vrot.slane %v1297, 4
      %v1299 = vrot.slane %v781, 5
      %v1300 = vsel %vm1275, %v1298, %v1299
      %v1301 = vrot.slane %v1299, 4
      %v1302 = vrot.slane %v809, 5
      %v1303 = vsel %vm1275, %v1301, %v1302
      %v1304 = vrot.slane %v1213, 5
      %v1305 = vrot.slane %v1304, 4
      %v1306 = vrot.slane %v783, 5
      %v1307 = vsel %vm1275, %v1305, %v1306
      %v1308 = vrot.slane %v1306, 4
      %v1309 = vrot.slane %v810, 5
      %v1310 = vsel %vm1275, %v1308, %v1309
      %v1311 = vrot.slane %v1214, 5
      %v1312 = vrot.slane %v1311, 4
      %v1313 = vrot.slane %v785, 5
      %v1314 = vsel %vm1275, %v1312, %v1313
      %v1315 = vrot.slane %v1313, 4
      %v1316 = vrot.slane %v811, 5
      %v1317 = vsel %vm1275, %v1315, %v1316
      %v1318 = vrot.slane %v1215, 5
      %v1319 = vrot.slane %v1318, 4
      %v1320 = vrot.slane %v787, 5
      %v1321 = vsel %vm1275, %v1319, %v1320
      %v1322 = vrot.slane %v1320, 4
      %v1323 = vrot.slane %v812, 5
      %v1324 = vsel %vm1275, %v1322, %v1323
      %v1325 = vrot.slane %v1216, 5
      %v1326 = vrot.slane %v1325, 4
      %v1327 = vrot.slane %v789, 5
      %v1328 = vsel %vm1275, %v1326, %v1327
      %v1329 = vrot.slane %v1327, 4
      %v1330 = vrot.slane %v813, 5
      %v1331 = vsel %vm1275, %v1329, %v1330
      %v1332 = vrot.slane %v1217, 5
      %v1333 = vrot.slane %v1332, 4
      %v1334 = vrot.slane %v791, 5
      %v1335 = vsel %vm1275, %v1333, %v1334
      %v1336 = vrot.slane %v1334, 4
      %v1337 = vrot.slane %v814, 5
      %v1338 = vsel %vm1275, %v1336, %v1337
      %v1339 = vrot.slane %v1218, 5
      %v1340 = vrot.slane %v1339, 4
      %v1341 = vrot.slane %v793, 5
      %v1342 = vsel %vm1275, %v1340, %v1341
      %v1343 = vrot.slane %v1341, 4
      %v1344 = vrot.slane %v815, 5
      %v1345 = vsel %vm1275, %v1343, %v1344
      %v1346 = vrot.slane %v1219, 5
      %v1347 = vrot.slane %v1346, 4
      %v1348 = vrot.slane %v795, 5
      %v1349 = vsel %vm1275, %v1347, %v1348
      %v1350 = vrot.slane %v1348, 4
      %v1351 = vrot.slane %v816, 5
      %v1352 = vsel %vm1275, %v1350, %v1351
      %v1353 = vrot.slane %v1220, 5
      %v1354 = vrot.slane %v1353, 4
      %v1355 = vrot.slane %v797, 5
      %v1356 = vsel %vm1275, %v1354, %v1355
      %v1357 = vrot.slane %v1355, 4
      %v1358 = vrot.slane %v817, 5
      %v1359 = vsel %vm1275, %v1357, %v1358
      %v1360 = vrot.slane %v1221, 5
      %v1361 = vrot.slane %v1360, 4
      %v1362 = vrot.slane %v799, 5
      %v1363 = vsel %vm1275, %v1361, %v1362
      %v1364 = vrot.slane %v1362, 4
      %v1365 = vrot.slane %v818, 5
      %v1366 = vsel %vm1275, %v1364, %v1365
      %v1367 = vrot.slane %v1222, 5
      %v1368 = vrot.slane %v1367, 4
      %v1369 = vrot.slane %v801, 5
      %v1370 = vsel %vm1275, %v1368, %v1369
      %v1371 = vrot.slane %v1369, 4
      %v1372 = vrot.slane %v819, 5
      %v1373 = vsel %vm1275, %v1371, %v1372
      %v1374 = vrot.slane %v1223, 5
      %v1375 = vrot.slane %v1374, 4
      %v1376 = vrot.slane %v803, 5
      %v1377 = vsel %vm1275, %v1375, %v1376
      %v1378 = vrot.slane %v1376, 4
      %v1379 = vrot.slane %v820, 5
      %v1380 = vsel %vm1275, %v1378, %v1379
      %v1381 = vrot.slane %v1224, 5
      %v1382 = vrot.slane %v1381, 4
      %v1383 = vrot.slane %v805, 5
      %v1384 = vsel %vm1275, %v1382, %v1383
      %v1385 = vrot.slane %v1383, 4
      %v1386 = vrot.slane %v821, 5
      %v1387 = vsel %vm1275, %v1385, %v1386
      %v1388 = vld [vmem:[%s659] sm:$0xf]
      %v1389 = vld [vmem:[%s659 + $0x4] sm:$0xf]
      %v1390 = vld [vmem:[%s659 + $0xc] sm:$0xf]
      %v1391 = vld [vmem:[%s659 + $0x10] sm:$0xf]
      %v1392 = vld [vmem:[%s659 + $0x18] sm:$0xf]
      %v1393 = vld [vmem:[%s659 + $0x1c] sm:$0xf]
      %v1394 = vld [vmem:[%s659 + $0x24] sm:$0xf]
      %v1395 = vld [vmem:[%s659 + $0x28] sm:$0xf]
      %v1396 = vld [vmem:[%s659 + $0x30] sm:$0xf]
      %v1397 = vld [vmem:[%s659 + $0x34] sm:$0xf]
      %v1398 = vld [vmem:[%s659 + $0x3c] sm:$0xf]
      %v1399 = vld [vmem:[%s659 + $0x40] sm:$0xf]
      %v1400 = vld [vmem:[%s659 + $0x48] sm:$0xf]
      %v1401 = vld [vmem:[%s659 + $0x4c] sm:$0xf]
      %v1402 = vld [vmem:[%s659 + $0x54] sm:$0xf]
      %v1403 = vld [vmem:[%s659 + $0x58] sm:$0xf]
      %v1404 = vld [vmem:[%s659 + $0x60] sm:$0xf]
      %v1405 = vld [vmem:[%s659 + $0x64] sm:$0xf]
      %v1406 = vld [vmem:[%s659 + $0x6c] sm:$0xf]
      %v1407 = vld [vmem:[%s659 + $0x70] sm:$0xf]
      %v1408 = vld [vmem:[%s659 + $0x78] sm:$0xf]
      %v1409 = vld [vmem:[%s659 + $0x7c] sm:$0xf]
      %v1410 = vld [vmem:[%s659 + $0x84] sm:$0xf]
      %v1411 = vld [vmem:[%s659 + $0x88] sm:$0xf]
      %v1412 = vld [vmem:[%s659 + $0x90] sm:$0xf]
      %v1413 = vld [vmem:[%s659 + $0x94] sm:$0xf]
      %v1414 = vld [vmem:[%s659 + $0x9c] sm:$0xf]
      %v1415 = vld [vmem:[%s659 + $0xa0] sm:$0xf]
      %v1416 = vld [vmem:[%s659 + $0xa8] sm:$0xf]
      %v1417 = vld [vmem:[%s659 + $0xac] sm:$0xf]
      %v1418 = vld [vmem:[%s659 + $0xb4] sm:$0xf]
      %v1419 = vld [vmem:[%s659 + $0xb8] sm:$0xf]
      %v1420 = vld [vmem:[%s659 + $0x8] sm:$0x1]
      %v1421 = vld [vmem:[%s659 + $0x14] sm:$0x1]
      %v1422 = vld [vmem:[%s659 + $0x20] sm:$0x1]
      %v1423 = vld [vmem:[%s659 + $0x2c] sm:$0x1]
      %v1424 = vld [vmem:[%s659 + $0x38] sm:$0x1]
      %v1425 = vld [vmem:[%s659 + $0x44] sm:$0x1]
      %v1426 = vld [vmem:[%s659 + $0x50] sm:$0x1]
      %v1427 = vld [vmem:[%s659 + $0x5c] sm:$0x1]
      %v1428 = vld [vmem:[%s659 + $0x68] sm:$0x1]
      %v1429 = vld [vmem:[%s659 + $0x74] sm:$0x1]
      %v1430 = vld [vmem:[%s659 + $0x80] sm:$0x1]
      %v1431 = vld [vmem:[%s659 + $0x8c] sm:$0x1]
      %v1432 = vld [vmem:[%s659 + $0x98] sm:$0x1]
      %v1433 = vld [vmem:[%s659 + $0xa4] sm:$0x1]
      %v1434 = vld [vmem:[%s659 + $0xb0] sm:$0x1]
      %v1435 = vld [vmem:[%s659 + $0xbc] sm:$0x1]
      %v1437 = vshrl.u32 %v1388, 16
      %v1439 = vrot.slane %v1437, 4
      %v1440 = vshll.u32 %v1388, 16
      %v1442 = vrot.slane %v1440, 5
      %v1443 = vor.u32 %v1439, %v1442
      %v1444 = vrot.slane %v1443, 4
      %v1446 = vshll.u32 %v1389, 16
      %v1448 = vrot.slane %v1446, 5
      %v1449 = vsel %vm824, %v1444, %v1448
      %v1450 = vshrl.u32 %v1389, 16
      %v1452 = vrot.slane %v1450, 4
      %v1453 = vor.u32 %v1452, %v1448
      %v1454 = vrot.slane %v1453, 4
      %v1456 = vshll.u32 %v1420, 16
      %v1458 = vrot.slane %v1456, 5
      %v1459 = vsel %vm824, %v1454, %v1458
      %v1461 = vshrl.u32 %v1390, 16
      %v1463 = vrot.slane %v1461, 4
      %v1464 = vshll.u32 %v1390, 16
      %v1466 = vrot.slane %v1464, 5
      %v1467 = vor.u32 %v1463, %v1466
      %v1468 = vrot.slane %v1467, 4
      %v1470 = vshll.u32 %v1391, 16
      %v1472 = vrot.slane %v1470, 5
      %v1473 = vsel %vm824, %v1468, %v1472
      %v1474 = vshrl.u32 %v1391, 16
      %v1476 = vrot.slane %v1474, 4
      %v1477 = vor.u32 %v1476, %v1472
      %v1478 = vrot.slane %v1477, 4
      %v1480 = vshll.u32 %v1421, 16
      %v1482 = vrot.slane %v1480, 5
      %v1483 = vsel %vm824, %v1478, %v1482
      %v1485 = vshrl.u32 %v1392, 16
      %v1487 = vrot.slane %v1485, 4
      %v1488 = vshll.u32 %v1392, 16
      %v1490 = vrot.slane %v1488, 5
      %v1491 = vor.u32 %v1487, %v1490
      %v1492 = vrot.slane %v1491, 4
      %v1494 = vshll.u32 %v1393, 16
      %v1496 = vrot.slane %v1494, 5
      %v1497 = vsel %vm824, %v1492, %v1496
      %v1498 = vshrl.u32 %v1393, 16
      %v1500 = vrot.slane %v1498, 4
      %v1501 = vor.u32 %v1500, %v1496
      %v1502 = vrot.slane %v1501, 4
      %v1504 = vshll.u32 %v1422, 16
      %v1506 = vrot.slane %v1504, 5
      %v1507 = vsel %vm824, %v1502, %v1506
      %v1509 = vshrl.u32 %v1394, 16
      %v1511 = vrot.slane %v1509, 4
      %v1512 = vshll.u32 %v1394, 16
      %v1514 = vrot.slane %v1512, 5
      %v1515 = vor.u32 %v1511, %v1514
      %v1516 = vrot.slane %v1515, 4
      %v1518 = vshll.u32 %v1395, 16
      %v1520 = vrot.slane %v1518, 5
      %v1521 = vsel %vm824, %v1516, %v1520
      %v1522 = vshrl.u32 %v1395, 16
      %v1524 = vrot.slane %v1522, 4
      %v1525 = vor.u32 %v1524, %v1520
      %v1526 = vrot.slane %v1525, 4
      %v1528 = vshll.u32 %v1423, 16
      %v1530 = vrot.slane %v1528, 5
      %v1531 = vsel %vm824, %v1526, %v1530
      %v1533 = vshrl.u32 %v1396, 16
      %v1535 = vrot.slane %v1533, 4
      %v1536 = vshll.u32 %v1396, 16
      %v1538 = vrot.slane %v1536, 5
      %v1539 = vor.u32 %v1535, %v1538
      %v1540 = vrot.slane %v1539, 4
      %v1542 = vshll.u32 %v1397, 16
      %v1544 = vrot.slane %v1542, 5
      %v1545 = vsel %vm824, %v1540, %v1544
      %v1546 = vshrl.u32 %v1397, 16
      %v1548 = vrot.slane %v1546, 4
      %v1549 = vor.u32 %v1548, %v1544
      %v1550 = vrot.slane %v1549, 4
      %v1552 = vshll.u32 %v1424, 16
      %v1554 = vrot.slane %v1552, 5
      %v1555 = vsel %vm824, %v1550, %v1554
      %v1557 = vshrl.u32 %v1398, 16
      %v1559 = vrot.slane %v1557, 4
      %v1560 = vshll.u32 %v1398, 16
      %v1562 = vrot.slane %v1560, 5
      %v1563 = vor.u32 %v1559, %v1562
      %v1564 = vrot.slane %v1563, 4
      %v1566 = vshll.u32 %v1399, 16
      %v1568 = vrot.slane %v1566, 5
      %v1569 = vsel %vm824, %v1564, %v1568
      %v1570 = vshrl.u32 %v1399, 16
      %v1572 = vrot.slane %v1570, 4
      %v1573 = vor.u32 %v1572, %v1568
      %v1574 = vrot.slane %v1573, 4
      %v1576 = vshll.u32 %v1425, 16
      %v1578 = vrot.slane %v1576, 5
      %v1579 = vsel %vm824, %v1574, %v1578
      %v1581 = vshrl.u32 %v1400, 16
      %v1583 = vrot.slane %v1581, 4
      %v1584 = vshll.u32 %v1400, 16
      %v1586 = vrot.slane %v1584, 5
      %v1587 = vor.u32 %v1583, %v1586
      %v1588 = vrot.slane %v1587, 4
      %v1590 = vshll.u32 %v1401, 16
      %v1592 = vrot.slane %v1590, 5
      %v1593 = vsel %vm824, %v1588, %v1592
      %v1594 = vshrl.u32 %v1401, 16
      %v1596 = vrot.slane %v1594, 4
      %v1597 = vor.u32 %v1596, %v1592
      %v1598 = vrot.slane %v1597, 4
      %v1600 = vshll.u32 %v1426, 16
      %v1602 = vrot.slane %v1600, 5
      %v1603 = vsel %vm824, %v1598, %v1602
      %v1605 = vshrl.u32 %v1402, 16
      %v1607 = vrot.slane %v1605, 4
      %v1608 = vshll.u32 %v1402, 16
      %v1610 = vrot.slane %v1608, 5
      %v1611 = vor.u32 %v1607, %v1610
      %v1612 = vrot.slane %v1611, 4
      %v1614 = vshll.u32 %v1403, 16
      %v1616 = vrot.slane %v1614, 5
      %v1617 = vsel %vm824, %v1612, %v1616
      %v1618 = vshrl.u32 %v1403, 16
      %v1620 = vrot.slane %v1618, 4
      %v1621 = vor.u32 %v1620, %v1616
      %v1622 = vrot.slane %v1621, 4
      %v1624 = vshll.u32 %v1427, 16
      %v1626 = vrot.slane %v1624, 5
      %v1627 = vsel %vm824, %v1622, %v1626
      %v1629 = vshrl.u32 %v1404, 16
      %v1631 = vrot.slane %v1629, 4
      %v1632 = vshll.u32 %v1404, 16
      %v1634 = vrot.slane %v1632, 5
      %v1635 = vor.u32 %v1631, %v1634
      %v1636 = vrot.slane %v1635, 4
      %v1638 = vshll.u32 %v1405, 16
      %v1640 = vrot.slane %v1638, 5
      %v1641 = vsel %vm824, %v1636, %v1640
      %v1642 = vshrl.u32 %v1405, 16
      %v1644 = vrot.slane %v1642, 4
      %v1645 = vor.u32 %v1644, %v1640
      %v1646 = vrot.slane %v1645, 4
      %v1648 = vshll.u32 %v1428, 16
      %v1650 = vrot.slane %v1648, 5
      %v1651 = vsel %vm824, %v1646, %v1650
      %v1653 = vshrl.u32 %v1406, 16
      %v1655 = vrot.slane %v1653, 4
      %v1656 = vshll.u32 %v1406, 16
      %v1658 = vrot.slane %v1656, 5
      %v1659 = vor.u32 %v1655, %v1658
      %v1660 = vrot.slane %v1659, 4
      %v1662 = vshll.u32 %v1407, 16
      %v1664 = vrot.slane %v1662, 5
      %v1665 = vsel %vm824, %v1660, %v1664
      %v1666 = vshrl.u32 %v1407, 16
      %v1668 = vrot.slane %v1666, 4
      %v1669 = vor.u32 %v1668, %v1664
      %v1670 = vrot.slane %v1669, 4
      %v1672 = vshll.u32 %v1429, 16
      %v1674 = vrot.slane %v1672, 5
      %v1675 = vsel %vm824, %v1670, %v1674
      %v1677 = vshrl.u32 %v1408, 16
      %v1679 = vrot.slane %v1677, 4
      %v1680 = vshll.u32 %v1408, 16
      %v1682 = vrot.slane %v1680, 5
      %v1683 = vor.u32 %v1679, %v1682
      %v1684 = vrot.slane %v1683, 4
      %v1686 = vshll.u32 %v1409, 16
      %v1688 = vrot.slane %v1686, 5
      %v1689 = vsel %vm824, %v1684, %v1688
      %v1690 = vshrl.u32 %v1409, 16
      %v1692 = vrot.slane %v1690, 4
      %v1693 = vor.u32 %v1692, %v1688
      %v1694 = vrot.slane %v1693, 4
      %v1696 = vshll.u32 %v1430, 16
      %v1698 = vrot.slane %v1696, 5
      %v1699 = vsel %vm824, %v1694, %v1698
      %v1701 = vshrl.u32 %v1410, 16
      %v1703 = vrot.slane %v1701, 4
      %v1704 = vshll.u32 %v1410, 16
      %v1706 = vrot.slane %v1704, 5
      %v1707 = vor.u32 %v1703, %v1706
      %v1708 = vrot.slane %v1707, 4
      %v1710 = vshll.u32 %v1411, 16
      %v1712 = vrot.slane %v1710, 5
      %v1713 = vsel %vm824, %v1708, %v1712
      %v1714 = vshrl.u32 %v1411, 16
      %v1716 = vrot.slane %v1714, 4
      %v1717 = vor.u32 %v1716, %v1712
      %v1718 = vrot.slane %v1717, 4
      %v1720 = vshll.u32 %v1431, 16
      %v1722 = vrot.slane %v1720, 5
      %v1723 = vsel %vm824, %v1718, %v1722
      %v1725 = vshrl.u32 %v1412, 16
      %v1727 = vrot.slane %v1725, 4
      %v1728 = vshll.u32 %v1412, 16
      %v1730 = vrot.slane %v1728, 5
      %v1731 = vor.u32 %v1727, %v1730
      %v1732 = vrot.slane %v1731, 4
      %v1734 = vshll.u32 %v1413, 16
      %v1736 = vrot.slane %v1734, 5
      %v1737 = vsel %vm824, %v1732, %v1736
      %v1738 = vshrl.u32 %v1413, 16
      %v1740 = vrot.slane %v1738, 4
      %v1741 = vor.u32 %v1740, %v1736
      %v1742 = vrot.slane %v1741, 4
      %v1744 = vshll.u32 %v1432, 16
      %v1746 = vrot.slane %v1744, 5
      %v1747 = vsel %vm824, %v1742, %v1746
      %v1749 = vshrl.u32 %v1414, 16
      %v1751 = vrot.slane %v1749, 4
      %v1752 = vshll.u32 %v1414, 16
      %v1754 = vrot.slane %v1752, 5
      %v1755 = vor.u32 %v1751, %v1754
      %v1756 = vrot.slane %v1755, 4
      %v1758 = vshll.u32 %v1415, 16
      %v1760 = vrot.slane %v1758, 5
      %v1761 = vsel %vm824, %v1756, %v1760
      %v1762 = vshrl.u32 %v1415, 16
      %v1764 = vrot.slane %v1762, 4
      %v1765 = vor.u32 %v1764, %v1760
      %v1766 = vrot.slane %v1765, 4
      %v1768 = vshll.u32 %v1433, 16
      %v1770 = vrot.slane %v1768, 5
      %v1771 = vsel %vm824, %v1766, %v1770
      %v1773 = vshrl.u32 %v1416, 16
      %v1775 = vrot.slane %v1773, 4
      %v1776 = vshll.u32 %v1416, 16
      %v1778 = vrot.slane %v1776, 5
      %v1779 = vor.u32 %v1775, %v1778
      %v1780 = vrot.slane %v1779, 4
      %v1782 = vshll.u32 %v1417, 16
      %v1784 = vrot.slane %v1782, 5
      %v1785 = vsel %vm824, %v1780, %v1784
      %v1786 = vshrl.u32 %v1417, 16
      %v1788 = vrot.slane %v1786, 4
      %v1789 = vor.u32 %v1788, %v1784
      %v1790 = vrot.slane %v1789, 4
      %v1792 = vshll.u32 %v1434, 16
      %v1794 = vrot.slane %v1792, 5
      %v1795 = vsel %vm824, %v1790, %v1794
      %v1797 = vshrl.u32 %v1418, 16
      %v1799 = vrot.slane %v1797, 4
      %v1800 = vshll.u32 %v1418, 16
      %v1802 = vrot.slane %v1800, 5
      %v1803 = vor.u32 %v1799, %v1802
      %v1804 = vrot.slane %v1803, 4
      %v1806 = vshll.u32 %v1419, 16
      %v1808 = vrot.slane %v1806, 5
      %v1809 = vsel %vm824, %v1804, %v1808
      %v1810 = vshrl.u32 %v1419, 16
      %v1812 = vrot.slane %v1810, 4
      %v1813 = vor.u32 %v1812, %v1808
      %v1814 = vrot.slane %v1813, 4
      %v1816 = vshll.u32 %v1435, 16
      %v1818 = vrot.slane %v1816, 5
      %v1819 = vsel %vm824, %v1814, %v1818
      %v1820 = vld [vmem:[%s659] sm:$0xe]
      %v1821 = vld [vmem:[%s659 + $0xc] sm:$0xe]
      %v1822 = vld [vmem:[%s659 + $0x18] sm:$0xe]
      %v1823 = vld [vmem:[%s659 + $0x24] sm:$0xe]
      %v1824 = vld [vmem:[%s659 + $0x30] sm:$0xe]
      %v1825 = vld [vmem:[%s659 + $0x3c] sm:$0xe]
      %v1826 = vld [vmem:[%s659 + $0x48] sm:$0xe]
      %v1827 = vld [vmem:[%s659 + $0x54] sm:$0xe]
      %v1828 = vld [vmem:[%s659 + $0x60] sm:$0xe]
      %v1829 = vld [vmem:[%s659 + $0x6c] sm:$0xe]
      %v1830 = vld [vmem:[%s659 + $0x78] sm:$0xe]
      %v1831 = vld [vmem:[%s659 + $0x84] sm:$0xe]
      %v1832 = vld [vmem:[%s659 + $0x90] sm:$0xe]
      %v1833 = vld [vmem:[%s659 + $0x9c] sm:$0xe]
      %v1834 = vld [vmem:[%s659 + $0xa8] sm:$0xe]
      %v1835 = vld [vmem:[%s659 + $0xb4] sm:$0xe]
      %v1884 = vrot.slane %v1820, 5
      %v1885 = vrot.slane %v1884, 4
      %v1886 = vrot.slane %v1389, 5
      %v1887 = vsel %vm1275, %v1885, %v1886
      %v1888 = vrot.slane %v1886, 4
      %v1889 = vrot.slane %v1420, 5
      %v1890 = vsel %vm1275, %v1888, %v1889
      %v1891 = vrot.slane %v1821, 5
      %v1892 = vrot.slane %v1891, 4
      %v1893 = vrot.slane %v1391, 5
      %v1894 = vsel %vm1275, %v1892, %v1893
      %v1895 = vrot.slane %v1893, 4
      %v1896 = vrot.slane %v1421, 5
      %v1897 = vsel %vm1275, %v1895, %v1896
      %v1898 = vrot.slane %v1822, 5
      %v1899 = vrot.slane %v1898, 4
      %v1900 = vrot.slane %v1393, 5
      %v1901 = vsel %vm1275, %v1899, %v1900
      %v1902 = vrot.slane %v1900, 4
      %v1903 = vrot.slane %v1422, 5
      %v1904 = vsel %vm1275, %v1902, %v1903
      %v1905 = vrot.slane %v1823, 5
      %v1906 = vrot.slane %v1905, 4
      %v1907 = vrot.slane %v1395, 5
      %v1908 = vsel %vm1275, %v1906, %v1907
      %v1909 = vrot.slane %v1907, 4
      %v1910 = vrot.slane %v1423, 5
      %v1911 = vsel %vm1275, %v1909, %v1910
      %v1912 = vrot.slane %v1824, 5
      %v1913 = vrot.slane %v1912, 4
      %v1914 = vrot.slane %v1397, 5
      %v1915 = vsel %vm1275, %v1913, %v1914
      %v1916 = vrot.slane %v1914, 4
      %v1917 = vrot.slane %v1424, 5
      %v1918 = vsel %vm1275, %v1916, %v1917
      %v1919 = vrot.slane %v1825, 5
      %v1920 = vrot.slane %v1919, 4
      %v1921 = vrot.slane %v1399, 5
      %v1922 = vsel %vm1275, %v1920, %v1921
      %v1923 = vrot.slane %v1921, 4
      %v1924 = vrot.slane %v1425, 5
      %v1925 = vsel %vm1275, %v1923, %v1924
      %v1926 = vrot.slane %v1826, 5
      %v1927 = vrot.slane %v1926, 4
      %v1928 = vrot.slane %v1401, 5
      %v1929 = vsel %vm1275, %v1927, %v1928
      %v1930 = vrot.slane %v1928, 4
      %v1931 = vrot.slane %v1426, 5
      %v1932 = vsel %vm1275, %v1930, %v1931
      %v1933 = vrot.slane %v1827, 5
      %v1934 = vrot.slane %v1933, 4
      %v1935 = vrot.slane %v1403, 5
      %v1936 = vsel %vm1275, %v1934, %v1935
      %v1937 = vrot.slane %v1935, 4
      %v1938 = vrot.slane %v1427, 5
      %v1939 = vsel %vm1275, %v1937, %v1938
      %v1940 = vrot.slane %v1828, 5
      %v1941 = vrot.slane %v1940, 4
      %v1942 = vrot.slane %v1405, 5
      %v1943 = vsel %vm1275, %v1941, %v1942
      %v1944 = vrot.slane %v1942, 4
      %v1945 = vrot.slane %v1428, 5
      %v1946 = vsel %vm1275, %v1944, %v1945
      %v1947 = vrot.slane %v1829, 5
      %v1948 = vrot.slane %v1947, 4
      %v1949 = vrot.slane %v1407, 5
      %v1950 = vsel %vm1275, %v1948, %v1949
      %v1951 = vrot.slane %v1949, 4
      %v1952 = vrot.slane %v1429, 5
      %v1953 = vsel %vm1275, %v1951, %v1952
      %v1954 = vrot.slane %v1830, 5
      %v1955 = vrot.slane %v1954, 4
      %v1956 = vrot.slane %v1409, 5
      %v1957 = vsel %vm1275, %v1955, %v1956
      %v1958 = vrot.slane %v1956, 4
      %v1959 = vrot.slane %v1430, 5
      %v1960 = vsel %vm1275, %v1958, %v1959
      %v1961 = vrot.slane %v1831, 5
      %v1962 = vrot.slane %v1961, 4
      %v1963 = vrot.slane %v1411, 5
      %v1964 = vsel %vm1275, %v1962, %v1963
      %v1965 = vrot.slane %v1963, 4
      %v1966 = vrot.slane %v1431, 5
      %v1967 = vsel %vm1275, %v1965, %v1966
      %v1968 = vrot.slane %v1832, 5
      %v1969 = vrot.slane %v1968, 4
      %v1970 = vrot.slane %v1413, 5
      %v1971 = vsel %vm1275, %v1969, %v1970
      %v1972 = vrot.slane %v1970, 4
      %v1973 = vrot.slane %v1432, 5
      %v1974 = vsel %vm1275, %v1972, %v1973
      %v1975 = vrot.slane %v1833, 5
      %v1976 = vrot.slane %v1975, 4
      %v1977 = vrot.slane %v1415, 5
      %v1978 = vsel %vm1275, %v1976, %v1977
      %v1979 = vrot.slane %v1977, 4
      %v1980 = vrot.slane %v1433, 5
      %v1981 = vsel %vm1275, %v1979, %v1980
      %v1982 = vrot.slane %v1834, 5
      %v1983 = vrot.slane %v1982, 4
      %v1984 = vrot.slane %v1417, 5
      %v1985 = vsel %vm1275, %v1983, %v1984
      %v1986 = vrot.slane %v1984, 4
      %v1987 = vrot.slane %v1434, 5
      %v1988 = vsel %vm1275, %v1986, %v1987
      %v1989 = vrot.slane %v1835, 5
      %v1990 = vrot.slane %v1989, 4
      %v1991 = vrot.slane %v1419, 5
      %v1992 = vsel %vm1275, %v1990, %v1991
      %v1993 = vrot.slane %v1991, 4
      %v1994 = vrot.slane %v1435, 5
      %v1995 = vsel %vm1275, %v1993, %v1994
      %s1996 = scalar_lea.vmem [#allocation2], 24
      %v1997 = vld [vmem:[%s1996] sm:$0xf]
      %v1998 = vld [vmem:[%s1996 + $0x4] sm:$0xf]
      %v1999 = vld [vmem:[%s1996 + $0xc] sm:$0xf]
      %v2000 = vld [vmem:[%s1996 + $0x10] sm:$0xf]
      %v2001 = vld [vmem:[%s1996 + $0x18] sm:$0xf]
      %v2002 = vld [vmem:[%s1996 + $0x1c] sm:$0xf]
      %v2003 = vld [vmem:[%s1996 + $0x24] sm:$0xf]
      %v2004 = vld [vmem:[%s1996 + $0x28] sm:$0xf]
      %v2005 = vld [vmem:[%s1996 + $0x30] sm:$0xf]
      %v2006 = vld [vmem:[%s1996 + $0x34] sm:$0xf]
      %v2007 = vld [vmem:[%s1996 + $0x3c] sm:$0xf]
      %v2008 = vld [vmem:[%s1996 + $0x40] sm:$0xf]
      %v2009 = vld [vmem:[%s1996 + $0x48] sm:$0xf]
      %v2010 = vld [vmem:[%s1996 + $0x4c] sm:$0xf]
      %v2011 = vld [vmem:[%s1996 + $0x54] sm:$0xf]
      %v2012 = vld [vmem:[%s1996 + $0x58] sm:$0xf]
      %v2013 = vld [vmem:[%s1996 + $0x60] sm:$0xf]
      %v2014 = vld [vmem:[%s1996 + $0x64] sm:$0xf]
      %v2015 = vld [vmem:[%s1996 + $0x6c] sm:$0xf]
      %v2016 = vld [vmem:[%s1996 + $0x70] sm:$0xf]
      %v2017 = vld [vmem:[%s1996 + $0x78] sm:$0xf]
      %v2018 = vld [vmem:[%s1996 + $0x7c] sm:$0xf]
      %v2019 = vld [vmem:[%s1996 + $0x84] sm:$0xf]
      %v2020 = vld [vmem:[%s1996 + $0x88] sm:$0xf]
      %v2021 = vld [vmem:[%s1996 + $0x90] sm:$0xf]
      %v2022 = vld [vmem:[%s1996 + $0x94] sm:$0xf]
      %v2023 = vld [vmem:[%s1996 + $0x9c] sm:$0xf]
      %v2024 = vld [vmem:[%s1996 + $0xa0] sm:$0xf]
      %v2025 = vld [vmem:[%s1996 + $0xa8] sm:$0xf]
      %v2026 = vld [vmem:[%s1996 + $0xac] sm:$0xf]
      %v2027 = vld [vmem:[%s1996 + $0xb4] sm:$0xf]
      %v2028 = vld [vmem:[%s1996 + $0xb8] sm:$0xf]
      %v2029 = vld [vmem:[%s1996 + $0x8] sm:$0x1]
      %v2030 = vld [vmem:[%s1996 + $0x14] sm:$0x1]
      %v2031 = vld [vmem:[%s1996 + $0x20] sm:$0x1]
      %v2032 = vld [vmem:[%s1996 + $0x2c] sm:$0x1]
      %v2033 = vld [vmem:[%s1996 + $0x38] sm:$0x1]
      %v2034 = vld [vmem:[%s1996 + $0x44] sm:$0x1]
      %v2035 = vld [vmem:[%s1996 + $0x50] sm:$0x1]
      %v2036 = vld [vmem:[%s1996 + $0x5c] sm:$0x1]
      %v2037 = vld [vmem:[%s1996 + $0x68] sm:$0x1]
      %v2038 = vld [vmem:[%s1996 + $0x74] sm:$0x1]
      %v2039 = vld [vmem:[%s1996 + $0x80] sm:$0x1]
      %v2040 = vld [vmem:[%s1996 + $0x8c] sm:$0x1]
      %v2041 = vld [vmem:[%s1996 + $0x98] sm:$0x1]
      %v2042 = vld [vmem:[%s1996 + $0xa4] sm:$0x1]
      %v2043 = vld [vmem:[%s1996 + $0xb0] sm:$0x1]
      %v2044 = vld [vmem:[%s1996 + $0xbc] sm:$0x1]
      %v2046 = vshrl.u32 %v1997, 16
      %v2048 = vrot.slane %v2046, 4
      %v2049 = vshll.u32 %v1997, 16
      %v2051 = vrot.slane %v2049, 5
      %v2052 = vor.u32 %v2048, %v2051
      %v2053 = vrot.slane %v2052, 4
      %v2055 = vshll.u32 %v1998, 16
      %v2057 = vrot.slane %v2055, 5
      %v2058 = vsel %vm824, %v2053, %v2057
      %v2059 = vshrl.u32 %v1998, 16
      %v2061 = vrot.slane %v2059, 4
      %v2062 = vor.u32 %v2061, %v2057
      %v2063 = vrot.slane %v2062, 4
      %v2065 = vshll.u32 %v2029, 16
      %v2067 = vrot.slane %v2065, 5
      %v2068 = vsel %vm824, %v2063, %v2067
      %v2070 = vshrl.u32 %v1999, 16
      %v2072 = vrot.slane %v2070, 4
      %v2073 = vshll.u32 %v1999, 16
      %v2075 = vrot.slane %v2073, 5
      %v2076 = vor.u32 %v2072, %v2075
      %v2077 = vrot.slane %v2076, 4
      %v2079 = vshll.u32 %v2000, 16
      %v2081 = vrot.slane %v2079, 5
      %v2082 = vsel %vm824, %v2077, %v2081
      %v2083 = vshrl.u32 %v2000, 16
      %v2085 = vrot.slane %v2083, 4
      %v2086 = vor.u32 %v2085, %v2081
      %v2087 = vrot.slane %v2086, 4
      %v2089 = vshll.u32 %v2030, 16
      %v2091 = vrot.slane %v2089, 5
      %v2092 = vsel %vm824, %v2087, %v2091
      %v2094 = vshrl.u32 %v2001, 16
      %v2096 = vrot.slane %v2094, 4
      %v2097 = vshll.u32 %v2001, 16
      %v2099 = vrot.slane %v2097, 5
      %v2100 = vor.u32 %v2096, %v2099
      %v2101 = vrot.slane %v2100, 4
      %v2103 = vshll.u32 %v2002, 16
      %v2105 = vrot.slane %v2103, 5
      %v2106 = vsel %vm824, %v2101, %v2105
      %v2107 = vshrl.u32 %v2002, 16
      %v2109 = vrot.slane %v2107, 4
      %v2110 = vor.u32 %v2109, %v2105
      %v2111 = vrot.slane %v2110, 4
      %v2113 = vshll.u32 %v2031, 16
      %v2115 = vrot.slane %v2113, 5
      %v2116 = vsel %vm824, %v2111, %v2115
      %v2118 = vshrl.u32 %v2003, 16
      %v2120 = vrot.slane %v2118, 4
      %v2121 = vshll.u32 %v2003, 16
      %v2123 = vrot.slane %v2121, 5
      %v2124 = vor.u32 %v2120, %v2123
      %v2125 = vrot.slane %v2124, 4
      %v2127 = vshll.u32 %v2004, 16
      %v2129 = vrot.slane %v2127, 5
      %v2130 = vsel %vm824, %v2125, %v2129
      %v2131 = vshrl.u32 %v2004, 16
      %v2133 = vrot.slane %v2131, 4
      %v2134 = vor.u32 %v2133, %v2129
      %v2135 = vrot.slane %v2134, 4
      %v2137 = vshll.u32 %v2032, 16
      %v2139 = vrot.slane %v2137, 5
      %v2140 = vsel %vm824, %v2135, %v2139
      %v2142 = vshrl.u32 %v2005, 16
      %v2144 = vrot.slane %v2142, 4
      %v2145 = vshll.u32 %v2005, 16
      %v2147 = vrot.slane %v2145, 5
      %v2148 = vor.u32 %v2144, %v2147
      %v2149 = vrot.slane %v2148, 4
      %v2151 = vshll.u32 %v2006, 16
      %v2153 = vrot.slane %v2151, 5
      %v2154 = vsel %vm824, %v2149, %v2153
      %v2155 = vshrl.u32 %v2006, 16
      %v2157 = vrot.slane %v2155, 4
      %v2158 = vor.u32 %v2157, %v2153
      %v2159 = vrot.slane %v2158, 4
      %v2161 = vshll.u32 %v2033, 16
      %v2163 = vrot.slane %v2161, 5
      %v2164 = vsel %vm824, %v2159, %v2163
      %v2166 = vshrl.u32 %v2007, 16
      %v2168 = vrot.slane %v2166, 4
      %v2169 = vshll.u32 %v2007, 16
      %v2171 = vrot.slane %v2169, 5
      %v2172 = vor.u32 %v2168, %v2171
      %v2173 = vrot.slane %v2172, 4
      %v2175 = vshll.u32 %v2008, 16
      %v2177 = vrot.slane %v2175, 5
      %v2178 = vsel %vm824, %v2173, %v2177
      %v2179 = vshrl.u32 %v2008, 16
      %v2181 = vrot.slane %v2179, 4
      %v2182 = vor.u32 %v2181, %v2177
      %v2183 = vrot.slane %v2182, 4
      %v2185 = vshll.u32 %v2034, 16
      %v2187 = vrot.slane %v2185, 5
      %v2188 = vsel %vm824, %v2183, %v2187
      %v2190 = vshrl.u32 %v2009, 16
      %v2192 = vrot.slane %v2190, 4
      %v2193 = vshll.u32 %v2009, 16
      %v2195 = vrot.slane %v2193, 5
      %v2196 = vor.u32 %v2192, %v2195
      %v2197 = vrot.slane %v2196, 4
      %v2199 = vshll.u32 %v2010, 16
      %v2201 = vrot.slane %v2199, 5
      %v2202 = vsel %vm824, %v2197, %v2201
      %v2203 = vshrl.u32 %v2010, 16
      %v2205 = vrot.slane %v2203, 4
      %v2206 = vor.u32 %v2205, %v2201
      %v2207 = vrot.slane %v2206, 4
      %v2209 = vshll.u32 %v2035, 16
      %v2211 = vrot.slane %v2209, 5
      %v2212 = vsel %vm824, %v2207, %v2211
      %v2214 = vshrl.u32 %v2011, 16
      %v2216 = vrot.slane %v2214, 4
      %v2217 = vshll.u32 %v2011, 16
      %v2219 = vrot.slane %v2217, 5
      %v2220 = vor.u32 %v2216, %v2219
      %v2221 = vrot.slane %v2220, 4
      %v2223 = vshll.u32 %v2012, 16
      %v2225 = vrot.slane %v2223, 5
      %v2226 = vsel %vm824, %v2221, %v2225
      %v2227 = vshrl.u32 %v2012, 16
      %v2229 = vrot.slane %v2227, 4
      %v2230 = vor.u32 %v2229, %v2225
      %v2231 = vrot.slane %v2230, 4
      %v2233 = vshll.u32 %v2036, 16
      %v2235 = vrot.slane %v2233, 5
      %v2236 = vsel %vm824, %v2231, %v2235
      %v2238 = vshrl.u32 %v2013, 16
      %v2240 = vrot.slane %v2238, 4
      %v2241 = vshll.u32 %v2013, 16
      %v2243 = vrot.slane %v2241, 5
      %v2244 = vor.u32 %v2240, %v2243
      %v2245 = vrot.slane %v2244, 4
      %v2247 = vshll.u32 %v2014, 16
      %v2249 = vrot.slane %v2247, 5
      %v2250 = vsel %vm824, %v2245, %v2249
      %v2251 = vshrl.u32 %v2014, 16
      %v2253 = vrot.slane %v2251, 4
      %v2254 = vor.u32 %v2253, %v2249
      %v2255 = vrot.slane %v2254, 4
      %v2257 = vshll.u32 %v2037, 16
      %v2259 = vrot.slane %v2257, 5
      %v2260 = vsel %vm824, %v2255, %v2259
      %v2262 = vshrl.u32 %v2015, 16
      %v2264 = vrot.slane %v2262, 4
      %v2265 = vshll.u32 %v2015, 16
      %v2267 = vrot.slane %v2265, 5
      %v2268 = vor.u32 %v2264, %v2267
      %v2269 = vrot.slane %v2268, 4
      %v2271 = vshll.u32 %v2016, 16
      %v2273 = vrot.slane %v2271, 5
      %v2274 = vsel %vm824, %v2269, %v2273
      %v2275 = vshrl.u32 %v2016, 16
      %v2277 = vrot.slane %v2275, 4
      %v2278 = vor.u32 %v2277, %v2273
      %v2279 = vrot.slane %v2278, 4
      %v2281 = vshll.u32 %v2038, 16
      %v2283 = vrot.slane %v2281, 5
      %v2284 = vsel %vm824, %v2279, %v2283
      %v2286 = vshrl.u32 %v2017, 16
      %v2288 = vrot.slane %v2286, 4
      %v2289 = vshll.u32 %v2017, 16
      %v2291 = vrot.slane %v2289, 5
      %v2292 = vor.u32 %v2288, %v2291
      %v2293 = vrot.slane %v2292, 4
      %v2295 = vshll.u32 %v2018, 16
      %v2297 = vrot.slane %v2295, 5
      %v2298 = vsel %vm824, %v2293, %v2297
      %v2299 = vshrl.u32 %v2018, 16
      %v2301 = vrot.slane %v2299, 4
      %v2302 = vor.u32 %v2301, %v2297
      %v2303 = vrot.slane %v2302, 4
      %v2305 = vshll.u32 %v2039, 16
      %v2307 = vrot.slane %v2305, 5
      %v2308 = vsel %vm824, %v2303, %v2307
      %v2310 = vshrl.u32 %v2019, 16
      %v2312 = vrot.slane %v2310, 4
      %v2313 = vshll.u32 %v2019, 16
      %v2315 = vrot.slane %v2313, 5
      %v2316 = vor.u32 %v2312, %v2315
      %v2317 = vrot.slane %v2316, 4
      %v2319 = vshll.u32 %v2020, 16
      %v2321 = vrot.slane %v2319, 5
      %v2322 = vsel %vm824, %v2317, %v2321
      %v2323 = vshrl.u32 %v2020, 16
      %v2325 = vrot.slane %v2323, 4
      %v2326 = vor.u32 %v2325, %v2321
      %v2327 = vrot.slane %v2326, 4
      %v2329 = vshll.u32 %v2040, 16
      %v2331 = vrot.slane %v2329, 5
      %v2332 = vsel %vm824, %v2327, %v2331
      %v2334 = vshrl.u32 %v2021, 16
      %v2336 = vrot.slane %v2334, 4
      %v2337 = vshll.u32 %v2021, 16
      %v2339 = vrot.slane %v2337, 5
      %v2340 = vor.u32 %v2336, %v2339
      %v2341 = vrot.slane %v2340, 4
      %v2343 = vshll.u32 %v2022, 16
      %v2345 = vrot.slane %v2343, 5
      %v2346 = vsel %vm824, %v2341, %v2345
      %v2347 = vshrl.u32 %v2022, 16
      %v2349 = vrot.slane %v2347, 4
      %v2350 = vor.u32 %v2349, %v2345
      %v2351 = vrot.slane %v2350, 4
      %v2353 = vshll.u32 %v2041, 16
      %v2355 = vrot.slane %v2353, 5
      %v2356 = vsel %vm824, %v2351, %v2355
      %v2358 = vshrl.u32 %v2023, 16
      %v2360 = vrot.slane %v2358, 4
      %v2361 = vshll.u32 %v2023, 16
      %v2363 = vrot.slane %v2361, 5
      %v2364 = vor.u32 %v2360, %v2363
      %v2365 = vrot.slane %v2364, 4
      %v2367 = vshll.u32 %v2024, 16
      %v2369 = vrot.slane %v2367, 5
      %v2370 = vsel %vm824, %v2365, %v2369
      %v2371 = vshrl.u32 %v2024, 16
      %v2373 = vrot.slane %v2371, 4
      %v2374 = vor.u32 %v2373, %v2369
      %v2375 = vrot.slane %v2374, 4
      %v2377 = vshll.u32 %v2042, 16
      %v2379 = vrot.slane %v2377, 5
      %v2380 = vsel %vm824, %v2375, %v2379
      %v2382 = vshrl.u32 %v2025, 16
      %v2384 = vrot.slane %v2382, 4
      %v2385 = vshll.u32 %v2025, 16
      %v2387 = vrot.slane %v2385, 5
      %v2388 = vor.u32 %v2384, %v2387
      %v2389 = vrot.slane %v2388, 4
      %v2391 = vshll.u32 %v2026, 16
      %v2393 = vrot.slane %v2391, 5
      %v2394 = vsel %vm824, %v2389, %v2393
      %v2395 = vshrl.u32 %v2026, 16
      %v2397 = vrot.slane %v2395, 4
      %v2398 = vor.u32 %v2397, %v2393
      %v2399 = vrot.slane %v2398, 4
      %v2401 = vshll.u32 %v2043, 16
      %v2403 = vrot.slane %v2401, 5
      %v2404 = vsel %vm824, %v2399, %v2403
      %v2406 = vshrl.u32 %v2027, 16
      %v2408 = vrot.slane %v2406, 4
      %v2409 = vshll.u32 %v2027, 16
      %v2411 = vrot.slane %v2409, 5
      %v2412 = vor.u32 %v2408, %v2411
      %v2413 = vrot.slane %v2412, 4
      %v2415 = vshll.u32 %v2028, 16
      %v2417 = vrot.slane %v2415, 5
      %v2418 = vsel %vm824, %v2413, %v2417
      %v2419 = vshrl.u32 %v2028, 16
      %v2421 = vrot.slane %v2419, 4
      %v2422 = vor.u32 %v2421, %v2417
      %v2423 = vrot.slane %v2422, 4
      %v2425 = vshll.u32 %v2044, 16
      %v2427 = vrot.slane %v2425, 5
      %v2428 = vsel %vm824, %v2423, %v2427
      %v2429 = vld [vmem:[%s1996] sm:$0xe]
      %v2430 = vld [vmem:[%s1996 + $0xc] sm:$0xe]
      %v2431 = vld [vmem:[%s1996 + $0x18] sm:$0xe]
      %v2432 = vld [vmem:[%s1996 + $0x24] sm:$0xe]
      %v2433 = vld [vmem:[%s1996 + $0x30] sm:$0xe]
      %v2434 = vld [vmem:[%s1996 + $0x3c] sm:$0xe]
      %v2435 = vld [vmem:[%s1996 + $0x48] sm:$0xe]
      %v2436 = vld [vmem:[%s1996 + $0x54] sm:$0xe]
      %v2437 = vld [vmem:[%s1996 + $0x60] sm:$0xe]
      %v2438 = vld [vmem:[%s1996 + $0x6c] sm:$0xe]
      %v2439 = vld [vmem:[%s1996 + $0x78] sm:$0xe]
      %v2440 = vld [vmem:[%s1996 + $0x84] sm:$0xe]
      %v2441 = vld [vmem:[%s1996 + $0x90] sm:$0xe]
      %v2442 = vld [vmem:[%s1996 + $0x9c] sm:$0xe]
      %v2443 = vld [vmem:[%s1996 + $0xa8] sm:$0xe]
      %v2444 = vld [vmem:[%s1996 + $0xb4] sm:$0xe]
      %v2493 = vrot.slane %v2429, 5
      %v2494 = vrot.slane %v2493, 4
      %v2495 = vrot.slane %v1998, 5
      %v2496 = vsel %vm1275, %v2494, %v2495
      %v2497 = vrot.slane %v2495, 4
      %v2498 = vrot.slane %v2029, 5
      %v2499 = vsel %vm1275, %v2497, %v2498
      %v2500 = vrot.slane %v2430, 5
      %v2501 = vrot.slane %v2500, 4
      %v2502 = vrot.slane %v2000, 5
      %v2503 = vsel %vm1275, %v2501, %v2502
      %v2504 = vrot.slane %v2502, 4
      %v2505 = vrot.slane %v2030, 5
      %v2506 = vsel %vm1275, %v2504, %v2505
      %v2507 = vrot.slane %v2431, 5
      %v2508 = vrot.slane %v2507, 4
      %v2509 = vrot.slane %v2002, 5
      %v2510 = vsel %vm1275, %v2508, %v2509
      %v2511 = vrot.slane %v2509, 4
      %v2512 = vrot.slane %v2031, 5
      %v2513 = vsel %vm1275, %v2511, %v2512
      %v2514 = vrot.slane %v2432, 5
      %v2515 = vrot.slane %v2514, 4
      %v2516 = vrot.slane %v2004, 5
      %v2517 = vsel %vm1275, %v2515, %v2516
      %v2518 = vrot.slane %v2516, 4
      %v2519 = vrot.slane %v2032, 5
      %v2520 = vsel %vm1275, %v2518, %v2519
      %v2521 = vrot.slane %v2433, 5
      %v2522 = vrot.slane %v2521, 4
      %v2523 = vrot.slane %v2006, 5
      %v2524 = vsel %vm1275, %v2522, %v2523
      %v2525 = vrot.slane %v2523, 4
      %v2526 = vrot.slane %v2033, 5
      %v2527 = vsel %vm1275, %v2525, %v2526
      %v2528 = vrot.slane %v2434, 5
      %v2529 = vrot.slane %v2528, 4
      %v2530 = vrot.slane %v2008, 5
      %v2531 = vsel %vm1275, %v2529, %v2530
      %v2532 = vrot.slane %v2530, 4
      %v2533 = vrot.slane %v2034, 5
      %v2534 = vsel %vm1275, %v2532, %v2533
      %v2535 = vrot.slane %v2435, 5
      %v2536 = vrot.slane %v2535, 4
      %v2537 = vrot.slane %v2010, 5
      %v2538 = vsel %vm1275, %v2536, %v2537
      %v2539 = vrot.slane %v2537, 4
      %v2540 = vrot.slane %v2035, 5
      %v2541 = vsel %vm1275, %v2539, %v2540
      %v2542 = vrot.slane %v2436, 5
      %v2543 = vrot.slane %v2542, 4
      %v2544 = vrot.slane %v2012, 5
      %v2545 = vsel %vm1275, %v2543, %v2544
      %v2546 = vrot.slane %v2544, 4
      %v2547 = vrot.slane %v2036, 5
      %v2548 = vsel %vm1275, %v2546, %v2547
      %v2549 = vrot.slane %v2437, 5
      %v2550 = vrot.slane %v2549, 4
      %v2551 = vrot.slane %v2014, 5
      %v2552 = vsel %vm1275, %v2550, %v2551
      %v2553 = vrot.slane %v2551, 4
      %v2554 = vrot.slane %v2037, 5
      %v2555 = vsel %vm1275, %v2553, %v2554
      %v2556 = vrot.slane %v2438, 5
      %v2557 = vrot.slane %v2556, 4
      %v2558 = vrot.slane %v2016, 5
      %v2559 = vsel %vm1275, %v2557, %v2558
      %v2560 = vrot.slane %v2558, 4
      %v2561 = vrot.slane %v2038, 5
      %v2562 = vsel %vm1275, %v2560, %v2561
      %v2563 = vrot.slane %v2439, 5
      %v2564 = vrot.slane %v2563, 4
      %v2565 = vrot.slane %v2018, 5
      %v2566 = vsel %vm1275, %v2564, %v2565
      %v2567 = vrot.slane %v2565, 4
      %v2568 = vrot.slane %v2039, 5
      %v2569 = vsel %vm1275, %v2567, %v2568
      %v2570 = vrot.slane %v2440, 5
      %v2571 = vrot.slane %v2570, 4
      %v2572 = vrot.slane %v2020, 5
      %v2573 = vsel %vm1275, %v2571, %v2572
      %v2574 = vrot.slane %v2572, 4
      %v2575 = vrot.slane %v2040, 5
      %v2576 = vsel %vm1275, %v2574, %v2575
      %v2577 = vrot.slane %v2441, 5
      %v2578 = vrot.slane %v2577, 4
      %v2579 = vrot.slane %v2022, 5
      %v2580 = vsel %vm1275, %v2578, %v2579
      %v2581 = vrot.slane %v2579, 4
      %v2582 = vrot.slane %v2041, 5
      %v2583 = vsel %vm1275, %v2581, %v2582
      %v2584 = vrot.slane %v2442, 5
      %v2585 = vrot.slane %v2584, 4
      %v2586 = vrot.slane %v2024, 5
      %v2587 = vsel %vm1275, %v2585, %v2586
      %v2588 = vrot.slane %v2586, 4
      %v2589 = vrot.slane %v2042, 5
      %v2590 = vsel %vm1275, %v2588, %v2589
      %v2591 = vrot.slane %v2443, 5
      %v2592 = vrot.slane %v2591, 4
      %v2593 = vrot.slane %v2026, 5
      %v2594 = vsel %vm1275, %v2592, %v2593
      %v2595 = vrot.slane %v2593, 4
      %v2596 = vrot.slane %v2043, 5
      %v2597 = vsel %vm1275, %v2595, %v2596
      %v2598 = vrot.slane %v2444, 5
      %v2599 = vrot.slane %v2598, 4
      %v2600 = vrot.slane %v2028, 5
      %v2601 = vsel %vm1275, %v2599, %v2600
      %v2602 = vrot.slane %v2600, 4
      %v2603 = vrot.slane %v2044, 5
      %v2604 = vsel %vm1275, %v2602, %v2603
      %v2621 = vunpack.c.l.b16 %v774
      %v2622 = vunpack.c.l.b16 %v775
      %v2623 = vunpack.c.l.b16 %v776
      %v2624 = vunpack.c.l.b16 %v777
      %v2625 = vunpack.c.l.b16 %v778
      %v2626 = vunpack.c.l.b16 %v779
      %v2627 = vunpack.c.l.b16 %v780
      %v2628 = vunpack.c.l.b16 %v781
      %v2629 = vunpack.c.l.b16 %v782
      %v2630 = vunpack.c.l.b16 %v783
      %v2631 = vunpack.c.l.b16 %v784
      %v2632 = vunpack.c.l.b16 %v785
      %v2633 = vunpack.c.l.b16 %v786
      %v2634 = vunpack.c.l.b16 %v787
      %v2635 = vunpack.c.l.b16 %v788
      %v2636 = vunpack.c.l.b16 %v789
      %v2637 = vunpack.c.l.b16 %v790
      %v2638 = vunpack.c.l.b16 %v791
      %v2639 = vunpack.c.l.b16 %v792
      %v2640 = vunpack.c.l.b16 %v793
      %v2641 = vunpack.c.l.b16 %v794
      %v2642 = vunpack.c.l.b16 %v795
      %v2643 = vunpack.c.l.b16 %v796
      %v2644 = vunpack.c.l.b16 %v797
      %v2645 = vunpack.c.l.b16 %v798
      %v2646 = vunpack.c.l.b16 %v799
      %v2647 = vunpack.c.l.b16 %v800
      %v2648 = vunpack.c.l.b16 %v801
      %v2649 = vunpack.c.l.b16 %v802
      %v2650 = vunpack.c.l.b16 %v803
      %v2651 = vunpack.c.l.b16 %v804
      %v2652 = vunpack.c.l.b16 %v805
      %v2653 = vpack.c.b16 %v2622, %v2621
      %v2654 = vpack.c.b16 %v2624, %v2623
      %v2655 = vpack.c.b16 %v2626, %v2625
      %v2656 = vpack.c.b16 %v2628, %v2627
      %v2657 = vpack.c.b16 %v2630, %v2629
      %v2658 = vpack.c.b16 %v2632, %v2631
      %v2659 = vpack.c.b16 %v2634, %v2633
      %v2660 = vpack.c.b16 %v2636, %v2635
      %v2661 = vpack.c.b16 %v2638, %v2637
      %v2662 = vpack.c.b16 %v2640, %v2639
      %v2663 = vpack.c.b16 %v2642, %v2641
      %v2664 = vpack.c.b16 %v2644, %v2643
      %v2665 = vpack.c.b16 %v2646, %v2645
      %v2666 = vpack.c.b16 %v2648, %v2647
      %v2667 = vpack.c.b16 %v2650, %v2649
      %v2668 = vpack.c.b16 %v2652, %v2651
      %v2669 = vunpack.c.l.b16 %v838
      %v2670 = vunpack.c.l.b16 %v848
      %v2671 = vunpack.c.l.b16 %v862
      %v2672 = vunpack.c.l.b16 %v872
      %v2673 = vunpack.c.l.b16 %v886
      %v2674 = vunpack.c.l.b16 %v896
      %v2675 = vunpack.c.l.b16 %v910
      %v2676 = vunpack.c.l.b16 %v920
      %v2677 = vunpack.c.l.b16 %v934
      %v2678 = vunpack.c.l.b16 %v944
      %v2679 = vunpack.c.l.b16 %v958
      %v2680 = vunpack.c.l.b16 %v968
      %v2681 = vunpack.c.l.b16 %v982
      %v2682 = vunpack.c.l.b16 %v992
      %v2683 = vunpack.c.l.b16 %v1006
      %v2684 = vunpack.c.l.b16 %v1016
      %v2685 = vunpack.c.l.b16 %v1030
      %v2686 = vunpack.c.l.b16 %v1040
      %v2687 = vunpack.c.l.b16 %v1054
      %v2688 = vunpack.c.l.b16 %v1064
      %v2689 = vunpack.c.l.b16 %v1078
      %v2690 = vunpack.c.l.b16 %v1088
      %v2691 = vunpack.c.l.b16 %v1102
      %v2692 = vunpack.c.l.b16 %v1112
      %v2693 = vunpack.c.l.b16 %v1126
      %v2694 = vunpack.c.l.b16 %v1136
      %v2695 = vunpack.c.l.b16 %v1150
      %v2696 = vunpack.c.l.b16 %v1160
      %v2697 = vunpack.c.l.b16 %v1174
      %v2698 = vunpack.c.l.b16 %v1184
      %v2699 = vunpack.c.l.b16 %v1198
      %v2700 = vunpack.c.l.b16 %v1208
      %v2701 = vpack.c.b16 %v2670, %v2669
      %v2702 = vpack.c.b16 %v2672, %v2671
      %v2703 = vpack.c.b16 %v2674, %v2673
      %v2704 = vpack.c.b16 %v2676, %v2675
      %v2705 = vpack.c.b16 %v2678, %v2677
      %v2706 = vpack.c.b16 %v2680, %v2679
      %v2707 = vpack.c.b16 %v2682, %v2681
      %v2708 = vpack.c.b16 %v2684, %v2683
      %v2709 = vpack.c.b16 %v2686, %v2685
      %v2710 = vpack.c.b16 %v2688, %v2687
      %v2711 = vpack.c.b16 %v2690, %v2689
      %v2712 = vpack.c.b16 %v2692, %v2691
      %v2713 = vpack.c.b16 %v2694, %v2693
      %v2714 = vpack.c.b16 %v2696, %v2695
      %v2715 = vpack.c.b16 %v2698, %v2697
      %v2716 = vpack.c.b16 %v2700, %v2699
      %2717 = vrot.lane.b32.xlu0 %v2701, 4
      %v2718 = vpop.permute.xlu0 %2717
      %2719 = vrot.lane.b32.xlu0 %v2702, 4
      %v2720 = vpop.permute.xlu0 %2719
      %2721 = vrot.lane.b32.xlu0 %v2703, 4
      %v2722 = vpop.permute.xlu0 %2721
      %2723 = vrot.lane.b32.xlu0 %v2704, 4
      %v2724 = vpop.permute.xlu0 %2723
      %2725 = vrot.lane.b32.xlu0 %v2705, 4
      %v2726 = vpop.permute.xlu0 %2725
      %2727 = vrot.lane.b32.xlu0 %v2706, 4
      %v2728 = vpop.permute.xlu0 %2727
      %2729 = vrot.lane.b32.xlu0 %v2707, 4
      %v2730 = vpop.permute.xlu0 %2729
      %2731 = vrot.lane.b32.xlu0 %v2708, 4
      %v2732 = vpop.permute.xlu0 %2731
      %2733 = vrot.lane.b32.xlu0 %v2709, 4
      %v2734 = vpop.permute.xlu0 %2733
      %2735 = vrot.lane.b32.xlu0 %v2710, 4
      %v2736 = vpop.permute.xlu0 %2735
      %2737 = vrot.lane.b32.xlu0 %v2711, 4
      %v2738 = vpop.permute.xlu0 %2737
      %2739 = vrot.lane.b32.xlu0 %v2712, 4
      %v2740 = vpop.permute.xlu0 %2739
      %2741 = vrot.lane.b32.xlu0 %v2713, 4
      %v2742 = vpop.permute.xlu0 %2741
      %2743 = vrot.lane.b32.xlu0 %v2714, 4
      %v2744 = vpop.permute.xlu0 %2743
      %2745 = vrot.lane.b32.xlu0 %v2715, 4
      %v2746 = vpop.permute.xlu0 %2745
      %2747 = vrot.lane.b32.xlu0 %v2716, 4
      %v2748 = vpop.permute.xlu0 %2747
      %v2749 = vunpack.c.l.b16 %v1279
      %v2750 = vunpack.c.l.b16 %v1282
      %v2751 = vunpack.c.l.b16 %v1286
      %v2752 = vunpack.c.l.b16 %v1289
      %v2753 = vunpack.c.l.b16 %v1293
      %v2754 = vunpack.c.l.b16 %v1296
      %v2755 = vunpack.c.l.b16 %v1300
      %v2756 = vunpack.c.l.b16 %v1303
      %v2757 = vunpack.c.l.b16 %v1307
      %v2758 = vunpack.c.l.b16 %v1310
      %v2759 = vunpack.c.l.b16 %v1314
      %v2760 = vunpack.c.l.b16 %v1317
      %v2761 = vunpack.c.l.b16 %v1321
      %v2762 = vunpack.c.l.b16 %v1324
      %v2763 = vunpack.c.l.b16 %v1328
      %v2764 = vunpack.c.l.b16 %v1331
      %v2765 = vunpack.c.l.b16 %v1335
      %v2766 = vunpack.c.l.b16 %v1338
      %v2767 = vunpack.c.l.b16 %v1342
      %v2768 = vunpack.c.l.b16 %v1345
      %v2769 = vunpack.c.l.b16 %v1349
      %v2770 = vunpack.c.l.b16 %v1352
      %v2771 = vunpack.c.l.b16 %v1356
      %v2772 = vunpack.c.l.b16 %v1359
      %v2773 = vunpack.c.l.b16 %v1363
      %v2774 = vunpack.c.l.b16 %v1366
      %v2775 = vunpack.c.l.b16 %v1370
      %v2776 = vunpack.c.l.b16 %v1373
      %v2777 = vunpack.c.l.b16 %v1377
      %v2778 = vunpack.c.l.b16 %v1380
      %v2779 = vunpack.c.l.b16 %v1384
      %v2780 = vunpack.c.l.b16 %v1387
      %v2781 = vpack.c.b16 %v2750, %v2749
      %v2782 = vpack.c.b16 %v2752, %v2751
      %v2783 = vpack.c.b16 %v2754, %v2753
      %v2784 = vpack.c.b16 %v2756, %v2755
      %v2785 = vpack.c.b16 %v2758, %v2757
      %v2786 = vpack.c.b16 %v2760, %v2759
      %v2787 = vpack.c.b16 %v2762, %v2761
      %v2788 = vpack.c.b16 %v2764, %v2763
      %v2789 = vpack.c.b16 %v2766, %v2765
      %v2790 = vpack.c.b16 %v2768, %v2767
      %v2791 = vpack.c.b16 %v2770, %v2769
      %v2792 = vpack.c.b16 %v2772, %v2771
      %v2793 = vpack.c.b16 %v2774, %v2773
      %v2794 = vpack.c.b16 %v2776, %v2775
      %v2795 = vpack.c.b16 %v2778, %v2777
      %v2796 = vpack.c.b16 %v2780, %v2779
      %2797 = vrot.lane.b32.xlu0 %v2781, 8
      %v2798 = vpop.permute.xlu0 %2797
      %2799 = vrot.lane.b32.xlu0 %v2782, 8
      %v2800 = vpop.permute.xlu0 %2799
      %2801 = vrot.lane.b32.xlu0 %v2783, 8
      %v2802 = vpop.permute.xlu0 %2801
      %2803 = vrot.lane.b32.xlu0 %v2784, 8
      %v2804 = vpop.permute.xlu0 %2803
      %2805 = vrot.lane.b32.xlu0 %v2785, 8
      %v2806 = vpop.permute.xlu0 %2805
      %2807 = vrot.lane.b32.xlu0 %v2786, 8
      %v2808 = vpop.permute.xlu0 %2807
      %2809 = vrot.lane.b32.xlu0 %v2787, 8
      %v2810 = vpop.permute.xlu0 %2809
      %2811 = vrot.lane.b32.xlu0 %v2788, 8
      %v2812 = vpop.permute.xlu0 %2811
      %2813 = vrot.lane.b32.xlu0 %v2789, 8
      %v2814 = vpop.permute.xlu0 %2813
      %2815 = vrot.lane.b32.xlu0 %v2790, 8
      %v2816 = vpop.permute.xlu0 %2815
      %2817 = vrot.lane.b32.xlu0 %v2791, 8
      %v2818 = vpop.permute.xlu0 %2817
      %2819 = vrot.lane.b32.xlu0 %v2792, 8
      %v2820 = vpop.permute.xlu0 %2819
      %2821 = vrot.lane.b32.xlu0 %v2793, 8
      %v2822 = vpop.permute.xlu0 %2821
      %2823 = vrot.lane.b32.xlu0 %v2794, 8
      %v2824 = vpop.permute.xlu0 %2823
      %2825 = vrot.lane.b32.xlu0 %v2795, 8
      %v2826 = vpop.permute.xlu0 %2825
      %2827 = vrot.lane.b32.xlu0 %v2796, 8
      %v2828 = vpop.permute.xlu0 %2827
      %v2845 = vunpack.c.l.b16 %v1388
      %v2846 = vunpack.c.l.b16 %v1389
      %v2847 = vunpack.c.l.b16 %v1390
      %v2848 = vunpack.c.l.b16 %v1391
      %v2849 = vunpack.c.l.b16 %v1392
      %v2850 = vunpack.c.l.b16 %v1393
      %v2851 = vunpack.c.l.b16 %v1394
      %v2852 = vunpack.c.l.b16 %v1395
      %v2853 = vunpack.c.l.b16 %v1396
      %v2854 = vunpack.c.l.b16 %v1397
      %v2855 = vunpack.c.l.b16 %v1398
      %v2856 = vunpack.c.l.b16 %v1399
      %v2857 = vunpack.c.l.b16 %v1400
      %v2858 = vunpack.c.l.b16 %v1401
      %v2859 = vunpack.c.l.b16 %v1402
      %v2860 = vunpack.c.l.b16 %v1403
      %v2861 = vunpack.c.l.b16 %v1404
      %v2862 = vunpack.c.l.b16 %v1405
      %v2863 = vunpack.c.l.b16 %v1406
      %v2864 = vunpack.c.l.b16 %v1407
      %v2865 = vunpack.c.l.b16 %v1408
      %v2866 = vunpack.c.l.b16 %v1409
      %v2867 = vunpack.c.l.b16 %v1410
      %v2868 = vunpack.c.l.b16 %v1411
      %v2869 = vunpack.c.l.b16 %v1412
      %v2870 = vunpack.c.l.b16 %v1413
      %v2871 = vunpack.c.l.b16 %v1414
      %v2872 = vunpack.c.l.b16 %v1415
      %v2873 = vunpack.c.l.b16 %v1416
      %v2874 = vunpack.c.l.b16 %v1417
      %v2875 = vunpack.c.l.b16 %v1418
      %v2876 = vunpack.c.l.b16 %v1419
      %v2877 = vpack.c.b16 %v2846, %v2845
      %v2878 = vpack.c.b16 %v2848, %v2847
      %v2879 = vpack.c.b16 %v2850, %v2849
      %v2880 = vpack.c.b16 %v2852, %v2851
      %v2881 = vpack.c.b16 %v2854, %v2853
      %v2882 = vpack.c.b16 %v2856, %v2855
      %v2883 = vpack.c.b16 %v2858, %v2857
      %v2884 = vpack.c.b16 %v2860, %v2859
      %v2885 = vpack.c.b16 %v2862, %v2861
      %v2886 = vpack.c.b16 %v2864, %v2863
      %v2887 = vpack.c.b16 %v2866, %v2865
      %v2888 = vpack.c.b16 %v2868, %v2867
      %v2889 = vpack.c.b16 %v2870, %v2869
      %v2890 = vpack.c.b16 %v2872, %v2871
      %v2891 = vpack.c.b16 %v2874, %v2873
      %v2892 = vpack.c.b16 %v2876, %v2875
      %2893 = vrot.lane.b32.xlu0 %v2877, 12
      %v2894 = vpop.permute.xlu0 %2893
      %2895 = vrot.lane.b32.xlu0 %v2878, 12
      %v2896 = vpop.permute.xlu0 %2895
      %2897 = vrot.lane.b32.xlu0 %v2879, 12
      %v2898 = vpop.permute.xlu0 %2897
      %2899 = vrot.lane.b32.xlu0 %v2880, 12
      %v2900 = vpop.permute.xlu0 %2899
      %2901 = vrot.lane.b32.xlu0 %v2881, 12
      %v2902 = vpop.permute.xlu0 %2901
      %2903 = vrot.lane.b32.xlu0 %v2882, 12
      %v2904 = vpop.permute.xlu0 %2903
      %2905 = vrot.lane.b32.xlu0 %v2883, 12
      %v2906 = vpop.permute.xlu0 %2905
      %2907 = vrot.lane.b32.xlu0 %v2884, 12
      %v2908 = vpop.permute.xlu0 %2907
      %2909 = vrot.lane.b32.xlu0 %v2885, 12
      %v2910 = vpop.permute.xlu0 %2909
      %2911 = vrot.lane.b32.xlu0 %v2886, 12
      %v2912 = vpop.permute.xlu0 %2911
      %2913 = vrot.lane.b32.xlu0 %v2887, 12
      %v2914 = vpop.permute.xlu0 %2913
      %2915 = vrot.lane.b32.xlu0 %v2888, 12
      %v2916 = vpop.permute.xlu0 %2915
      %2917 = vrot.lane.b32.xlu0 %v2889, 12
      %v2918 = vpop.permute.xlu0 %2917
      %2919 = vrot.lane.b32.xlu0 %v2890, 12
      %v2920 = vpop.permute.xlu0 %2919
      %2921 = vrot.lane.b32.xlu0 %v2891, 12
      %v2922 = vpop.permute.xlu0 %2921
      %2923 = vrot.lane.b32.xlu0 %v2892, 12
      %v2924 = vpop.permute.xlu0 %2923
      %v2925 = vunpack.c.l.b16 %v1449
      %v2926 = vunpack.c.l.b16 %v1459
      %v2927 = vunpack.c.l.b16 %v1473
      %v2928 = vunpack.c.l.b16 %v1483
      %v2929 = vunpack.c.l.b16 %v1497
      %v2930 = vunpack.c.l.b16 %v1507
      %v2931 = vunpack.c.l.b16 %v1521
      %v2932 = vunpack.c.l.b16 %v1531
      %v2933 = vunpack.c.l.b16 %v1545
      %v2934 = vunpack.c.l.b16 %v1555
      %v2935 = vunpack.c.l.b16 %v1569
      %v2936 = vunpack.c.l.b16 %v1579
      %v2937 = vunpack.c.l.b16 %v1593
      %v2938 = vunpack.c.l.b16 %v1603
      %v2939 = vunpack.c.l.b16 %v1617
      %v2940 = vunpack.c.l.b16 %v1627
      %v2941 = vunpack.c.l.b16 %v1641
      %v2942 = vunpack.c.l.b16 %v1651
      %v2943 = vunpack.c.l.b16 %v1665
      %v2944 = vunpack.c.l.b16 %v1675
      %v2945 = vunpack.c.l.b16 %v1689
      %v2946 = vunpack.c.l.b16 %v1699
      %v2947 = vunpack.c.l.b16 %v1713
      %v2948 = vunpack.c.l.b16 %v1723
      %v2949 = vunpack.c.l.b16 %v1737
      %v2950 = vunpack.c.l.b16 %v1747
      %v2951 = vunpack.c.l.b16 %v1761
      %v2952 = vunpack.c.l.b16 %v1771
      %v2953 = vunpack.c.l.b16 %v1785
      %v2954 = vunpack.c.l.b16 %v1795
      %v2955 = vunpack.c.l.b16 %v1809
      %v2956 = vunpack.c.l.b16 %v1819
      %v2957 = vpack.c.b16 %v2926, %v2925
      %v2958 = vpack.c.b16 %v2928, %v2927
      %v2959 = vpack.c.b16 %v2930, %v2929
      %v2960 = vpack.c.b16 %v2932, %v2931
      %v2961 = vpack.c.b16 %v2934, %v2933
      %v2962 = vpack.c.b16 %v2936, %v2935
      %v2963 = vpack.c.b16 %v2938, %v2937
      %v2964 = vpack.c.b16 %v2940, %v2939
      %v2965 = vpack.c.b16 %v2942, %v2941
      %v2966 = vpack.c.b16 %v2944, %v2943
      %v2967 = vpack.c.b16 %v2946, %v2945
      %v2968 = vpack.c.b16 %v2948, %v2947
      %v2969 = vpack.c.b16 %v2950, %v2949
      %v2970 = vpack.c.b16 %v2952, %v2951
      %v2971 = vpack.c.b16 %v2954, %v2953
      %v2972 = vpack.c.b16 %v2956, %v2955
      %2973 = vrot.lane.b32.xlu0 %v2957, 16
      %v2974 = vpop.permute.xlu0 %2973
      %2975 = vrot.lane.b32.xlu0 %v2958, 16
      %v2976 = vpop.permute.xlu0 %2975
      %2977 = vrot.lane.b32.xlu0 %v2959, 16
      %v2978 = vpop.permute.xlu0 %2977
      %2979 = vrot.lane.b32.xlu0 %v2960, 16
      %v2980 = vpop.permute.xlu0 %2979
      %2981 = vrot.lane.b32.xlu0 %v2961, 16
      %v2982 = vpop.permute.xlu0 %2981
      %2983 = vrot.lane.b32.xlu0 %v2962, 16
      %v2984 = vpop.permute.xlu0 %2983
      %2985 = vrot.lane.b32.xlu0 %v2963, 16
      %v2986 = vpop.permute.xlu0 %2985
      %2987 = vrot.lane.b32.xlu0 %v2964, 16
      %v2988 = vpop.permute.xlu0 %2987
      %2989 = vrot.lane.b32.xlu0 %v2965, 16
      %v2990 = vpop.permute.xlu0 %2989
      %2991 = vrot.lane.b32.xlu0 %v2966, 16
      %v2992 = vpop.permute.xlu0 %2991
      %2993 = vrot.lane.b32.xlu0 %v2967, 16
      %v2994 = vpop.permute.xlu0 %2993
      %2995 = vrot.lane.b32.xlu0 %v2968, 16
      %v2996 = vpop.permute.xlu0 %2995
      %2997 = vrot.lane.b32.xlu0 %v2969, 16
      %v2998 = vpop.permute.xlu0 %2997
      %2999 = vrot.lane.b32.xlu0 %v2970, 16
      %v3000 = vpop.permute.xlu0 %2999
      %3001 = vrot.lane.b32.xlu0 %v2971, 16
      %v3002 = vpop.permute.xlu0 %3001
      %3003 = vrot.lane.b32.xlu0 %v2972, 16
      %v3004 = vpop.permute.xlu0 %3003
      %v3005 = vunpack.c.l.b16 %v1887
      %v3006 = vunpack.c.l.b16 %v1890
      %v3007 = vunpack.c.l.b16 %v1894
      %v3008 = vunpack.c.l.b16 %v1897
      %v3009 = vunpack.c.l.b16 %v1901
      %v3010 = vunpack.c.l.b16 %v1904
      %v3011 = vunpack.c.l.b16 %v1908
      %v3012 = vunpack.c.l.b16 %v1911
      %v3013 = vunpack.c.l.b16 %v1915
      %v3014 = vunpack.c.l.b16 %v1918
      %v3015 = vunpack.c.l.b16 %v1922
      %v3016 = vunpack.c.l.b16 %v1925
      %v3017 = vunpack.c.l.b16 %v1929
      %v3018 = vunpack.c.l.b16 %v1932
      %v3019 = vunpack.c.l.b16 %v1936
      %v3020 = vunpack.c.l.b16 %v1939
      %v3021 = vunpack.c.l.b16 %v1943
      %v3022 = vunpack.c.l.b16 %v1946
      %v3023 = vunpack.c.l.b16 %v1950
      %v3024 = vunpack.c.l.b16 %v1953
      %v3025 = vunpack.c.l.b16 %v1957
      %v3026 = vunpack.c.l.b16 %v1960
      %v3027 = vunpack.c.l.b16 %v1964
      %v3028 = vunpack.c.l.b16 %v1967
      %v3029 = vunpack.c.l.b16 %v1971
      %v3030 = vunpack.c.l.b16 %v1974
      %v3031 = vunpack.c.l.b16 %v1978
      %v3032 = vunpack.c.l.b16 %v1981
      %v3033 = vunpack.c.l.b16 %v1985
      %v3034 = vunpack.c.l.b16 %v1988
      %v3035 = vunpack.c.l.b16 %v1992
      %v3036 = vunpack.c.l.b16 %v1995
      %v3037 = vpack.c.b16 %v3006, %v3005
      %v3038 = vpack.c.b16 %v3008, %v3007
      %v3039 = vpack.c.b16 %v3010, %v3009
      %v3040 = vpack.c.b16 %v3012, %v3011
      %v3041 = vpack.c.b16 %v3014, %v3013
      %v3042 = vpack.c.b16 %v3016, %v3015
      %v3043 = vpack.c.b16 %v3018, %v3017
      %v3044 = vpack.c.b16 %v3020, %v3019
      %v3045 = vpack.c.b16 %v3022, %v3021
      %v3046 = vpack.c.b16 %v3024, %v3023
      %v3047 = vpack.c.b16 %v3026, %v3025
      %v3048 = vpack.c.b16 %v3028, %v3027
      %v3049 = vpack.c.b16 %v3030, %v3029
      %v3050 = vpack.c.b16 %v3032, %v3031
      %v3051 = vpack.c.b16 %v3034, %v3033
      %v3052 = vpack.c.b16 %v3036, %v3035
      %3053 = vrot.lane.b32.xlu0 %v3037, 20
      %v3054 = vpop.permute.xlu0 %3053
      %3055 = vrot.lane.b32.xlu0 %v3038, 20
      %v3056 = vpop.permute.xlu0 %3055
      %3057 = vrot.lane.b32.xlu0 %v3039, 20
      %v3058 = vpop.permute.xlu0 %3057
      %3059 = vrot.lane.b32.xlu0 %v3040, 20
      %v3060 = vpop.permute.xlu0 %3059
      %3061 = vrot.lane.b32.xlu0 %v3041, 20
      %v3062 = vpop.permute.xlu0 %3061
      %3063 = vrot.lane.b32.xlu0 %v3042, 20
      %v3064 = vpop.permute.xlu0 %3063
      %3065 = vrot.lane.b32.xlu0 %v3043, 20
      %v3066 = vpop.permute.xlu0 %3065
      %3067 = vrot.lane.b32.xlu0 %v3044, 20
      %v3068 = vpop.permute.xlu0 %3067
      %3069 = vrot.lane.b32.xlu0 %v3045, 20
      %v3070 = vpop.permute.xlu0 %3069
      %3071 = vrot.lane.b32.xlu0 %v3046, 20
      %v3072 = vpop.permute.xlu0 %3071
      %3073 = vrot.lane.b32.xlu0 %v3047, 20
      %v3074 = vpop.permute.xlu0 %3073
      %3075 = vrot.lane.b32.xlu0 %v3048, 20
      %v3076 = vpop.permute.xlu0 %3075
      %3077 = vrot.lane.b32.xlu0 %v3049, 20
      %v3078 = vpop.permute.xlu0 %3077
      %3079 = vrot.lane.b32.xlu0 %v3050, 20
      %v3080 = vpop.permute.xlu0 %3079
      %3081 = vrot.lane.b32.xlu0 %v3051, 20
      %v3082 = vpop.permute.xlu0 %3081
      %3083 = vrot.lane.b32.xlu0 %v3052, 20
      %v3084 = vpop.permute.xlu0 %3083
      %v3101 = vunpack.c.l.b16 %v1997
      %v3102 = vunpack.c.l.b16 %v1998
      %v3103 = vunpack.c.l.b16 %v1999
      %v3104 = vunpack.c.l.b16 %v2000
      %v3105 = vunpack.c.l.b16 %v2001
      %v3106 = vunpack.c.l.b16 %v2002
      %v3107 = vunpack.c.l.b16 %v2003
      %v3108 = vunpack.c.l.b16 %v2004
      %v3109 = vunpack.c.l.b16 %v2005
      %v3110 = vunpack.c.l.b16 %v2006
      %v3111 = vunpack.c.l.b16 %v2007
      %v3112 = vunpack.c.l.b16 %v2008
      %v3113 = vunpack.c.l.b16 %v2009
      %v3114 = vunpack.c.l.b16 %v2010
      %v3115 = vunpack.c.l.b16 %v2011
      %v3116 = vunpack.c.l.b16 %v2012
      %v3117 = vunpack.c.l.b16 %v2013
      %v3118 = vunpack.c.l.b16 %v2014
      %v3119 = vunpack.c.l.b16 %v2015
      %v3120 = vunpack.c.l.b16 %v2016
      %v3121 = vunpack.c.l.b16 %v2017
      %v3122 = vunpack.c.l.b16 %v2018
      %v3123 = vunpack.c.l.b16 %v2019
      %v3124 = vunpack.c.l.b16 %v2020
      %v3125 = vunpack.c.l.b16 %v2021
      %v3126 = vunpack.c.l.b16 %v2022
      %v3127 = vunpack.c.l.b16 %v2023
      %v3128 = vunpack.c.l.b16 %v2024
      %v3129 = vunpack.c.l.b16 %v2025
      %v3130 = vunpack.c.l.b16 %v2026
      %v3131 = vunpack.c.l.b16 %v2027
      %v3132 = vunpack.c.l.b16 %v2028
      %v3133 = vpack.c.b16 %v3102, %v3101
      %v3134 = vpack.c.b16 %v3104, %v3103
      %v3135 = vpack.c.b16 %v3106, %v3105
      %v3136 = vpack.c.b16 %v3108, %v3107
      %v3137 = vpack.c.b16 %v3110, %v3109
      %v3138 = vpack.c.b16 %v3112, %v3111
      %v3139 = vpack.c.b16 %v3114, %v3113
      %v3140 = vpack.c.b16 %v3116, %v3115
      %v3141 = vpack.c.b16 %v3118, %v3117
      %v3142 = vpack.c.b16 %v3120, %v3119
      %v3143 = vpack.c.b16 %v3122, %v3121
      %v3144 = vpack.c.b16 %v3124, %v3123
      %v3145 = vpack.c.b16 %v3126, %v3125
      %v3146 = vpack.c.b16 %v3128, %v3127
      %v3147 = vpack.c.b16 %v3130, %v3129
      %v3148 = vpack.c.b16 %v3132, %v3131
      %3149 = vrot.lane.b32.xlu0 %v3133, 24
      %v3150 = vpop.permute.xlu0 %3149
      %3151 = vrot.lane.b32.xlu0 %v3134, 24
      %v3152 = vpop.permute.xlu0 %3151
      %3153 = vrot.lane.b32.xlu0 %v3135, 24
      %v3154 = vpop.permute.xlu0 %3153
      %3155 = vrot.lane.b32.xlu0 %v3136, 24
      %v3156 = vpop.permute.xlu0 %3155
      %3157 = vrot.lane.b32.xlu0 %v3137, 24
      %v3158 = vpop.permute.xlu0 %3157
      %3159 = vrot.lane.b32.xlu0 %v3138, 24
      %v3160 = vpop.permute.xlu0 %3159
      %3161 = vrot.lane.b32.xlu0 %v3139, 24
      %v3162 = vpop.permute.xlu0 %3161
      %3163 = vrot.lane.b32.xlu0 %v3140, 24
      %v3164 = vpop.permute.xlu0 %3163
      %3165 = vrot.lane.b32.xlu0 %v3141, 24
      %v3166 = vpop.permute.xlu0 %3165
      %3167 = vrot.lane.b32.xlu0 %v3142, 24
      %v3168 = vpop.permute.xlu0 %3167
      %3169 = vrot.lane.b32.xlu0 %v3143, 24
      %v3170 = vpop.permute.xlu0 %3169
      %3171 = vrot.lane.b32.xlu0 %v3144, 24
      %v3172 = vpop.permute.xlu0 %3171
      %3173 = vrot.lane.b32.xlu0 %v3145, 24
      %v3174 = vpop.permute.xlu0 %3173
      %3175 = vrot.lane.b32.xlu0 %v3146, 24
      %v3176 = vpop.permute.xlu0 %3175
      %3177 = vrot.lane.b32.xlu0 %v3147, 24
      %v3178 = vpop.permute.xlu0 %3177
      %3179 = vrot.lane.b32.xlu0 %v3148, 24
      %v3180 = vpop.permute.xlu0 %3179
      %v3181 = vunpack.c.l.b16 %v2058
      %v3182 = vunpack.c.l.b16 %v2068
      %v3183 = vunpack.c.l.b16 %v2082
      %v3184 = vunpack.c.l.b16 %v2092
      %v3185 = vunpack.c.l.b16 %v2106
      %v3186 = vunpack.c.l.b16 %v2116
      %v3187 = vunpack.c.l.b16 %v2130
      %v3188 = vunpack.c.l.b16 %v2140
      %v3189 = vunpack.c.l.b16 %v2154
      %v3190 = vunpack.c.l.b16 %v2164
      %v3191 = vunpack.c.l.b16 %v2178
      %v3192 = vunpack.c.l.b16 %v2188
      %v3193 = vunpack.c.l.b16 %v2202
      %v3194 = vunpack.c.l.b16 %v2212
      %v3195 = vunpack.c.l.b16 %v2226
      %v3196 = vunpack.c.l.b16 %v2236
      %v3197 = vunpack.c.l.b16 %v2250
      %v3198 = vunpack.c.l.b16 %v2260
      %v3199 = vunpack.c.l.b16 %v2274
      %v3200 = vunpack.c.l.b16 %v2284
      %v3201 = vunpack.c.l.b16 %v2298
      %v3202 = vunpack.c.l.b16 %v2308
      %v3203 = vunpack.c.l.b16 %v2322
      %v3204 = vunpack.c.l.b16 %v2332
      %v3205 = vunpack.c.l.b16 %v2346
      %v3206 = vunpack.c.l.b16 %v2356
      %v3207 = vunpack.c.l.b16 %v2370
      %v3208 = vunpack.c.l.b16 %v2380
      %v3209 = vunpack.c.l.b16 %v2394
      %v3210 = vunpack.c.l.b16 %v2404
      %v3211 = vunpack.c.l.b16 %v2418
      %v3212 = vunpack.c.l.b16 %v2428
      %v3213 = vpack.c.b16 %v3182, %v3181
      %v3214 = vpack.c.b16 %v3184, %v3183
      %v3215 = vpack.c.b16 %v3186, %v3185
      %v3216 = vpack.c.b16 %v3188, %v3187
      %v3217 = vpack.c.b16 %v3190, %v3189
      %v3218 = vpack.c.b16 %v3192, %v3191
      %v3219 = vpack.c.b16 %v3194, %v3193
      %v3220 = vpack.c.b16 %v3196, %v3195
      %v3221 = vpack.c.b16 %v3198, %v3197
      %v3222 = vpack.c.b16 %v3200, %v3199
      %v3223 = vpack.c.b16 %v3202, %v3201
      %v3224 = vpack.c.b16 %v3204, %v3203
      %v3225 = vpack.c.b16 %v3206, %v3205
      %v3226 = vpack.c.b16 %v3208, %v3207
      %v3227 = vpack.c.b16 %v3210, %v3209
      %v3228 = vpack.c.b16 %v3212, %v3211
      %3229 = vrot.lane.b32.xlu0 %v3213, 28
      %v3230 = vpop.permute.xlu0 %3229
      %3231 = vrot.lane.b32.xlu0 %v3214, 28
      %v3232 = vpop.permute.xlu0 %3231
      %3233 = vrot.lane.b32.xlu0 %v3215, 28
      %v3234 = vpop.permute.xlu0 %3233
      %3235 = vrot.lane.b32.xlu0 %v3216, 28
      %v3236 = vpop.permute.xlu0 %3235
      %3237 = vrot.lane.b32.xlu0 %v3217, 28
      %v3238 = vpop.permute.xlu0 %3237
      %3239 = vrot.lane.b32.xlu0 %v3218, 28
      %v3240 = vpop.permute.xlu0 %3239
      %3241 = vrot.lane.b32.xlu0 %v3219, 28
      %v3242 = vpop.permute.xlu0 %3241
      %3243 = vrot.lane.b32.xlu0 %v3220, 28
      %v3244 = vpop.permute.xlu0 %3243
      %3245 = vrot.lane.b32.xlu0 %v3221, 28
      %v3246 = vpop.permute.xlu0 %3245
      %3247 = vrot.lane.b32.xlu0 %v3222, 28
      %v3248 = vpop.permute.xlu0 %3247
      %3249 = vrot.lane.b32.xlu0 %v3223, 28
      %v3250 = vpop.permute.xlu0 %3249
      %3251 = vrot.lane.b32.xlu0 %v3224, 28
      %v3252 = vpop.permute.xlu0 %3251
      %3253 = vrot.lane.b32.xlu0 %v3225, 28
      %v3254 = vpop.permute.xlu0 %3253
      %3255 = vrot.lane.b32.xlu0 %v3226, 28
      %v3256 = vpop.permute.xlu0 %3255
      %3257 = vrot.lane.b32.xlu0 %v3227, 28
      %v3258 = vpop.permute.xlu0 %3257
      %3259 = vrot.lane.b32.xlu0 %v3228, 28
      %v3260 = vpop.permute.xlu0 %3259
      %v3261 = vunpack.c.l.b16 %v2496
      %v3262 = vunpack.c.l.b16 %v2499
      %v3263 = vunpack.c.l.b16 %v2503
      %v3264 = vunpack.c.l.b16 %v2506
      %v3265 = vunpack.c.l.b16 %v2510
      %v3266 = vunpack.c.l.b16 %v2513
      %v3267 = vunpack.c.l.b16 %v2517
      %v3268 = vunpack.c.l.b16 %v2520
      %v3269 = vunpack.c.l.b16 %v2524
      %v3270 = vunpack.c.l.b16 %v2527
      %v3271 = vunpack.c.l.b16 %v2531
      %v3272 = vunpack.c.l.b16 %v2534
      %v3273 = vunpack.c.l.b16 %v2538
      %v3274 = vunpack.c.l.b16 %v2541
      %v3275 = vunpack.c.l.b16 %v2545
      %v3276 = vunpack.c.l.b16 %v2548
      %v3277 = vunpack.c.l.b16 %v2552
      %v3278 = vunpack.c.l.b16 %v2555
      %v3279 = vunpack.c.l.b16 %v2559
      %v3280 = vunpack.c.l.b16 %v2562
      %v3281 = vunpack.c.l.b16 %v2566
      %v3282 = vunpack.c.l.b16 %v2569
      %v3283 = vunpack.c.l.b16 %v2573
      %v3284 = vunpack.c.l.b16 %v2576
      %v3285 = vunpack.c.l.b16 %v2580
      %v3286 = vunpack.c.l.b16 %v2583
      %v3287 = vunpack.c.l.b16 %v2587
      %v3288 = vunpack.c.l.b16 %v2590
      %v3289 = vunpack.c.l.b16 %v2594
      %v3290 = vunpack.c.l.b16 %v2597
      %v3291 = vunpack.c.l.b16 %v2601
      %v3292 = vunpack.c.l.b16 %v2604
      %v3293 = vpack.c.b16 %v3262, %v3261
      %v3294 = vpack.c.b16 %v3264, %v3263
      %v3295 = vpack.c.b16 %v3266, %v3265
      %v3296 = vpack.c.b16 %v3268, %v3267
      %v3297 = vpack.c.b16 %v3270, %v3269
      %v3298 = vpack.c.b16 %v3272, %v3271
      %v3299 = vpack.c.b16 %v3274, %v3273
      %v3300 = vpack.c.b16 %v3276, %v3275
      %v3301 = vpack.c.b16 %v3278, %v3277
      %v3302 = vpack.c.b16 %v3280, %v3279
      %v3303 = vpack.c.b16 %v3282, %v3281
      %v3304 = vpack.c.b16 %v3284, %v3283
      %v3305 = vpack.c.b16 %v3286, %v3285
      %v3306 = vpack.c.b16 %v3288, %v3287
      %v3307 = vpack.c.b16 %v3290, %v3289
      %v3308 = vpack.c.b16 %v3292, %v3291
      %3309 = vrot.lane.b32.xlu0 %v3293, 32
      %v3310 = vpop.permute.xlu0 %3309
      %3311 = vrot.lane.b32.xlu0 %v3294, 32
      %v3312 = vpop.permute.xlu0 %3311
      %3313 = vrot.lane.b32.xlu0 %v3295, 32
      %v3314 = vpop.permute.xlu0 %3313
      %3315 = vrot.lane.b32.xlu0 %v3296, 32
      %v3316 = vpop.permute.xlu0 %3315
      %3317 = vrot.lane.b32.xlu0 %v3297, 32
      %v3318 = vpop.permute.xlu0 %3317
      %3319 = vrot.lane.b32.xlu0 %v3298, 32
      %v3320 = vpop.permute.xlu0 %3319
      %3321 = vrot.lane.b32.xlu0 %v3299, 32
      %v3322 = vpop.permute.xlu0 %3321
      %3323 = vrot.lane.b32.xlu0 %v3300, 32
      %v3324 = vpop.permute.xlu0 %3323
      %3325 = vrot.lane.b32.xlu0 %v3301, 32
      %v3326 = vpop.permute.xlu0 %3325
      %3327 = vrot.lane.b32.xlu0 %v3302, 32
      %v3328 = vpop.permute.xlu0 %3327
      %3329 = vrot.lane.b32.xlu0 %v3303, 32
      %v3330 = vpop.permute.xlu0 %3329
      %3331 = vrot.lane.b32.xlu0 %v3304, 32
      %v3332 = vpop.permute.xlu0 %3331
      %3333 = vrot.lane.b32.xlu0 %v3305, 32
      %v3334 = vpop.permute.xlu0 %3333
      %3335 = vrot.lane.b32.xlu0 %v3306, 32
      %v3336 = vpop.permute.xlu0 %3335
      %3337 = vrot.lane.b32.xlu0 %v3307, 32
      %v3338 = vpop.permute.xlu0 %3337
      %3339 = vrot.lane.b32.xlu0 %v3308, 32
      %v3340 = vpop.permute.xlu0 %3339
      %vm3341 = vcmask 31744
      %v3344 = vsel %vm3341, %v2653, %v2718
      %v3347 = vsel %vm3341, %v2654, %v2720
      %v3350 = vsel %vm3341, %v2655, %v2722
      %v3353 = vsel %vm3341, %v2656, %v2724
      %v3356 = vsel %vm3341, %v2657, %v2726
      %v3359 = vsel %vm3341, %v2658, %v2728
      %v3362 = vsel %vm3341, %v2659, %v2730
      %v3365 = vsel %vm3341, %v2660, %v2732
      %v3368 = vsel %vm3341, %v2661, %v2734
      %v3371 = vsel %vm3341, %v2662, %v2736
      %v3374 = vsel %vm3341, %v2663, %v2738
      %v3377 = vsel %vm3341, %v2664, %v2740
      %v3380 = vsel %vm3341, %v2665, %v2742
      %v3383 = vsel %vm3341, %v2666, %v2744
      %v3386 = vsel %vm3341, %v2667, %v2746
      %v3389 = vsel %vm3341, %v2668, %v2748
      %vm3390 = vcmask 64512
      %v3392 = vsel %vm3390, %v3344, %v2798
      %v3394 = vsel %vm3390, %v3347, %v2800
      %v3396 = vsel %vm3390, %v3350, %v2802
      %v3398 = vsel %vm3390, %v3353, %v2804
      %v3400 = vsel %vm3390, %v3356, %v2806
      %v3402 = vsel %vm3390, %v3359, %v2808
      %v3404 = vsel %vm3390, %v3362, %v2810
      %v3406 = vsel %vm3390, %v3365, %v2812
      %v3408 = vsel %vm3390, %v3368, %v2814
      %v3410 = vsel %vm3390, %v3371, %v2816
      %v3412 = vsel %vm3390, %v3374, %v2818
      %v3414 = vsel %vm3390, %v3377, %v2820
      %v3416 = vsel %vm3390, %v3380, %v2822
      %v3418 = vsel %vm3390, %v3383, %v2824
      %v3420 = vsel %vm3390, %v3386, %v2826
      %v3422 = vsel %vm3390, %v3389, %v2828
      %vm3423 = vcmask 97280
      %v3425 = vsel %vm3423, %v3392, %v2894
      %v3427 = vsel %vm3423, %v3394, %v2896
      %v3429 = vsel %vm3423, %v3396, %v2898
      %v3431 = vsel %vm3423, %v3398, %v2900
      %v3433 = vsel %vm3423, %v3400, %v2902
      %v3435 = vsel %vm3423, %v3402, %v2904
      %v3437 = vsel %vm3423, %v3404, %v2906
      %v3439 = vsel %vm3423, %v3406, %v2908
      %v3441 = vsel %vm3423, %v3408, %v2910
      %v3443 = vsel %vm3423, %v3410, %v2912
      %v3445 = vsel %vm3423, %v3412, %v2914
      %v3447 = vsel %vm3423, %v3414, %v2916
      %v3449 = vsel %vm3423, %v3416, %v2918
      %v3451 = vsel %vm3423, %v3418, %v2920
      %v3453 = vsel %vm3423, %v3420, %v2922
      %v3455 = vsel %vm3423, %v3422, %v2924
      %vm3456 = vcmask 130048
      %v3458 = vsel %vm3456, %v3425, %v2974
      %v3460 = vsel %vm3456, %v3427, %v2976
      %v3462 = vsel %vm3456, %v3429, %v2978
      %v3464 = vsel %vm3456, %v3431, %v2980
      %v3466 = vsel %vm3456, %v3433, %v2982
      %v3468 = vsel %vm3456, %v3435, %v2984
      %v3470 = vsel %vm3456, %v3437, %v2986
      %v3472 = vsel %vm3456, %v3439, %v2988
      %v3474 = vsel %vm3456, %v3441, %v2990
      %v3476 = vsel %vm3456, %v3443, %v2992
      %v3478 = vsel %vm3456, %v3445, %v2994
      %v3480 = vsel %vm3456, %v3447, %v2996
      %v3482 = vsel %vm3456, %v3449, %v2998
      %v3484 = vsel %vm3456, %v3451, %v3000
      %v3486 = vsel %vm3456, %v3453, %v3002
      %v3488 = vsel %vm3456, %v3455, %v3004
      %vm3489 = vcmask 162816
      %v3491 = vsel %vm3489, %v3458, %v3054
      %v3493 = vsel %vm3489, %v3460, %v3056
      %v3495 = vsel %vm3489, %v3462, %v3058
      %v3497 = vsel %vm3489, %v3464, %v3060
      %v3499 = vsel %vm3489, %v3466, %v3062
      %v3501 = vsel %vm3489, %v3468, %v3064
      %v3503 = vsel %vm3489, %v3470, %v3066
      %v3505 = vsel %vm3489, %v3472, %v3068
      %v3507 = vsel %vm3489, %v3474, %v3070
      %v3509 = vsel %vm3489, %v3476, %v3072
      %v3511 = vsel %vm3489, %v3478, %v3074
      %v3513 = vsel %vm3489, %v3480, %v3076
      %v3515 = vsel %vm3489, %v3482, %v3078
      %v3517 = vsel %vm3489, %v3484, %v3080
      %v3519 = vsel %vm3489, %v3486, %v3082
      %v3521 = vsel %vm3489, %v3488, %v3084
      %vm3522 = vcmask 195584
      %v3524 = vsel %vm3522, %v3491, %v3150
      %v3526 = vsel %vm3522, %v3493, %v3152
      %v3528 = vsel %vm3522, %v3495, %v3154
      %v3530 = vsel %vm3522, %v3497, %v3156
      %v3532 = vsel %vm3522, %v3499, %v3158
      %v3534 = vsel %vm3522, %v3501, %v3160
      %v3536 = vsel %vm3522, %v3503, %v3162
      %v3538 = vsel %vm3522, %v3505, %v3164
      %v3540 = vsel %vm3522, %v3507, %v3166
      %v3542 = vsel %vm3522, %v3509, %v3168
      %v3544 = vsel %vm3522, %v3511, %v3170
      %v3546 = vsel %vm3522, %v3513, %v3172
      %v3548 = vsel %vm3522, %v3515, %v3174
      %v3550 = vsel %vm3522, %v3517, %v3176
      %v3552 = vsel %vm3522, %v3519, %v3178
      %v3554 = vsel %vm3522, %v3521, %v3180
      %vm3555 = vcmask 228352
      %v3557 = vsel %vm3555, %v3524, %v3230
      %v3559 = vsel %vm3555, %v3526, %v3232
      %v3561 = vsel %vm3555, %v3528, %v3234
      %v3563 = vsel %vm3555, %v3530, %v3236
      %v3565 = vsel %vm3555, %v3532, %v3238
      %v3567 = vsel %vm3555, %v3534, %v3240
      %v3569 = vsel %vm3555, %v3536, %v3242
      %v3571 = vsel %vm3555, %v3538, %v3244
      %v3573 = vsel %vm3555, %v3540, %v3246
      %v3575 = vsel %vm3555, %v3542, %v3248
      %v3577 = vsel %vm3555, %v3544, %v3250
      %v3579 = vsel %vm3555, %v3546, %v3252
      %v3581 = vsel %vm3555, %v3548, %v3254
      %v3583 = vsel %vm3555, %v3550, %v3256
      %v3585 = vsel %vm3555, %v3552, %v3258
      %v3587 = vsel %vm3555, %v3554, %v3260
      %vm3588 = vcmask 261120
      %v3590 = vsel %vm3588, %v3557, %v3310
      %v3592 = vsel %vm3588, %v3559, %v3312
      %v3594 = vsel %vm3588, %v3561, %v3314
      %v3596 = vsel %vm3588, %v3563, %v3316
      %v3598 = vsel %vm3588, %v3565, %v3318
      %v3600 = vsel %vm3588, %v3567, %v3320
      %v3602 = vsel %vm3588, %v3569, %v3322
      %v3604 = vsel %vm3588, %v3571, %v3324
      %v3606 = vsel %vm3588, %v3573, %v3326
      %v3608 = vsel %vm3588, %v3575, %v3328
      %v3610 = vsel %vm3588, %v3577, %v3330
      %v3612 = vsel %vm3588, %v3579, %v3332
      %v3614 = vsel %vm3588, %v3581, %v3334
      %v3616 = vsel %vm3588, %v3583, %v3336
      %v3618 = vsel %vm3588, %v3585, %v3338
      %v3620 = vsel %vm3588, %v3587, %v3340
      %v3621 = vld [vmem:[%s1] sm:$0xf]
      %v3622 = vld [vmem:[%s1 + $0x4] sm:$0xf]
      %v3623 = vld [vmem:[%s1 + $0x8] sm:$0xf]
      %v3624 = vld [vmem:[%s1 + $0xc] sm:$0xf]
      %v3625 = vld [vmem:[%s1 + $0x10] sm:$0x3]
      %v3631 = vunpack.c.l.b16 %v3621
      %v3632 = vunpack.c.l.b16 %v3622
      %v3633 = vunpack.c.l.b16 %v3623
      %v3634 = vunpack.c.l.b16 %v3624
      %v3635 = vunpack.c.l.b16 %v3625
      %v3636 = vpack.c.b16 %v3632, %v3631
      %v3637 = vpack.c.b16 %v3634, %v3633
      %v3638 = vpack.c.b16 %v3635, %v3635
      %vm3641 = vcmask 293888
      %v3642 = vsel %vm3641, %v3590, 0
      %v3644 = vsel %vm3641, %v3592, 0
      %v3646 = vsel %vm3641, %v3594, 0
      %v3648 = vsel %vm3641, %v3596, 0
      %v3650 = vsel %vm3641, %v3598, 0
      %v3652 = vsel %vm3641, %v3600, 0
      %v3654 = vsel %vm3641, %v3602, 0
      %v3656 = vsel %vm3641, %v3604, 0
      %v3658 = vsel %vm3641, %v3606, 0
      %v3660 = vsel %vm3641, %v3608, 0
      %v3662 = vsel %vm3641, %v3610, 0
      %v3664 = vsel %vm3641, %v3612, 0
      %v3666 = vsel %vm3641, %v3614, 0
      %v3668 = vsel %vm3641, %v3616, 0
      %v3670 = vsel %vm3641, %v3618, 0
      %v3672 = vsel %vm3641, %v3620, 0
      %vm3674 = vcmask 1041408
      %v3676 = vsel %vm3674, %v3638, 0
      %3678 = vmatpush.bf16.msra.mxu0 0
      %3679 = vmatpush.bf16.msra.mxu0 0
      %3680 = vmatpush.bf16.msra.mxu0 0
      %3681 = vmatpush.bf16.msra.mxu0 0
      %3682 = vmatpush.bf16.msra.mxu0 0
      %3683 = vmatpush.bf16.msra.mxu0 %v3676
      %3684 = vmatpush.bf16.msra.mxu0 %v3637
      %3685 = vmatpush.bf16.msra.mxu0 %v3636
      %3686 = vmatmul.bf16.gmra.mxu0 %v3642
      %v3687 = vpop.f32.mrf.mxu0
      %v3688 = vadd.f32 0.0, %v3687
      %v3689 = vpop.f32.mrf.mxu0
      %v3690 = vadd.f32 0.0, %v3689
      %3691 = vmatmul.bf16.gmra.mxu0 %v3644
      %v3692 = vpop.f32.mrf.mxu0
      %v3693 = vadd.f32 0.0, %v3692
      %v3694 = vpop.f32.mrf.mxu0
      %v3695 = vadd.f32 0.0, %v3694
      %3696 = vmatmul.bf16.gmra.mxu0 %v3646
      %v3697 = vpop.f32.mrf.mxu0
      %v3698 = vadd.f32 0.0, %v3697
      %v3699 = vpop.f32.mrf.mxu0
      %v3700 = vadd.f32 0.0, %v3699
      %3701 = vmatmul.bf16.gmra.mxu0 %v3648
      %v3702 = vpop.f32.mrf.mxu0
      %v3703 = vadd.f32 0.0, %v3702
      %v3704 = vpop.f32.mrf.mxu0
      %v3705 = vadd.f32 0.0, %v3704
      %3706 = vmatmul.bf16.gmra.mxu0 %v3650
      %v3707 = vpop.f32.mrf.mxu0
      %v3708 = vadd.f32 0.0, %v3707
      %v3709 = vpop.f32.mrf.mxu0
      %v3710 = vadd.f32 0.0, %v3709
      %3711 = vmatmul.bf16.gmra.mxu0 %v3652
      %v3712 = vpop.f32.mrf.mxu0
      %v3713 = vadd.f32 0.0, %v3712
      %v3714 = vpop.f32.mrf.mxu0
      %v3715 = vadd.f32 0.0, %v3714
      %3716 = vmatmul.bf16.gmra.mxu0 %v3654
      %v3717 = vpop.f32.mrf.mxu0
      %v3718 = vadd.f32 0.0, %v3717
      %v3719 = vpop.f32.mrf.mxu0
      %v3720 = vadd.f32 0.0, %v3719
      %3721 = vmatmul.bf16.gmra.mxu0 %v3656
      %v3722 = vpop.f32.mrf.mxu0
      %v3723 = vadd.f32 0.0, %v3722
      %v3724 = vpop.f32.mrf.mxu0
      %v3725 = vadd.f32 0.0, %v3724
      %3726 = vmatmul.bf16.gmra.mxu0 %v3658
      %v3727 = vpop.f32.mrf.mxu0
      %v3728 = vadd.f32 0.0, %v3727
      %v3729 = vpop.f32.mrf.mxu0
      %v3730 = vadd.f32 0.0, %v3729
      %3731 = vmatmul.bf16.gmra.mxu0 %v3660
      %v3732 = vpop.f32.mrf.mxu0
      %v3733 = vadd.f32 0.0, %v3732
      %v3734 = vpop.f32.mrf.mxu0
      %v3735 = vadd.f32 0.0, %v3734
      %3736 = vmatmul.bf16.gmra.mxu0 %v3662
      %v3737 = vpop.f32.mrf.mxu0
      %v3738 = vadd.f32 0.0, %v3737
      %v3739 = vpop.f32.mrf.mxu0
      %v3740 = vadd.f32 0.0, %v3739
      %3741 = vmatmul.bf16.gmra.mxu0 %v3664
      %v3742 = vpop.f32.mrf.mxu0
      %v3743 = vadd.f32 0.0, %v3742
      %v3744 = vpop.f32.mrf.mxu0
      %v3745 = vadd.f32 0.0, %v3744
      %3746 = vmatmul.bf16.gmra.mxu0 %v3666
      %v3747 = vpop.f32.mrf.mxu0
      %v3748 = vadd.f32 0.0, %v3747
      %v3749 = vpop.f32.mrf.mxu0
      %v3750 = vadd.f32 0.0, %v3749
      %3751 = vmatmul.bf16.gmra.mxu0 %v3668
      %v3752 = vpop.f32.mrf.mxu0
      %v3753 = vadd.f32 0.0, %v3752
      %v3754 = vpop.f32.mrf.mxu0
      %v3755 = vadd.f32 0.0, %v3754
      %3756 = vmatmul.bf16.gmra.mxu0 %v3670
      %v3757 = vpop.f32.mrf.mxu0
      %v3758 = vadd.f32 0.0, %v3757
      %v3759 = vpop.f32.mrf.mxu0
      %v3760 = vadd.f32 0.0, %v3759
      %3761 = vmatmul.bf16.gmra.mxu0 %v3672
      %v3762 = vpop.f32.mrf.mxu0
      %v3763 = vadd.f32 0.0, %v3762
      %v3764 = vpop.f32.mrf.mxu0
      %v3765 = vadd.f32 0.0, %v3764
      %3766 = vdwg.mxu0
      %v3767 = vpack.c.bf16 %v3688, %v3688
      %v3768 = vpack.c.bf16 %v3690, %v3690
      %v3769 = vpack.c.bf16 %v3693, %v3693
      %v3770 = vpack.c.bf16 %v3695, %v3695
      %v3771 = vpack.c.bf16 %v3698, %v3698
      %v3772 = vpack.c.bf16 %v3700, %v3700
      %v3773 = vpack.c.bf16 %v3703, %v3703
      %v3774 = vpack.c.bf16 %v3705, %v3705
      %v3775 = vpack.c.bf16 %v3708, %v3708
      %v3776 = vpack.c.bf16 %v3710, %v3710
      %v3777 = vpack.c.bf16 %v3713, %v3713
      %v3778 = vpack.c.bf16 %v3715, %v3715
      %v3779 = vpack.c.bf16 %v3718, %v3718
      %v3780 = vpack.c.bf16 %v3720, %v3720
      %v3781 = vpack.c.bf16 %v3723, %v3723
      %v3782 = vpack.c.bf16 %v3725, %v3725
      %v3783 = vpack.c.bf16 %v3728, %v3728
      %v3784 = vpack.c.bf16 %v3730, %v3730
      %v3785 = vpack.c.bf16 %v3733, %v3733
      %v3786 = vpack.c.bf16 %v3735, %v3735
      %v3787 = vpack.c.bf16 %v3738, %v3738
      %v3788 = vpack.c.bf16 %v3740, %v3740
      %v3789 = vpack.c.bf16 %v3743, %v3743
      %v3790 = vpack.c.bf16 %v3745, %v3745
      %v3791 = vpack.c.bf16 %v3748, %v3748
      %v3792 = vpack.c.bf16 %v3750, %v3750
      %v3793 = vpack.c.bf16 %v3753, %v3753
      %v3794 = vpack.c.bf16 %v3755, %v3755
      %v3795 = vpack.c.bf16 %v3758, %v3758
      %v3796 = vpack.c.bf16 %v3760, %v3760
      %v3797 = vpack.c.bf16 %v3763, %v3763
      %v3798 = vpack.c.bf16 %v3765, %v3765
      %3799 = vst [vmem:[%s177] sm:$0xf] %v3767
      %3800 = vst [vmem:[%s177 + $0x4] sm:$0xf] %v3768
      %3801 = vst [vmem:[%s177 + $0x8] sm:$0xf] %v3769
      %3802 = vst [vmem:[%s177 + $0xc] sm:$0xf] %v3770
      %3803 = vst [vmem:[%s177 + $0x10] sm:$0xf] %v3771
      %3804 = vst [vmem:[%s177 + $0x14] sm:$0xf] %v3772
      %3805 = vst [vmem:[%s177 + $0x18] sm:$0xf] %v3773
      %3806 = vst [vmem:[%s177 + $0x1c] sm:$0xf] %v3774
      %3807 = vst [vmem:[%s177 + $0x20] sm:$0xf] %v3775
      %3808 = vst [vmem:[%s177 + $0x24] sm:$0xf] %v3776
      %3809 = vst [vmem:[%s177 + $0x28] sm:$0xf] %v3777
      %3810 = vst [vmem:[%s177 + $0x2c] sm:$0xf] %v3778
      %3811 = vst [vmem:[%s177 + $0x30] sm:$0xf] %v3779
      %3812 = vst [vmem:[%s177 + $0x34] sm:$0xf] %v3780
      %3813 = vst [vmem:[%s177 + $0x38] sm:$0xf] %v3781
      %3814 = vst [vmem:[%s177 + $0x3c] sm:$0xf] %v3782
      %3815 = vst [vmem:[%s177 + $0x40] sm:$0xf] %v3783
      %3816 = vst [vmem:[%s177 + $0x44] sm:$0xf] %v3784
      %3817 = vst [vmem:[%s177 + $0x48] sm:$0xf] %v3785
      %3818 = vst [vmem:[%s177 + $0x4c] sm:$0xf] %v3786
      %3819 = vst [vmem:[%s177 + $0x50] sm:$0xf] %v3787
      %3820 = vst [vmem:[%s177 + $0x54] sm:$0xf] %v3788
      %3821 = vst [vmem:[%s177 + $0x58] sm:$0xf] %v3789
      %3822 = vst [vmem:[%s177 + $0x5c] sm:$0xf] %v3790
      %3823 = vst [vmem:[%s177 + $0x60] sm:$0xf] %v3791
      %3824 = vst [vmem:[%s177 + $0x64] sm:$0xf] %v3792
      %3825 = vst [vmem:[%s177 + $0x68] sm:$0xf] %v3793
      %3826 = vst [vmem:[%s177 + $0x6c] sm:$0xf] %v3794
      %3827 = vst [vmem:[%s177 + $0x70] sm:$0xf] %v3795
      %3828 = vst [vmem:[%s177 + $0x74] sm:$0xf] %v3796
      %3829 = vst [vmem:[%s177 + $0x78] sm:$0xf] %v3797
      %3830 = vst [vmem:[%s177 + $0x7c] sm:$0xf] %v3798
      %v3831 = vadd.f32 %v3688, %v3690
      %v3832 = vadd.f32 %v3831, %v3693
      %v3833 = vadd.f32 %v3832, %v3695
      %v3834 = vadd.f32 %v3833, %v3698
      %v3835 = vadd.f32 %v3834, %v3700
      %v3836 = vadd.f32 %v3835, %v3703
      %v3837 = vadd.f32 %v3836, %v3705
      %v3838 = vadd.f32 %v3837, %v3708
      %v3839 = vadd.f32 %v3838, %v3710
      %v3840 = vadd.f32 %v3839, %v3713
      %v3841 = vadd.f32 %v3840, %v3715
      %v3842 = vadd.f32 %v3841, %v3718
      %v3843 = vadd.f32 %v3842, %v3720
      %v3844 = vadd.f32 %v3843, %v3723
      %v3845 = vadd.f32 %v3844, %v3725
      %v3846 = vadd.f32 %v3845, %v3728
      %v3847 = vadd.f32 %v3846, %v3730
      %v3848 = vadd.f32 %v3847, %v3733
      %v3849 = vadd.f32 %v3848, %v3735
      %v3850 = vadd.f32 %v3849, %v3738
      %v3851 = vadd.f32 %v3850, %v3740
      %v3852 = vadd.f32 %v3851, %v3743
      %v3853 = vadd.f32 %v3852, %v3745
      %v3854 = vadd.f32 %v3853, %v3748
      %v3855 = vadd.f32 %v3854, %v3750
      %v3856 = vadd.f32 %v3855, %v3753
      %v3857 = vadd.f32 %v3856, %v3755
      %v3858 = vadd.f32 %v3857, %v3758
      %v3859 = vadd.f32 %v3858, %v3760
      %v3860 = vadd.f32 %v3859, %v3763
      %v3861 = vadd.f32 %v3860, %v3765
      %v3862 = vrot.slane %v3861, 4
      %v3863 = vadd.f32 %v3861, %v3862
      %v3864 = vrot.slane %v3863, 2
      %v3865 = vadd.f32 %v3863, %v3864
      %v3866 = vrot.slane %v3865, 1
      %v3867 = vadd.f32 %v3865, %v3866
      %v3868 = vrcp.pop 256.0
      %v3869 = vmul.f32 256.0, %v3868
      %v3870 = vsub.f32 1.0, %v3869
      %v3871 = vmul.f32 %v3868, %v3870
      %v3872 = vadd.f32 %v3868, %v3871
      %vm3873 = vweird.f32 %v3868
      %v3874 = vsel %vm3873, %v3868, %v3872
      %v3875 = vmul.f32 %v3867, %v3874
      %v3876 = vsub.f32 %v3688, %v3875
      %v3877 = vsub.f32 %v3690, %v3875
      %v3878 = vsub.f32 %v3693, %v3875
      %v3879 = vsub.f32 %v3695, %v3875
      %v3880 = vsub.f32 %v3698, %v3875
      %v3881 = vsub.f32 %v3700, %v3875
      %v3882 = vsub.f32 %v3703, %v3875
      %v3883 = vsub.f32 %v3705, %v3875
      %v3884 = vsub.f32 %v3708, %v3875
      %v3885 = vsub.f32 %v3710, %v3875
      %v3886 = vsub.f32 %v3713, %v3875
      %v3887 = vsub.f32 %v3715, %v3875
      %v3888 = vsub.f32 %v3718, %v3875
      %v3889 = vsub.f32 %v3720, %v3875
      %v3890 = vsub.f32 %v3723, %v3875
      %v3891 = vsub.f32 %v3725, %v3875
      %v3892 = vsub.f32 %v3728, %v3875
      %v3893 = vsub.f32 %v3730, %v3875
      %v3894 = vsub.f32 %v3733, %v3875
      %v3895 = vsub.f32 %v3735, %v3875
      %v3896 = vsub.f32 %v3738, %v3875
      %v3897 = vsub.f32 %v3740, %v3875
      %v3898 = vsub.f32 %v3743, %v3875
      %v3899 = vsub.f32 %v3745, %v3875
      %v3900 = vsub.f32 %v3748, %v3875
      %v3901 = vsub.f32 %v3750, %v3875
      %v3902 = vsub.f32 %v3753, %v3875
      %v3903 = vsub.f32 %v3755, %v3875
      %v3904 = vsub.f32 %v3758, %v3875
      %v3905 = vsub.f32 %v3760, %v3875
      %v3906 = vsub.f32 %v3763, %v3875
      %v3907 = vsub.f32 %v3765, %v3875
      %v3908 = vmul.f32 %v3876, %v3876
      %v3909 = vmul.f32 %v3877, %v3877
      %v3910 = vmul.f32 %v3878, %v3878
      %v3911 = vmul.f32 %v3879, %v3879
      %v3912 = vmul.f32 %v3880, %v3880
      %v3913 = vmul.f32 %v3881, %v3881
      %v3914 = vmul.f32 %v3882, %v3882
      %v3915 = vmul.f32 %v3883, %v3883
      %v3916 = vmul.f32 %v3884, %v3884
      %v3917 = vmul.f32 %v3885, %v3885
      %v3918 = vmul.f32 %v3886, %v3886
      %v3919 = vmul.f32 %v3887, %v3887
      %v3920 = vmul.f32 %v3888, %v3888
      %v3921 = vmul.f32 %v3889, %v3889
      %v3922 = vmul.f32 %v3890, %v3890
      %v3923 = vmul.f32 %v3891, %v3891
      %v3924 = vmul.f32 %v3892, %v3892
      %v3925 = vmul.f32 %v3893, %v3893
      %v3926 = vmul.f32 %v3894, %v3894
      %v3927 = vmul.f32 %v3895, %v3895
      %v3928 = vmul.f32 %v3896, %v3896
      %v3929 = vmul.f32 %v3897, %v3897
      %v3930 = vmul.f32 %v3898, %v3898
      %v3931 = vmul.f32 %v3899, %v3899
      %v3932 = vmul.f32 %v3900, %v3900
      %v3933 = vmul.f32 %v3901, %v3901
      %v3934 = vmul.f32 %v3902, %v3902
      %v3935 = vmul.f32 %v3903, %v3903
      %v3936 = vmul.f32 %v3904, %v3904
      %v3937 = vmul.f32 %v3905, %v3905
      %v3938 = vmul.f32 %v3906, %v3906
      %v3939 = vmul.f32 %v3907, %v3907
      %v3940 = vadd.f32 %v3908, %v3909
      %v3941 = vadd.f32 %v3940, %v3910
      %v3942 = vadd.f32 %v3941, %v3911
      %v3943 = vadd.f32 %v3942, %v3912
      %v3944 = vadd.f32 %v3943, %v3913
      %v3945 = vadd.f32 %v3944, %v3914
      %v3946 = vadd.f32 %v3945, %v3915
      %v3947 = vadd.f32 %v3946, %v3916
      %v3948 = vadd.f32 %v3947, %v3917
      %v3949 = vadd.f32 %v3948, %v3918
      %v3950 = vadd.f32 %v3949, %v3919
      %v3951 = vadd.f32 %v3950, %v3920
      %v3952 = vadd.f32 %v3951, %v3921
      %v3953 = vadd.f32 %v3952, %v3922
      %v3954 = vadd.f32 %v3953, %v3923
      %v3955 = vadd.f32 %v3954, %v3924
      %v3956 = vadd.f32 %v3955, %v3925
      %v3957 = vadd.f32 %v3956, %v3926
      %v3958 = vadd.f32 %v3957, %v3927
      %v3959 = vadd.f32 %v3958, %v3928
      %v3960 = vadd.f32 %v3959, %v3929
      %v3961 = vadd.f32 %v3960, %v3930
      %v3962 = vadd.f32 %v3961, %v3931
      %v3963 = vadd.f32 %v3962, %v3932
      %v3964 = vadd.f32 %v3963, %v3933
      %v3965 = vadd.f32 %v3964, %v3934
      %v3966 = vadd.f32 %v3965, %v3935
      %v3967 = vadd.f32 %v3966, %v3936
      %v3968 = vadd.f32 %v3967, %v3937
      %v3969 = vadd.f32 %v3968, %v3938
      %v3970 = vadd.f32 %v3969, %v3939
      %v3971 = vrot.slane %v3970, 4
      %v3972 = vadd.f32 %v3970, %v3971
      %v3973 = vrot.slane %v3972, 2
      %v3974 = vadd.f32 %v3972, %v3973
      %v3975 = vrot.slane %v3974, 1
      %v3976 = vadd.f32 %v3974, %v3975
      %vm3977 = vcmask 1040384
      %v3978 = vsel %vm3977, %v3867, %v3976
      %3979 = vst [vmem:[%s181] sm:$0x3] %v3978
      %p3980 = scmp.lt.s32.totalorder %s15, 1
      %s3981 = scalar_select %p3980, %s15, 1
      %s3982 = smul.addr %s3981, 32
      %s3983 = smul.addr %s3982, 4
      %s3984 = scalar_lea.vmem %s2, %s3983
      %p3985 = scmp.lt.s32.totalorder %s15, 1
      %s3986 = scalar_select %p3985, %s15, 1
      %s3987 = smul.addr %s3986, 2
      %s3988 = scalar_lea.vmem %s3, %s3987
      // Predicated region
      $region29: #{conv_block_forward.3} parent=27 // pred_check
        %p3989 = pneg %p80
      $region30: #{conv_block_forward.3} parent=27 // pred_check_branch
        %3991 = sbr.rel (%p3989) target = $region32
      $region31: #{conv_block_forward.3} parent=27 // pred_region
        _
      $region32: #{conv_block_forward.3} parent=27 // pred_fallthru
        _
      // Predicated region
      $region33: #{conv_block_forward.3} parent=27 // pred_check
        %p3992 = pneg %p106
      $region34: #{conv_block_forward.3} parent=27 // pred_check_branch
        %3994 = sbr.rel (%p3992) target = $region36
      $region35: #{conv_block_forward.3} parent=27 // pred_region
        _
      $region36: #{conv_block_forward.3} parent=27 // pred_fallthru
        _
    $region28: #{conv_block_forward.3} parent=5 // pred_fallthru
      _
    %p3995 = scmp.le.s32.totalorder 2, %s10
    // Predicated region
    $region37: #{conv_block_forward.3} parent=5 // pred_check
      %p3996 = pneg %p3995
    $region38: #{conv_block_forward.3} parent=5 // pred_check_branch
      %3998 = sbr.rel (%p3996) target = $region40
    $region39: #{conv_block_forward.3} parent=5 // pred_region
      %s3999 = ssub.s32 %s10, 2
      // Predicated region
      $region41: #{conv_block_forward.3} parent=39 // pred_check
        %p4000 = pneg %p86
      $region42: #{conv_block_forward.3} parent=39 // pred_check_branch
        %4002 = sbr.rel (%p4000) target = $region44
      $region43: #{conv_block_forward.3} parent=39 // pred_region
        %p4003 = scmp.lt.s32.totalorder %s16, 1
        %s4004 = scalar_select %p4003, %s16, 1
        %s4005 = smul.addr %s4004, 32
        %s4006 = smul.addr %s4005, 4
        %s4007 = scalar_lea.vmem %s2, %s4006
      $region44: #{conv_block_forward.3} parent=39 // pred_fallthru
        _
      // Predicated region
      $region45: #{conv_block_forward.3} parent=39 // pred_check
        %p4008 = pneg %p112
      $region46: #{conv_block_forward.3} parent=39 // pred_check_branch
        %4010 = sbr.rel (%p4008) target = $region48
      $region47: #{conv_block_forward.3} parent=39 // pred_region
        %p4011 = scmp.lt.s32.totalorder %s16, 1
        %s4012 = scalar_select %p4011, %s16, 1
        %s4013 = smul.addr %s4012, 2
        %s4014 = scalar_lea.vmem %s3, %s4013
      $region48: #{conv_block_forward.3} parent=39 // pred_fallthru
        _
    $region40: #{conv_block_forward.3} parent=5 // pred_fallthru
      _
  $region6: #{conv_block_forward.3} parent=0 // loop_footer
    %s14 = sadd.s32 1, %s10
  $region7: #{conv_block_forward.3} parent=0 // loop_footer_branch
    %9 = sbr.rel target = $region3
  $region8: #{conv_block_forward.3} parent=0 // loop_exit
    _

// kernel: conv_block_forward.4
$region0: #{conv_block_forward.4}
  #allocation0 [shape = 'u32[]', space=smem, size = 0x4, offset = 0x4, fixed_abs, tag = 'smem constant byte address 0x4 - core index']
  #allocation1 [shape = 'u32[72,128]{1,0:T(1,128)}', space=vmem, size = 0x9000, scoped, tag = 'internal scratch']
  #allocation2 [shape = 'bf16[18,18,128]{2,1,0:T(8,128)(2,1)}', space=vmem, size = 0x1b000, scoped, tag = 'scratch operand']
  %s0 = inlined_call_operand.vmem [shape: bf16[2,16,16,128], index: 0, kind: input, shape index: {}]
  %s1 = inlined_call_operand.vmem [shape: f32[1,128], index: 1, kind: input, shape index: {}]
  %s2 = inlined_call_operand.vmem [shape: f32[1,128], index: 2, kind: input, shape index: {}]
  %s3 = inlined_call_operand.vmem [shape: bf16[1152,128], index: 3, kind: input, shape index: {}]
  %s4 = inlined_call_operand.vmem [shape: bf16[2,16,16,128], index: 4, kind: output, shape index: {0}]
  %s5 = inlined_call_operand.vmem [shape: f32[2,2,128], index: 5, kind: output, shape index: {1}]
  %6 = xla_tuple %s4, %s5
  %s7 = sld [smem:[#allocation0]]
  $region57: #{conv_block_forward.4} parent=0
    _
  %s9 = ssub.s32 1, %s7
  %s10 = scalar_select 0, %s9, %s7
  loop: start=0, step=1, limit=4
  $region2: #{conv_block_forward.4} parent=0 // loop_pre_header
    _
  $region3: #{conv_block_forward.4} parent=0 // loop_header
    %s12 = sphi 0, %s16
    %p13 = scmp.ge.s32.totalorder %s12, 4
    %s22 = sphi 0, %s24
    %s25 = sphi 0, %s22
    %s26 = sphi 0, %s25
    %s42 = sphi 0, %s26
    %s46 = sphi 0, %s46
    %s48 = sphi 0, %s46
    %s49 = sphi 0, %s48
    %s63 = sphi 0, %s49
    %s67 = sphi 0, %s67
    %s69 = sphi 0, %s67
    %s70 = sphi 0, %s69
    %s84 = sphi 0, %s70
    %s88 = sphi 0, %s88
    %s90 = sphi 0, %s88
    %s91 = sphi 0, %s90
    %s105 = sphi 0, %s91
    %s111 = sphi 0, %s113
    %s114 = sphi 0, %s111
    %s115 = sphi 0, %s114
    %s131 = sphi 0, %s115
    %s137 = sphi 0, %s139
    %s140 = sphi 0, %s137
    %s141 = sphi 0, %s140
    %s157 = sphi 0, %s141
  $region4: #{conv_block_forward.4} parent=0 // loop_header_branch
    %15 = sbr.rel (%p13) target = $region8
  $region5: #{conv_block_forward.4} parent=0 // loop_body
    %s17 = ssub.s32 %s12, 1
    %s18 = ssub.s32 %s12, 2
    %s19 = sadd.s32 %s12, 1
    %s20 = ssub.s32 %s12, %s19
    %p21 = scmp.eq.s32.totalorder %s20, 0
    %s23 = sadd.s32 %s22, 1
    %s24 = scalar_select %p21, %s22, %s23
    %p27 = pneg %p21
    %p28 = scmp.eq.s32.totalorder %s12, 1
    %p29 = por %p27, %p28
    %p30 = scmp.ne.s32.totalorder %s22, %s25
    %p31 = scmp.eq.s32.totalorder %s12, 0
    %p32 = por %p30, %p31
    %p33 = scmp.ne.s32.totalorder %s22, %s25
    %p34 = scmp.eq.s32.totalorder %s17, 1
    %p35 = por %p33, %p34
    %p36 = scmp.ne.s32.totalorder %s25, %s26
    %p37 = scmp.eq.s32.totalorder %s17, 0
    %p38 = por %p36, %p37
    %p39 = scmp.ne.s32.totalorder %s25, %s26
    %p40 = scmp.eq.s32.totalorder %s18, 1
    %p41 = por %p39, %p40
    %p43 = scmp.ne.s32.totalorder %s26, %s42
    %p44 = scmp.eq.s32.totalorder %s18, 0
    %p45 = por %p43, %p44
    %s47 = sadd.s32 %s46, 1
    %p50 = scmp.eq.s32.totalorder %s12, 1
    %p51 = scmp.ne.s32.totalorder %s46, %s48
    %p52 = scmp.eq.s32.totalorder %s12, 0
    %p53 = por %p51, %p52
    %p54 = scmp.ne.s32.totalorder %s46, %s48
    %p55 = scmp.eq.s32.totalorder %s17, 1
    %p56 = por %p54, %p55
    %p57 = scmp.ne.s32.totalorder %s48, %s49
    %p58 = scmp.eq.s32.totalorder %s17, 0
    %p59 = por %p57, %p58
    %p60 = scmp.ne.s32.totalorder %s48, %s49
    %p61 = scmp.eq.s32.totalorder %s18, 1
    %p62 = por %p60, %p61
    %p64 = scmp.ne.s32.totalorder %s49, %s63
    %p65 = scmp.eq.s32.totalorder %s18, 0
    %p66 = por %p64, %p65
    %s68 = sadd.s32 %s67, 1
    %p71 = scmp.eq.s32.totalorder %s12, 1
    %p72 = scmp.ne.s32.totalorder %s67, %s69
    %p73 = scmp.eq.s32.totalorder %s12, 0
    %p74 = por %p72, %p73
    %p75 = scmp.ne.s32.totalorder %s67, %s69
    %p76 = scmp.eq.s32.totalorder %s17, 1
    %p77 = por %p75, %p76
    %p78 = scmp.ne.s32.totalorder %s69, %s70
    %p79 = scmp.eq.s32.totalorder %s17, 0
    %p80 = por %p78, %p79
    %p81 = scmp.ne.s32.totalorder %s69, %s70
    %p82 = scmp.eq.s32.totalorder %s18, 1
    %p83 = por %p81, %p82
    %p85 = scmp.ne.s32.totalorder %s70, %s84
    %p86 = scmp.eq.s32.totalorder %s18, 0
    %p87 = por %p85, %p86
    %s89 = sadd.s32 %s88, 1
    %p92 = scmp.eq.s32.totalorder %s12, 1
    %p93 = scmp.ne.s32.totalorder %s88, %s90
    %p94 = scmp.eq.s32.totalorder %s12, 0
    %p95 = por %p93, %p94
    %p96 = scmp.ne.s32.totalorder %s88, %s90
    %p97 = scmp.eq.s32.totalorder %s17, 1
    %p98 = por %p96, %p97
    %p99 = scmp.ne.s32.totalorder %s90, %s91
    %p100 = scmp.eq.s32.totalorder %s17, 0
    %p101 = por %p99, %p100
    %p102 = scmp.ne.s32.totalorder %s90, %s91
    %p103 = scmp.eq.s32.totalorder %s18, 1
    %p104 = por %p102, %p103
    %p106 = scmp.ne.s32.totalorder %s91, %s105
    %p107 = scmp.eq.s32.totalorder %s18, 0
    %p108 = por %p106, %p107
    %s109 = ssub.s32 %s12, %s19
    %p110 = scmp.eq.s32.totalorder %s109, 0
    %s112 = sadd.s32 %s111, 1
    %s113 = scalar_select %p110, %s111, %s112
    %p116 = pneg %p110
    %p117 = scmp.eq.s32.totalorder %s12, 1
    %p118 = por %p116, %p117
    %p119 = scmp.ne.s32.totalorder %s111, %s114
    %p120 = scmp.eq.s32.totalorder %s12, 0
    %p121 = por %p119, %p120
    %p122 = scmp.ne.s32.totalorder %s111, %s114
    %p123 = scmp.eq.s32.totalorder %s17, 1
    %p124 = por %p122, %p123
    %p125 = scmp.ne.s32.totalorder %s114, %s115
    %p126 = scmp.eq.s32.totalorder %s17, 0
    %p127 = por %p125, %p126
    %p128 = scmp.ne.s32.totalorder %s114, %s115
    %p129 = scmp.eq.s32.totalorder %s18, 1
    %p130 = por %p128, %p129
    %p132 = scmp.ne.s32.totalorder %s115, %s131
    %p133 = scmp.eq.s32.totalorder %s18, 0
    %p134 = por %p132, %p133
    %s135 = ssub.s32 %s12, %s19
    %p136 = scmp.eq.s32.totalorder %s135, 0
    %s138 = sadd.s32 %s137, 1
    %s139 = scalar_select %p136, %s137, %s138
    %p142 = pneg %p136
    %p143 = scmp.eq.s32.totalorder %s12, 1
    %p144 = por %p142, %p143
    %p145 = scmp.ne.s32.totalorder %s137, %s140
    %p146 = scmp.eq.s32.totalorder %s12, 0
    %p147 = por %p145, %p146
    %p148 = scmp.ne.s32.totalorder %s137, %s140
    %p149 = scmp.eq.s32.totalorder %s17, 1
    %p150 = por %p148, %p149
    %p151 = scmp.ne.s32.totalorder %s140, %s141
    %p152 = scmp.eq.s32.totalorder %s17, 0
    %p153 = por %p151, %p152
    %p154 = scmp.ne.s32.totalorder %s140, %s141
    %p155 = scmp.eq.s32.totalorder %s18, 1
    %p156 = por %p154, %p155
    %p158 = scmp.ne.s32.totalorder %s141, %s157
    %p159 = scmp.eq.s32.totalorder %s18, 0
    %p160 = por %p158, %p159
    %p161 = scmp.le.s32.totalorder 1, %s12
    %p162 = scmp.lt.s32.totalorder %s12, 3
    %p163 = pnand %p161, %p162
    %p164 = pneg %p163
    // Predicated region
    $region9: #{conv_block_forward.4} parent=5 // pred_check
      _
    $region10: #{conv_block_forward.4} parent=5 // pred_check_branch
      %166 = sbr.rel (%p163) target = $region12
    $region11: #{conv_block_forward.4} parent=5 // pred_region
      %s167 = ssub.s32 %s12, 1
      // Predicated region
      $region13: #{conv_block_forward.4} parent=11 // pred_check
        %p168 = pneg %p59
      $region14: #{conv_block_forward.4} parent=11 // pred_check_branch
        %170 = sbr.rel (%p168) target = $region16
      $region15: #{conv_block_forward.4} parent=11 // pred_region
        _
      $region16: #{conv_block_forward.4} parent=11 // pred_fallthru
        _
      // Predicated region
      $region17: #{conv_block_forward.4} parent=11 // pred_check
        %p171 = pneg %p80
      $region18: #{conv_block_forward.4} parent=11 // pred_check_branch
        %173 = sbr.rel (%p171) target = $region20
      $region19: #{conv_block_forward.4} parent=11 // pred_region
        _
      $region20: #{conv_block_forward.4} parent=11 // pred_fallthru
        _
      // Predicated region
      $region21: #{conv_block_forward.4} parent=11 // pred_check
        %p174 = pneg %p101
      $region22: #{conv_block_forward.4} parent=11 // pred_check_branch
        %176 = sbr.rel (%p174) target = $region24
      $region23: #{conv_block_forward.4} parent=11 // pred_region
        _
      $region24: #{conv_block_forward.4} parent=11 // pred_fallthru
        _
    $region12: #{conv_block_forward.4} parent=5 // pred_fallthru
      _
    %p177 = scmp.lt.s32.totalorder %s12, 2
    // Predicated region
    $region25: #{conv_block_forward.4} parent=5 // pred_check
      %p178 = pneg %p177
    $region26: #{conv_block_forward.4} parent=5 // pred_check_branch
      %180 = sbr.rel (%p178) target = $region28
    $region27: #{conv_block_forward.4} parent=5 // pred_region
      // Predicated region
      $region29: #{conv_block_forward.4} parent=27 // pred_check
        %p181 = pneg %p32
      $region30: #{conv_block_forward.4} parent=27 // pred_check_branch
        %183 = sbr.rel (%p181) target = $region32
      $region31: #{conv_block_forward.4} parent=27 // pred_region
        %p184 = scmp.lt.s32.totalorder %s12, 1
        %s185 = scalar_select %p184, %s12, 1
        %s186 = smul.addr %s185, 32
        %s187 = smul.addr %s186, 4
        %s188 = scalar_lea.vmem %s0, %s187
      $region32: #{conv_block_forward.4} parent=27 // pred_fallthru
        _
    $region28: #{conv_block_forward.4} parent=5 // pred_fallthru
      _
    %p189 = scmp.le.s32.totalorder 1, %s12
    %p190 = scmp.lt.s32.totalorder %s12, 3
    %p191 = pnand %p189, %p190
    %p192 = pneg %p191
    // Predicated region
    $region33: #{conv_block_forward.4} parent=5 // pred_check
      _
    $region34: #{conv_block_forward.4} parent=5 // pred_check_branch
      %194 = sbr.rel (%p191) target = $region36
    $region35: #{conv_block_forward.4} parent=5 // pred_region
      %s195 = ssub.s32 %s12, 1
      %p196 = scmp.lt.s32.totalorder %s17, 1
      %s197 = scalar_select %p196, %s17, 1
      %s198 = smul.addr %s197, 32
      %s199 = smul.addr %s198, 4
      %s200 = scalar_lea.vmem %s0, %s199
      %p201 = pneg %p38
      %p202 = pneg %p35
      %p203 = pneg %p59
      %p204 = pneg %p56
      %p205 = pneg %p80
      %p206 = pneg %p77
      %p207 = pneg %p101
      %p208 = pneg %p98
      %p209 = pneg %p127
      %p210 = pneg %p124
      %p211 = scmp.lt.s32.totalorder %s17, 1
      %s212 = scalar_select %p211, %s17, 1
      %s213 = smul.addr %s212, 32
      %s214 = smul.addr %s213, 4
      %s215 = scalar_lea.vmem %s4, %s214
      %p216 = pneg %p153
      %p217 = pneg %p150
      %p218 = scmp.lt.s32.totalorder %s17, 1
      %s219 = scalar_select %p218, %s17, 1
      %s220 = smul.addr %s219, 2
      %s221 = scalar_lea.vmem %s5, %s220
      %p222 = scmp.lt.s32.totalorder %s17, 1
      %s223 = scalar_select %p222, %s17, 1
      %s224 = smul.addr %s223, 32
      %s225 = smul.addr %s224, 4
      %s226 = scalar_lea.vmem %s0, %s225
      %p227 = scmp.lt.s32.totalorder %s17, 1
      %s228 = scalar_select %p227, %s17, 1
      %s229 = smul.addr %s228, 32
      %s230 = smul.addr %s229, 4
      %s231 = scalar_lea.vmem %s4, %s230
      %p232 = scmp.lt.s32.totalorder %s17, 1
      %s233 = scalar_select %p232, %s17, 1
      %s234 = smul.addr %s233, 2
      %s235 = scalar_lea.vmem %s5, %s234
      %v237 = vld [vmem:[%s226] sm:$0xf]
      %v238 = vld [vmem:[%s226 + $0x4] sm:$0xf]
      %v239 = vld [vmem:[%s226 + $0x8] sm:$0xf]
      %v240 = vld [vmem:[%s226 + $0xc] sm:$0xf]
      %v241 = vld [vmem:[%s226 + $0x10] sm:$0xf]
      %v242 = vld [vmem:[%s226 + $0x14] sm:$0xf]
      %v243 = vld [vmem:[%s226 + $0x18] sm:$0xf]
      %v244 = vld [vmem:[%s226 + $0x1c] sm:$0xf]
      %v245 = vld [vmem:[%s226 + $0x20] sm:$0xf]
      %v246 = vld [vmem:[%s226 + $0x24] sm:$0xf]
      %v247 = vld [vmem:[%s226 + $0x28] sm:$0xf]
      %v248 = vld [vmem:[%s226 + $0x2c] sm:$0xf]
      %v249 = vld [vmem:[%s226 + $0x30] sm:$0xf]
      %v250 = vld [vmem:[%s226 + $0x34] sm:$0xf]
      %v251 = vld [vmem:[%s226 + $0x38] sm:$0xf]
      %v252 = vld [vmem:[%s226 + $0x3c] sm:$0xf]
      %v253 = vld [vmem:[%s226 + $0x40] sm:$0xf]
      %v254 = vld [vmem:[%s226 + $0x44] sm:$0xf]
      %v255 = vld [vmem:[%s226 + $0x48] sm:$0xf]
      %v256 = vld [vmem:[%s226 + $0x4c] sm:$0xf]
      %v257 = vld [vmem:[%s226 + $0x50] sm:$0xf]
      %v258 = vld [vmem:[%s226 + $0x54] sm:$0xf]
      %v259 = vld [vmem:[%s226 + $0x58] sm:$0xf]
      %v260 = vld [vmem:[%s226 + $0x5c] sm:$0xf]
      %v261 = vld [vmem:[%s226 + $0x60] sm:$0xf]
      %v262 = vld [vmem:[%s226 + $0x64] sm:$0xf]
      %v263 = vld [vmem:[%s226 + $0x68] sm:$0xf]
      %v264 = vld [vmem:[%s226 + $0x6c] sm:$0xf]
      %v265 = vld [vmem:[%s226 + $0x70] sm:$0xf]
      %v266 = vld [vmem:[%s226 + $0x74] sm:$0xf]
      %v267 = vld [vmem:[%s226 + $0x78] sm:$0xf]
      %v268 = vld [vmem:[%s226 + $0x7c] sm:$0xf]
      %v269 = vunpack.c.l.bf16 %v237
      %v270 = vunpack.c.l.bf16 %v238
      %v271 = vunpack.c.l.bf16 %v239
      %v272 = vunpack.c.l.bf16 %v240
      %v273 = vunpack.c.l.bf16 %v241
      %v274 = vunpack.c.l.bf16 %v242
      %v275 = vunpack.c.l.bf16 %v243
      %v276 = vunpack.c.l.bf16 %v244
      %v277 = vunpack.c.l.bf16 %v245
      %v278 = vunpack.c.l.bf16 %v246
      %v279 = vunpack.c.l.bf16 %v247
      %v280 = vunpack.c.l.bf16 %v248
      %v281 = vunpack.c.l.bf16 %v249
      %v282 = vunpack.c.l.bf16 %v250
      %v283 = vunpack.c.l.bf16 %v251
      %v284 = vunpack.c.l.bf16 %v252
      %v285 = vunpack.c.l.bf16 %v253
      %v286 = vunpack.c.l.bf16 %v254
      %v287 = vunpack.c.l.bf16 %v255
      %v288 = vunpack.c.l.bf16 %v256
      %v289 = vunpack.c.l.bf16 %v257
      %v290 = vunpack.c.l.bf16 %v258
      %v291 = vunpack.c.l.bf16 %v259
      %v292 = vunpack.c.l.bf16 %v260
      %v293 = vunpack.c.l.bf16 %v261
      %v294 = vunpack.c.l.bf16 %v262
      %v295 = vunpack.c.l.bf16 %v263
      %v296 = vunpack.c.l.bf16 %v264
      %v297 = vunpack.c.l.bf16 %v265
      %v298 = vunpack.c.l.bf16 %v266
      %v299 = vunpack.c.l.bf16 %v267
      %v300 = vunpack.c.l.bf16 %v268
      %v301 = vld [vmem:[%s1] sm:$0x1]
      %v303 = vperm.slane %v301, 0
      %v305 = vmul.f32 %v269, %v303
      %v306 = vmul.f32 %v270, %v303
      %v307 = vmul.f32 %v271, %v303
      %v308 = vmul.f32 %v272, %v303
      %v309 = vmul.f32 %v273, %v303
      %v310 = vmul.f32 %v274, %v303
      %v311 = vmul.f32 %v275, %v303
      %v312 = vmul.f32 %v276, %v303
      %v313 = vmul.f32 %v277, %v303
      %v314 = vmul.f32 %v278, %v303
      %v315 = vmul.f32 %v279, %v303
      %v316 = vmul.f32 %v280, %v303
      %v317 = vmul.f32 %v281, %v303
      %v318 = vmul.f32 %v282, %v303
      %v319 = vmul.f32 %v283, %v303
      %v320 = vmul.f32 %v284, %v303
      %v321 = vmul.f32 %v285, %v303
      %v322 = vmul.f32 %v286, %v303
      %v323 = vmul.f32 %v287, %v303
      %v324 = vmul.f32 %v288, %v303
      %v325 = vmul.f32 %v289, %v303
      %v326 = vmul.f32 %v290, %v303
      %v327 = vmul.f32 %v291, %v303
      %v328 = vmul.f32 %v292, %v303
      %v329 = vmul.f32 %v293, %v303
      %v330 = vmul.f32 %v294, %v303
      %v331 = vmul.f32 %v295, %v303
      %v332 = vmul.f32 %v296, %v303
      %v333 = vmul.f32 %v297, %v303
      %v334 = vmul.f32 %v298, %v303
      %v335 = vmul.f32 %v299, %v303
      %v336 = vmul.f32 %v300, %v303
      %v337 = vld [vmem:[%s2] sm:$0x1]
      %v339 = vperm.slane %v337, 0
      %v341 = vadd.f32 %v305, %v339
      %v342 = vadd.f32 %v306, %v339
      %v343 = vadd.f32 %v307, %v339
      %v344 = vadd.f32 %v308, %v339
      %v345 = vadd.f32 %v309, %v339
      %v346 = vadd.f32 %v310, %v339
      %v347 = vadd.f32 %v311, %v339
      %v348 = vadd.f32 %v312, %v339
      %v349 = vadd.f32 %v313, %v339
      %v350 = vadd.f32 %v314, %v339
      %v351 = vadd.f32 %v315, %v339
      %v352 = vadd.f32 %v316, %v339
      %v353 = vadd.f32 %v317, %v339
      %v354 = vadd.f32 %v318, %v339
      %v355 = vadd.f32 %v319, %v339
      %v356 = vadd.f32 %v320, %v339
      %v357 = vadd.f32 %v321, %v339
      %v358 = vadd.f32 %v322, %v339
      %v359 = vadd.f32 %v323, %v339
      %v360 = vadd.f32 %v324, %v339
      %v361 = vadd.f32 %v325, %v339
      %v362 = vadd.f32 %v326, %v339
      %v363 = vadd.f32 %v327, %v339
      %v364 = vadd.f32 %v328, %v339
      %v365 = vadd.f32 %v329, %v339
      %v366 = vadd.f32 %v330, %v339
      %v367 = vadd.f32 %v331, %v339
      %v368 = vadd.f32 %v332, %v339
      %v369 = vadd.f32 %v333, %v339
      %v370 = vadd.f32 %v334, %v339
      %v371 = vadd.f32 %v335, %v339
      %v372 = vadd.f32 %v336, %v339
      %v373 = vmax.f32 %v341, 0.0
      %v374 = vmax.f32 %v342, 0.0
      %v375 = vmax.f32 %v343, 0.0
      %v376 = vmax.f32 %v344, 0.0
      %v377 = vmax.f32 %v345, 0.0
      %v378 = vmax.f32 %v346, 0.0
      %v379 = vmax.f32 %v347, 0.0
      %v380 = vmax.f32 %v348, 0.0
      %v381 = vmax.f32 %v349, 0.0
      %v382 = vmax.f32 %v350, 0.0
      %v383 = vmax.f32 %v351, 0.0
      %v384 = vmax.f32 %v352, 0.0
      %v385 = vmax.f32 %v353, 0.0
      %v386 = vmax.f32 %v354, 0.0
      %v387 = vmax.f32 %v355, 0.0
      %v388 = vmax.f32 %v356, 0.0
      %v389 = vmax.f32 %v357, 0.0
      %v390 = vmax.f32 %v358, 0.0
      %v391 = vmax.f32 %v359, 0.0
      %v392 = vmax.f32 %v360, 0.0
      %v393 = vmax.f32 %v361, 0.0
      %v394 = vmax.f32 %v362, 0.0
      %v395 = vmax.f32 %v363, 0.0
      %v396 = vmax.f32 %v364, 0.0
      %v397 = vmax.f32 %v365, 0.0
      %v398 = vmax.f32 %v366, 0.0
      %v399 = vmax.f32 %v367, 0.0
      %v400 = vmax.f32 %v368, 0.0
      %v401 = vmax.f32 %v369, 0.0
      %v402 = vmax.f32 %v370, 0.0
      %v403 = vmax.f32 %v371, 0.0
      %v404 = vmax.f32 %v372, 0.0
      %405 = vst [vmem:[#allocation2] sm:$0xf] 0
      %406 = vst [vmem:[#allocation2 + $0x4] sm:$0xf] 0
      %407 = vst [vmem:[#allocation2 + $0x8] sm:$0x1] 0
      %s408 = scalar_lea.vmem [#allocation2], 204
      %409 = vst [vmem:[%s408] sm:$0xf] 0
      %410 = vst [vmem:[%s408 + $0x4] sm:$0xf] 0
      %411 = vst [vmem:[%s408 + $0x8] sm:$0x1] 0
      %vm412 = vcmask 1040384
      %vm413 = vsmask.f32 256
      %vm414 = vmand %vm412, %vm413
      %v415 = vld [vmem:[#allocation2] sm:$0x1]
      %v416 = vsel %vm414, 0, %v415
      %417 = vst [vmem:[#allocation2] sm:$0x1] %v416
      %v418 = vld [vmem:[#allocation2 + $0xc] sm:$0x1]
      %v419 = vsel %vm414, 0, %v418
      %420 = vst [vmem:[#allocation2 + $0xc] sm:$0x1] %v419
      %v421 = vld [vmem:[#allocation2 + $0x18] sm:$0x1]
      %v422 = vsel %vm414, 0, %v421
      %423 = vst [vmem:[#allocation2 + $0x18] sm:$0x1] %v422
      %v424 = vld [vmem:[#allocation2 + $0x24] sm:$0x1]
      %v425 = vsel %vm414, 0, %v424
      %426 = vst [vmem:[#allocation2 + $0x24] sm:$0x1] %v425
      %v427 = vld [vmem:[#allocation2 + $0x30] sm:$0x1]
      %v428 = vsel %vm414, 0, %v427
      %429 = vst [vmem:[#allocation2 + $0x30] sm:$0x1] %v428
      %v430 = vld [vmem:[#allocation2 + $0x3c] sm:$0x1]
      %v431 = vsel %vm414, 0, %v430
      %432 = vst [vmem:[#allocation2 + $0x3c] sm:$0x1] %v431
      %v433 = vld [vmem:[#allocation2 + $0x48] sm:$0x1]
      %v434 = vsel %vm414, 0, %v433
      %435 = vst [vmem:[#allocation2 + $0x48] sm:$0x1] %v434
      %v436 = vld [vmem:[#allocation2 + $0x54] sm:$0x1]
      %v437 = vsel %vm414, 0, %v436
      %438 = vst [vmem:[#allocation2 + $0x54] sm:$0x1] %v437
      %v439 = vld [vmem:[#allocation2 + $0x60] sm:$0x1]
      %v440 = vsel %vm414, 0, %v439
      %441 = vst [vmem:[#allocation2 + $0x60] sm:$0x1] %v440
      %v442 = vld [vmem:[#allocation2 + $0x6c] sm:$0x1]
      %v443 = vsel %vm414, 0, %v442
      %444 = vst [vmem:[#allocation2 + $0x6c] sm:$0x1] %v443
      %v445 = vld [vmem:[#allocation2 + $0x78] sm:$0x1]
      %v446 = vsel %vm414, 0, %v445
      %447 = vst [vmem:[#allocation2 + $0x78] sm:$0x1] %v446
      %v448 = vld [vmem:[#allocation2 + $0x84] sm:$0x1]
      %v449 = vsel %vm414, 0, %v448
      %450 = vst [vmem:[#allocation2 + $0x84] sm:$0x1] %v449
      %v451 = vld [vmem:[#allocation2 + $0x90] sm:$0x1]
      %v452 = vsel %vm414, 0, %v451
      %453 = vst [vmem:[#allocation2 + $0x90] sm:$0x1] %v452
      %v454 = vld [vmem:[#allocation2 + $0x9c] sm:$0x1]
      %v455 = vsel %vm414, 0, %v454
      %456 = vst [vmem:[#allocation2 + $0x9c] sm:$0x1] %v455
      %v457 = vld [vmem:[#allocation2 + $0xa8] sm:$0x1]
      %v458 = vsel %vm414, 0, %v457
      %459 = vst [vmem:[#allocation2 + $0xa8] sm:$0x1] %v458
      %v460 = vld [vmem:[#allocation2 + $0xb4] sm:$0x1]
      %v461 = vsel %vm414, 0, %v460
      %462 = vst [vmem:[#allocation2 + $0xb4] sm:$0x1] %v461
      %v463 = vld [vmem:[#allocation2 + $0xc0] sm:$0x1]
      %v464 = vsel %vm414, 0, %v463
      %465 = vst [vmem:[#allocation2 + $0xc0] sm:$0x1] %v464
      %v466 = vld [vmem:[#allocation2 + $0xcc] sm:$0x1]
      %v467 = vsel %vm414, 0, %v466
      %468 = vst [vmem:[#allocation2 + $0xcc] sm:$0x1] %v467
      %vm469 = vsmask.f32 7938
      %vm470 = vmand %vm412, %vm469
      %v471 = vld [vmem:[#allocation2 + $0x8] sm:$0x1]
      %v472 = vsel %vm470, 0, %v471
      %473 = vst [vmem:[#allocation2 + $0x8] sm:$0x1] %v472
      %v474 = vld [vmem:[#allocation2 + $0x14] sm:$0x1]
      %v475 = vsel %vm470, 0, %v474
      %476 = vst [vmem:[#allocation2 + $0x14] sm:$0x1] %v475
      %v477 = vld [vmem:[#allocation2 + $0x20] sm:$0x1]
      %v478 = vsel %vm470, 0, %v477
      %479 = vst [vmem:[#allocation2 + $0x20] sm:$0x1] %v478
      %v480 = vld [vmem:[#allocation2 + $0x2c] sm:$0x1]
      %v481 = vsel %vm470, 0, %v480
      %482 = vst [vmem:[#allocation2 + $0x2c] sm:$0x1] %v481
      %v483 = vld [vmem:[#allocation2 + $0x38] sm:$0x1]
      %v484 = vsel %vm470, 0, %v483
      %485 = vst [vmem:[#allocation2 + $0x38] sm:$0x1] %v484
      %v486 = vld [vmem:[#allocation2 + $0x44] sm:$0x1]
      %v487 = vsel %vm470, 0, %v486
      %488 = vst [vmem:[#allocation2 + $0x44] sm:$0x1] %v487
      %v489 = vld [vmem:[#allocation2 + $0x50] sm:$0x1]
      %v490 = vsel %vm470, 0, %v489
      %491 = vst [vmem:[#allocation2 + $0x50] sm:$0x1] %v490
      %v492 = vld [vmem:[#allocation2 + $0x5c] sm:$0x1]
      %v493 = vsel %vm470, 0, %v492
      %494 = vst [vmem:[#allocation2 + $0x5c] sm:$0x1] %v493
      %v495 = vld [vmem:[#allocation2 + $0x68] sm:$0x1]
      %v496 = vsel %vm470, 0, %v495
      %497 = vst [vmem:[#allocation2 + $0x68] sm:$0x1] %v496
      %v498 = vld [vmem:[#allocation2 + $0x74] sm:$0x1]
      %v499 = vsel %vm470, 0, %v498
      %500 = vst [vmem:[#allocation2 + $0x74] sm:$0x1] %v499
      %v501 = vld [vmem:[#allocation2 + $0x80] sm:$0x1]
      %v502 = vsel %vm470, 0, %v501
      %503 = vst [vmem:[#allocation2 + $0x80] sm:$0x1] %v502
      %v504 = vld [vmem:[#allocation2 + $0x8c] sm:$0x1]
      %v505 = vsel %vm470, 0, %v504
      %506 = vst [vmem:[#allocation2 + $0x8c] sm:$0x1] %v505
      %v507 = vld [vmem:[#allocation2 + $0x98] sm:$0x1]
      %v508 = vsel %vm470, 0, %v507
      %509 = vst [vmem:[#allocation2 + $0x98] sm:$0x1] %v508
      %v510 = vld [vmem:[#allocation2 + $0xa4] sm:$0x1]
      %v511 = vsel %vm470, 0, %v510
      %512 = vst [vmem:[#allocation2 + $0xa4] sm:$0x1] %v511
      %v513 = vld [vmem:[#allocation2 + $0xb0] sm:$0x1]
      %v514 = vsel %vm470, 0, %v513
      %515 = vst [vmem:[#allocation2 + $0xb0] sm:$0x1] %v514
      %v516 = vld [vmem:[#allocation2 + $0xbc] sm:$0x1]
      %v517 = vsel %vm470, 0, %v516
      %518 = vst [vmem:[#allocation2 + $0xbc] sm:$0x1] %v517
      %v519 = vld [vmem:[#allocation2 + $0xc8] sm:$0x1]
      %v520 = vsel %vm470, 0, %v519
      %521 = vst [vmem:[#allocation2 + $0xc8] sm:$0x1] %v520
      %v522 = vld [vmem:[#allocation2 + $0xd4] sm:$0x1]
      %v523 = vsel %vm470, 0, %v522
      %524 = vst [vmem:[#allocation2 + $0xd4] sm:$0x1] %v523
      %v525 = vpack.c.bf16 %v373, %v373
      %v526 = vpack.c.bf16 %v374, %v374
      %v527 = vpack.c.bf16 %v375, %v375
      %v528 = vpack.c.bf16 %v376, %v376
      %v529 = vpack.c.bf16 %v377, %v377
      %v530 = vpack.c.bf16 %v378, %v378
      %v531 = vpack.c.bf16 %v379, %v379
      %v532 = vpack.c.bf16 %v380, %v380
      %v533 = vpack.c.bf16 %v381, %v381
      %v534 = vpack.c.bf16 %v382, %v382
      %v535 = vpack.c.bf16 %v383, %v383
      %v536 = vpack.c.bf16 %v384, %v384
      %v537 = vpack.c.bf16 %v385, %v385
      %v538 = vpack.c.bf16 %v386, %v386
      %v539 = vpack.c.bf16 %v387, %v387
      %v540 = vpack.c.bf16 %v388, %v388
      %v541 = vpack.c.bf16 %v389, %v389
      %v542 = vpack.c.bf16 %v390, %v390
      %v543 = vpack.c.bf16 %v391, %v391
      %v544 = vpack.c.bf16 %v392, %v392
      %v545 = vpack.c.bf16 %v393, %v393
      %v546 = vpack.c.bf16 %v394, %v394
      %v547 = vpack.c.bf16 %v395, %v395
      %v548 = vpack.c.bf16 %v396, %v396
      %v549 = vpack.c.bf16 %v397, %v397
      %v550 = vpack.c.bf16 %v398, %v398
      %v551 = vpack.c.bf16 %v399, %v399
      %v552 = vpack.c.bf16 %v400, %v400
      %v553 = vpack.c.bf16 %v401, %v401
      %v554 = vpack.c.bf16 %v402, %v402
      %v555 = vpack.c.bf16 %v403, %v403
      %v556 = vpack.c.bf16 %v404, %v404
      %vm557 = vsmask.f32 4368
      %vm558 = vmor %vm413, %vm557
      %v560 = vshrl.u32 %v525, 16
      %v562 = vrot.slane %v560, 7
      %v563 = vshll.u32 %v525, 16
      %v565 = vor.u32 %v562, %v563
      %v566 = vrot.slane %v562, 4
      %v568 = vshrl.u32 %v526, 16
      %v570 = vrot.slane %v568, 7
      %v571 = vshll.u32 %v526, 16
      %v573 = vor.u32 %v570, %v571
      %v574 = vsel %vm558, %v566, %v573
      %v575 = vrot.slane %v570, 4
      %v577 = vshrl.u32 %v527, 16
      %v579 = vrot.slane %v577, 7
      %v580 = vshll.u32 %v527, 16
      %v582 = vor.u32 %v579, %v580
      %v583 = vrot.slane %v579, 4
      %v585 = vshrl.u32 %v528, 16
      %v587 = vrot.slane %v585, 7
      %v588 = vshll.u32 %v528, 16
      %v590 = vor.u32 %v587, %v588
      %v591 = vsel %vm558, %v583, %v590
      %v592 = vrot.slane %v587, 4
      %v594 = vshrl.u32 %v529, 16
      %v596 = vrot.slane %v594, 7
      %v597 = vshll.u32 %v529, 16
      %v599 = vor.u32 %v596, %v597
      %v600 = vrot.slane %v596, 4
      %v602 = vshrl.u32 %v530, 16
      %v604 = vrot.slane %v602, 7
      %v605 = vshll.u32 %v530, 16
      %v607 = vor.u32 %v604, %v605
      %v608 = vsel %vm558, %v600, %v607
      %v609 = vrot.slane %v604, 4
      %v611 = vshrl.u32 %v531, 16
      %v613 = vrot.slane %v611, 7
      %v614 = vshll.u32 %v531, 16
      %v616 = vor.u32 %v613, %v614
      %v617 = vrot.slane %v613, 4
      %v619 = vshrl.u32 %v532, 16
      %v621 = vrot.slane %v619, 7
      %v622 = vshll.u32 %v532, 16
      %v624 = vor.u32 %v621, %v622
      %v625 = vsel %vm558, %v617, %v624
      %v626 = vrot.slane %v621, 4
      %v628 = vshrl.u32 %v533, 16
      %v630 = vrot.slane %v628, 7
      %v631 = vshll.u32 %v533, 16
      %v633 = vor.u32 %v630, %v631
      %v634 = vrot.slane %v630, 4
      %v636 = vshrl.u32 %v534, 16
      %v638 = vrot.slane %v636, 7
      %v639 = vshll.u32 %v534, 16
      %v641 = vor.u32 %v638, %v639
      %v642 = vsel %vm558, %v634, %v641
      %v643 = vrot.slane %v638, 4
      %v645 = vshrl.u32 %v535, 16
      %v647 = vrot.slane %v645, 7
      %v648 = vshll.u32 %v535, 16
      %v650 = vor.u32 %v647, %v648
      %v651 = vrot.slane %v647, 4
      %v653 = vshrl.u32 %v536, 16
      %v655 = vrot.slane %v653, 7
      %v656 = vshll.u32 %v536, 16
      %v658 = vor.u32 %v655, %v656
      %v659 = vsel %vm558, %v651, %v658
      %v660 = vrot.slane %v655, 4
      %v662 = vshrl.u32 %v537, 16
      %v664 = vrot.slane %v662, 7
      %v665 = vshll.u32 %v537, 16
      %v667 = vor.u32 %v664, %v665
      %v668 = vrot.slane %v664, 4
      %v670 = vshrl.u32 %v538, 16
      %v672 = vrot.slane %v670, 7
      %v673 = vshll.u32 %v538, 16
      %v675 = vor.u32 %v672, %v673
      %v676 = vsel %vm558, %v668, %v675
      %v677 = vrot.slane %v672, 4
      %v679 = vshrl.u32 %v539, 16
      %v681 = vrot.slane %v679, 7
      %v682 = vshll.u32 %v539, 16
      %v684 = vor.u32 %v681, %v682
      %v685 = vrot.slane %v681, 4
      %v687 = vshrl.u32 %v540, 16
      %v689 = vrot.slane %v687, 7
      %v690 = vshll.u32 %v540, 16
      %v692 = vor.u32 %v689, %v690
      %v693 = vsel %vm558, %v685, %v692
      %v694 = vrot.slane %v689, 4
      %v696 = vshrl.u32 %v541, 16
      %v698 = vrot.slane %v696, 7
      %v699 = vshll.u32 %v541, 16
      %v701 = vor.u32 %v698, %v699
      %v702 = vrot.slane %v698, 4
      %v704 = vshrl.u32 %v542, 16
      %v706 = vrot.slane %v704, 7
      %v707 = vshll.u32 %v542, 16
      %v709 = vor.u32 %v706, %v707
      %v710 = vsel %vm558, %v702, %v709
      %v711 = vrot.slane %v706, 4
      %v713 = vshrl.u32 %v543, 16
      %v715 = vrot.slane %v713, 7
      %v716 = vshll.u32 %v543, 16
      %v718 = vor.u32 %v715, %v716
      %v719 = vrot.slane %v715, 4
      %v721 = vshrl.u32 %v544, 16
      %v723 = vrot.slane %v721, 7
      %v724 = vshll.u32 %v544, 16
      %v726 = vor.u32 %v723, %v724
      %v727 = vsel %vm558, %v719, %v726
      %v728 = vrot.slane %v723, 4
      %v730 = vshrl.u32 %v545, 16
      %v732 = vrot.slane %v730, 7
      %v733 = vshll.u32 %v545, 16
      %v735 = vor.u32 %v732, %v733
      %v736 = vrot.slane %v732, 4
      %v738 = vshrl.u32 %v546, 16
      %v740 = vrot.slane %v738, 7
      %v741 = vshll.u32 %v546, 16
      %v743 = vor.u32 %v740, %v741
      %v744 = vsel %vm558, %v736, %v743
      %v745 = vrot.slane %v740, 4
      %v747 = vshrl.u32 %v547, 16
      %v749 = vrot.slane %v747, 7
      %v750 = vshll.u32 %v547, 16
      %v752 = vor.u32 %v749, %v750
      %v753 = vrot.slane %v749, 4
      %v755 = vshrl.u32 %v548, 16
      %v757 = vrot.slane %v755, 7
      %v758 = vshll.u32 %v548, 16
      %v760 = vor.u32 %v757, %v758
      %v761 = vsel %vm558, %v753, %v760
      %v762 = vrot.slane %v757, 4
      %v764 = vshrl.u32 %v549, 16
      %v766 = vrot.slane %v764, 7
      %v767 = vshll.u32 %v549, 16
      %v769 = vor.u32 %v766, %v767
      %v770 = vrot.slane %v766, 4
      %v772 = vshrl.u32 %v550, 16
      %v774 = vrot.slane %v772, 7
      %v775 = vshll.u32 %v550, 16
      %v777 = vor.u32 %v774, %v775
      %v778 = vsel %vm558, %v770, %v777
      %v779 = vrot.slane %v774, 4
      %v781 = vshrl.u32 %v551, 16
      %v783 = vrot.slane %v781, 7
      %v784 = vshll.u32 %v551, 16
      %v786 = vor.u32 %v783, %v784
      %v787 = vrot.slane %v783, 4
      %v789 = vshrl.u32 %v552, 16
      %v791 = vrot.slane %v789, 7
      %v792 = vshll.u32 %v552, 16
      %v794 = vor.u32 %v791, %v792
      %v795 = vsel %vm558, %v787, %v794
      %v796 = vrot.slane %v791, 4
      %v798 = vshrl.u32 %v553, 16
      %v800 = vrot.slane %v798, 7
      %v801 = vshll.u32 %v553, 16
      %v803 = vor.u32 %v800, %v801
      %v804 = vrot.slane %v800, 4
      %v806 = vshrl.u32 %v554, 16
      %v808 = vrot.slane %v806, 7
      %v809 = vshll.u32 %v554, 16
      %v811 = vor.u32 %v808, %v809
      %v812 = vsel %vm558, %v804, %v811
      %v813 = vrot.slane %v808, 4
      %v815 = vshrl.u32 %v555, 16
      %v817 = vrot.slane %v815, 7
      %v818 = vshll.u32 %v555, 16
      %v820 = vor.u32 %v817, %v818
      %v821 = vrot.slane %v817, 4
      %v823 = vshrl.u32 %v556, 16
      %v825 = vrot.slane %v823, 7
      %v826 = vshll.u32 %v556, 16
      %v828 = vor.u32 %v825, %v826
      %v829 = vsel %vm558, %v821, %v828
      %v830 = vrot.slane %v825, 4
      %s879 = scalar_lea.vmem [#allocation2], 12
      %vm880 = vcmask 1043456
      %vm881 = vmand %vm880, %vm469
      %v882 = vld [vmem:[%s879] sm:$0xf]
      %v883 = vsel %vm881, %v565, %v882
      %884 = vst [vmem:[%s879] sm:$0xf] %v883
      %885 = vst [vmem:[%s879 + $0x4] sm:$0xf] %v574
      %v886 = vld [vmem:[%s879 + $0x8] sm:$0x1]
      %v887 = vsel %vm414, %v575, %v886
      %888 = vst [vmem:[%s879 + $0x8] sm:$0x1] %v887
      %v889 = vld [vmem:[%s879 + $0xc] sm:$0xf]
      %v890 = vsel %vm881, %v582, %v889
      %891 = vst [vmem:[%s879 + $0xc] sm:$0xf] %v890
      %892 = vst [vmem:[%s879 + $0x10] sm:$0xf] %v591
      %v893 = vld [vmem:[%s879 + $0x14] sm:$0x1]
      %v894 = vsel %vm414, %v592, %v893
      %895 = vst [vmem:[%s879 + $0x14] sm:$0x1] %v894
      %v896 = vld [vmem:[%s879 + $0x18] sm:$0xf]
      %v897 = vsel %vm881, %v599, %v896
      %898 = vst [vmem:[%s879 + $0x18] sm:$0xf] %v897
      %899 = vst [vmem:[%s879 + $0x1c] sm:$0xf] %v608
      %v900 = vld [vmem:[%s879 + $0x20] sm:$0x1]
      %v901 = vsel %vm414, %v609, %v900
      %902 = vst [vmem:[%s879 + $0x20] sm:$0x1] %v901
      %v903 = vld [vmem:[%s879 + $0x24] sm:$0xf]
      %v904 = vsel %vm881, %v616, %v903
      %905 = vst [vmem:[%s879 + $0x24] sm:$0xf] %v904
      %906 = vst [vmem:[%s879 + $0x28] sm:$0xf] %v625
      %v907 = vld [vmem:[%s879 + $0x2c] sm:$0x1]
      %v908 = vsel %vm414, %v626, %v907
      %909 = vst [vmem:[%s879 + $0x2c] sm:$0x1] %v908
      %v910 = vld [vmem:[%s879 + $0x30] sm:$0xf]
      %v911 = vsel %vm881, %v633, %v910
      %912 = vst [vmem:[%s879 + $0x30] sm:$0xf] %v911
      %913 = vst [vmem:[%s879 + $0x34] sm:$0xf] %v642
      %v914 = vld [vmem:[%s879 + $0x38] sm:$0x1]
      %v915 = vsel %vm414, %v643, %v914
      %916 = vst [vmem:[%s879 + $0x38] sm:$0x1] %v915
      %v917 = vld [vmem:[%s879 + $0x3c] sm:$0xf]
      %v918 = vsel %vm881, %v650, %v917
      %919 = vst [vmem:[%s879 + $0x3c] sm:$0xf] %v918
      %920 = vst [vmem:[%s879 + $0x40] sm:$0xf] %v659
      %v921 = vld [vmem:[%s879 + $0x44] sm:$0x1]
      %v922 = vsel %vm414, %v660, %v921
      %923 = vst [vmem:[%s879 + $0x44] sm:$0x1] %v922
      %v924 = vld [vmem:[%s879 + $0x48] sm:$0xf]
      %v925 = vsel %vm881, %v667, %v924
      %926 = vst [vmem:[%s879 + $0x48] sm:$0xf] %v925
      %927 = vst [vmem:[%s879 + $0x4c] sm:$0xf] %v676
      %v928 = vld [vmem:[%s879 + $0x50] sm:$0x1]
      %v929 = vsel %vm414, %v677, %v928
      %930 = vst [vmem:[%s879 + $0x50] sm:$0x1] %v929
      %v931 = vld [vmem:[%s879 + $0x54] sm:$0xf]
      %v932 = vsel %vm881, %v684, %v931
      %933 = vst [vmem:[%s879 + $0x54] sm:$0xf] %v932
      %934 = vst [vmem:[%s879 + $0x58] sm:$0xf] %v693
      %v935 = vld [vmem:[%s879 + $0x5c] sm:$0x1]
      %v936 = vsel %vm414, %v694, %v935
      %937 = vst [vmem:[%s879 + $0x5c] sm:$0x1] %v936
      %v938 = vld [vmem:[%s879 + $0x60] sm:$0xf]
      %v939 = vsel %vm881, %v701, %v938
      %940 = vst [vmem:[%s879 + $0x60] sm:$0xf] %v939
      %941 = vst [vmem:[%s879 + $0x64] sm:$0xf] %v710
      %v942 = vld [vmem:[%s879 + $0x68] sm:$0x1]
      %v943 = vsel %vm414, %v711, %v942
      %944 = vst [vmem:[%s879 + $0x68] sm:$0x1] %v943
      %v945 = vld [vmem:[%s879 + $0x6c] sm:$0xf]
      %v946 = vsel %vm881, %v718, %v945
      %947 = vst [vmem:[%s879 + $0x6c] sm:$0xf] %v946
      %948 = vst [vmem:[%s879 + $0x70] sm:$0xf] %v727
      %v949 = vld [vmem:[%s879 + $0x74] sm:$0x1]
      %v950 = vsel %vm414, %v728, %v949
      %951 = vst [vmem:[%s879 + $0x74] sm:$0x1] %v950
      %v952 = vld [vmem:[%s879 + $0x78] sm:$0xf]
      %v953 = vsel %vm881, %v735, %v952
      %954 = vst [vmem:[%s879 + $0x78] sm:$0xf] %v953
      %955 = vst [vmem:[%s879 + $0x7c] sm:$0xf] %v744
      %v956 = vld [vmem:[%s879 + $0x80] sm:$0x1]
      %v957 = vsel %vm414, %v745, %v956
      %958 = vst [vmem:[%s879 + $0x80] sm:$0x1] %v957
      %v959 = vld [vmem:[%s879 + $0x84] sm:$0xf]
      %v960 = vsel %vm881, %v752, %v959
      %961 = vst [vmem:[%s879 + $0x84] sm:$0xf] %v960
      %962 = vst [vmem:[%s879 + $0x88] sm:$0xf] %v761
      %v963 = vld [vmem:[%s879 + $0x8c] sm:$0x1]
      %v964 = vsel %vm414, %v762, %v963
      %965 = vst [vmem:[%s879 + $0x8c] sm:$0x1] %v964
      %v966 = vld [vmem:[%s879 + $0x90] sm:$0xf]
      %v967 = vsel %vm881, %v769, %v966
      %968 = vst [vmem:[%s879 + $0x90] sm:$0xf] %v967
      %969 = vst [vmem:[%s879 + $0x94] sm:$0xf] %v778
      %v970 = vld [vmem:[%s879 + $0x98] sm:$0x1]
      %v971 = vsel %vm414, %v779, %v970
      %972 = vst [vmem:[%s879 + $0x98] sm:$0x1] %v971
      %v973 = vld [vmem:[%s879 + $0x9c] sm:$0xf]
      %v974 = vsel %vm881, %v786, %v973
      %975 = vst [vmem:[%s879 + $0x9c] sm:$0xf] %v974
      %976 = vst [vmem:[%s879 + $0xa0] sm:$0xf] %v795
      %v977 = vld [vmem:[%s879 + $0xa4] sm:$0x1]
      %v978 = vsel %vm414, %v796, %v977
      %979 = vst [vmem:[%s879 + $0xa4] sm:$0x1] %v978
      %v980 = vld [vmem:[%s879 + $0xa8] sm:$0xf]
      %v981 = vsel %vm881, %v803, %v980
      %982 = vst [vmem:[%s879 + $0xa8] sm:$0xf] %v981
      %983 = vst [vmem:[%s879 + $0xac] sm:$0xf] %v812
      %v984 = vld [vmem:[%s879 + $0xb0] sm:$0x1]
      %v985 = vsel %vm414, %v813, %v984
      %986 = vst [vmem:[%s879 + $0xb0] sm:$0x1] %v985
      %v987 = vld [vmem:[%s879 + $0xb4] sm:$0xf]
      %v988 = vsel %vm881, %v820, %v987
      %989 = vst [vmem:[%s879 + $0xb4] sm:$0xf] %v988
      %990 = vst [vmem:[%s879 + $0xb8] sm:$0xf] %v829
      %v991 = vld [vmem:[%s879 + $0xbc] sm:$0x1]
      %v992 = vsel %vm414, %v830, %v991
      %993 = vst [vmem:[%s879 + $0xbc] sm:$0x1] %v992
      %v994 = vld [vmem:[#allocation2] sm:$0xf]
      %v995 = vld [vmem:[#allocation2 + $0x4] sm:$0xf]
      %v996 = vld [vmem:[#allocation2 + $0xc] sm:$0xf]
      %v997 = vld [vmem:[#allocation2 + $0x10] sm:$0xf]
      %v998 = vld [vmem:[#allocation2 + $0x18] sm:$0xf]
      %v999 = vld [vmem:[#allocation2 + $0x1c] sm:$0xf]
      %v1000 = vld [vmem:[#allocation2 + $0x24] sm:$0xf]
      %v1001 = vld [vmem:[#allocation2 + $0x28] sm:$0xf]
      %v1002 = vld [vmem:[#allocation2 + $0x30] sm:$0xf]
      %v1003 = vld [vmem:[#allocation2 + $0x34] sm:$0xf]
      %v1004 = vld [vmem:[#allocation2 + $0x3c] sm:$0xf]
      %v1005 = vld [vmem:[#allocation2 + $0x40] sm:$0xf]
      %v1006 = vld [vmem:[#allocation2 + $0x48] sm:$0xf]
      %v1007 = vld [vmem:[#allocation2 + $0x4c] sm:$0xf]
      %v1008 = vld [vmem:[#allocation2 + $0x54] sm:$0xf]
      %v1009 = vld [vmem:[#allocation2 + $0x58] sm:$0xf]
      %v1010 = vld [vmem:[#allocation2 + $0x60] sm:$0xf]
      %v1011 = vld [vmem:[#allocation2 + $0x64] sm:$0xf]
      %v1012 = vld [vmem:[#allocation2 + $0x6c] sm:$0xf]
      %v1013 = vld [vmem:[#allocation2 + $0x70] sm:$0xf]
      %v1014 = vld [vmem:[#allocation2 + $0x78] sm:$0xf]
      %v1015 = vld [vmem:[#allocation2 + $0x7c] sm:$0xf]
      %v1016 = vld [vmem:[#allocation2 + $0x84] sm:$0xf]
      %v1017 = vld [vmem:[#allocation2 + $0x88] sm:$0xf]
      %v1018 = vld [vmem:[#allocation2 + $0x90] sm:$0xf]
      %v1019 = vld [vmem:[#allocation2 + $0x94] sm:$0xf]
      %v1020 = vld [vmem:[#allocation2 + $0x9c] sm:$0xf]
      %v1021 = vld [vmem:[#allocation2 + $0xa0] sm:$0xf]
      %v1022 = vld [vmem:[#allocation2 + $0xa8] sm:$0xf]
      %v1023 = vld [vmem:[#allocation2 + $0xac] sm:$0xf]
      %v1024 = vld [vmem:[#allocation2 + $0xb4] sm:$0xf]
      %v1025 = vld [vmem:[#allocation2 + $0xb8] sm:$0xf]
      %v1026 = vld [vmem:[%s3] sm:$0xf]
      %v1027 = vld [vmem:[%s3 + $0x4] sm:$0xf]
      %v1028 = vld [vmem:[%s3 + $0x8] sm:$0xf]
      %v1029 = vld [vmem:[%s3 + $0xc] sm:$0xf]
      %v1030 = vld [vmem:[%s3 + $0x10] sm:$0xf]
      %v1031 = vld [vmem:[%s3 + $0x14] sm:$0xf]
      %v1032 = vld [vmem:[%s3 + $0x18] sm:$0xf]
      %v1033 = vld [vmem:[%s3 + $0x1c] sm:$0xf]
      %v1034 = vld [vmem:[%s3 + $0x20] sm:$0xf]
      %v1035 = vld [vmem:[%s3 + $0x24] sm:$0xf]
      %v1036 = vld [vmem:[%s3 + $0x28] sm:$0xf]
      %v1037 = vld [vmem:[%s3 + $0x2c] sm:$0xf]
      %v1038 = vld [vmem:[%s3 + $0x30] sm:$0xf]
      %v1039 = vld [vmem:[%s3 + $0x34] sm:$0xf]
      %v1040 = vld [vmem:[%s3 + $0x38] sm:$0xf]
      %v1041 = vld [vmem:[%s3 + $0x3c] sm:$0xf]
      %v1042 = vld [vmem:[#allocation2 + $0x8] sm:$0x1]
      %v1043 = vld [vmem:[#allocation2 + $0x14] sm:$0x1]
      %v1044 = vld [vmem:[#allocation2 + $0x20] sm:$0x1]
      %v1045 = vld [vmem:[#allocation2 + $0x2c] sm:$0x1]
      %v1046 = vld [vmem:[#allocation2 + $0x38] sm:$0x1]
      %v1047 = vld [vmem:[#allocation2 + $0x44] sm:$0x1]
      %v1048 = vld [vmem:[#allocation2 + $0x50] sm:$0x1]
      %v1049 = vld [vmem:[#allocation2 + $0x5c] sm:$0x1]
      %v1050 = vld [vmem:[#allocation2 + $0x68] sm:$0x1]
      %v1051 = vld [vmem:[#allocation2 + $0x74] sm:$0x1]
      %v1052 = vld [vmem:[#allocation2 + $0x80] sm:$0x1]
      %v1053 = vld [vmem:[#allocation2 + $0x8c] sm:$0x1]
      %v1054 = vld [vmem:[#allocation2 + $0x98] sm:$0x1]
      %v1055 = vld [vmem:[#allocation2 + $0xa4] sm:$0x1]
      %v1056 = vld [vmem:[#allocation2 + $0xb0] sm:$0x1]
      %v1057 = vld [vmem:[#allocation2 + $0xbc] sm:$0x1]
      %vm1058 = vsmask.f32 3328
      %vm1059 = vsmask.f32 7440
      %vm1060 = vmor %vm1058, %vm1059
      %v1062 = vshrl.u32 %v994, 16
      %v1064 = vrot.slane %v1062, 4
      %v1065 = vshll.u32 %v994, 16
      %v1067 = vrot.slane %v1065, 5
      %v1068 = vor.u32 %v1064, %v1067
      %v1069 = vrot.slane %v1068, 4
      %v1071 = vshll.u32 %v995, 16
      %v1073 = vrot.slane %v1071, 5
      %v1074 = vsel %vm1060, %v1069, %v1073
      %v1075 = vshrl.u32 %v995, 16
      %v1077 = vrot.slane %v1075, 4
      %v1078 = vor.u32 %v1077, %v1073
      %v1079 = vrot.slane %v1078, 4
      %v1081 = vshll.u32 %v1042, 16
      %v1083 = vrot.slane %v1081, 5
      %v1084 = vsel %vm1060, %v1079, %v1083
      %v1086 = vshrl.u32 %v996, 16
      %v1088 = vrot.slane %v1086, 4
      %v1089 = vshll.u32 %v996, 16
      %v1091 = vrot.slane %v1089, 5
      %v1092 = vor.u32 %v1088, %v1091
      %v1093 = vrot.slane %v1092, 4
      %v1095 = vshll.u32 %v997, 16
      %v1097 = vrot.slane %v1095, 5
      %v1098 = vsel %vm1060, %v1093, %v1097
      %v1099 = vshrl.u32 %v997, 16
      %v1101 = vrot.slane %v1099, 4
      %v1102 = vor.u32 %v1101, %v1097
      %v1103 = vrot.slane %v1102, 4
      %v1105 = vshll.u32 %v1043, 16
      %v1107 = vrot.slane %v1105, 5
      %v1108 = vsel %vm1060, %v1103, %v1107
      %v1110 = vshrl.u32 %v998, 16
      %v1112 = vrot.slane %v1110, 4
      %v1113 = vshll.u32 %v998, 16
      %v1115 = vrot.slane %v1113, 5
      %v1116 = vor.u32 %v1112, %v1115
      %v1117 = vrot.slane %v1116, 4
      %v1119 = vshll.u32 %v999, 16
      %v1121 = vrot.slane %v1119, 5
      %v1122 = vsel %vm1060, %v1117, %v1121
      %v1123 = vshrl.u32 %v999, 16
      %v1125 = vrot.slane %v1123, 4
      %v1126 = vor.u32 %v1125, %v1121
      %v1127 = vrot.slane %v1126, 4
      %v1129 = vshll.u32 %v1044, 16
      %v1131 = vrot.slane %v1129, 5
      %v1132 = vsel %vm1060, %v1127, %v1131
      %v1134 = vshrl.u32 %v1000, 16
      %v1136 = vrot.slane %v1134, 4
      %v1137 = vshll.u32 %v1000, 16
      %v1139 = vrot.slane %v1137, 5
      %v1140 = vor.u32 %v1136, %v1139
      %v1141 = vrot.slane %v1140, 4
      %v1143 = vshll.u32 %v1001, 16
      %v1145 = vrot.slane %v1143, 5
      %v1146 = vsel %vm1060, %v1141, %v1145
      %v1147 = vshrl.u32 %v1001, 16
      %v1149 = vrot.slane %v1147, 4
      %v1150 = vor.u32 %v1149, %v1145
      %v1151 = vrot.slane %v1150, 4
      %v1153 = vshll.u32 %v1045, 16
      %v1155 = vrot.slane %v1153, 5
      %v1156 = vsel %vm1060, %v1151, %v1155
      %v1158 = vshrl.u32 %v1002, 16
      %v1160 = vrot.slane %v1158, 4
      %v1161 = vshll.u32 %v1002, 16
      %v1163 = vrot.slane %v1161, 5
      %v1164 = vor.u32 %v1160, %v1163
      %v1165 = vrot.slane %v1164, 4
      %v1167 = vshll.u32 %v1003, 16
      %v1169 = vrot.slane %v1167, 5
      %v1170 = vsel %vm1060, %v1165, %v1169
      %v1171 = vshrl.u32 %v1003, 16
      %v1173 = vrot.slane %v1171, 4
      %v1174 = vor.u32 %v1173, %v1169
      %v1175 = vrot.slane %v1174, 4
      %v1177 = vshll.u32 %v1046, 16
      %v1179 = vrot.slane %v1177, 5
      %v1180 = vsel %vm1060, %v1175, %v1179
      %v1182 = vshrl.u32 %v1004, 16
      %v1184 = vrot.slane %v1182, 4
      %v1185 = vshll.u32 %v1004, 16
      %v1187 = vrot.slane %v1185, 5
      %v1188 = vor.u32 %v1184, %v1187
      %v1189 = vrot.slane %v1188, 4
      %v1191 = vshll.u32 %v1005, 16
      %v1193 = vrot.slane %v1191, 5
      %v1194 = vsel %vm1060, %v1189, %v1193
      %v1195 = vshrl.u32 %v1005, 16
      %v1197 = vrot.slane %v1195, 4
      %v1198 = vor.u32 %v1197, %v1193
      %v1199 = vrot.slane %v1198, 4
      %v1201 = vshll.u32 %v1047, 16
      %v1203 = vrot.slane %v1201, 5
      %v1204 = vsel %vm1060, %v1199, %v1203
      %v1206 = vshrl.u32 %v1006, 16
      %v1208 = vrot.slane %v1206, 4
      %v1209 = vshll.u32 %v1006, 16
      %v1211 = vrot.slane %v1209, 5
      %v1212 = vor.u32 %v1208, %v1211
      %v1213 = vrot.slane %v1212, 4
      %v1215 = vshll.u32 %v1007, 16
      %v1217 = vrot.slane %v1215, 5
      %v1218 = vsel %vm1060, %v1213, %v1217
      %v1219 = vshrl.u32 %v1007, 16
      %v1221 = vrot.slane %v1219, 4
      %v1222 = vor.u32 %v1221, %v1217
      %v1223 = vrot.slane %v1222, 4
      %v1225 = vshll.u32 %v1048, 16
      %v1227 = vrot.slane %v1225, 5
      %v1228 = vsel %vm1060, %v1223, %v1227
      %v1230 = vshrl.u32 %v1008, 16
      %v1232 = vrot.slane %v1230, 4
      %v1233 = vshll.u32 %v1008, 16
      %v1235 = vrot.slane %v1233, 5
      %v1236 = vor.u32 %v1232, %v1235
      %v1237 = vrot.slane %v1236, 4
      %v1239 = vshll.u32 %v1009, 16
      %v1241 = vrot.slane %v1239, 5
      %v1242 = vsel %vm1060, %v1237, %v1241
      %v1243 = vshrl.u32 %v1009, 16
      %v1245 = vrot.slane %v1243, 4
      %v1246 = vor.u32 %v1245, %v1241
      %v1247 = vrot.slane %v1246, 4
      %v1249 = vshll.u32 %v1049, 16
      %v1251 = vrot.slane %v1249, 5
      %v1252 = vsel %vm1060, %v1247, %v1251
      %v1254 = vshrl.u32 %v1010, 16
      %v1256 = vrot.slane %v1254, 4
      %v1257 = vshll.u32 %v1010, 16
      %v1259 = vrot.slane %v1257, 5
      %v1260 = vor.u32 %v1256, %v1259
      %v1261 = vrot.slane %v1260, 4
      %v1263 = vshll.u32 %v1011, 16
      %v1265 = vrot.slane %v1263, 5
      %v1266 = vsel %vm1060, %v1261, %v1265
      %v1267 = vshrl.u32 %v1011, 16
      %v1269 = vrot.slane %v1267, 4
      %v1270 = vor.u32 %v1269, %v1265
      %v1271 = vrot.slane %v1270, 4
      %v1273 = vshll.u32 %v1050, 16
      %v1275 = vrot.slane %v1273, 5
      %v1276 = vsel %vm1060, %v1271, %v1275
      %v1278 = vshrl.u32 %v1012, 16
      %v1280 = vrot.slane %v1278, 4
      %v1281 = vshll.u32 %v1012, 16
      %v1283 = vrot.slane %v1281, 5
      %v1284 = vor.u32 %v1280, %v1283
      %v1285 = vrot.slane %v1284, 4
      %v1287 = vshll.u32 %v1013, 16
      %v1289 = vrot.slane %v1287, 5
      %v1290 = vsel %vm1060, %v1285, %v1289
      %v1291 = vshrl.u32 %v1013, 16
      %v1293 = vrot.slane %v1291, 4
      %v1294 = vor.u32 %v1293, %v1289
      %v1295 = vrot.slane %v1294, 4
      %v1297 = vshll.u32 %v1051, 16
      %v1299 = vrot.slane %v1297, 5
      %v1300 = vsel %vm1060, %v1295, %v1299
      %v1302 = vshrl.u32 %v1014, 16
      %v1304 = vrot.slane %v1302, 4
      %v1305 = vshll.u32 %v1014, 16
      %v1307 = vrot.slane %v1305, 5
      %v1308 = vor.u32 %v1304, %v1307
      %v1309 = vrot.slane %v1308, 4
      %v1311 = vshll.u32 %v1015, 16
      %v1313 = vrot.slane %v1311, 5
      %v1314 = vsel %vm1060, %v1309, %v1313
      %v1315 = vshrl.u32 %v1015, 16
      %v1317 = vrot.slane %v1315, 4
      %v1318 = vor.u32 %v1317, %v1313
      %v1319 = vrot.slane %v1318, 4
      %v1321 = vshll.u32 %v1052, 16
      %v1323 = vrot.slane %v1321, 5
      %v1324 = vsel %vm1060, %v1319, %v1323
      %v1326 = vshrl.u32 %v1016, 16
      %v1328 = vrot.slane %v1326, 4
      %v1329 = vshll.u32 %v1016, 16
      %v1331 = vrot.slane %v1329, 5
      %v1332 = vor.u32 %v1328, %v1331
      %v1333 = vrot.slane %v1332, 4
      %v1335 = vshll.u32 %v1017, 16
      %v1337 = vrot.slane %v1335, 5
      %v1338 = vsel %vm1060, %v1333, %v1337
      %v1339 = vshrl.u32 %v1017, 16
      %v1341 = vrot.slane %v1339, 4
      %v1342 = vor.u32 %v1341, %v1337
      %v1343 = vrot.slane %v1342, 4
      %v1345 = vshll.u32 %v1053, 16
      %v1347 = vrot.slane %v1345, 5
      %v1348 = vsel %vm1060, %v1343, %v1347
      %v1350 = vshrl.u32 %v1018, 16
      %v1352 = vrot.slane %v1350, 4
      %v1353 = vshll.u32 %v1018, 16
      %v1355 = vrot.slane %v1353, 5
      %v1356 = vor.u32 %v1352, %v1355
      %v1357 = vrot.slane %v1356, 4
      %v1359 = vshll.u32 %v1019, 16
      %v1361 = vrot.slane %v1359, 5
      %v1362 = vsel %vm1060, %v1357, %v1361
      %v1363 = vshrl.u32 %v1019, 16
      %v1365 = vrot.slane %v1363, 4
      %v1366 = vor.u32 %v1365, %v1361
      %v1367 = vrot.slane %v1366, 4
      %v1369 = vshll.u32 %v1054, 16
      %v1371 = vrot.slane %v1369, 5
      %v1372 = vsel %vm1060, %v1367, %v1371
      %v1374 = vshrl.u32 %v1020, 16
      %v1376 = vrot.slane %v1374, 4
      %v1377 = vshll.u32 %v1020, 16
      %v1379 = vrot.slane %v1377, 5
      %v1380 = vor.u32 %v1376, %v1379
      %v1381 = vrot.slane %v1380, 4
      %v1383 = vshll.u32 %v1021, 16
      %v1385 = vrot.slane %v1383, 5
      %v1386 = vsel %vm1060, %v1381, %v1385
      %v1387 = vshrl.u32 %v1021, 16
      %v1389 = vrot.slane %v1387, 4
      %v1390 = vor.u32 %v1389, %v1385
      %v1391 = vrot.slane %v1390, 4
      %v1393 = vshll.u32 %v1055, 16
      %v1395 = vrot.slane %v1393, 5
      %v1396 = vsel %vm1060, %v1391, %v1395
      %v1398 = vshrl.u32 %v1022, 16
      %v1400 = vrot.slane %v1398, 4
      %v1401 = vshll.u32 %v1022, 16
      %v1403 = vrot.slane %v1401, 5
      %v1404 = vor.u32 %v1400, %v1403
      %v1405 = vrot.slane %v1404, 4
      %v1407 = vshll.u32 %v1023, 16
      %v1409 = vrot.slane %v1407, 5
      %v1410 = vsel %vm1060, %v1405, %v1409
      %v1411 = vshrl.u32 %v1023, 16
      %v1413 = vrot.slane %v1411, 4
      %v1414 = vor.u32 %v1413, %v1409
      %v1415 = vrot.slane %v1414, 4
      %v1417 = vshll.u32 %v1056, 16
      %v1419 = vrot.slane %v1417, 5
      %v1420 = vsel %vm1060, %v1415, %v1419
      %v1422 = vshrl.u32 %v1024, 16
      %v1424 = vrot.slane %v1422, 4
      %v1425 = vshll.u32 %v1024, 16
      %v1427 = vrot.slane %v1425, 5
      %v1428 = vor.u32 %v1424, %v1427
      %v1429 = vrot.slane %v1428, 4
      %v1431 = vshll.u32 %v1025, 16
      %v1433 = vrot.slane %v1431, 5
      %v1434 = vsel %vm1060, %v1429, %v1433
      %v1435 = vshrl.u32 %v1025, 16
      %v1437 = vrot.slane %v1435, 4
      %v1438 = vor.u32 %v1437, %v1433
      %v1439 = vrot.slane %v1438, 4
      %v1441 = vshll.u32 %v1057, 16
      %v1443 = vrot.slane %v1441, 5
      %v1444 = vsel %vm1060, %v1439, %v1443
      %v1445 = vld [vmem:[%s3 + $0x40] sm:$0xf]
      %v1446 = vld [vmem:[%s3 + $0x44] sm:$0xf]
      %v1447 = vld [vmem:[%s3 + $0x48] sm:$0xf]
      %v1448 = vld [vmem:[%s3 + $0x4c] sm:$0xf]
      %v1449 = vld [vmem:[%s3 + $0x50] sm:$0xf]
      %v1450 = vld [vmem:[%s3 + $0x54] sm:$0xf]
      %v1451 = vld [vmem:[%s3 + $0x58] sm:$0xf]
      %v1452 = vld [vmem:[%s3 + $0x5c] sm:$0xf]
      %v1453 = vld [vmem:[%s3 + $0x60] sm:$0xf]
      %v1454 = vld [vmem:[%s3 + $0x64] sm:$0xf]
      %v1455 = vld [vmem:[%s3 + $0x68] sm:$0xf]
      %v1456 = vld [vmem:[%s3 + $0x6c] sm:$0xf]
      %v1457 = vld [vmem:[%s3 + $0x70] sm:$0xf]
      %v1458 = vld [vmem:[%s3 + $0x74] sm:$0xf]
      %v1459 = vld [vmem:[%s3 + $0x78] sm:$0xf]
      %v1460 = vld [vmem:[%s3 + $0x7c] sm:$0xf]
      %v1461 = vunpack.c.l.b16 %v1074
      %v1462 = vunpack.c.l.b16 %v1084
      %v1463 = vunpack.c.l.b16 %v1098
      %v1464 = vunpack.c.l.b16 %v1108
      %v1465 = vunpack.c.l.b16 %v1122
      %v1466 = vunpack.c.l.b16 %v1132
      %v1467 = vunpack.c.l.b16 %v1146
      %v1468 = vunpack.c.l.b16 %v1156
      %v1469 = vunpack.c.l.b16 %v1170
      %v1470 = vunpack.c.l.b16 %v1180
      %v1471 = vunpack.c.l.b16 %v1194
      %v1472 = vunpack.c.l.b16 %v1204
      %v1473 = vunpack.c.l.b16 %v1218
      %v1474 = vunpack.c.l.b16 %v1228
      %v1475 = vunpack.c.l.b16 %v1242
      %v1476 = vunpack.c.l.b16 %v1252
      %v1477 = vunpack.c.l.b16 %v1266
      %v1478 = vunpack.c.l.b16 %v1276
      %v1479 = vunpack.c.l.b16 %v1290
      %v1480 = vunpack.c.l.b16 %v1300
      %v1481 = vunpack.c.l.b16 %v1314
      %v1482 = vunpack.c.l.b16 %v1324
      %v1483 = vunpack.c.l.b16 %v1338
      %v1484 = vunpack.c.l.b16 %v1348
      %v1485 = vunpack.c.l.b16 %v1362
      %v1486 = vunpack.c.l.b16 %v1372
      %v1487 = vunpack.c.l.b16 %v1386
      %v1488 = vunpack.c.l.b16 %v1396
      %v1489 = vunpack.c.l.b16 %v1410
      %v1490 = vunpack.c.l.b16 %v1420
      %v1491 = vunpack.c.l.b16 %v1434
      %v1492 = vunpack.c.l.b16 %v1444
      %v1493 = vpack.c.b16 %v1462, %v1461
      %v1494 = vpack.c.b16 %v1464, %v1463
      %v1495 = vpack.c.b16 %v1466, %v1465
      %v1496 = vpack.c.b16 %v1468, %v1467
      %v1497 = vpack.c.b16 %v1470, %v1469
      %v1498 = vpack.c.b16 %v1472, %v1471
      %v1499 = vpack.c.b16 %v1474, %v1473
      %v1500 = vpack.c.b16 %v1476, %v1475
      %v1501 = vpack.c.b16 %v1478, %v1477
      %v1502 = vpack.c.b16 %v1480, %v1479
      %v1503 = vpack.c.b16 %v1482, %v1481
      %v1504 = vpack.c.b16 %v1484, %v1483
      %v1505 = vpack.c.b16 %v1486, %v1485
      %v1506 = vpack.c.b16 %v1488, %v1487
      %v1507 = vpack.c.b16 %v1490, %v1489
      %v1508 = vpack.c.b16 %v1492, %v1491
      %v1541 = vunpack.c.l.b16 %v1445
      %v1542 = vunpack.c.l.b16 %v1446
      %v1543 = vunpack.c.l.b16 %v1447
      %v1544 = vunpack.c.l.b16 %v1448
      %v1545 = vunpack.c.l.b16 %v1449
      %v1546 = vunpack.c.l.b16 %v1450
      %v1547 = vunpack.c.l.b16 %v1451
      %v1548 = vunpack.c.l.b16 %v1452
      %v1549 = vunpack.c.l.b16 %v1453
      %v1550 = vunpack.c.l.b16 %v1454
      %v1551 = vunpack.c.l.b16 %v1455
      %v1552 = vunpack.c.l.b16 %v1456
      %v1553 = vunpack.c.l.b16 %v1457
      %v1554 = vunpack.c.l.b16 %v1458
      %v1555 = vunpack.c.l.b16 %v1459
      %v1556 = vunpack.c.l.b16 %v1460
      %v1557 = vpack.c.b16 %v1542, %v1541
      %v1558 = vpack.c.b16 %v1544, %v1543
      %v1559 = vpack.c.b16 %v1546, %v1545
      %v1560 = vpack.c.b16 %v1548, %v1547
      %v1561 = vpack.c.b16 %v1550, %v1549
      %v1562 = vpack.c.b16 %v1552, %v1551
      %v1563 = vpack.c.b16 %v1554, %v1553
      %v1564 = vpack.c.b16 %v1556, %v1555
      %1573 = vmatpush.bf16.msra.mxu0 %v1564
      %1574 = vmatpush.bf16.msra.mxu0 %v1563
      %1575 = vmatpush.bf16.msra.mxu0 %v1562
      %1576 = vmatpush.bf16.msra.mxu0 %v1561
      %1577 = vmatpush.bf16.msra.mxu0 %v1560
      %1578 = vmatpush.bf16.msra.mxu0 %v1559
      %1579 = vmatpush.bf16.msra.mxu0 %v1558
      %1580 = vmatpush.bf16.msra.mxu0 %v1557
      %1581 = vmatmul.bf16.gmra.mxu0 %v1493
      %v1582 = vpop.f32.mrf.mxu0
      %v1583 = vadd.f32 0.0, %v1582
      %v1584 = vpop.f32.mrf.mxu0
      %v1585 = vadd.f32 0.0, %v1584
      %1586 = vmatmul.bf16.gmra.mxu0 %v1494
      %v1587 = vpop.f32.mrf.mxu0
      %v1588 = vadd.f32 0.0, %v1587
      %v1589 = vpop.f32.mrf.mxu0
      %v1590 = vadd.f32 0.0, %v1589
      %1591 = vmatmul.bf16.gmra.mxu0 %v1495
      %v1592 = vpop.f32.mrf.mxu0
      %v1593 = vadd.f32 0.0, %v1592
      %v1594 = vpop.f32.mrf.mxu0
      %v1595 = vadd.f32 0.0, %v1594
      %1596 = vmatmul.bf16.gmra.mxu0 %v1496
      %v1597 = vpop.f32.mrf.mxu0
      %v1598 = vadd.f32 0.0, %v1597
      %v1599 = vpop.f32.mrf.mxu0
      %v1600 = vadd.f32 0.0, %v1599
      %1601 = vmatmul.bf16.gmra.mxu0 %v1497
      %v1602 = vpop.f32.mrf.mxu0
      %v1603 = vadd.f32 0.0, %v1602
      %v1604 = vpop.f32.mrf.mxu0
      %v1605 = vadd.f32 0.0, %v1604
      %1606 = vmatmul.bf16.gmra.mxu0 %v1498
      %v1607 = vpop.f32.mrf.mxu0
      %v1608 = vadd.f32 0.0, %v1607
      %v1609 = vpop.f32.mrf.mxu0
      %v1610 = vadd.f32 0.0, %v1609
      %1611 = vmatmul.bf16.gmra.mxu0 %v1499
      %v1612 = vpop.f32.mrf.mxu0
      %v1613 = vadd.f32 0.0, %v1612
      %v1614 = vpop.f32.mrf.mxu0
      %v1615 = vadd.f32 0.0, %v1614
      %1616 = vmatmul.bf16.gmra.mxu0 %v1500
      %v1617 = vpop.f32.mrf.mxu0
      %v1618 = vadd.f32 0.0, %v1617
      %v1619 = vpop.f32.mrf.mxu0
      %v1620 = vadd.f32 0.0, %v1619
      %1621 = vmatmul.bf16.gmra.mxu0 %v1501
      %v1622 = vpop.f32.mrf.mxu0
      %v1623 = vadd.f32 0.0, %v1622
      %v1624 = vpop.f32.mrf.mxu0
      %v1625 = vadd.f32 0.0, %v1624
      %1626 = vmatmul.bf16.gmra.mxu0 %v1502
      %v1627 = vpop.f32.mrf.mxu0
      %v1628 = vadd.f32 0.0, %v1627
      %v1629 = vpop.f32.mrf.mxu0
      %v1630 = vadd.f32 0.0, %v1629
      %1631 = vmatmul.bf16.gmra.mxu0 %v1503
      %v1632 = vpop.f32.mrf.mxu0
      %v1633 = vadd.f32 0.0, %v1632
      %v1634 = vpop.f32.mrf.mxu0
      %v1635 = vadd.f32 0.0, %v1634
      %1636 = vmatmul.bf16.gmra.mxu0 %v1504
      %v1637 = vpop.f32.mrf.mxu0
      %v1638 = vadd.f32 0.0, %v1637
      %v1639 = vpop.f32.mrf.mxu0
      %v1640 = vadd.f32 0.0, %v1639
      %1641 = vmatmul.bf16.gmra.mxu0 %v1505
      %v1642 = vpop.f32.mrf.mxu0
      %v1643 = vadd.f32 0.0, %v1642
      %v1644 = vpop.f32.mrf.mxu0
      %v1645 = vadd.f32 0.0, %v1644
      %1646 = vmatmul.bf16.gmra.mxu0 %v1506
      %v1647 = vpop.f32.mrf.mxu0
      %v1648 = vadd.f32 0.0, %v1647
      %v1649 = vpop.f32.mrf.mxu0
      %v1650 = vadd.f32 0.0, %v1649
      %1651 = vmatmul.bf16.gmra.mxu0 %v1507
      %v1652 = vpop.f32.mrf.mxu0
      %v1653 = vadd.f32 0.0, %v1652
      %v1654 = vpop.f32.mrf.mxu0
      %v1655 = vadd.f32 0.0, %v1654
      %1656 = vmatmul.bf16.gmra.mxu0 %v1508
      %v1657 = vpop.f32.mrf.mxu0
      %v1658 = vadd.f32 0.0, %v1657
      %v1659 = vpop.f32.mrf.mxu0
      %v1660 = vadd.f32 0.0, %v1659
      %1661 = vdwg.mxu0
      %v1694 = vunpack.c.l.b16 %v994
      %v1695 = vunpack.c.l.b16 %v995
      %v1696 = vunpack.c.l.b16 %v996
      %v1697 = vunpack.c.l.b16 %v997
      %v1698 = vunpack.c.l.b16 %v998
      %v1699 = vunpack.c.l.b16 %v999
      %v1700 = vunpack.c.l.b16 %v1000
      %v1701 = vunpack.c.l.b16 %v1001
      %v1702 = vunpack.c.l.b16 %v1002
      %v1703 = vunpack.c.l.b16 %v1003
      %v1704 = vunpack.c.l.b16 %v1004
      %v1705 = vunpack.c.l.b16 %v1005
      %v1706 = vunpack.c.l.b16 %v1006
      %v1707 = vunpack.c.l.b16 %v1007
      %v1708 = vunpack.c.l.b16 %v1008
      %v1709 = vunpack.c.l.b16 %v1009
      %v1710 = vunpack.c.l.b16 %v1010
      %v1711 = vunpack.c.l.b16 %v1011
      %v1712 = vunpack.c.l.b16 %v1012
      %v1713 = vunpack.c.l.b16 %v1013
      %v1714 = vunpack.c.l.b16 %v1014
      %v1715 = vunpack.c.l.b16 %v1015
      %v1716 = vunpack.c.l.b16 %v1016
      %v1717 = vunpack.c.l.b16 %v1017
      %v1718 = vunpack.c.l.b16 %v1018
      %v1719 = vunpack.c.l.b16 %v1019
      %v1720 = vunpack.c.l.b16 %v1020
      %v1721 = vunpack.c.l.b16 %v1021
      %v1722 = vunpack.c.l.b16 %v1022
      %v1723 = vunpack.c.l.b16 %v1023
      %v1724 = vunpack.c.l.b16 %v1024
      %v1725 = vunpack.c.l.b16 %v1025
      %v1726 = vpack.c.b16 %v1695, %v1694
      %v1727 = vpack.c.b16 %v1697, %v1696
      %v1728 = vpack.c.b16 %v1699, %v1698
      %v1729 = vpack.c.b16 %v1701, %v1700
      %v1730 = vpack.c.b16 %v1703, %v1702
      %v1731 = vpack.c.b16 %v1705, %v1704
      %v1732 = vpack.c.b16 %v1707, %v1706
      %v1733 = vpack.c.b16 %v1709, %v1708
      %v1734 = vpack.c.b16 %v1711, %v1710
      %v1735 = vpack.c.b16 %v1713, %v1712
      %v1736 = vpack.c.b16 %v1715, %v1714
      %v1737 = vpack.c.b16 %v1717, %v1716
      %v1738 = vpack.c.b16 %v1719, %v1718
      %v1739 = vpack.c.b16 %v1721, %v1720
      %v1740 = vpack.c.b16 %v1723, %v1722
      %v1741 = vpack.c.b16 %v1725, %v1724
      %v1774 = vunpack.c.l.b16 %v1026
      %v1775 = vunpack.c.l.b16 %v1027
      %v1776 = vunpack.c.l.b16 %v1028
      %v1777 = vunpack.c.l.b16 %v1029
      %v1778 = vunpack.c.l.b16 %v1030
      %v1779 = vunpack.c.l.b16 %v1031
      %v1780 = vunpack.c.l.b16 %v1032
      %v1781 = vunpack.c.l.b16 %v1033
      %v1782 = vunpack.c.l.b16 %v1034
      %v1783 = vunpack.c.l.b16 %v1035
      %v1784 = vunpack.c.l.b16 %v1036
      %v1785 = vunpack.c.l.b16 %v1037
      %v1786 = vunpack.c.l.b16 %v1038
      %v1787 = vunpack.c.l.b16 %v1039
      %v1788 = vunpack.c.l.b16 %v1040
      %v1789 = vunpack.c.l.b16 %v1041
      %v1790 = vpack.c.b16 %v1775, %v1774
      %v1791 = vpack.c.b16 %v1777, %v1776
      %v1792 = vpack.c.b16 %v1779, %v1778
      %v1793 = vpack.c.b16 %v1781, %v1780
      %v1794 = vpack.c.b16 %v1783, %v1782
      %v1795 = vpack.c.b16 %v1785, %v1784
      %v1796 = vpack.c.b16 %v1787, %v1786
      %v1797 = vpack.c.b16 %v1789, %v1788
      %1806 = vmatpush.bf16.msra.mxu0 %v1797
      %1807 = vmatpush.bf16.msra.mxu0 %v1796
      %1808 = vmatpush.bf16.msra.mxu0 %v1795
      %1809 = vmatpush.bf16.msra.mxu0 %v1794
      %1810 = vmatpush.bf16.msra.mxu0 %v1793
      %1811 = vmatpush.bf16.msra.mxu0 %v1792
      %1812 = vmatpush.bf16.msra.mxu0 %v1791
      %1813 = vmatpush.bf16.msra.mxu0 %v1790
      %1814 = vmatmul.bf16.gmra.mxu0 %v1726
      %v1815 = vpop.f32.mrf.mxu0
      %v1816 = vadd.f32 %v1583, %v1815
      %v1817 = vpop.f32.mrf.mxu0
      %v1818 = vadd.f32 %v1585, %v1817
      %1819 = vmatmul.bf16.gmra.mxu0 %v1727
      %v1820 = vpop.f32.mrf.mxu0
      %v1821 = vadd.f32 %v1588, %v1820
      %v1822 = vpop.f32.mrf.mxu0
      %v1823 = vadd.f32 %v1590, %v1822
      %1824 = vmatmul.bf16.gmra.mxu0 %v1728
      %v1825 = vpop.f32.mrf.mxu0
      %v1826 = vadd.f32 %v1593, %v1825
      %v1827 = vpop.f32.mrf.mxu0
      %v1828 = vadd.f32 %v1595, %v1827
      %1829 = vmatmul.bf16.gmra.mxu0 %v1729
      %v1830 = vpop.f32.mrf.mxu0
      %v1831 = vadd.f32 %v1598, %v1830
      %v1832 = vpop.f32.mrf.mxu0
      %v1833 = vadd.f32 %v1600, %v1832
      %1834 = vmatmul.bf16.gmra.mxu0 %v1730
      %v1835 = vpop.f32.mrf.mxu0
      %v1836 = vadd.f32 %v1603, %v1835
      %v1837 = vpop.f32.mrf.mxu0
      %v1838 = vadd.f32 %v1605, %v1837
      %1839 = vmatmul.bf16.gmra.mxu0 %v1731
      %v1840 = vpop.f32.mrf.mxu0
      %v1841 = vadd.f32 %v1608, %v1840
      %v1842 = vpop.f32.mrf.mxu0
      %v1843 = vadd.f32 %v1610, %v1842
      %1844 = vmatmul.bf16.gmra.mxu0 %v1732
      %v1845 = vpop.f32.mrf.mxu0
      %v1846 = vadd.f32 %v1613, %v1845
      %v1847 = vpop.f32.mrf.mxu0
      %v1848 = vadd.f32 %v1615, %v1847
      %1849 = vmatmul.bf16.gmra.mxu0 %v1733
      %v1850 = vpop.f32.mrf.mxu0
      %v1851 = vadd.f32 %v1618, %v1850
      %v1852 = vpop.f32.mrf.mxu0
      %v1853 = vadd.f32 %v1620, %v1852
      %1854 = vmatmul.bf16.gmra.mxu0 %v1734
      %v1855 = vpop.f32.mrf.mxu0
      %v1856 = vadd.f32 %v1623, %v1855
      %v1857 = vpop.f32.mrf.mxu0
      %v1858 = vadd.f32 %v1625, %v1857
      %1859 = vmatmul.bf16.gmra.mxu0 %v1735
      %v1860 = vpop.f32.mrf.mxu0
      %v1861 = vadd.f32 %v1628, %v1860
      %v1862 = vpop.f32.mrf.mxu0
      %v1863 = vadd.f32 %v1630, %v1862
      %1864 = vmatmul.bf16.gmra.mxu0 %v1736
      %v1865 = vpop.f32.mrf.mxu0
      %v1866 = vadd.f32 %v1633, %v1865
      %v1867 = vpop.f32.mrf.mxu0
      %v1868 = vadd.f32 %v1635, %v1867
      %1869 = vmatmul.bf16.gmra.mxu0 %v1737
      %v1870 = vpop.f32.mrf.mxu0
      %v1871 = vadd.f32 %v1638, %v1870
      %v1872 = vpop.f32.mrf.mxu0
      %v1873 = vadd.f32 %v1640, %v1872
      %1874 = vmatmul.bf16.gmra.mxu0 %v1738
      %v1875 = vpop.f32.mrf.mxu0
      %v1876 = vadd.f32 %v1643, %v1875
      %v1877 = vpop.f32.mrf.mxu0
      %v1878 = vadd.f32 %v1645, %v1877
      %1879 = vmatmul.bf16.gmra.mxu0 %v1739
      %v1880 = vpop.f32.mrf.mxu0
      %v1881 = vadd.f32 %v1648, %v1880
      %v1882 = vpop.f32.mrf.mxu0
      %v1883 = vadd.f32 %v1650, %v1882
      %1884 = vmatmul.bf16.gmra.mxu0 %v1740
      %v1885 = vpop.f32.mrf.mxu0
      %v1886 = vadd.f32 %v1653, %v1885
      %v1887 = vpop.f32.mrf.mxu0
      %v1888 = vadd.f32 %v1655, %v1887
      %1889 = vmatmul.bf16.gmra.mxu0 %v1741
      %v1890 = vpop.f32.mrf.mxu0
      %v1891 = vadd.f32 %v1658, %v1890
      %v1892 = vpop.f32.mrf.mxu0
      %v1893 = vadd.f32 %v1660, %v1892
      %1894 = vdwg.mxu0
      %v1895 = vld [vmem:[#allocation2] sm:$0xe]
      %v1896 = vld [vmem:[#allocation2 + $0xc] sm:$0xe]
      %v1897 = vld [vmem:[#allocation2 + $0x18] sm:$0xe]
      %v1898 = vld [vmem:[#allocation2 + $0x24] sm:$0xe]
      %v1899 = vld [vmem:[#allocation2 + $0x30] sm:$0xe]
      %v1900 = vld [vmem:[#allocation2 + $0x3c] sm:$0xe]
      %v1901 = vld [vmem:[#allocation2 + $0x48] sm:$0xe]
      %v1902 = vld [vmem:[#allocation2 + $0x54] sm:$0xe]
      %v1903 = vld [vmem:[#allocation2 + $0x60] sm:$0xe]
      %v1904 = vld [vmem:[#allocation2 + $0x6c] sm:$0xe]
      %v1905 = vld [vmem:[#allocation2 + $0x78] sm:$0xe]
      %v1906 = vld [vmem:[#allocation2 + $0x84] sm:$0xe]
      %v1907 = vld [vmem:[#allocation2 + $0x90] sm:$0xe]
      %v1908 = vld [vmem:[#allocation2 + $0x9c] sm:$0xe]
      %v1909 = vld [vmem:[#allocation2 + $0xa8] sm:$0xe]
      %v1910 = vld [vmem:[#allocation2 + $0xb4] sm:$0xe]
      %vm1943 = vcmask 1042432
      %vm1944 = vcmask 1046532
      %vm1945 = vmor %vm1943, %vm1944
      %v1946 = vrot.slane %v1895, 5
      %v1947 = vrot.slane %v1946, 4
      %v1948 = vrot.slane %v995, 5
      %v1949 = vsel %vm1945, %v1947, %v1948
      %v1950 = vrot.slane %v1948, 4
      %v1951 = vrot.slane %v1042, 5
      %v1952 = vsel %vm1945, %v1950, %v1951
      %v1953 = vrot.slane %v1896, 5
      %v1954 = vrot.slane %v1953, 4
      %v1955 = vrot.slane %v997, 5
      %v1956 = vsel %vm1945, %v1954, %v1955
      %v1957 = vrot.slane %v1955, 4
      %v1958 = vrot.slane %v1043, 5
      %v1959 = vsel %vm1945, %v1957, %v1958
      %v1960 = vrot.slane %v1897, 5
      %v1961 = vrot.slane %v1960, 4
      %v1962 = vrot.slane %v999, 5
      %v1963 = vsel %vm1945, %v1961, %v1962
      %v1964 = vrot.slane %v1962, 4
      %v1965 = vrot.slane %v1044, 5
      %v1966 = vsel %vm1945, %v1964, %v1965
      %v1967 = vrot.slane %v1898, 5
      %v1968 = vrot.slane %v1967, 4
      %v1969 = vrot.slane %v1001, 5
      %v1970 = vsel %vm1945, %v1968, %v1969
      %v1971 = vrot.slane %v1969, 4
      %v1972 = vrot.slane %v1045, 5
      %v1973 = vsel %vm1945, %v1971, %v1972
      %v1974 = vrot.slane %v1899, 5
      %v1975 = vrot.slane %v1974, 4
      %v1976 = vrot.slane %v1003, 5
      %v1977 = vsel %vm1945, %v1975, %v1976
      %v1978 = vrot.slane %v1976, 4
      %v1979 = vrot.slane %v1046, 5
      %v1980 = vsel %vm1945, %v1978, %v1979
      %v1981 = vrot.slane %v1900, 5
      %v1982 = vrot.slane %v1981, 4
      %v1983 = vrot.slane %v1005, 5
      %v1984 = vsel %vm1945, %v1982, %v1983
      %v1985 = vrot.slane %v1983, 4
      %v1986 = vrot.slane %v1047, 5
      %v1987 = vsel %vm1945, %v1985, %v1986
      %v1988 = vrot.slane %v1901, 5
      %v1989 = vrot.slane %v1988, 4
      %v1990 = vrot.slane %v1007, 5
      %v1991 = vsel %vm1945, %v1989, %v1990
      %v1992 = vrot.slane %v1990, 4
      %v1993 = vrot.slane %v1048, 5
      %v1994 = vsel %vm1945, %v1992, %v1993
      %v1995 = vrot.slane %v1902, 5
      %v1996 = vrot.slane %v1995, 4
      %v1997 = vrot.slane %v1009, 5
      %v1998 = vsel %vm1945, %v1996, %v1997
      %v1999 = vrot.slane %v1997, 4
      %v2000 = vrot.slane %v1049, 5
      %v2001 = vsel %vm1945, %v1999, %v2000
      %v2002 = vrot.slane %v1903, 5
      %v2003 = vrot.slane %v2002, 4
      %v2004 = vrot.slane %v1011, 5
      %v2005 = vsel %vm1945, %v2003, %v2004
      %v2006 = vrot.slane %v2004, 4
      %v2007 = vrot.slane %v1050, 5
      %v2008 = vsel %vm1945, %v2006, %v2007
      %v2009 = vrot.slane %v1904, 5
      %v2010 = vrot.slane %v2009, 4
      %v2011 = vrot.slane %v1013, 5
      %v2012 = vsel %vm1945, %v2010, %v2011
      %v2013 = vrot.slane %v2011, 4
      %v2014 = vrot.slane %v1051, 5
      %v2015 = vsel %vm1945, %v2013, %v2014
      %v2016 = vrot.slane %v1905, 5
      %v2017 = vrot.slane %v2016, 4
      %v2018 = vrot.slane %v1015, 5
      %v2019 = vsel %vm1945, %v2017, %v2018
      %v2020 = vrot.slane %v2018, 4
      %v2021 = vrot.slane %v1052, 5
      %v2022 = vsel %vm1945, %v2020, %v2021
      %v2023 = vrot.slane %v1906, 5
      %v2024 = vrot.slane %v2023, 4
      %v2025 = vrot.slane %v1017, 5
      %v2026 = vsel %vm1945, %v2024, %v2025
      %v2027 = vrot.slane %v2025, 4
      %v2028 = vrot.slane %v1053, 5
      %v2029 = vsel %vm1945, %v2027, %v2028
      %v2030 = vrot.slane %v1907, 5
      %v2031 = vrot.slane %v2030, 4
      %v2032 = vrot.slane %v1019, 5
      %v2033 = vsel %vm1945, %v2031, %v2032
      %v2034 = vrot.slane %v2032, 4
      %v2035 = vrot.slane %v1054, 5
      %v2036 = vsel %vm1945, %v2034, %v2035
      %v2037 = vrot.slane %v1908, 5
      %v2038 = vrot.slane %v2037, 4
      %v2039 = vrot.slane %v1021, 5
      %v2040 = vsel %vm1945, %v2038, %v2039
      %v2041 = vrot.slane %v2039, 4
      %v2042 = vrot.slane %v1055, 5
      %v2043 = vsel %vm1945, %v2041, %v2042
      %v2044 = vrot.slane %v1909, 5
      %v2045 = vrot.slane %v2044, 4
      %v2046 = vrot.slane %v1023, 5
      %v2047 = vsel %vm1945, %v2045, %v2046
      %v2048 = vrot.slane %v2046, 4
      %v2049 = vrot.slane %v1056, 5
      %v2050 = vsel %vm1945, %v2048, %v2049
      %v2051 = vrot.slane %v1910, 5
      %v2052 = vrot.slane %v2051, 4
      %v2053 = vrot.slane %v1025, 5
      %v2054 = vsel %vm1945, %v2052, %v2053
      %v2055 = vrot.slane %v2053, 4
      %v2056 = vrot.slane %v1057, 5
      %v2057 = vsel %vm1945, %v2055, %v2056
      %v2058 = vld [vmem:[%s3 + $0x80] sm:$0xf]
      %v2059 = vld [vmem:[%s3 + $0x84] sm:$0xf]
      %v2060 = vld [vmem:[%s3 + $0x88] sm:$0xf]
      %v2061 = vld [vmem:[%s3 + $0x8c] sm:$0xf]
      %v2062 = vld [vmem:[%s3 + $0x90] sm:$0xf]
      %v2063 = vld [vmem:[%s3 + $0x94] sm:$0xf]
      %v2064 = vld [vmem:[%s3 + $0x98] sm:$0xf]
      %v2065 = vld [vmem:[%s3 + $0x9c] sm:$0xf]
      %v2066 = vld [vmem:[%s3 + $0xa0] sm:$0xf]
      %v2067 = vld [vmem:[%s3 + $0xa4] sm:$0xf]
      %v2068 = vld [vmem:[%s3 + $0xa8] sm:$0xf]
      %v2069 = vld [vmem:[%s3 + $0xac] sm:$0xf]
      %v2070 = vld [vmem:[%s3 + $0xb0] sm:$0xf]
      %v2071 = vld [vmem:[%s3 + $0xb4] sm:$0xf]
      %v2072 = vld [vmem:[%s3 + $0xb8] sm:$0xf]
      %v2073 = vld [vmem:[%s3 + $0xbc] sm:$0xf]
      %v2074 = vunpack.c.l.b16 %v1949
      %v2075 = vunpack.c.l.b16 %v1952
      %v2076 = vunpack.c.l.b16 %v1956
      %v2077 = vunpack.c.l.b16 %v1959
      %v2078 = vunpack.c.l.b16 %v1963
      %v2079 = vunpack.c.l.b16 %v1966
      %v2080 = vunpack.c.l.b16 %v1970
      %v2081 = vunpack.c.l.b16 %v1973
      %v2082 = vunpack.c.l.b16 %v1977
      %v2083 = vunpack.c.l.b16 %v1980
      %v2084 = vunpack.c.l.b16 %v1984
      %v2085 = vunpack.c.l.b16 %v1987
      %v2086 = vunpack.c.l.b16 %v1991
      %v2087 = vunpack.c.l.b16 %v1994
      %v2088 = vunpack.c.l.b16 %v1998
      %v2089 = vunpack.c.l.b16 %v2001
      %v2090 = vunpack.c.l.b16 %v2005
      %v2091 = vunpack.c.l.b16 %v2008
      %v2092 = vunpack.c.l.b16 %v2012
      %v2093 = vunpack.c.l.b16 %v2015
      %v2094 = vunpack.c.l.b16 %v2019
      %v2095 = vunpack.c.l.b16 %v2022
      %v2096 = vunpack.c.l.b16 %v2026
      %v2097 = vunpack.c.l.b16 %v2029
      %v2098 = vunpack.c.l.b16 %v2033
      %v2099 = vunpack.c.l.b16 %v2036
      %v2100 = vunpack.c.l.b16 %v2040
      %v2101 = vunpack.c.l.b16 %v2043
      %v2102 = vunpack.c.l.b16 %v2047
      %v2103 = vunpack.c.l.b16 %v2050
      %v2104 = vunpack.c.l.b16 %v2054
      %v2105 = vunpack.c.l.b16 %v2057
      %v2106 = vpack.c.b16 %v2075, %v2074
      %v2107 = vpack.c.b16 %v2077, %v2076
      %v2108 = vpack.c.b16 %v2079, %v2078
      %v2109 = vpack.c.b16 %v2081, %v2080
      %v2110 = vpack.c.b16 %v2083, %v2082
      %v2111 = vpack.c.b16 %v2085, %v2084
      %v2112 = vpack.c.b16 %v2087, %v2086
      %v2113 = vpack.c.b16 %v2089, %v2088
      %v2114 = vpack.c.b16 %v2091, %v2090
      %v2115 = vpack.c.b16 %v2093, %v2092
      %v2116 = vpack.c.b16 %v2095, %v2094
      %v2117 = vpack.c.b16 %v2097, %v2096
      %v2118 = vpack.c.b16 %v2099, %v2098
      %v2119 = vpack.c.b16 %v2101, %v2100
      %v2120 = vpack.c.b16 %v2103, %v2102
      %v2121 = vpack.c.b16 %v2105, %v2104
      %v2154 = vunpack.c.l.b16 %v2058
      %v2155 = vunpack.c.l.b16 %v2059
      %v2156 = vunpack.c.l.b16 %v2060
      %v2157 = vunpack.c.l.b16 %v2061
      %v2158 = vunpack.c.l.b16 %v2062
      %v2159 = vunpack.c.l.b16 %v2063
      %v2160 = vunpack.c.l.b16 %v2064
      %v2161 = vunpack.c.l.b16 %v2065
      %v2162 = vunpack.c.l.b16 %v2066
      %v2163 = vunpack.c.l.b16 %v2067
      %v2164 = vunpack.c.l.b16 %v2068
      %v2165 = vunpack.c.l.b16 %v2069
      %v2166 = vunpack.c.l.b16 %v2070
      %v2167 = vunpack.c.l.b16 %v2071
      %v2168 = vunpack.c.l.b16 %v2072
      %v2169 = vunpack.c.l.b16 %v2073
      %v2170 = vpack.c.b16 %v2155, %v2154
      %v2171 = vpack.c.b16 %v2157, %v2156
      %v2172 = vpack.c.b16 %v2159, %v2158
      %v2173 = vpack.c.b16 %v2161, %v2160
      %v2174 = vpack.c.b16 %v2163, %v2162
      %v2175 = vpack.c.b16 %v2165, %v2164
      %v2176 = vpack.c.b16 %v2167, %v2166
      %v2177 = vpack.c.b16 %v2169, %v2168
      %2186 = vmatpush.bf16.msra.mxu0 %v2177
      %2187 = vmatpush.bf16.msra.mxu0 %v2176
      %2188 = vmatpush.bf16.msra.mxu0 %v2175
      %2189 = vmatpush.bf16.msra.mxu0 %v2174
      %2190 = vmatpush.bf16.msra.mxu0 %v2173
      %2191 = vmatpush.bf16.msra.mxu0 %v2172
      %2192 = vmatpush.bf16.msra.mxu0 %v2171
      %2193 = vmatpush.bf16.msra.mxu0 %v2170
      %2194 = vmatmul.bf16.gmra.mxu0 %v2106
      %v2195 = vpop.f32.mrf.mxu0
      %v2196 = vadd.f32 0.0, %v2195
      %v2197 = vpop.f32.mrf.mxu0
      %v2198 = vadd.f32 0.0, %v2197
      %2199 = vmatmul.bf16.gmra.mxu0 %v2107
      %v2200 = vpop.f32.mrf.mxu0
      %v2201 = vadd.f32 0.0, %v2200
      %v2202 = vpop.f32.mrf.mxu0
      %v2203 = vadd.f32 0.0, %v2202
      %2204 = vmatmul.bf16.gmra.mxu0 %v2108
      %v2205 = vpop.f32.mrf.mxu0
      %v2206 = vadd.f32 0.0, %v2205
      %v2207 = vpop.f32.mrf.mxu0
      %v2208 = vadd.f32 0.0, %v2207
      %2209 = vmatmul.bf16.gmra.mxu0 %v2109
      %v2210 = vpop.f32.mrf.mxu0
      %v2211 = vadd.f32 0.0, %v2210
      %v2212 = vpop.f32.mrf.mxu0
      %v2213 = vadd.f32 0.0, %v2212
      %2214 = vmatmul.bf16.gmra.mxu0 %v2110
      %v2215 = vpop.f32.mrf.mxu0
      %v2216 = vadd.f32 0.0, %v2215
      %v2217 = vpop.f32.mrf.mxu0
      %v2218 = vadd.f32 0.0, %v2217
      %2219 = vmatmul.bf16.gmra.mxu0 %v2111
      %v2220 = vpop.f32.mrf.mxu0
      %v2221 = vadd.f32 0.0, %v2220
      %v2222 = vpop.f32.mrf.mxu0
      %v2223 = vadd.f32 0.0, %v2222
      %2224 = vmatmul.bf16.gmra.mxu0 %v2112
      %v2225 = vpop.f32.mrf.mxu0
      %v2226 = vadd.f32 0.0, %v2225
      %v2227 = vpop.f32.mrf.mxu0
      %v2228 = vadd.f32 0.0, %v2227
      %2229 = vmatmul.bf16.gmra.mxu0 %v2113
      %v2230 = vpop.f32.mrf.mxu0
      %v2231 = vadd.f32 0.0, %v2230
      %v2232 = vpop.f32.mrf.mxu0
      %v2233 = vadd.f32 0.0, %v2232
      %2234 = vmatmul.bf16.gmra.mxu0 %v2114
      %v2235 = vpop.f32.mrf.mxu0
      %v2236 = vadd.f32 0.0, %v2235
      %v2237 = vpop.f32.mrf.mxu0
      %v2238 = vadd.f32 0.0, %v2237
      %2239 = vmatmul.bf16.gmra.mxu0 %v2115
      %v2240 = vpop.f32.mrf.mxu0
      %v2241 = vadd.f32 0.0, %v2240
      %v2242 = vpop.f32.mrf.mxu0
      %v2243 = vadd.f32 0.0, %v2242
      %2244 = vmatmul.bf16.gmra.mxu0 %v2116
      %v2245 = vpop.f32.mrf.mxu0
      %v2246 = vadd.f32 0.0, %v2245
      %v2247 = vpop.f32.mrf.mxu0
      %v2248 = vadd.f32 0.0, %v2247
      %2249 = vmatmul.bf16.gmra.mxu0 %v2117
      %v2250 = vpop.f32.mrf.mxu0
      %v2251 = vadd.f32 0.0, %v2250
      %v2252 = vpop.f32.mrf.mxu0
      %v2253 = vadd.f32 0.0, %v2252
      %2254 = vmatmul.bf16.gmra.mxu0 %v2118
      %v2255 = vpop.f32.mrf.mxu0
      %v2256 = vadd.f32 0.0, %v2255
      %v2257 = vpop.f32.mrf.mxu0
      %v2258 = vadd.f32 0.0, %v2257
      %2259 = vmatmul.bf16.gmra.mxu0 %v2119
      %v2260 = vpop.f32.mrf.mxu0
      %v2261 = vadd.f32 0.0, %v2260
      %v2262 = vpop.f32.mrf.mxu0
      %v2263 = vadd.f32 0.0, %v2262
      %2264 = vmatmul.bf16.gmra.mxu0 %v2120
      %v2265 = vpop.f32.mrf.mxu0
      %v2266 = vadd.f32 0.0, %v2265
      %v2267 = vpop.f32.mrf.mxu0
      %v2268 = vadd.f32 0.0, %v2267
      %2269 = vmatmul.bf16.gmra.mxu0 %v2121
      %v2270 = vpop.f32.mrf.mxu0
      %v2271 = vadd.f32 0.0, %v2270
      %v2272 = vpop.f32.mrf.mxu0
      %v2273 = vadd.f32 0.0, %v2272
      %2274 = vdwg.mxu0
      %v2275 = vadd.f32 %v1816, %v2196
      %v2276 = vadd.f32 %v1818, %v2198
      %v2277 = vadd.f32 %v1821, %v2201
      %v2278 = vadd.f32 %v1823, %v2203
      %v2279 = vadd.f32 %v1826, %v2206
      %v2280 = vadd.f32 %v1828, %v2208
      %v2281 = vadd.f32 %v1831, %v2211
      %v2282 = vadd.f32 %v1833, %v2213
      %v2283 = vadd.f32 %v1836, %v2216
      %v2284 = vadd.f32 %v1838, %v2218
      %v2285 = vadd.f32 %v1841, %v2221
      %v2286 = vadd.f32 %v1843, %v2223
      %v2287 = vadd.f32 %v1846, %v2226
      %v2288 = vadd.f32 %v1848, %v2228
      %v2289 = vadd.f32 %v1851, %v2231
      %v2290 = vadd.f32 %v1853, %v2233
      %v2291 = vadd.f32 %v1856, %v2236
      %v2292 = vadd.f32 %v1858, %v2238
      %v2293 = vadd.f32 %v1861, %v2241
      %v2294 = vadd.f32 %v1863, %v2243
      %v2295 = vadd.f32 %v1866, %v2246
      %v2296 = vadd.f32 %v1868, %v2248
      %v2297 = vadd.f32 %v1871, %v2251
      %v2298 = vadd.f32 %v1873, %v2253
      %v2299 = vadd.f32 %v1876, %v2256
      %v2300 = vadd.f32 %v1878, %v2258
      %v2301 = vadd.f32 %v1881, %v2261
      %v2302 = vadd.f32 %v1883, %v2263
      %v2303 = vadd.f32 %v1886, %v2266
      %v2304 = vadd.f32 %v1888, %v2268
      %v2305 = vadd.f32 %v1891, %v2271
      %v2306 = vadd.f32 %v1893, %v2273
      %v2307 = vld [vmem:[%s879] sm:$0xf]
      %v2308 = vld [vmem:[%s879 + $0x4] sm:$0xf]
      %v2309 = vld [vmem:[%s879 + $0xc] sm:$0xf]
      %v2310 = vld [vmem:[%s879 + $0x10] sm:$0xf]
      %v2311 = vld [vmem:[%s879 + $0x18] sm:$0xf]
      %v2312 = vld [vmem:[%s879 + $0x1c] sm:$0xf]
      %v2313 = vld [vmem:[%s879 + $0x24] sm:$0xf]
      %v2314 = vld [vmem:[%s879 + $0x28] sm:$0xf]
      %v2315 = vld [vmem:[%s879 + $0x30] sm:$0xf]
      %v2316 = vld [vmem:[%s879 + $0x34] sm:$0xf]
      %v2317 = vld [vmem:[%s879 + $0x3c] sm:$0xf]
      %v2318 = vld [vmem:[%s879 + $0x40] sm:$0xf]
      %v2319 = vld [vmem:[%s879 + $0x48] sm:$0xf]
      %v2320 = vld [vmem:[%s879 + $0x4c] sm:$0xf]
      %v2321 = vld [vmem:[%s879 + $0x54] sm:$0xf]
      %v2322 = vld [vmem:[%s879 + $0x58] sm:$0xf]
      %v2323 = vld [vmem:[%s879 + $0x60] sm:$0xf]
      %v2324 = vld [vmem:[%s879 + $0x64] sm:$0xf]
      %v2325 = vld [vmem:[%s879 + $0x6c] sm:$0xf]
      %v2326 = vld [vmem:[%s879 + $0x70] sm:$0xf]
      %v2327 = vld [vmem:[%s879 + $0x78] sm:$0xf]
      %v2328 = vld [vmem:[%s879 + $0x7c] sm:$0xf]
      %v2329 = vld [vmem:[%s879 + $0x84] sm:$0xf]
      %v2330 = vld [vmem:[%s879 + $0x88] sm:$0xf]
      %v2331 = vld [vmem:[%s879 + $0x90] sm:$0xf]
      %v2332 = vld [vmem:[%s879 + $0x94] sm:$0xf]
      %v2333 = vld [vmem:[%s879 + $0x9c] sm:$0xf]
      %v2334 = vld [vmem:[%s879 + $0xa0] sm:$0xf]
      %v2335 = vld [vmem:[%s879 + $0xa8] sm:$0xf]
      %v2336 = vld [vmem:[%s879 + $0xac] sm:$0xf]
      %v2337 = vld [vmem:[%s879 + $0xb4] sm:$0xf]
      %v2338 = vld [vmem:[%s879 + $0xb8] sm:$0xf]
      %v2339 = vld [vmem:[%s3 + $0xc0] sm:$0xf]
      %v2340 = vld [vmem:[%s3 + $0xc4] sm:$0xf]
      %v2341 = vld [vmem:[%s3 + $0xc8] sm:$0xf]
      %v2342 = vld [vmem:[%s3 + $0xcc] sm:$0xf]
      %v2343 = vld [vmem:[%s3 + $0xd0] sm:$0xf]
      %v2344 = vld [vmem:[%s3 + $0xd4] sm:$0xf]
      %v2345 = vld [vmem:[%s3 + $0xd8] sm:$0xf]
      %v2346 = vld [vmem:[%s3 + $0xdc] sm:$0xf]
      %v2347 = vld [vmem:[%s3 + $0xe0] sm:$0xf]
      %v2348 = vld [vmem:[%s3 + $0xe4] sm:$0xf]
      %v2349 = vld [vmem:[%s3 + $0xe8] sm:$0xf]
      %v2350 = vld [vmem:[%s3 + $0xec] sm:$0xf]
      %v2351 = vld [vmem:[%s3 + $0xf0] sm:$0xf]
      %v2352 = vld [vmem:[%s3 + $0xf4] sm:$0xf]
      %v2353 = vld [vmem:[%s3 + $0xf8] sm:$0xf]
      %v2354 = vld [vmem:[%s3 + $0xfc] sm:$0xf]
      %v2387 = vunpack.c.l.b16 %v2307
      %v2388 = vunpack.c.l.b16 %v2308
      %v2389 = vunpack.c.l.b16 %v2309
      %v2390 = vunpack.c.l.b16 %v2310
      %v2391 = vunpack.c.l.b16 %v2311
      %v2392 = vunpack.c.l.b16 %v2312
      %v2393 = vunpack.c.l.b16 %v2313
      %v2394 = vunpack.c.l.b16 %v2314
      %v2395 = vunpack.c.l.b16 %v2315
      %v2396 = vunpack.c.l.b16 %v2316
      %v2397 = vunpack.c.l.b16 %v2317
      %v2398 = vunpack.c.l.b16 %v2318
      %v2399 = vunpack.c.l.b16 %v2319
      %v2400 = vunpack.c.l.b16 %v2320
      %v2401 = vunpack.c.l.b16 %v2321
      %v2402 = vunpack.c.l.b16 %v2322
      %v2403 = vunpack.c.l.b16 %v2323
      %v2404 = vunpack.c.l.b16 %v2324
      %v2405 = vunpack.c.l.b16 %v2325
      %v2406 = vunpack.c.l.b16 %v2326
      %v2407 = vunpack.c.l.b16 %v2327
      %v2408 = vunpack.c.l.b16 %v2328
      %v2409 = vunpack.c.l.b16 %v2329
      %v2410 = vunpack.c.l.b16 %v2330
      %v2411 = vunpack.c.l.b16 %v2331
      %v2412 = vunpack.c.l.b16 %v2332
      %v2413 = vunpack.c.l.b16 %v2333
      %v2414 = vunpack.c.l.b16 %v2334
      %v2415 = vunpack.c.l.b16 %v2335
      %v2416 = vunpack.c.l.b16 %v2336
      %v2417 = vunpack.c.l.b16 %v2337
      %v2418 = vunpack.c.l.b16 %v2338
      %v2419 = vpack.c.b16 %v2388, %v2387
      %v2420 = vpack.c.b16 %v2390, %v2389
      %v2421 = vpack.c.b16 %v2392, %v2391
      %v2422 = vpack.c.b16 %v2394, %v2393
      %v2423 = vpack.c.b16 %v2396, %v2395
      %v2424 = vpack.c.b16 %v2398, %v2397
      %v2425 = vpack.c.b16 %v2400, %v2399
      %v2426 = vpack.c.b16 %v2402, %v2401
      %v2427 = vpack.c.b16 %v2404, %v2403
      %v2428 = vpack.c.b16 %v2406, %v2405
      %v2429 = vpack.c.b16 %v2408, %v2407
      %v2430 = vpack.c.b16 %v2410, %v2409
      %v2431 = vpack.c.b16 %v2412, %v2411
      %v2432 = vpack.c.b16 %v2414, %v2413
      %v2433 = vpack.c.b16 %v2416, %v2415
      %v2434 = vpack.c.b16 %v2418, %v2417
      %v2467 = vunpack.c.l.b16 %v2339
      %v2468 = vunpack.c.l.b16 %v2340
      %v2469 = vunpack.c.l.b16 %v2341
      %v2470 = vunpack.c.l.b16 %v2342
      %v2471 = vunpack.c.l.b16 %v2343
      %v2472 = vunpack.c.l.b16 %v2344
      %v2473 = vunpack.c.l.b16 %v2345
      %v2474 = vunpack.c.l.b16 %v2346
      %v2475 = vunpack.c.l.b16 %v2347
      %v2476 = vunpack.c.l.b16 %v2348
      %v2477 = vunpack.c.l.b16 %v2349
      %v2478 = vunpack.c.l.b16 %v2350
      %v2479 = vunpack.c.l.b16 %v2351
      %v2480 = vunpack.c.l.b16 %v2352
      %v2481 = vunpack.c.l.b16 %v2353
      %v2482 = vunpack.c.l.b16 %v2354
      %v2483 = vpack.c.b16 %v2468, %v2467
      %v2484 = vpack.c.b16 %v2470, %v2469
      %v2485 = vpack.c.b16 %v2472, %v2471
      %v2486 = vpack.c.b16 %v2474, %v2473
      %v2487 = vpack.c.b16 %v2476, %v2475
      %v2488 = vpack.c.b16 %v2478, %v2477
      %v2489 = vpack.c.b16 %v2480, %v2479
      %v2490 = vpack.c.b16 %v2482, %v2481
      %2499 = vmatpush.bf16.msra.mxu0 %v2490
      %2500 = vmatpush.bf16.msra.mxu0 %v2489
      %2501 = vmatpush.bf16.msra.mxu0 %v2488
      %2502 = vmatpush.bf16.msra.mxu0 %v2487
      %2503 = vmatpush.bf16.msra.mxu0 %v2486
      %2504 = vmatpush.bf16.msra.mxu0 %v2485
      %2505 = vmatpush.bf16.msra.mxu0 %v2484
      %2506 = vmatpush.bf16.msra.mxu0 %v2483
      %2507 = vmatmul.bf16.gmra.mxu0 %v2419
      %v2508 = vpop.f32.mrf.mxu0
      %v2509 = vadd.f32 0.0, %v2508
      %v2510 = vpop.f32.mrf.mxu0
      %v2511 = vadd.f32 0.0, %v2510
      %2512 = vmatmul.bf16.gmra.mxu0 %v2420
      %v2513 = vpop.f32.mrf.mxu0
      %v2514 = vadd.f32 0.0, %v2513
      %v2515 = vpop.f32.mrf.mxu0
      %v2516 = vadd.f32 0.0, %v2515
      %2517 = vmatmul.bf16.gmra.mxu0 %v2421
      %v2518 = vpop.f32.mrf.mxu0
      %v2519 = vadd.f32 0.0, %v2518
      %v2520 = vpop.f32.mrf.mxu0
      %v2521 = vadd.f32 0.0, %v2520
      %2522 = vmatmul.bf16.gmra.mxu0 %v2422
      %v2523 = vpop.f32.mrf.mxu0
      %v2524 = vadd.f32 0.0, %v2523
      %v2525 = vpop.f32.mrf.mxu0
      %v2526 = vadd.f32 0.0, %v2525
      %2527 = vmatmul.bf16.gmra.mxu0 %v2423
      %v2528 = vpop.f32.mrf.mxu0
      %v2529 = vadd.f32 0.0, %v2528
      %v2530 = vpop.f32.mrf.mxu0
      %v2531 = vadd.f32 0.0, %v2530
      %2532 = vmatmul.bf16.gmra.mxu0 %v2424
      %v2533 = vpop.f32.mrf.mxu0
      %v2534 = vadd.f32 0.0, %v2533
      %v2535 = vpop.f32.mrf.mxu0
      %v2536 = vadd.f32 0.0, %v2535
      %2537 = vmatmul.bf16.gmra.mxu0 %v2425
      %v2538 = vpop.f32.mrf.mxu0
      %v2539 = vadd.f32 0.0, %v2538
      %v2540 = vpop.f32.mrf.mxu0
      %v2541 = vadd.f32 0.0, %v2540
      %2542 = vmatmul.bf16.gmra.mxu0 %v2426
      %v2543 = vpop.f32.mrf.mxu0
      %v2544 = vadd.f32 0.0, %v2543
      %v2545 = vpop.f32.mrf.mxu0
      %v2546 = vadd.f32 0.0, %v2545
      %2547 = vmatmul.bf16.gmra.mxu0 %v2427
      %v2548 = vpop.f32.mrf.mxu0
      %v2549 = vadd.f32 0.0, %v2548
      %v2550 = vpop.f32.mrf.mxu0
      %v2551 = vadd.f32 0.0, %v2550
      %2552 = vmatmul.bf16.gmra.mxu0 %v2428
      %v2553 = vpop.f32.mrf.mxu0
      %v2554 = vadd.f32 0.0, %v2553
      %v2555 = vpop.f32.mrf.mxu0
      %v2556 = vadd.f32 0.0, %v2555
      %2557 = vmatmul.bf16.gmra.mxu0 %v2429
      %v2558 = vpop.f32.mrf.mxu0
      %v2559 = vadd.f32 0.0, %v2558
      %v2560 = vpop.f32.mrf.mxu0
      %v2561 = vadd.f32 0.0, %v2560
      %2562 = vmatmul.bf16.gmra.mxu0 %v2430
      %v2563 = vpop.f32.mrf.mxu0
      %v2564 = vadd.f32 0.0, %v2563
      %v2565 = vpop.f32.mrf.mxu0
      %v2566 = vadd.f32 0.0, %v2565
      %2567 = vmatmul.bf16.gmra.mxu0 %v2431
      %v2568 = vpop.f32.mrf.mxu0
      %v2569 = vadd.f32 0.0, %v2568
      %v2570 = vpop.f32.mrf.mxu0
      %v2571 = vadd.f32 0.0, %v2570
      %2572 = vmatmul.bf16.gmra.mxu0 %v2432
      %v2573 = vpop.f32.mrf.mxu0
      %v2574 = vadd.f32 0.0, %v2573
      %v2575 = vpop.f32.mrf.mxu0
      %v2576 = vadd.f32 0.0, %v2575
      %2577 = vmatmul.bf16.gmra.mxu0 %v2433
      %v2578 = vpop.f32.mrf.mxu0
      %v2579 = vadd.f32 0.0, %v2578
      %v2580 = vpop.f32.mrf.mxu0
      %v2581 = vadd.f32 0.0, %v2580
      %2582 = vmatmul.bf16.gmra.mxu0 %v2434
      %v2583 = vpop.f32.mrf.mxu0
      %v2584 = vadd.f32 0.0, %v2583
      %v2585 = vpop.f32.mrf.mxu0
      %v2586 = vadd.f32 0.0, %v2585
      %2587 = vdwg.mxu0
      %v2588 = vadd.f32 %v2275, %v2509
      %v2589 = vadd.f32 %v2276, %v2511
      %v2590 = vadd.f32 %v2277, %v2514
      %v2591 = vadd.f32 %v2278, %v2516
      %v2592 = vadd.f32 %v2279, %v2519
      %v2593 = vadd.f32 %v2280, %v2521
      %v2594 = vadd.f32 %v2281, %v2524
      %v2595 = vadd.f32 %v2282, %v2526
      %v2596 = vadd.f32 %v2283, %v2529
      %v2597 = vadd.f32 %v2284, %v2531
      %v2598 = vadd.f32 %v2285, %v2534
      %v2599 = vadd.f32 %v2286, %v2536
      %v2600 = vadd.f32 %v2287, %v2539
      %v2601 = vadd.f32 %v2288, %v2541
      %v2602 = vadd.f32 %v2289, %v2544
      %v2603 = vadd.f32 %v2290, %v2546
      %v2604 = vadd.f32 %v2291, %v2549
      %v2605 = vadd.f32 %v2292, %v2551
      %v2606 = vadd.f32 %v2293, %v2554
      %v2607 = vadd.f32 %v2294, %v2556
      %v2608 = vadd.f32 %v2295, %v2559
      %v2609 = vadd.f32 %v2296, %v2561
      %v2610 = vadd.f32 %v2297, %v2564
      %v2611 = vadd.f32 %v2298, %v2566
      %v2612 = vadd.f32 %v2299, %v2569
      %v2613 = vadd.f32 %v2300, %v2571
      %v2614 = vadd.f32 %v2301, %v2574
      %v2615 = vadd.f32 %v2302, %v2576
      %v2616 = vadd.f32 %v2303, %v2579
      %v2617 = vadd.f32 %v2304, %v2581
      %v2618 = vadd.f32 %v2305, %v2584
      %v2619 = vadd.f32 %v2306, %v2586
      %v2620 = vld [vmem:[%s879] sm:$0xf]
      %v2621 = vld [vmem:[%s879 + $0x4] sm:$0xf]
      %v2622 = vld [vmem:[%s879 + $0x8] sm:$0x1]
      %v2623 = vld [vmem:[%s879 + $0xc] sm:$0xf]
      %v2624 = vld [vmem:[%s879 + $0x10] sm:$0xf]
      %v2625 = vld [vmem:[%s879 + $0x14] sm:$0x1]
      %v2626 = vld [vmem:[%s879 + $0x18] sm:$0xf]
      %v2627 = vld [vmem:[%s879 + $0x1c] sm:$0xf]
      %v2628 = vld [vmem:[%s879 + $0x20] sm:$0x1]
      %v2629 = vld [vmem:[%s879 + $0x24] sm:$0xf]
      %v2630 = vld [vmem:[%s879 + $0x28] sm:$0xf]
      %v2631 = vld [vmem:[%s879 + $0x2c] sm:$0x1]
      %v2632 = vld [vmem:[%s879 + $0x30] sm:$0xf]
      %v2633 = vld [vmem:[%s879 + $0x34] sm:$0xf]
      %v2634 = vld [vmem:[%s879 + $0x38] sm:$0x1]
      %v2635 = vld [vmem:[%s879 + $0x3c] sm:$0xf]
      %v2636 = vld [vmem:[%s879 + $0x40] sm:$0xf]
      %v2637 = vld [vmem:[%s879 + $0x44] sm:$0x1]
      %v2638 = vld [vmem:[%s879 + $0x48] sm:$0xf]
      %v2639 = vld [vmem:[%s879 + $0x4c] sm:$0xf]
      %v2640 = vld [vmem:[%s879 + $0x50] sm:$0x1]
      %v2641 = vld [vmem:[%s879 + $0x54] sm:$0xf]
      %v2642 = vld [vmem:[%s879 + $0x58] sm:$0xf]
      %v2643 = vld [vmem:[%s879 + $0x5c] sm:$0x1]
      %v2644 = vld [vmem:[%s879 + $0x60] sm:$0xf]
      %v2645 = vld [vmem:[%s879 + $0x64] sm:$0xf]
      %v2646 = vld [vmem:[%s879 + $0x68] sm:$0x1]
      %v2647 = vld [vmem:[%s879 + $0x6c] sm:$0xf]
      %v2648 = vld [vmem:[%s879 + $0x70] sm:$0xf]
      %v2649 = vld [vmem:[%s879 + $0x74] sm:$0x1]
      %v2650 = vld [vmem:[%s879 + $0x78] sm:$0xf]
      %v2651 = vld [vmem:[%s879 + $0x7c] sm:$0xf]
      %v2652 = vld [vmem:[%s879 + $0x80] sm:$0x1]
      %v2653 = vld [vmem:[%s879 + $0x84] sm:$0xf]
      %v2654 = vld [vmem:[%s879 + $0x88] sm:$0xf]
      %v2655 = vld [vmem:[%s879 + $0x8c] sm:$0x1]
      %v2656 = vld [vmem:[%s879 + $0x90] sm:$0xf]
      %v2657 = vld [vmem:[%s879 + $0x94] sm:$0xf]
      %v2658 = vld [vmem:[%s879 + $0x98] sm:$0x1]
      %v2659 = vld [vmem:[%s879 + $0x9c] sm:$0xf]
      %v2660 = vld [vmem:[%s879 + $0xa0] sm:$0xf]
      %v2661 = vld [vmem:[%s879 + $0xa4] sm:$0x1]
      %v2662 = vld [vmem:[%s879 + $0xa8] sm:$0xf]
      %v2663 = vld [vmem:[%s879 + $0xac] sm:$0xf]
      %v2664 = vld [vmem:[%s879 + $0xb0] sm:$0x1]
      %v2665 = vld [vmem:[%s879 + $0xb4] sm:$0xf]
      %v2666 = vld [vmem:[%s879 + $0xb8] sm:$0xf]
      %v2667 = vld [vmem:[%s879 + $0xbc] sm:$0x1]
      %v2669 = vshrl.u32 %v2620, 16
      %v2671 = vrot.slane %v2669, 4
      %v2672 = vshll.u32 %v2620, 16
      %v2674 = vrot.slane %v2672, 5
      %v2675 = vor.u32 %v2671, %v2674
      %v2676 = vrot.slane %v2675, 4
      %v2678 = vshll.u32 %v2621, 16
      %v2680 = vrot.slane %v2678, 5
      %v2681 = vsel %vm1060, %v2676, %v2680
      %v2682 = vshrl.u32 %v2621, 16
      %v2684 = vrot.slane %v2682, 4
      %v2685 = vor.u32 %v2684, %v2680
      %v2686 = vrot.slane %v2685, 4
      %v2688 = vshll.u32 %v2622, 16
      %v2690 = vrot.slane %v2688, 5
      %v2691 = vsel %vm1060, %v2686, %v2690
      %v2693 = vshrl.u32 %v2623, 16
      %v2695 = vrot.slane %v2693, 4
      %v2696 = vshll.u32 %v2623, 16
      %v2698 = vrot.slane %v2696, 5
      %v2699 = vor.u32 %v2695, %v2698
      %v2700 = vrot.slane %v2699, 4
      %v2702 = vshll.u32 %v2624, 16
      %v2704 = vrot.slane %v2702, 5
      %v2705 = vsel %vm1060, %v2700, %v2704
      %v2706 = vshrl.u32 %v2624, 16
      %v2708 = vrot.slane %v2706, 4
      %v2709 = vor.u32 %v2708, %v2704
      %v2710 = vrot.slane %v2709, 4
      %v2712 = vshll.u32 %v2625, 16
      %v2714 = vrot.slane %v2712, 5
      %v2715 = vsel %vm1060, %v2710, %v2714
      %v2717 = vshrl.u32 %v2626, 16
      %v2719 = vrot.slane %v2717, 4
      %v2720 = vshll.u32 %v2626, 16
      %v2722 = vrot.slane %v2720, 5
      %v2723 = vor.u32 %v2719, %v2722
      %v2724 = vrot.slane %v2723, 4
      %v2726 = vshll.u32 %v2627, 16
      %v2728 = vrot.slane %v2726, 5
      %v2729 = vsel %vm1060, %v2724, %v2728
      %v2730 = vshrl.u32 %v2627, 16
      %v2732 = vrot.slane %v2730, 4
      %v2733 = vor.u32 %v2732, %v2728
      %v2734 = vrot.slane %v2733, 4
      %v2736 = vshll.u32 %v2628, 16
      %v2738 = vrot.slane %v2736, 5
      %v2739 = vsel %vm1060, %v2734, %v2738
      %v2741 = vshrl.u32 %v2629, 16
      %v2743 = vrot.slane %v2741, 4
      %v2744 = vshll.u32 %v2629, 16
      %v2746 = vrot.slane %v2744, 5
      %v2747 = vor.u32 %v2743, %v2746
      %v2748 = vrot.slane %v2747, 4
      %v2750 = vshll.u32 %v2630, 16
      %v2752 = vrot.slane %v2750, 5
      %v2753 = vsel %vm1060, %v2748, %v2752
      %v2754 = vshrl.u32 %v2630, 16
      %v2756 = vrot.slane %v2754, 4
      %v2757 = vor.u32 %v2756, %v2752
      %v2758 = vrot.slane %v2757, 4
      %v2760 = vshll.u32 %v2631, 16
      %v2762 = vrot.slane %v2760, 5
      %v2763 = vsel %vm1060, %v2758, %v2762
      %v2765 = vshrl.u32 %v2632, 16
      %v2767 = vrot.slane %v2765, 4
      %v2768 = vshll.u32 %v2632, 16
      %v2770 = vrot.slane %v2768, 5
      %v2771 = vor.u32 %v2767, %v2770
      %v2772 = vrot.slane %v2771, 4
      %v2774 = vshll.u32 %v2633, 16
      %v2776 = vrot.slane %v2774, 5
      %v2777 = vsel %vm1060, %v2772, %v2776
      %v2778 = vshrl.u32 %v2633, 16
      %v2780 = vrot.slane %v2778, 4
      %v2781 = vor.u32 %v2780, %v2776
      %v2782 = vrot.slane %v2781, 4
      %v2784 = vshll.u32 %v2634, 16
      %v2786 = vrot.slane %v2784, 5
      %v2787 = vsel %vm1060, %v2782, %v2786
      %v2789 = vshrl.u32 %v2635, 16
      %v2791 = vrot.slane %v2789, 4
      %v2792 = vshll.u32 %v2635, 16
      %v2794 = vrot.slane %v2792, 5
      %v2795 = vor.u32 %v2791, %v2794
      %v2796 = vrot.slane %v2795, 4
      %v2798 = vshll.u32 %v2636, 16
      %v2800 = vrot.slane %v2798, 5
      %v2801 = vsel %vm1060, %v2796, %v2800
      %v2802 = vshrl.u32 %v2636, 16
      %v2804 = vrot.slane %v2802, 4
      %v2805 = vor.u32 %v2804, %v2800
      %v2806 = vrot.slane %v2805, 4
      %v2808 = vshll.u32 %v2637, 16
      %v2810 = vrot.slane %v2808, 5
      %v2811 = vsel %vm1060, %v2806, %v2810
      %v2813 = vshrl.u32 %v2638, 16
      %v2815 = vrot.slane %v2813, 4
      %v2816 = vshll.u32 %v2638, 16
      %v2818 = vrot.slane %v2816, 5
      %v2819 = vor.u32 %v2815, %v2818
      %v2820 = vrot.slane %v2819, 4
      %v2822 = vshll.u32 %v2639, 16
      %v2824 = vrot.slane %v2822, 5
      %v2825 = vsel %vm1060, %v2820, %v2824
      %v2826 = vshrl.u32 %v2639, 16
      %v2828 = vrot.slane %v2826, 4
      %v2829 = vor.u32 %v2828, %v2824
      %v2830 = vrot.slane %v2829, 4
      %v2832 = vshll.u32 %v2640, 16
      %v2834 = vrot.slane %v2832, 5
      %v2835 = vsel %vm1060, %v2830, %v2834
      %v2837 = vshrl.u32 %v2641, 16
      %v2839 = vrot.slane %v2837, 4
      %v2840 = vshll.u32 %v2641, 16
      %v2842 = vrot.slane %v2840, 5
      %v2843 = vor.u32 %v2839, %v2842
      %v2844 = vrot.slane %v2843, 4
      %v2846 = vshll.u32 %v2642, 16
      %v2848 = vrot.slane %v2846, 5
      %v2849 = vsel %vm1060, %v2844, %v2848
      %v2850 = vshrl.u32 %v2642, 16
      %v2852 = vrot.slane %v2850, 4
      %v2853 = vor.u32 %v2852, %v2848
      %v2854 = vrot.slane %v2853, 4
      %v2856 = vshll.u32 %v2643, 16
      %v2858 = vrot.slane %v2856, 5
      %v2859 = vsel %vm1060, %v2854, %v2858
      %v2861 = vshrl.u32 %v2644, 16
      %v2863 = vrot.slane %v2861, 4
      %v2864 = vshll.u32 %v2644, 16
      %v2866 = vrot.slane %v2864, 5
      %v2867 = vor.u32 %v2863, %v2866
      %v2868 = vrot.slane %v2867, 4
      %v2870 = vshll.u32 %v2645, 16
      %v2872 = vrot.slane %v2870, 5
      %v2873 = vsel %vm1060, %v2868, %v2872
      %v2874 = vshrl.u32 %v2645, 16
      %v2876 = vrot.slane %v2874, 4
      %v2877 = vor.u32 %v2876, %v2872
      %v2878 = vrot.slane %v2877, 4
      %v2880 = vshll.u32 %v2646, 16
      %v2882 = vrot.slane %v2880, 5
      %v2883 = vsel %vm1060, %v2878, %v2882
      %v2885 = vshrl.u32 %v2647, 16
      %v2887 = vrot.slane %v2885, 4
      %v2888 = vshll.u32 %v2647, 16
      %v2890 = vrot.slane %v2888, 5
      %v2891 = vor.u32 %v2887, %v2890
      %v2892 = vrot.slane %v2891, 4
      %v2894 = vshll.u32 %v2648, 16
      %v2896 = vrot.slane %v2894, 5
      %v2897 = vsel %vm1060, %v2892, %v2896
      %v2898 = vshrl.u32 %v2648, 16
      %v2900 = vrot.slane %v2898, 4
      %v2901 = vor.u32 %v2900, %v2896
      %v2902 = vrot.slane %v2901, 4
      %v2904 = vshll.u32 %v2649, 16
      %v2906 = vrot.slane %v2904, 5
      %v2907 = vsel %vm1060, %v2902, %v2906
      %v2909 = vshrl.u32 %v2650, 16
      %v2911 = vrot.slane %v2909, 4
      %v2912 = vshll.u32 %v2650, 16
      %v2914 = vrot.slane %v2912, 5
      %v2915 = vor.u32 %v2911, %v2914
      %v2916 = vrot.slane %v2915, 4
      %v2918 = vshll.u32 %v2651, 16
      %v2920 = vrot.slane %v2918, 5
      %v2921 = vsel %vm1060, %v2916, %v2920
      %v2922 = vshrl.u32 %v2651, 16
      %v2924 = vrot.slane %v2922, 4
      %v2925 = vor.u32 %v2924, %v2920
      %v2926 = vrot.slane %v2925, 4
      %v2928 = vshll.u32 %v2652, 16
      %v2930 = vrot.slane %v2928, 5
      %v2931 = vsel %vm1060, %v2926, %v2930
      %v2933 = vshrl.u32 %v2653, 16
      %v2935 = vrot.slane %v2933, 4
      %v2936 = vshll.u32 %v2653, 16
      %v2938 = vrot.slane %v2936, 5
      %v2939 = vor.u32 %v2935, %v2938
      %v2940 = vrot.slane %v2939, 4
      %v2942 = vshll.u32 %v2654, 16
      %v2944 = vrot.slane %v2942, 5
      %v2945 = vsel %vm1060, %v2940, %v2944
      %v2946 = vshrl.u32 %v2654, 16
      %v2948 = vrot.slane %v2946, 4
      %v2949 = vor.u32 %v2948, %v2944
      %v2950 = vrot.slane %v2949, 4
      %v2952 = vshll.u32 %v2655, 16
      %v2954 = vrot.slane %v2952, 5
      %v2955 = vsel %vm1060, %v2950, %v2954
      %v2957 = vshrl.u32 %v2656, 16
      %v2959 = vrot.slane %v2957, 4
      %v2960 = vshll.u32 %v2656, 16
      %v2962 = vrot.slane %v2960, 5
      %v2963 = vor.u32 %v2959, %v2962
      %v2964 = vrot.slane %v2963, 4
      %v2966 = vshll.u32 %v2657, 16
      %v2968 = vrot.slane %v2966, 5
      %v2969 = vsel %vm1060, %v2964, %v2968
      %v2970 = vshrl.u32 %v2657, 16
      %v2972 = vrot.slane %v2970, 4
      %v2973 = vor.u32 %v2972, %v2968
      %v2974 = vrot.slane %v2973, 4
      %v2976 = vshll.u32 %v2658, 16
      %v2978 = vrot.slane %v2976, 5
      %v2979 = vsel %vm1060, %v2974, %v2978
      %v2981 = vshrl.u32 %v2659, 16
      %v2983 = vrot.slane %v2981, 4
      %v2984 = vshll.u32 %v2659, 16
      %v2986 = vrot.slane %v2984, 5
      %v2987 = vor.u32 %v2983, %v2986
      %v2988 = vrot.slane %v2987, 4
      %v2990 = vshll.u32 %v2660, 16
      %v2992 = vrot.slane %v2990, 5
      %v2993 = vsel %vm1060, %v2988, %v2992
      %v2994 = vshrl.u32 %v2660, 16
      %v2996 = vrot.slane %v2994, 4
      %v2997 = vor.u32 %v2996, %v2992
      %v2998 = vrot.slane %v2997, 4
      %v3000 = vshll.u32 %v2661, 16
      %v3002 = vrot.slane %v3000, 5
      %v3003 = vsel %vm1060, %v2998, %v3002
      %v3005 = vshrl.u32 %v2662, 16
      %v3007 = vrot.slane %v3005, 4
      %v3008 = vshll.u32 %v2662, 16
      %v3010 = vrot.slane %v3008, 5
      %v3011 = vor.u32 %v3007, %v3010
      %v3012 = vrot.slane %v3011, 4
      %v3014 = vshll.u32 %v2663, 16
      %v3016 = vrot.slane %v3014, 5
      %v3017 = vsel %vm1060, %v3012, %v3016
      %v3018 = vshrl.u32 %v2663, 16
      %v3020 = vrot.slane %v3018, 4
      %v3021 = vor.u32 %v3020, %v3016
      %v3022 = vrot.slane %v3021, 4
      %v3024 = vshll.u32 %v2664, 16
      %v3026 = vrot.slane %v3024, 5
      %v3027 = vsel %vm1060, %v3022, %v3026
      %v3029 = vshrl.u32 %v2665, 16
      %v3031 = vrot.slane %v3029, 4
      %v3032 = vshll.u32 %v2665, 16
      %v3034 = vrot.slane %v3032, 5
      %v3035 = vor.u32 %v3031, %v3034
      %v3036 = vrot.slane %v3035, 4
      %v3038 = vshll.u32 %v2666, 16
      %v3040 = vrot.slane %v3038, 5
      %v3041 = vsel %vm1060, %v3036, %v3040
      %v3042 = vshrl.u32 %v2666, 16
      %v3044 = vrot.slane %v3042, 4
      %v3045 = vor.u32 %v3044, %v3040
      %v3046 = vrot.slane %v3045, 4
      %v3048 = vshll.u32 %v2667, 16
      %v3050 = vrot.slane %v3048, 5
      %v3051 = vsel %vm1060, %v3046, %v3050
      %v3052 = vld [vmem:[%s3 + $0x100] sm:$0xf]
      %v3053 = vld [vmem:[%s3 + $0x104] sm:$0xf]
      %v3054 = vld [vmem:[%s3 + $0x108] sm:$0xf]
      %v3055 = vld [vmem:[%s3 + $0x10c] sm:$0xf]
      %v3056 = vld [vmem:[%s3 + $0x110] sm:$0xf]
      %v3057 = vld [vmem:[%s3 + $0x114] sm:$0xf]
      %v3058 = vld [vmem:[%s3 + $0x118] sm:$0xf]
      %v3059 = vld [vmem:[%s3 + $0x11c] sm:$0xf]
      %v3060 = vld [vmem:[%s3 + $0x120] sm:$0xf]
      %v3061 = vld [vmem:[%s3 + $0x124] sm:$0xf]
      %v3062 = vld [vmem:[%s3 + $0x128] sm:$0xf]
      %v3063 = vld [vmem:[%s3 + $0x12c] sm:$0xf]
      %v3064 = vld [vmem:[%s3 + $0x130] sm:$0xf]
      %v3065 = vld [vmem:[%s3 + $0x134] sm:$0xf]
      %v3066 = vld [vmem:[%s3 + $0x138] sm:$0xf]
      %v3067 = vld [vmem:[%s3 + $0x13c] sm:$0xf]
      %v3068 = vunpack.c.l.b16 %v2681
      %v3069 = vunpack.c.l.b16 %v2691
      %v3070 = vunpack.c.l.b16 %v2705
      %v3071 = vunpack.c.l.b16 %v2715
      %v3072 = vunpack.c.l.b16 %v2729
      %v3073 = vunpack.c.l.b16 %v2739
      %v3074 = vunpack.c.l.b16 %v2753
      %v3075 = vunpack.c.l.b16 %v2763
      %v3076 = vunpack.c.l.b16 %v2777
      %v3077 = vunpack.c.l.b16 %v2787
      %v3078 = vunpack.c.l.b16 %v2801
      %v3079 = vunpack.c.l.b16 %v2811
      %v3080 = vunpack.c.l.b16 %v2825
      %v3081 = vunpack.c.l.b16 %v2835
      %v3082 = vunpack.c.l.b16 %v2849
      %v3083 = vunpack.c.l.b16 %v2859
      %v3084 = vunpack.c.l.b16 %v2873
      %v3085 = vunpack.c.l.b16 %v2883
      %v3086 = vunpack.c.l.b16 %v2897
      %v3087 = vunpack.c.l.b16 %v2907
      %v3088 = vunpack.c.l.b16 %v2921
      %v3089 = vunpack.c.l.b16 %v2931
      %v3090 = vunpack.c.l.b16 %v2945
      %v3091 = vunpack.c.l.b16 %v2955
      %v3092 = vunpack.c.l.b16 %v2969
      %v3093 = vunpack.c.l.b16 %v2979
      %v3094 = vunpack.c.l.b16 %v2993
      %v3095 = vunpack.c.l.b16 %v3003
      %v3096 = vunpack.c.l.b16 %v3017
      %v3097 = vunpack.c.l.b16 %v3027
      %v3098 = vunpack.c.l.b16 %v3041
      %v3099 = vunpack.c.l.b16 %v3051
      %v3100 = vpack.c.b16 %v3069, %v3068
      %v3101 = vpack.c.b16 %v3071, %v3070
      %v3102 = vpack.c.b16 %v3073, %v3072
      %v3103 = vpack.c.b16 %v3075, %v3074
      %v3104 = vpack.c.b16 %v3077, %v3076
      %v3105 = vpack.c.b16 %v3079, %v3078
      %v3106 = vpack.c.b16 %v3081, %v3080
      %v3107 = vpack.c.b16 %v3083, %v3082
      %v3108 = vpack.c.b16 %v3085, %v3084
      %v3109 = vpack.c.b16 %v3087, %v3086
      %v3110 = vpack.c.b16 %v3089, %v3088
      %v3111 = vpack.c.b16 %v3091, %v3090
      %v3112 = vpack.c.b16 %v3093, %v3092
      %v3113 = vpack.c.b16 %v3095, %v3094
      %v3114 = vpack.c.b16 %v3097, %v3096
      %v3115 = vpack.c.b16 %v3099, %v3098
      %v3148 = vunpack.c.l.b16 %v3052
      %v3149 = vunpack.c.l.b16 %v3053
      %v3150 = vunpack.c.l.b16 %v3054
      %v3151 = vunpack.c.l.b16 %v3055
      %v3152 = vunpack.c.l.b16 %v3056
      %v3153 = vunpack.c.l.b16 %v3057
      %v3154 = vunpack.c.l.b16 %v3058
      %v3155 = vunpack.c.l.b16 %v3059
      %v3156 = vunpack.c.l.b16 %v3060
      %v3157 = vunpack.c.l.b16 %v3061
      %v3158 = vunpack.c.l.b16 %v3062
      %v3159 = vunpack.c.l.b16 %v3063
      %v3160 = vunpack.c.l.b16 %v3064
      %v3161 = vunpack.c.l.b16 %v3065
      %v3162 = vunpack.c.l.b16 %v3066
      %v3163 = vunpack.c.l.b16 %v3067
      %v3164 = vpack.c.b16 %v3149, %v3148
      %v3165 = vpack.c.b16 %v3151, %v3150
      %v3166 = vpack.c.b16 %v3153, %v3152
      %v3167 = vpack.c.b16 %v3155, %v3154
      %v3168 = vpack.c.b16 %v3157, %v3156
      %v3169 = vpack.c.b16 %v3159, %v3158
      %v3170 = vpack.c.b16 %v3161, %v3160
      %v3171 = vpack.c.b16 %v3163, %v3162
      %3180 = vmatpush.bf16.msra.mxu0 %v3171
      %3181 = vmatpush.bf16.msra.mxu0 %v3170
      %3182 = vmatpush.bf16.msra.mxu0 %v3169
      %3183 = vmatpush.bf16.msra.mxu0 %v3168
      %3184 = vmatpush.bf16.msra.mxu0 %v3167
      %3185 = vmatpush.bf16.msra.mxu0 %v3166
      %3186 = vmatpush.bf16.msra.mxu0 %v3165
      %3187 = vmatpush.bf16.msra.mxu0 %v3164
      %3188 = vmatmul.bf16.gmra.mxu0 %v3100
      %v3189 = vpop.f32.mrf.mxu0
      %v3190 = vadd.f32 0.0, %v3189
      %v3191 = vpop.f32.mrf.mxu0
      %v3192 = vadd.f32 0.0, %v3191
      %3193 = vmatmul.bf16.gmra.mxu0 %v3101
      %v3194 = vpop.f32.mrf.mxu0
      %v3195 = vadd.f32 0.0, %v3194
      %v3196 = vpop.f32.mrf.mxu0
      %v3197 = vadd.f32 0.0, %v3196
      %3198 = vmatmul.bf16.gmra.mxu0 %v3102
      %v3199 = vpop.f32.mrf.mxu0
      %v3200 = vadd.f32 0.0, %v3199
      %v3201 = vpop.f32.mrf.mxu0
      %v3202 = vadd.f32 0.0, %v3201
      %3203 = vmatmul.bf16.gmra.mxu0 %v3103
      %v3204 = vpop.f32.mrf.mxu0
      %v3205 = vadd.f32 0.0, %v3204
      %v3206 = vpop.f32.mrf.mxu0
      %v3207 = vadd.f32 0.0, %v3206
      %3208 = vmatmul.bf16.gmra.mxu0 %v3104
      %v3209 = vpop.f32.mrf.mxu0
      %v3210 = vadd.f32 0.0, %v3209
      %v3211 = vpop.f32.mrf.mxu0
      %v3212 = vadd.f32 0.0, %v3211
      %3213 = vmatmul.bf16.gmra.mxu0 %v3105
      %v3214 = vpop.f32.mrf.mxu0
      %v3215 = vadd.f32 0.0, %v3214
      %v3216 = vpop.f32.mrf.mxu0
      %v3217 = vadd.f32 0.0, %v3216
      %3218 = vmatmul.bf16.gmra.mxu0 %v3106
      %v3219 = vpop.f32.mrf.mxu0
      %v3220 = vadd.f32 0.0, %v3219
      %v3221 = vpop.f32.mrf.mxu0
      %v3222 = vadd.f32 0.0, %v3221
      %3223 = vmatmul.bf16.gmra.mxu0 %v3107
      %v3224 = vpop.f32.mrf.mxu0
      %v3225 = vadd.f32 0.0, %v3224
      %v3226 = vpop.f32.mrf.mxu0
      %v3227 = vadd.f32 0.0, %v3226
      %3228 = vmatmul.bf16.gmra.mxu0 %v3108
      %v3229 = vpop.f32.mrf.mxu0
      %v3230 = vadd.f32 0.0, %v3229
      %v3231 = vpop.f32.mrf.mxu0
      %v3232 = vadd.f32 0.0, %v3231
      %3233 = vmatmul.bf16.gmra.mxu0 %v3109
      %v3234 = vpop.f32.mrf.mxu0
      %v3235 = vadd.f32 0.0, %v3234
      %v3236 = vpop.f32.mrf.mxu0
      %v3237 = vadd.f32 0.0, %v3236
      %3238 = vmatmul.bf16.gmra.mxu0 %v3110
      %v3239 = vpop.f32.mrf.mxu0
      %v3240 = vadd.f32 0.0, %v3239
      %v3241 = vpop.f32.mrf.mxu0
      %v3242 = vadd.f32 0.0, %v3241
      %3243 = vmatmul.bf16.gmra.mxu0 %v3111
      %v3244 = vpop.f32.mrf.mxu0
      %v3245 = vadd.f32 0.0, %v3244
      %v3246 = vpop.f32.mrf.mxu0
      %v3247 = vadd.f32 0.0, %v3246
      %3248 = vmatmul.bf16.gmra.mxu0 %v3112
      %v3249 = vpop.f32.mrf.mxu0
      %v3250 = vadd.f32 0.0, %v3249
      %v3251 = vpop.f32.mrf.mxu0
      %v3252 = vadd.f32 0.0, %v3251
      %3253 = vmatmul.bf16.gmra.mxu0 %v3113
      %v3254 = vpop.f32.mrf.mxu0
      %v3255 = vadd.f32 0.0, %v3254
      %v3256 = vpop.f32.mrf.mxu0
      %v3257 = vadd.f32 0.0, %v3256
      %3258 = vmatmul.bf16.gmra.mxu0 %v3114
      %v3259 = vpop.f32.mrf.mxu0
      %v3260 = vadd.f32 0.0, %v3259
      %v3261 = vpop.f32.mrf.mxu0
      %v3262 = vadd.f32 0.0, %v3261
      %3263 = vmatmul.bf16.gmra.mxu0 %v3115
      %v3264 = vpop.f32.mrf.mxu0
      %v3265 = vadd.f32 0.0, %v3264
      %v3266 = vpop.f32.mrf.mxu0
      %v3267 = vadd.f32 0.0, %v3266
      %3268 = vdwg.mxu0
      %v3269 = vadd.f32 %v2588, %v3190
      %v3270 = vadd.f32 %v2589, %v3192
      %v3271 = vadd.f32 %v2590, %v3195
      %v3272 = vadd.f32 %v2591, %v3197
      %v3273 = vadd.f32 %v2592, %v3200
      %v3274 = vadd.f32 %v2593, %v3202
      %v3275 = vadd.f32 %v2594, %v3205
      %v3276 = vadd.f32 %v2595, %v3207
      %v3277 = vadd.f32 %v2596, %v3210
      %v3278 = vadd.f32 %v2597, %v3212
      %v3279 = vadd.f32 %v2598, %v3215
      %v3280 = vadd.f32 %v2599, %v3217
      %v3281 = vadd.f32 %v2600, %v3220
      %v3282 = vadd.f32 %v2601, %v3222
      %v3283 = vadd.f32 %v2602, %v3225
      %v3284 = vadd.f32 %v2603, %v3227
      %v3285 = vadd.f32 %v2604, %v3230
      %v3286 = vadd.f32 %v2605, %v3232
      %v3287 = vadd.f32 %v2606, %v3235
      %v3288 = vadd.f32 %v2607, %v3237
      %v3289 = vadd.f32 %v2608, %v3240
      %v3290 = vadd.f32 %v2609, %v3242
      %v3291 = vadd.f32 %v2610, %v3245
      %v3292 = vadd.f32 %v2611, %v3247
      %v3293 = vadd.f32 %v2612, %v3250
      %v3294 = vadd.f32 %v2613, %v3252
      %v3295 = vadd.f32 %v2614, %v3255
      %v3296 = vadd.f32 %v2615, %v3257
      %v3297 = vadd.f32 %v2616, %v3260
      %v3298 = vadd.f32 %v2617, %v3262
      %v3299 = vadd.f32 %v2618, %v3265
      %v3300 = vadd.f32 %v2619, %v3267
      %v3301 = vld [vmem:[%s879] sm:$0xe]
      %v3302 = vld [vmem:[%s879 + $0xc] sm:$0xe]
      %v3303 = vld [vmem:[%s879 + $0x18] sm:$0xe]
      %v3304 = vld [vmem:[%s879 + $0x24] sm:$0xe]
      %v3305 = vld [vmem:[%s879 + $0x30] sm:$0xe]
      %v3306 = vld [vmem:[%s879 + $0x3c] sm:$0xe]
      %v3307 = vld [vmem:[%s879 + $0x48] sm:$0xe]
      %v3308 = vld [vmem:[%s879 + $0x54] sm:$0xe]
      %v3309 = vld [vmem:[%s879 + $0x60] sm:$0xe]
      %v3310 = vld [vmem:[%s879 + $0x6c] sm:$0xe]
      %v3311 = vld [vmem:[%s879 + $0x78] sm:$0xe]
      %v3312 = vld [vmem:[%s879 + $0x84] sm:$0xe]
      %v3313 = vld [vmem:[%s879 + $0x90] sm:$0xe]
      %v3314 = vld [vmem:[%s879 + $0x9c] sm:$0xe]
      %v3315 = vld [vmem:[%s879 + $0xa8] sm:$0xe]
      %v3316 = vld [vmem:[%s879 + $0xb4] sm:$0xe]
      %v3365 = vrot.slane %v3301, 5
      %v3366 = vrot.slane %v3365, 4
      %v3367 = vrot.slane %v2621, 5
      %v3368 = vsel %vm1945, %v3366, %v3367
      %v3369 = vrot.slane %v3367, 4
      %v3370 = vrot.slane %v2622, 5
      %v3371 = vsel %vm1945, %v3369, %v3370
      %v3372 = vrot.slane %v3302, 5
      %v3373 = vrot.slane %v3372, 4
      %v3374 = vrot.slane %v2624, 5
      %v3375 = vsel %vm1945, %v3373, %v3374
      %v3376 = vrot.slane %v3374, 4
      %v3377 = vrot.slane %v2625, 5
      %v3378 = vsel %vm1945, %v3376, %v3377
      %v3379 = vrot.slane %v3303, 5
      %v3380 = vrot.slane %v3379, 4
      %v3381 = vrot.slane %v2627, 5
      %v3382 = vsel %vm1945, %v3380, %v3381
      %v3383 = vrot.slane %v3381, 4
      %v3384 = vrot.slane %v2628, 5
      %v3385 = vsel %vm1945, %v3383, %v3384
      %v3386 = vrot.slane %v3304, 5
      %v3387 = vrot.slane %v3386, 4
      %v3388 = vrot.slane %v2630, 5
      %v3389 = vsel %vm1945, %v3387, %v3388
      %v3390 = vrot.slane %v3388, 4
      %v3391 = vrot.slane %v2631, 5
      %v3392 = vsel %vm1945, %v3390, %v3391
      %v3393 = vrot.slane %v3305, 5
      %v3394 = vrot.slane %v3393, 4
      %v3395 = vrot.slane %v2633, 5
      %v3396 = vsel %vm1945, %v3394, %v3395
      %v3397 = vrot.slane %v3395, 4
      %v3398 = vrot.slane %v2634, 5
      %v3399 = vsel %vm1945, %v3397, %v3398
      %v3400 = vrot.slane %v3306, 5
      %v3401 = vrot.slane %v3400, 4
      %v3402 = vrot.slane %v2636, 5
      %v3403 = vsel %vm1945, %v3401, %v3402
      %v3404 = vrot.slane %v3402, 4
      %v3405 = vrot.slane %v2637, 5
      %v3406 = vsel %vm1945, %v3404, %v3405
      %v3407 = vrot.slane %v3307, 5
      %v3408 = vrot.slane %v3407, 4
      %v3409 = vrot.slane %v2639, 5
      %v3410 = vsel %vm1945, %v3408, %v3409
      %v3411 = vrot.slane %v3409, 4
      %v3412 = vrot.slane %v2640, 5
      %v3413 = vsel %vm1945, %v3411, %v3412
      %v3414 = vrot.slane %v3308, 5
      %v3415 = vrot.slane %v3414, 4
      %v3416 = vrot.slane %v2642, 5
      %v3417 = vsel %vm1945, %v3415, %v3416
      %v3418 = vrot.slane %v3416, 4
      %v3419 = vrot.slane %v2643, 5
      %v3420 = vsel %vm1945, %v3418, %v3419
      %v3421 = vrot.slane %v3309, 5
      %v3422 = vrot.slane %v3421, 4
      %v3423 = vrot.slane %v2645, 5
      %v3424 = vsel %vm1945, %v3422, %v3423
      %v3425 = vrot.slane %v3423, 4
      %v3426 = vrot.slane %v2646, 5
      %v3427 = vsel %vm1945, %v3425, %v3426
      %v3428 = vrot.slane %v3310, 5
      %v3429 = vrot.slane %v3428, 4
      %v3430 = vrot.slane %v2648, 5
      %v3431 = vsel %vm1945, %v3429, %v3430
      %v3432 = vrot.slane %v3430, 4
      %v3433 = vrot.slane %v2649, 5
      %v3434 = vsel %vm1945, %v3432, %v3433
      %v3435 = vrot.slane %v3311, 5
      %v3436 = vrot.slane %v3435, 4
      %v3437 = vrot.slane %v2651, 5
      %v3438 = vsel %vm1945, %v3436, %v3437
      %v3439 = vrot.slane %v3437, 4
      %v3440 = vrot.slane %v2652, 5
      %v3441 = vsel %vm1945, %v3439, %v3440
      %v3442 = vrot.slane %v3312, 5
      %v3443 = vrot.slane %v3442, 4
      %v3444 = vrot.slane %v2654, 5
      %v3445 = vsel %vm1945, %v3443, %v3444
      %v3446 = vrot.slane %v3444, 4
      %v3447 = vrot.slane %v2655, 5
      %v3448 = vsel %vm1945, %v3446, %v3447
      %v3449 = vrot.slane %v3313, 5
      %v3450 = vrot.slane %v3449, 4
      %v3451 = vrot.slane %v2657, 5
      %v3452 = vsel %vm1945, %v3450, %v3451
      %v3453 = vrot.slane %v3451, 4
      %v3454 = vrot.slane %v2658, 5
      %v3455 = vsel %vm1945, %v3453, %v3454
      %v3456 = vrot.slane %v3314, 5
      %v3457 = vrot.slane %v3456, 4
      %v3458 = vrot.slane %v2660, 5
      %v3459 = vsel %vm1945, %v3457, %v3458
      %v3460 = vrot.slane %v3458, 4
      %v3461 = vrot.slane %v2661, 5
      %v3462 = vsel %vm1945, %v3460, %v3461
      %v3463 = vrot.slane %v3315, 5
      %v3464 = vrot.slane %v3463, 4
      %v3465 = vrot.slane %v2663, 5
      %v3466 = vsel %vm1945, %v3464, %v3465
      %v3467 = vrot.slane %v3465, 4
      %v3468 = vrot.slane %v2664, 5
      %v3469 = vsel %vm1945, %v3467, %v3468
      %v3470 = vrot.slane %v3316, 5
      %v3471 = vrot.slane %v3470, 4
      %v3472 = vrot.slane %v2666, 5
      %v3473 = vsel %vm1945, %v3471, %v3472
      %v3474 = vrot.slane %v3472, 4
      %v3475 = vrot.slane %v2667, 5
      %v3476 = vsel %vm1945, %v3474, %v3475
      %v3477 = vld [vmem:[%s3 + $0x140] sm:$0xf]
      %v3478 = vld [vmem:[%s3 + $0x144] sm:$0xf]
      %v3479 = vld [vmem:[%s3 + $0x148] sm:$0xf]
      %v3480 = vld [vmem:[%s3 + $0x14c] sm:$0xf]
      %v3481 = vld [vmem:[%s3 + $0x150] sm:$0xf]
      %v3482 = vld [vmem:[%s3 + $0x154] sm:$0xf]
      %v3483 = vld [vmem:[%s3 + $0x158] sm:$0xf]
      %v3484 = vld [vmem:[%s3 + $0x15c] sm:$0xf]
      %v3485 = vld [vmem:[%s3 + $0x160] sm:$0xf]
      %v3486 = vld [vmem:[%s3 + $0x164] sm:$0xf]
      %v3487 = vld [vmem:[%s3 + $0x168] sm:$0xf]
      %v3488 = vld [vmem:[%s3 + $0x16c] sm:$0xf]
      %v3489 = vld [vmem:[%s3 + $0x170] sm:$0xf]
      %v3490 = vld [vmem:[%s3 + $0x174] sm:$0xf]
      %v3491 = vld [vmem:[%s3 + $0x178] sm:$0xf]
      %v3492 = vld [vmem:[%s3 + $0x17c] sm:$0xf]
      %v3493 = vunpack.c.l.b16 %v3368
      %v3494 = vunpack.c.l.b16 %v3371
      %v3495 = vunpack.c.l.b16 %v3375
      %v3496 = vunpack.c.l.b16 %v3378
      %v3497 = vunpack.c.l.b16 %v3382
      %v3498 = vunpack.c.l.b16 %v3385
      %v3499 = vunpack.c.l.b16 %v3389
      %v3500 = vunpack.c.l.b16 %v3392
      %v3501 = vunpack.c.l.b16 %v3396
      %v3502 = vunpack.c.l.b16 %v3399
      %v3503 = vunpack.c.l.b16 %v3403
      %v3504 = vunpack.c.l.b16 %v3406
      %v3505 = vunpack.c.l.b16 %v3410
      %v3506 = vunpack.c.l.b16 %v3413
      %v3507 = vunpack.c.l.b16 %v3417
      %v3508 = vunpack.c.l.b16 %v3420
      %v3509 = vunpack.c.l.b16 %v3424
      %v3510 = vunpack.c.l.b16 %v3427
      %v3511 = vunpack.c.l.b16 %v3431
      %v3512 = vunpack.c.l.b16 %v3434
      %v3513 = vunpack.c.l.b16 %v3438
      %v3514 = vunpack.c.l.b16 %v3441
      %v3515 = vunpack.c.l.b16 %v3445
      %v3516 = vunpack.c.l.b16 %v3448
      %v3517 = vunpack.c.l.b16 %v3452
      %v3518 = vunpack.c.l.b16 %v3455
      %v3519 = vunpack.c.l.b16 %v3459
      %v3520 = vunpack.c.l.b16 %v3462
      %v3521 = vunpack.c.l.b16 %v3466
      %v3522 = vunpack.c.l.b16 %v3469
      %v3523 = vunpack.c.l.b16 %v3473
      %v3524 = vunpack.c.l.b16 %v3476
      %v3525 = vpack.c.b16 %v3494, %v3493
      %v3526 = vpack.c.b16 %v3496, %v3495
      %v3527 = vpack.c.b16 %v3498, %v3497
      %v3528 = vpack.c.b16 %v3500, %v3499
      %v3529 = vpack.c.b16 %v3502, %v3501
      %v3530 = vpack.c.b16 %v3504, %v3503
      %v3531 = vpack.c.b16 %v3506, %v3505
      %v3532 = vpack.c.b16 %v3508, %v3507
      %v3533 = vpack.c.b16 %v3510, %v3509
      %v3534 = vpack.c.b16 %v3512, %v3511
      %v3535 = vpack.c.b16 %v3514, %v3513
      %v3536 = vpack.c.b16 %v3516, %v3515
      %v3537 = vpack.c.b16 %v3518, %v3517
      %v3538 = vpack.c.b16 %v3520, %v3519
      %v3539 = vpack.c.b16 %v3522, %v3521
      %v3540 = vpack.c.b16 %v3524, %v3523
      %v3573 = vunpack.c.l.b16 %v3477
      %v3574 = vunpack.c.l.b16 %v3478
      %v3575 = vunpack.c.l.b16 %v3479
      %v3576 = vunpack.c.l.b16 %v3480
      %v3577 = vunpack.c.l.b16 %v3481
      %v3578 = vunpack.c.l.b16 %v3482
      %v3579 = vunpack.c.l.b16 %v3483
      %v3580 = vunpack.c.l.b16 %v3484
      %v3581 = vunpack.c.l.b16 %v3485
      %v3582 = vunpack.c.l.b16 %v3486
      %v3583 = vunpack.c.l.b16 %v3487
      %v3584 = vunpack.c.l.b16 %v3488
      %v3585 = vunpack.c.l.b16 %v3489
      %v3586 = vunpack.c.l.b16 %v3490
      %v3587 = vunpack.c.l.b16 %v3491
      %v3588 = vunpack.c.l.b16 %v3492
      %v3589 = vpack.c.b16 %v3574, %v3573
      %v3590 = vpack.c.b16 %v3576, %v3575
      %v3591 = vpack.c.b16 %v3578, %v3577
      %v3592 = vpack.c.b16 %v3580, %v3579
      %v3593 = vpack.c.b16 %v3582, %v3581
      %v3594 = vpack.c.b16 %v3584, %v3583
      %v3595 = vpack.c.b16 %v3586, %v3585
      %v3596 = vpack.c.b16 %v3588, %v3587
      %3605 = vmatpush.bf16.msra.mxu0 %v3596
      %3606 = vmatpush.bf16.msra.mxu0 %v3595
      %3607 = vmatpush.bf16.msra.mxu0 %v3594
      %3608 = vmatpush.bf16.msra.mxu0 %v3593
      %3609 = vmatpush.bf16.msra.mxu0 %v3592
      %3610 = vmatpush.bf16.msra.mxu0 %v3591
      %3611 = vmatpush.bf16.msra.mxu0 %v3590
      %3612 = vmatpush.bf16.msra.mxu0 %v3589
      %3613 = vmatmul.bf16.gmra.mxu0 %v3525
      %v3614 = vpop.f32.mrf.mxu0
      %v3615 = vadd.f32 0.0, %v3614
      %v3616 = vpop.f32.mrf.mxu0
      %v3617 = vadd.f32 0.0, %v3616
      %3618 = vmatmul.bf16.gmra.mxu0 %v3526
      %v3619 = vpop.f32.mrf.mxu0
      %v3620 = vadd.f32 0.0, %v3619
      %v3621 = vpop.f32.mrf.mxu0
      %v3622 = vadd.f32 0.0, %v3621
      %3623 = vmatmul.bf16.gmra.mxu0 %v3527
      %v3624 = vpop.f32.mrf.mxu0
      %v3625 = vadd.f32 0.0, %v3624
      %v3626 = vpop.f32.mrf.mxu0
      %v3627 = vadd.f32 0.0, %v3626
      %3628 = vmatmul.bf16.gmra.mxu0 %v3528
      %v3629 = vpop.f32.mrf.mxu0
      %v3630 = vadd.f32 0.0, %v3629
      %v3631 = vpop.f32.mrf.mxu0
      %v3632 = vadd.f32 0.0, %v3631
      %3633 = vmatmul.bf16.gmra.mxu0 %v3529
      %v3634 = vpop.f32.mrf.mxu0
      %v3635 = vadd.f32 0.0, %v3634
      %v3636 = vpop.f32.mrf.mxu0
      %v3637 = vadd.f32 0.0, %v3636
      %3638 = vmatmul.bf16.gmra.mxu0 %v3530
      %v3639 = vpop.f32.mrf.mxu0
      %v3640 = vadd.f32 0.0, %v3639
      %v3641 = vpop.f32.mrf.mxu0
      %v3642 = vadd.f32 0.0, %v3641
      %3643 = vmatmul.bf16.gmra.mxu0 %v3531
      %v3644 = vpop.f32.mrf.mxu0
      %v3645 = vadd.f32 0.0, %v3644
      %v3646 = vpop.f32.mrf.mxu0
      %v3647 = vadd.f32 0.0, %v3646
      %3648 = vmatmul.bf16.gmra.mxu0 %v3532
      %v3649 = vpop.f32.mrf.mxu0
      %v3650 = vadd.f32 0.0, %v3649
      %v3651 = vpop.f32.mrf.mxu0
      %v3652 = vadd.f32 0.0, %v3651
      %3653 = vmatmul.bf16.gmra.mxu0 %v3533
      %v3654 = vpop.f32.mrf.mxu0
      %v3655 = vadd.f32 0.0, %v3654
      %v3656 = vpop.f32.mrf.mxu0
      %v3657 = vadd.f32 0.0, %v3656
      %3658 = vmatmul.bf16.gmra.mxu0 %v3534
      %v3659 = vpop.f32.mrf.mxu0
      %v3660 = vadd.f32 0.0, %v3659
      %v3661 = vpop.f32.mrf.mxu0
      %v3662 = vadd.f32 0.0, %v3661
      %3663 = vmatmul.bf16.gmra.mxu0 %v3535
      %v3664 = vpop.f32.mrf.mxu0
      %v3665 = vadd.f32 0.0, %v3664
      %v3666 = vpop.f32.mrf.mxu0
      %v3667 = vadd.f32 0.0, %v3666
      %3668 = vmatmul.bf16.gmra.mxu0 %v3536
      %v3669 = vpop.f32.mrf.mxu0
      %v3670 = vadd.f32 0.0, %v3669
      %v3671 = vpop.f32.mrf.mxu0
      %v3672 = vadd.f32 0.0, %v3671
      %3673 = vmatmul.bf16.gmra.mxu0 %v3537
      %v3674 = vpop.f32.mrf.mxu0
      %v3675 = vadd.f32 0.0, %v3674
      %v3676 = vpop.f32.mrf.mxu0
      %v3677 = vadd.f32 0.0, %v3676
      %3678 = vmatmul.bf16.gmra.mxu0 %v3538
      %v3679 = vpop.f32.mrf.mxu0
      %v3680 = vadd.f32 0.0, %v3679
      %v3681 = vpop.f32.mrf.mxu0
      %v3682 = vadd.f32 0.0, %v3681
      %3683 = vmatmul.bf16.gmra.mxu0 %v3539
      %v3684 = vpop.f32.mrf.mxu0
      %v3685 = vadd.f32 0.0, %v3684
      %v3686 = vpop.f32.mrf.mxu0
      %v3687 = vadd.f32 0.0, %v3686
      %3688 = vmatmul.bf16.gmra.mxu0 %v3540
      %v3689 = vpop.f32.mrf.mxu0
      %v3690 = vadd.f32 0.0, %v3689
      %v3691 = vpop.f32.mrf.mxu0
      %v3692 = vadd.f32 0.0, %v3691
      %3693 = vdwg.mxu0
      %v3694 = vadd.f32 %v3269, %v3615
      %v3695 = vadd.f32 %v3270, %v3617
      %v3696 = vadd.f32 %v3271, %v3620
      %v3697 = vadd.f32 %v3272, %v3622
      %v3698 = vadd.f32 %v3273, %v3625
      %v3699 = vadd.f32 %v3274, %v3627
      %v3700 = vadd.f32 %v3275, %v3630
      %v3701 = vadd.f32 %v3276, %v3632
      %v3702 = vadd.f32 %v3277, %v3635
      %v3703 = vadd.f32 %v3278, %v3637
      %v3704 = vadd.f32 %v3279, %v3640
      %v3705 = vadd.f32 %v3280, %v3642
      %v3706 = vadd.f32 %v3281, %v3645
      %v3707 = vadd.f32 %v3282, %v3647
      %v3708 = vadd.f32 %v3283, %v3650
      %v3709 = vadd.f32 %v3284, %v3652
      %v3710 = vadd.f32 %v3285, %v3655
      %v3711 = vadd.f32 %v3286, %v3657
      %v3712 = vadd.f32 %v3287, %v3660
      %v3713 = vadd.f32 %v3288, %v3662
      %v3714 = vadd.f32 %v3289, %v3665
      %v3715 = vadd.f32 %v3290, %v3667
      %v3716 = vadd.f32 %v3291, %v3670
      %v3717 = vadd.f32 %v3292, %v3672
      %v3718 = vadd.f32 %v3293, %v3675
      %v3719 = vadd.f32 %v3294, %v3677
      %v3720 = vadd.f32 %v3295, %v3680
      %v3721 = vadd.f32 %v3296, %v3682
      %v3722 = vadd.f32 %v3297, %v3685
      %v3723 = vadd.f32 %v3298, %v3687
      %v3724 = vadd.f32 %v3299, %v3690
      %v3725 = vadd.f32 %v3300, %v3692
      %s3726 = scalar_lea.vmem [#allocation2], 24
      %v3727 = vld [vmem:[%s3726] sm:$0xf]
      %v3728 = vld [vmem:[%s3726 + $0x4] sm:$0xf]
      %v3729 = vld [vmem:[%s3726 + $0xc] sm:$0xf]
      %v3730 = vld [vmem:[%s3726 + $0x10] sm:$0xf]
      %v3731 = vld [vmem:[%s3726 + $0x18] sm:$0xf]
      %v3732 = vld [vmem:[%s3726 + $0x1c] sm:$0xf]
      %v3733 = vld [vmem:[%s3726 + $0x24] sm:$0xf]
      %v3734 = vld [vmem:[%s3726 + $0x28] sm:$0xf]
      %v3735 = vld [vmem:[%s3726 + $0x30] sm:$0xf]
      %v3736 = vld [vmem:[%s3726 + $0x34] sm:$0xf]
      %v3737 = vld [vmem:[%s3726 + $0x3c] sm:$0xf]
      %v3738 = vld [vmem:[%s3726 + $0x40] sm:$0xf]
      %v3739 = vld [vmem:[%s3726 + $0x48] sm:$0xf]
      %v3740 = vld [vmem:[%s3726 + $0x4c] sm:$0xf]
      %v3741 = vld [vmem:[%s3726 + $0x54] sm:$0xf]
      %v3742 = vld [vmem:[%s3726 + $0x58] sm:$0xf]
      %v3743 = vld [vmem:[%s3726 + $0x60] sm:$0xf]
      %v3744 = vld [vmem:[%s3726 + $0x64] sm:$0xf]
      %v3745 = vld [vmem:[%s3726 + $0x6c] sm:$0xf]
      %v3746 = vld [vmem:[%s3726 + $0x70] sm:$0xf]
      %v3747 = vld [vmem:[%s3726 + $0x78] sm:$0xf]
      %v3748 = vld [vmem:[%s3726 + $0x7c] sm:$0xf]
      %v3749 = vld [vmem:[%s3726 + $0x84] sm:$0xf]
      %v3750 = vld [vmem:[%s3726 + $0x88] sm:$0xf]
      %v3751 = vld [vmem:[%s3726 + $0x90] sm:$0xf]
      %v3752 = vld [vmem:[%s3726 + $0x94] sm:$0xf]
      %v3753 = vld [vmem:[%s3726 + $0x9c] sm:$0xf]
      %v3754 = vld [vmem:[%s3726 + $0xa0] sm:$0xf]
      %v3755 = vld [vmem:[%s3726 + $0xa8] sm:$0xf]
      %v3756 = vld [vmem:[%s3726 + $0xac] sm:$0xf]
      %v3757 = vld [vmem:[%s3726 + $0xb4] sm:$0xf]
      %v3758 = vld [vmem:[%s3726 + $0xb8] sm:$0xf]
      %v3759 = vld [vmem:[%s3 + $0x180] sm:$0xf]
      %v3760 = vld [vmem:[%s3 + $0x184] sm:$0xf]
      %v3761 = vld [vmem:[%s3 + $0x188] sm:$0xf]
      %v3762 = vld [vmem:[%s3 + $0x18c] sm:$0xf]
      %v3763 = vld [vmem:[%s3 + $0x190] sm:$0xf]
      %v3764 = vld [vmem:[%s3 + $0x194] sm:$0xf]
      %v3765 = vld [vmem:[%s3 + $0x198] sm:$0xf]
      %v3766 = vld [vmem:[%s3 + $0x19c] sm:$0xf]
      %v3767 = vld [vmem:[%s3 + $0x1a0] sm:$0xf]
      %v3768 = vld [vmem:[%s3 + $0x1a4] sm:$0xf]
      %v3769 = vld [vmem:[%s3 + $0x1a8] sm:$0xf]
      %v3770 = vld [vmem:[%s3 + $0x1ac] sm:$0xf]
      %v3771 = vld [vmem:[%s3 + $0x1b0] sm:$0xf]
      %v3772 = vld [vmem:[%s3 + $0x1b4] sm:$0xf]
      %v3773 = vld [vmem:[%s3 + $0x1b8] sm:$0xf]
      %v3774 = vld [vmem:[%s3 + $0x1bc] sm:$0xf]
      %v3807 = vunpack.c.l.b16 %v3727
      %v3808 = vunpack.c.l.b16 %v3728
      %v3809 = vunpack.c.l.b16 %v3729
      %v3810 = vunpack.c.l.b16 %v3730
      %v3811 = vunpack.c.l.b16 %v3731
      %v3812 = vunpack.c.l.b16 %v3732
      %v3813 = vunpack.c.l.b16 %v3733
      %v3814 = vunpack.c.l.b16 %v3734
      %v3815 = vunpack.c.l.b16 %v3735
      %v3816 = vunpack.c.l.b16 %v3736
      %v3817 = vunpack.c.l.b16 %v3737
      %v3818 = vunpack.c.l.b16 %v3738
      %v3819 = vunpack.c.l.b16 %v3739
      %v3820 = vunpack.c.l.b16 %v3740
      %v3821 = vunpack.c.l.b16 %v3741
      %v3822 = vunpack.c.l.b16 %v3742
      %v3823 = vunpack.c.l.b16 %v3743
      %v3824 = vunpack.c.l.b16 %v3744
      %v3825 = vunpack.c.l.b16 %v3745
      %v3826 = vunpack.c.l.b16 %v3746
      %v3827 = vunpack.c.l.b16 %v3747
      %v3828 = vunpack.c.l.b16 %v3748
      %v3829 = vunpack.c.l.b16 %v3749
      %v3830 = vunpack.c.l.b16 %v3750
      %v3831 = vunpack.c.l.b16 %v3751
      %v3832 = vunpack.c.l.b16 %v3752
      %v3833 = vunpack.c.l.b16 %v3753
      %v3834 = vunpack.c.l.b16 %v3754
      %v3835 = vunpack.c.l.b16 %v3755
      %v3836 = vunpack.c.l.b16 %v3756
      %v3837 = vunpack.c.l.b16 %v3757
      %v3838 = vunpack.c.l.b16 %v3758
      %v3839 = vpack.c.b16 %v3808, %v3807
      %v3840 = vpack.c.b16 %v3810, %v3809
      %v3841 = vpack.c.b16 %v3812, %v3811
      %v3842 = vpack.c.b16 %v3814, %v3813
      %v3843 = vpack.c.b16 %v3816, %v3815
      %v3844 = vpack.c.b16 %v3818, %v3817
      %v3845 = vpack.c.b16 %v3820, %v3819
      %v3846 = vpack.c.b16 %v3822, %v3821
      %v3847 = vpack.c.b16 %v3824, %v3823
      %v3848 = vpack.c.b16 %v3826, %v3825
      %v3849 = vpack.c.b16 %v3828, %v3827
      %v3850 = vpack.c.b16 %v3830, %v3829
      %v3851 = vpack.c.b16 %v3832, %v3831
      %v3852 = vpack.c.b16 %v3834, %v3833
      %v3853 = vpack.c.b16 %v3836, %v3835
      %v3854 = vpack.c.b16 %v3838, %v3837
      %v3887 = vunpack.c.l.b16 %v3759
      %v3888 = vunpack.c.l.b16 %v3760
      %v3889 = vunpack.c.l.b16 %v3761
      %v3890 = vunpack.c.l.b16 %v3762
      %v3891 = vunpack.c.l.b16 %v3763
      %v3892 = vunpack.c.l.b16 %v3764
      %v3893 = vunpack.c.l.b16 %v3765
      %v3894 = vunpack.c.l.b16 %v3766
      %v3895 = vunpack.c.l.b16 %v3767
      %v3896 = vunpack.c.l.b16 %v3768
      %v3897 = vunpack.c.l.b16 %v3769
      %v3898 = vunpack.c.l.b16 %v3770
      %v3899 = vunpack.c.l.b16 %v3771
      %v3900 = vunpack.c.l.b16 %v3772
      %v3901 = vunpack.c.l.b16 %v3773
      %v3902 = vunpack.c.l.b16 %v3774
      %v3903 = vpack.c.b16 %v3888, %v3887
      %v3904 = vpack.c.b16 %v3890, %v3889
      %v3905 = vpack.c.b16 %v3892, %v3891
      %v3906 = vpack.c.b16 %v3894, %v3893
      %v3907 = vpack.c.b16 %v3896, %v3895
      %v3908 = vpack.c.b16 %v3898, %v3897
      %v3909 = vpack.c.b16 %v3900, %v3899
      %v3910 = vpack.c.b16 %v3902, %v3901
      %3919 = vmatpush.bf16.msra.mxu0 %v3910
      %3920 = vmatpush.bf16.msra.mxu0 %v3909
      %3921 = vmatpush.bf16.msra.mxu0 %v3908
      %3922 = vmatpush.bf16.msra.mxu0 %v3907
      %3923 = vmatpush.bf16.msra.mxu0 %v3906
      %3924 = vmatpush.bf16.msra.mxu0 %v3905
      %3925 = vmatpush.bf16.msra.mxu0 %v3904
      %3926 = vmatpush.bf16.msra.mxu0 %v3903
      %3927 = vmatmul.bf16.gmra.mxu0 %v3839
      %v3928 = vpop.f32.mrf.mxu0
      %v3929 = vadd.f32 0.0, %v3928
      %v3930 = vpop.f32.mrf.mxu0
      %v3931 = vadd.f32 0.0, %v3930
      %3932 = vmatmul.bf16.gmra.mxu0 %v3840
      %v3933 = vpop.f32.mrf.mxu0
      %v3934 = vadd.f32 0.0, %v3933
      %v3935 = vpop.f32.mrf.mxu0
      %v3936 = vadd.f32 0.0, %v3935
      %3937 = vmatmul.bf16.gmra.mxu0 %v3841
      %v3938 = vpop.f32.mrf.mxu0
      %v3939 = vadd.f32 0.0, %v3938
      %v3940 = vpop.f32.mrf.mxu0
      %v3941 = vadd.f32 0.0, %v3940
      %3942 = vmatmul.bf16.gmra.mxu0 %v3842
      %v3943 = vpop.f32.mrf.mxu0
      %v3944 = vadd.f32 0.0, %v3943
      %v3945 = vpop.f32.mrf.mxu0
      %v3946 = vadd.f32 0.0, %v3945
      %3947 = vmatmul.bf16.gmra.mxu0 %v3843
      %v3948 = vpop.f32.mrf.mxu0
      %v3949 = vadd.f32 0.0, %v3948
      %v3950 = vpop.f32.mrf.mxu0
      %v3951 = vadd.f32 0.0, %v3950
      %3952 = vmatmul.bf16.gmra.mxu0 %v3844
      %v3953 = vpop.f32.mrf.mxu0
      %v3954 = vadd.f32 0.0, %v3953
      %v3955 = vpop.f32.mrf.mxu0
      %v3956 = vadd.f32 0.0, %v3955
      %3957 = vmatmul.bf16.gmra.mxu0 %v3845
      %v3958 = vpop.f32.mrf.mxu0
      %v3959 = vadd.f32 0.0, %v3958
      %v3960 = vpop.f32.mrf.mxu0
      %v3961 = vadd.f32 0.0, %v3960
      %3962 = vmatmul.bf16.gmra.mxu0 %v3846
      %v3963 = vpop.f32.mrf.mxu0
      %v3964 = vadd.f32 0.0, %v3963
      %v3965 = vpop.f32.mrf.mxu0
      %v3966 = vadd.f32 0.0, %v3965
      %3967 = vmatmul.bf16.gmra.mxu0 %v3847
      %v3968 = vpop.f32.mrf.mxu0
      %v3969 = vadd.f32 0.0, %v3968
      %v3970 = vpop.f32.mrf.mxu0
      %v3971 = vadd.f32 0.0, %v3970
      %3972 = vmatmul.bf16.gmra.mxu0 %v3848
      %v3973 = vpop.f32.mrf.mxu0
      %v3974 = vadd.f32 0.0, %v3973
      %v3975 = vpop.f32.mrf.mxu0
      %v3976 = vadd.f32 0.0, %v3975
      %3977 = vmatmul.bf16.gmra.mxu0 %v3849
      %v3978 = vpop.f32.mrf.mxu0
      %v3979 = vadd.f32 0.0, %v3978
      %v3980 = vpop.f32.mrf.mxu0
      %v3981 = vadd.f32 0.0, %v3980
      %3982 = vmatmul.bf16.gmra.mxu0 %v3850
      %v3983 = vpop.f32.mrf.mxu0
      %v3984 = vadd.f32 0.0, %v3983
      %v3985 = vpop.f32.mrf.mxu0
      %v3986 = vadd.f32 0.0, %v3985
      %3987 = vmatmul.bf16.gmra.mxu0 %v3851
      %v3988 = vpop.f32.mrf.mxu0
      %v3989 = vadd.f32 0.0, %v3988
      %v3990 = vpop.f32.mrf.mxu0
      %v3991 = vadd.f32 0.0, %v3990
      %3992 = vmatmul.bf16.gmra.mxu0 %v3852
      %v3993 = vpop.f32.mrf.mxu0
      %v3994 = vadd.f32 0.0, %v3993
      %v3995 = vpop.f32.mrf.mxu0
      %v3996 = vadd.f32 0.0, %v3995
      %3997 = vmatmul.bf16.gmra.mxu0 %v3853
      %v3998 = vpop.f32.mrf.mxu0
      %v3999 = vadd.f32 0.0, %v3998
      %v4000 = vpop.f32.mrf.mxu0
      %v4001 = vadd.f32 0.0, %v4000
      %4002 = vmatmul.bf16.gmra.mxu0 %v3854
      %v4003 = vpop.f32.mrf.mxu0
      %v4004 = vadd.f32 0.0, %v4003
      %v4005 = vpop.f32.mrf.mxu0
      %v4006 = vadd.f32 0.0, %v4005
      %4007 = vdwg.mxu0
      %v4008 = vadd.f32 %v3694, %v3929
      %v4009 = vadd.f32 %v3695, %v3931
      %v4010 = vadd.f32 %v3696, %v3934
      %v4011 = vadd.f32 %v3697, %v3936
      %v4012 = vadd.f32 %v3698, %v3939
      %v4013 = vadd.f32 %v3699, %v3941
      %v4014 = vadd.f32 %v3700, %v3944
      %v4015 = vadd.f32 %v3701, %v3946
      %v4016 = vadd.f32 %v3702, %v3949
      %v4017 = vadd.f32 %v3703, %v3951
      %v4018 = vadd.f32 %v3704, %v3954
      %v4019 = vadd.f32 %v3705, %v3956
      %v4020 = vadd.f32 %v3706, %v3959
      %v4021 = vadd.f32 %v3707, %v3961
      %v4022 = vadd.f32 %v3708, %v3964
      %v4023 = vadd.f32 %v3709, %v3966
      %v4024 = vadd.f32 %v3710, %v3969
      %v4025 = vadd.f32 %v3711, %v3971
      %v4026 = vadd.f32 %v3712, %v3974
      %v4027 = vadd.f32 %v3713, %v3976
      %v4028 = vadd.f32 %v3714, %v3979
      %v4029 = vadd.f32 %v3715, %v3981
      %v4030 = vadd.f32 %v3716, %v3984
      %v4031 = vadd.f32 %v3717, %v3986
      %v4032 = vadd.f32 %v3718, %v3989
      %v4033 = vadd.f32 %v3719, %v3991
      %v4034 = vadd.f32 %v3720, %v3994
      %v4035 = vadd.f32 %v3721, %v3996
      %v4036 = vadd.f32 %v3722, %v3999
      %v4037 = vadd.f32 %v3723, %v4001
      %v4038 = vadd.f32 %v3724, %v4004
      %v4039 = vadd.f32 %v3725, %v4006
      %v4040 = vld [vmem:[%s3726] sm:$0xf]
      %v4041 = vld [vmem:[%s3726 + $0x4] sm:$0xf]
      %v4042 = vld [vmem:[%s3726 + $0x8] sm:$0x1]
      %v4043 = vld [vmem:[%s3726 + $0xc] sm:$0xf]
      %v4044 = vld [vmem:[%s3726 + $0x10] sm:$0xf]
      %v4045 = vld [vmem:[%s3726 + $0x14] sm:$0x1]
      %v4046 = vld [vmem:[%s3726 + $0x18] sm:$0xf]
      %v4047 = vld [vmem:[%s3726 + $0x1c] sm:$0xf]
      %v4048 = vld [vmem:[%s3726 + $0x20] sm:$0x1]
      %v4049 = vld [vmem:[%s3726 + $0x24] sm:$0xf]
      %v4050 = vld [vmem:[%s3726 + $0x28] sm:$0xf]
      %v4051 = vld [vmem:[%s3726 + $0x2c] sm:$0x1]
      %v4052 = vld [vmem:[%s3726 + $0x30] sm:$0xf]
      %v4053 = vld [vmem:[%s3726 + $0x34] sm:$0xf]
      %v4054 = vld [vmem:[%s3726 + $0x38] sm:$0x1]
      %v4055 = vld [vmem:[%s3726 + $0x3c] sm:$0xf]
      %v4056 = vld [vmem:[%s3726 + $0x40] sm:$0xf]
      %v4057 = vld [vmem:[%s3726 + $0x44] sm:$0x1]
      %v4058 = vld [vmem:[%s3726 + $0x48] sm:$0xf]
      %v4059 = vld [vmem:[%s3726 + $0x4c] sm:$0xf]
      %v4060 = vld [vmem:[%s3726 + $0x50] sm:$0x1]
      %v4061 = vld [vmem:[%s3726 + $0x54] sm:$0xf]
      %v4062 = vld [vmem:[%s3726 + $0x58] sm:$0xf]
      %v4063 = vld [vmem:[%s3726 + $0x5c] sm:$0x1]
      %v4064 = vld [vmem:[%s3726 + $0x60] sm:$0xf]
      %v4065 = vld [vmem:[%s3726 + $0x64] sm:$0xf]
      %v4066 = vld [vmem:[%s3726 + $0x68] sm:$0x1]
      %v4067 = vld [vmem:[%s3726 + $0x6c] sm:$0xf]
      %v4068 = vld [vmem:[%s3726 + $0x70] sm:$0xf]
      %v4069 = vld [vmem:[%s3726 + $0x74] sm:$0x1]
      %v4070 = vld [vmem:[%s3726 + $0x78] sm:$0xf]
      %v4071 = vld [vmem:[%s3726 + $0x7c] sm:$0xf]
      %v4072 = vld [vmem:[%s3726 + $0x80] sm:$0x1]
      %v4073 = vld [vmem:[%s3726 + $0x84] sm:$0xf]
      %v4074 = vld [vmem:[%s3726 + $0x88] sm:$0xf]
      %v4075 = vld [vmem:[%s3726 + $0x8c] sm:$0x1]
      %v4076 = vld [vmem:[%s3726 + $0x90] sm:$0xf]
      %v4077 = vld [vmem:[%s3726 + $0x94] sm:$0xf]
      %v4078 = vld [vmem:[%s3726 + $0x98] sm:$0x1]
      %v4079 = vld [vmem:[%s3726 + $0x9c] sm:$0xf]
      %v4080 = vld [vmem:[%s3726 + $0xa0] sm:$0xf]
      %v4081 = vld [vmem:[%s3726 + $0xa4] sm:$0x1]
      %v4082 = vld [vmem:[%s3726 + $0xa8] sm:$0xf]
      %v4083 = vld [vmem:[%s3726 + $0xac] sm:$0xf]
      %v4084 = vld [vmem:[%s3726 + $0xb0] sm:$0x1]
      %v4085 = vld [vmem:[%s3726 + $0xb4] sm:$0xf]
      %v4086 = vld [vmem:[%s3726 + $0xb8] sm:$0xf]
      %v4087 = vld [vmem:[%s3726 + $0xbc] sm:$0x1]
      %v4089 = vshrl.u32 %v4040, 16
      %v4091 = vrot.slane %v4089, 4
      %v4092 = vshll.u32 %v4040, 16
      %v4094 = vrot.slane %v4092, 5
      %v4095 = vor.u32 %v4091, %v4094
      %v4096 = vrot.slane %v4095, 4
      %v4098 = vshll.u32 %v4041, 16
      %v4100 = vrot.slane %v4098, 5
      %v4101 = vsel %vm1060, %v4096, %v4100
      %v4102 = vshrl.u32 %v4041, 16
      %v4104 = vrot.slane %v4102, 4
      %v4105 = vor.u32 %v4104, %v4100
      %v4106 = vrot.slane %v4105, 4
      %v4108 = vshll.u32 %v4042, 16
      %v4110 = vrot.slane %v4108, 5
      %v4111 = vsel %vm1060, %v4106, %v4110
      %v4113 = vshrl.u32 %v4043, 16
      %v4115 = vrot.slane %v4113, 4
      %v4116 = vshll.u32 %v4043, 16
      %v4118 = vrot.slane %v4116, 5
      %v4119 = vor.u32 %v4115, %v4118
      %v4120 = vrot.slane %v4119, 4
      %v4122 = vshll.u32 %v4044, 16
      %v4124 = vrot.slane %v4122, 5
      %v4125 = vsel %vm1060, %v4120, %v4124
      %v4126 = vshrl.u32 %v4044, 16
      %v4128 = vrot.slane %v4126, 4
      %v4129 = vor.u32 %v4128, %v4124
      %v4130 = vrot.slane %v4129, 4
      %v4132 = vshll.u32 %v4045, 16
      %v4134 = vrot.slane %v4132, 5
      %v4135 = vsel %vm1060, %v4130, %v4134
      %v4137 = vshrl.u32 %v4046, 16
      %v4139 = vrot.slane %v4137, 4
      %v4140 = vshll.u32 %v4046, 16
      %v4142 = vrot.slane %v4140, 5
      %v4143 = vor.u32 %v4139, %v4142
      %v4144 = vrot.slane %v4143, 4
      %v4146 = vshll.u32 %v4047, 16
      %v4148 = vrot.slane %v4146, 5
      %v4149 = vsel %vm1060, %v4144, %v4148
      %v4150 = vshrl.u32 %v4047, 16
      %v4152 = vrot.slane %v4150, 4
      %v4153 = vor.u32 %v4152, %v4148
      %v4154 = vrot.slane %v4153, 4
      %v4156 = vshll.u32 %v4048, 16
      %v4158 = vrot.slane %v4156, 5
      %v4159 = vsel %vm1060, %v4154, %v4158
      %v4161 = vshrl.u32 %v4049, 16
      %v4163 = vrot.slane %v4161, 4
      %v4164 = vshll.u32 %v4049, 16
      %v4166 = vrot.slane %v4164, 5
      %v4167 = vor.u32 %v4163, %v4166
      %v4168 = vrot.slane %v4167, 4
      %v4170 = vshll.u32 %v4050, 16
      %v4172 = vrot.slane %v4170, 5
      %v4173 = vsel %vm1060, %v4168, %v4172
      %v4174 = vshrl.u32 %v4050, 16
      %v4176 = vrot.slane %v4174, 4
      %v4177 = vor.u32 %v4176, %v4172
      %v4178 = vrot.slane %v4177, 4
      %v4180 = vshll.u32 %v4051, 16
      %v4182 = vrot.slane %v4180, 5
      %v4183 = vsel %vm1060, %v4178, %v4182
      %v4185 = vshrl.u32 %v4052, 16
      %v4187 = vrot.slane %v4185, 4
      %v4188 = vshll.u32 %v4052, 16
      %v4190 = vrot.slane %v4188, 5
      %v4191 = vor.u32 %v4187, %v4190
      %v4192 = vrot.slane %v4191, 4
      %v4194 = vshll.u32 %v4053, 16
      %v4196 = vrot.slane %v4194, 5
      %v4197 = vsel %vm1060, %v4192, %v4196
      %v4198 = vshrl.u32 %v4053, 16
      %v4200 = vrot.slane %v4198, 4
      %v4201 = vor.u32 %v4200, %v4196
      %v4202 = vrot.slane %v4201, 4
      %v4204 = vshll.u32 %v4054, 16
      %v4206 = vrot.slane %v4204, 5
      %v4207 = vsel %vm1060, %v4202, %v4206
      %v4209 = vshrl.u32 %v4055, 16
      %v4211 = vrot.slane %v4209, 4
      %v4212 = vshll.u32 %v4055, 16
      %v4214 = vrot.slane %v4212, 5
      %v4215 = vor.u32 %v4211, %v4214
      %v4216 = vrot.slane %v4215, 4
      %v4218 = vshll.u32 %v4056, 16
      %v4220 = vrot.slane %v4218, 5
      %v4221 = vsel %vm1060, %v4216, %v4220
      %v4222 = vshrl.u32 %v4056, 16
      %v4224 = vrot.slane %v4222, 4
      %v4225 = vor.u32 %v4224, %v4220
      %v4226 = vrot.slane %v4225, 4
      %v4228 = vshll.u32 %v4057, 16
      %v4230 = vrot.slane %v4228, 5
      %v4231 = vsel %vm1060, %v4226, %v4230
      %v4233 = vshrl.u32 %v4058, 16
      %v4235 = vrot.slane %v4233, 4
      %v4236 = vshll.u32 %v4058, 16
      %v4238 = vrot.slane %v4236, 5
      %v4239 = vor.u32 %v4235, %v4238
      %v4240 = vrot.slane %v4239, 4
      %v4242 = vshll.u32 %v4059, 16
      %v4244 = vrot.slane %v4242, 5
      %v4245 = vsel %vm1060, %v4240, %v4244
      %v4246 = vshrl.u32 %v4059, 16
      %v4248 = vrot.slane %v4246, 4
      %v4249 = vor.u32 %v4248, %v4244
      %v4250 = vrot.slane %v4249, 4
      %v4252 = vshll.u32 %v4060, 16
      %v4254 = vrot.slane %v4252, 5
      %v4255 = vsel %vm1060, %v4250, %v4254
      %v4257 = vshrl.u32 %v4061, 16
      %v4259 = vrot.slane %v4257, 4
      %v4260 = vshll.u32 %v4061, 16
      %v4262 = vrot.slane %v4260, 5
      %v4263 = vor.u32 %v4259, %v4262
      %v4264 = vrot.slane %v4263, 4
      %v4266 = vshll.u32 %v4062, 16
      %v4268 = vrot.slane %v4266, 5
      %v4269 = vsel %vm1060, %v4264, %v4268
      %v4270 = vshrl.u32 %v4062, 16
      %v4272 = vrot.slane %v4270, 4
      %v4273 = vor.u32 %v4272, %v4268
      %v4274 = vrot.slane %v4273, 4
      %v4276 = vshll.u32 %v4063, 16
      %v4278 = vrot.slane %v4276, 5
      %v4279 = vsel %vm1060, %v4274, %v4278
      %v4281 = vshrl.u32 %v4064, 16
      %v4283 = vrot.slane %v4281, 4
      %v4284 = vshll.u32 %v4064, 16
      %v4286 = vrot.slane %v4284, 5
      %v4287 = vor.u32 %v4283, %v4286
      %v4288 = vrot.slane %v4287, 4
      %v4290 = vshll.u32 %v4065, 16
      %v4292 = vrot.slane %v4290, 5
      %v4293 = vsel %vm1060, %v4288, %v4292
      %v4294 = vshrl.u32 %v4065, 16
      %v4296 = vrot.slane %v4294, 4
      %v4297 = vor.u32 %v4296, %v4292
      %v4298 = vrot.slane %v4297, 4
      %v4300 = vshll.u32 %v4066, 16
      %v4302 = vrot.slane %v4300, 5
      %v4303 = vsel %vm1060, %v4298, %v4302
      %v4305 = vshrl.u32 %v4067, 16
      %v4307 = vrot.slane %v4305, 4
      %v4308 = vshll.u32 %v4067, 16
      %v4310 = vrot.slane %v4308, 5
      %v4311 = vor.u32 %v4307, %v4310
      %v4312 = vrot.slane %v4311, 4
      %v4314 = vshll.u32 %v4068, 16
      %v4316 = vrot.slane %v4314, 5
      %v4317 = vsel %vm1060, %v4312, %v4316
      %v4318 = vshrl.u32 %v4068, 16
      %v4320 = vrot.slane %v4318, 4
      %v4321 = vor.u32 %v4320, %v4316
      %v4322 = vrot.slane %v4321, 4
      %v4324 = vshll.u32 %v4069, 16
      %v4326 = vrot.slane %v4324, 5
      %v4327 = vsel %vm1060, %v4322, %v4326
      %v4329 = vshrl.u32 %v4070, 16
      %v4331 = vrot.slane %v4329, 4
      %v4332 = vshll.u32 %v4070, 16
      %v4334 = vrot.slane %v4332, 5
      %v4335 = vor.u32 %v4331, %v4334
      %v4336 = vrot.slane %v4335, 4
      %v4338 = vshll.u32 %v4071, 16
      %v4340 = vrot.slane %v4338, 5
      %v4341 = vsel %vm1060, %v4336, %v4340
      %v4342 = vshrl.u32 %v4071, 16
      %v4344 = vrot.slane %v4342, 4
      %v4345 = vor.u32 %v4344, %v4340
      %v4346 = vrot.slane %v4345, 4
      %v4348 = vshll.u32 %v4072, 16
      %v4350 = vrot.slane %v4348, 5
      %v4351 = vsel %vm1060, %v4346, %v4350
      %v4353 = vshrl.u32 %v4073, 16
      %v4355 = vrot.slane %v4353, 4
      %v4356 = vshll.u32 %v4073, 16
      %v4358 = vrot.slane %v4356, 5
      %v4359 = vor.u32 %v4355, %v4358
      %v4360 = vrot.slane %v4359, 4
      %v4362 = vshll.u32 %v4074, 16
      %v4364 = vrot.slane %v4362, 5
      %v4365 = vsel %vm1060, %v4360, %v4364
      %v4366 = vshrl.u32 %v4074, 16
      %v4368 = vrot.slane %v4366, 4
      %v4369 = vor.u32 %v4368, %v4364
      %v4370 = vrot.slane %v4369, 4
      %v4372 = vshll.u32 %v4075, 16
      %v4374 = vrot.slane %v4372, 5
      %v4375 = vsel %vm1060, %v4370, %v4374
      %v4377 = vshrl.u32 %v4076, 16
      %v4379 = vrot.slane %v4377, 4
      %v4380 = vshll.u32 %v4076, 16
      %v4382 = vrot.slane %v4380, 5
      %v4383 = vor.u32 %v4379, %v4382
      %v4384 = vrot.slane %v4383, 4
      %v4386 = vshll.u32 %v4077, 16
      %v4388 = vrot.slane %v4386, 5
      %v4389 = vsel %vm1060, %v4384, %v4388
      %v4390 = vshrl.u32 %v4077, 16
      %v4392 = vrot.slane %v4390, 4
      %v4393 = vor.u32 %v4392, %v4388
      %v4394 = vrot.slane %v4393, 4
      %v4396 = vshll.u32 %v4078, 16
      %v4398 = vrot.slane %v4396, 5
      %v4399 = vsel %vm1060, %v4394, %v4398
      %v4401 = vshrl.u32 %v4079, 16
      %v4403 = vrot.slane %v4401, 4
      %v4404 = vshll.u32 %v4079, 16
      %v4406 = vrot.slane %v4404, 5
      %v4407 = vor.u32 %v4403, %v4406
      %v4408 = vrot.slane %v4407, 4
      %v4410 = vshll.u32 %v4080, 16
      %v4412 = vrot.slane %v4410, 5
      %v4413 = vsel %vm1060, %v4408, %v4412
      %v4414 = vshrl.u32 %v4080, 16
      %v4416 = vrot.slane %v4414, 4
      %v4417 = vor.u32 %v4416, %v4412
      %v4418 = vrot.slane %v4417, 4
      %v4420 = vshll.u32 %v4081, 16
      %v4422 = vrot.slane %v4420, 5
      %v4423 = vsel %vm1060, %v4418, %v4422
      %v4425 = vshrl.u32 %v4082, 16
      %v4427 = vrot.slane %v4425, 4
      %v4428 = vshll.u32 %v4082, 16
      %v4430 = vrot.slane %v4428, 5
      %v4431 = vor.u32 %v4427, %v4430
      %v4432 = vrot.slane %v4431, 4
      %v4434 = vshll.u32 %v4083, 16
      %v4436 = vrot.slane %v4434, 5
      %v4437 = vsel %vm1060, %v4432, %v4436
      %v4438 = vshrl.u32 %v4083, 16
      %v4440 = vrot.slane %v4438, 4
      %v4441 = vor.u32 %v4440, %v4436
      %v4442 = vrot.slane %v4441, 4
      %v4444 = vshll.u32 %v4084, 16
      %v4446 = vrot.slane %v4444, 5
      %v4447 = vsel %vm1060, %v4442, %v4446
      %v4449 = vshrl.u32 %v4085, 16
      %v4451 = vrot.slane %v4449, 4
      %v4452 = vshll.u32 %v4085, 16
      %v4454 = vrot.slane %v4452, 5
      %v4455 = vor.u32 %v4451, %v4454
      %v4456 = vrot.slane %v4455, 4
      %v4458 = vshll.u32 %v4086, 16
      %v4460 = vrot.slane %v4458, 5
      %v4461 = vsel %vm1060, %v4456, %v4460
      %v4462 = vshrl.u32 %v4086, 16
      %v4464 = vrot.slane %v4462, 4
      %v4465 = vor.u32 %v4464, %v4460
      %v4466 = vrot.slane %v4465, 4
      %v4468 = vshll.u32 %v4087, 16
      %v4470 = vrot.slane %v4468, 5
      %v4471 = vsel %vm1060, %v4466, %v4470
      %v4472 = vld [vmem:[%s3 + $0x1c0] sm:$0xf]
      %v4473 = vld [vmem:[%s3 + $0x1c4] sm:$0xf]
      %v4474 = vld [vmem:[%s3 + $0x1c8] sm:$0xf]
      %v4475 = vld [vmem:[%s3 + $0x1cc] sm:$0xf]
      %v4476 = vld [vmem:[%s3 + $0x1d0] sm:$0xf]
      %v4477 = vld [vmem:[%s3 + $0x1d4] sm:$0xf]
      %v4478 = vld [vmem:[%s3 + $0x1d8] sm:$0xf]
      %v4479 = vld [vmem:[%s3 + $0x1dc] sm:$0xf]
      %v4480 = vld [vmem:[%s3 + $0x1e0] sm:$0xf]
      %v4481 = vld [vmem:[%s3 + $0x1e4] sm:$0xf]
      %v4482 = vld [vmem:[%s3 + $0x1e8] sm:$0xf]
      %v4483 = vld [vmem:[%s3 + $0x1ec] sm:$0xf]
      %v4484 = vld [vmem:[%s3 + $0x1f0] sm:$0xf]
      %v4485 = vld [vmem:[%s3 + $0x1f4] sm:$0xf]
      %v4486 = vld [vmem:[%s3 + $0x1f8] sm:$0xf]
      %v4487 = vld [vmem:[%s3 + $0x1fc] sm:$0xf]
      %v4488 = vunpack.c.l.b16 %v4101
      %v4489 = vunpack.c.l.b16 %v4111
      %v4490 = vunpack.c.l.b16 %v4125
      %v4491 = vunpack.c.l.b16 %v4135
      %v4492 = vunpack.c.l.b16 %v4149
      %v4493 = vunpack.c.l.b16 %v4159
      %v4494 = vunpack.c.l.b16 %v4173
      %v4495 = vunpack.c.l.b16 %v4183
      %v4496 = vunpack.c.l.b16 %v4197
      %v4497 = vunpack.c.l.b16 %v4207
      %v4498 = vunpack.c.l.b16 %v4221
      %v4499 = vunpack.c.l.b16 %v4231
      %v4500 = vunpack.c.l.b16 %v4245
      %v4501 = vunpack.c.l.b16 %v4255
      %v4502 = vunpack.c.l.b16 %v4269
      %v4503 = vunpack.c.l.b16 %v4279
      %v4504 = vunpack.c.l.b16 %v4293
      %v4505 = vunpack.c.l.b16 %v4303
      %v4506 = vunpack.c.l.b16 %v4317
      %v4507 = vunpack.c.l.b16 %v4327
      %v4508 = vunpack.c.l.b16 %v4341
      %v4509 = vunpack.c.l.b16 %v4351
      %v4510 = vunpack.c.l.b16 %v4365
      %v4511 = vunpack.c.l.b16 %v4375
      %v4512 = vunpack.c.l.b16 %v4389
      %v4513 = vunpack.c.l.b16 %v4399
      %v4514 = vunpack.c.l.b16 %v4413
      %v4515 = vunpack.c.l.b16 %v4423
      %v4516 = vunpack.c.l.b16 %v4437
      %v4517 = vunpack.c.l.b16 %v4447
      %v4518 = vunpack.c.l.b16 %v4461
      %v4519 = vunpack.c.l.b16 %v4471
      %v4520 = vpack.c.b16 %v4489, %v4488
      %v4521 = vpack.c.b16 %v4491, %v4490
      %v4522 = vpack.c.b16 %v4493, %v4492
      %v4523 = vpack.c.b16 %v4495, %v4494
      %v4524 = vpack.c.b16 %v4497, %v4496
      %v4525 = vpack.c.b16 %v4499, %v4498
      %v4526 = vpack.c.b16 %v4501, %v4500
      %v4527 = vpack.c.b16 %v4503, %v4502
      %v4528 = vpack.c.b16 %v4505, %v4504
      %v4529 = vpack.c.b16 %v4507, %v4506
      %v4530 = vpack.c.b16 %v4509, %v4508
      %v4531 = vpack.c.b16 %v4511, %v4510
      %v4532 = vpack.c.b16 %v4513, %v4512
      %v4533 = vpack.c.b16 %v4515, %v4514
      %v4534 = vpack.c.b16 %v4517, %v4516
      %v4535 = vpack.c.b16 %v4519, %v4518
      %v4568 = vunpack.c.l.b16 %v4472
      %v4569 = vunpack.c.l.b16 %v4473
      %v4570 = vunpack.c.l.b16 %v4474
      %v4571 = vunpack.c.l.b16 %v4475
      %v4572 = vunpack.c.l.b16 %v4476
      %v4573 = vunpack.c.l.b16 %v4477
      %v4574 = vunpack.c.l.b16 %v4478
      %v4575 = vunpack.c.l.b16 %v4479
      %v4576 = vunpack.c.l.b16 %v4480
      %v4577 = vunpack.c.l.b16 %v4481
      %v4578 = vunpack.c.l.b16 %v4482
      %v4579 = vunpack.c.l.b16 %v4483
      %v4580 = vunpack.c.l.b16 %v4484
      %v4581 = vunpack.c.l.b16 %v4485
      %v4582 = vunpack.c.l.b16 %v4486
      %v4583 = vunpack.c.l.b16 %v4487
      %v4584 = vpack.c.b16 %v4569, %v4568
      %v4585 = vpack.c.b16 %v4571, %v4570
      %v4586 = vpack.c.b16 %v4573, %v4572
      %v4587 = vpack.c.b16 %v4575, %v4574
      %v4588 = vpack.c.b16 %v4577, %v4576
      %v4589 = vpack.c.b16 %v4579, %v4578
      %v4590 = vpack.c.b16 %v4581, %v4580
      %v4591 = vpack.c.b16 %v4583, %v4582
      %4600 = vmatpush.bf16.msra.mxu0 %v4591
      %4601 = vmatpush.bf16.msra.mxu0 %v4590
      %4602 = vmatpush.bf16.msra.mxu0 %v4589
      %4603 = vmatpush.bf16.msra.mxu0 %v4588
      %4604 = vmatpush.bf16.msra.mxu0 %v4587
      %4605 = vmatpush.bf16.msra.mxu0 %v4586
      %4606 = vmatpush.bf16.msra.mxu0 %v4585
      %4607 = vmatpush.bf16.msra.mxu0 %v4584
      %4608 = vmatmul.bf16.gmra.mxu0 %v4520
      %v4609 = vpop.f32.mrf.mxu0
      %v4610 = vadd.f32 0.0, %v4609
      %v4611 = vpop.f32.mrf.mxu0
      %v4612 = vadd.f32 0.0, %v4611
      %4613 = vmatmul.bf16.gmra.mxu0 %v4521
      %v4614 = vpop.f32.mrf.mxu0
      %v4615 = vadd.f32 0.0, %v4614
      %v4616 = vpop.f32.mrf.mxu0
      %v4617 = vadd.f32 0.0, %v4616
      %4618 = vmatmul.bf16.gmra.mxu0 %v4522
      %v4619 = vpop.f32.mrf.mxu0
      %v4620 = vadd.f32 0.0, %v4619
      %v4621 = vpop.f32.mrf.mxu0
      %v4622 = vadd.f32 0.0, %v4621
      %4623 = vmatmul.bf16.gmra.mxu0 %v4523
      %v4624 = vpop.f32.mrf.mxu0
      %v4625 = vadd.f32 0.0, %v4624
      %v4626 = vpop.f32.mrf.mxu0
      %v4627 = vadd.f32 0.0, %v4626
      %4628 = vmatmul.bf16.gmra.mxu0 %v4524
      %v4629 = vpop.f32.mrf.mxu0
      %v4630 = vadd.f32 0.0, %v4629
      %v4631 = vpop.f32.mrf.mxu0
      %v4632 = vadd.f32 0.0, %v4631
      %4633 = vmatmul.bf16.gmra.mxu0 %v4525
      %v4634 = vpop.f32.mrf.mxu0
      %v4635 = vadd.f32 0.0, %v4634
      %v4636 = vpop.f32.mrf.mxu0
      %v4637 = vadd.f32 0.0, %v4636
      %4638 = vmatmul.bf16.gmra.mxu0 %v4526
      %v4639 = vpop.f32.mrf.mxu0
      %v4640 = vadd.f32 0.0, %v4639
      %v4641 = vpop.f32.mrf.mxu0
      %v4642 = vadd.f32 0.0, %v4641
      %4643 = vmatmul.bf16.gmra.mxu0 %v4527
      %v4644 = vpop.f32.mrf.mxu0
      %v4645 = vadd.f32 0.0, %v4644
      %v4646 = vpop.f32.mrf.mxu0
      %v4647 = vadd.f32 0.0, %v4646
      %4648 = vmatmul.bf16.gmra.mxu0 %v4528
      %v4649 = vpop.f32.mrf.mxu0
      %v4650 = vadd.f32 0.0, %v4649
      %v4651 = vpop.f32.mrf.mxu0
      %v4652 = vadd.f32 0.0, %v4651
      %4653 = vmatmul.bf16.gmra.mxu0 %v4529
      %v4654 = vpop.f32.mrf.mxu0
      %v4655 = vadd.f32 0.0, %v4654
      %v4656 = vpop.f32.mrf.mxu0
      %v4657 = vadd.f32 0.0, %v4656
      %4658 = vmatmul.bf16.gmra.mxu0 %v4530
      %v4659 = vpop.f32.mrf.mxu0
      %v4660 = vadd.f32 0.0, %v4659
      %v4661 = vpop.f32.mrf.mxu0
      %v4662 = vadd.f32 0.0, %v4661
      %4663 = vmatmul.bf16.gmra.mxu0 %v4531
      %v4664 = vpop.f32.mrf.mxu0
      %v4665 = vadd.f32 0.0, %v4664
      %v4666 = vpop.f32.mrf.mxu0
      %v4667 = vadd.f32 0.0, %v4666
      %4668 = vmatmul.bf16.gmra.mxu0 %v4532
      %v4669 = vpop.f32.mrf.mxu0
      %v4670 = vadd.f32 0.0, %v4669
      %v4671 = vpop.f32.mrf.mxu0
      %v4672 = vadd.f32 0.0, %v4671
      %4673 = vmatmul.bf16.gmra.mxu0 %v4533
      %v4674 = vpop.f32.mrf.mxu0
      %v4675 = vadd.f32 0.0, %v4674
      %v4676 = vpop.f32.mrf.mxu0
      %v4677 = vadd.f32 0.0, %v4676
      %4678 = vmatmul.bf16.gmra.mxu0 %v4534
      %v4679 = vpop.f32.mrf.mxu0
      %v4680 = vadd.f32 0.0, %v4679
      %v4681 = vpop.f32.mrf.mxu0
      %v4682 = vadd.f32 0.0, %v4681
      %4683 = vmatmul.bf16.gmra.mxu0 %v4535
      %v4684 = vpop.f32.mrf.mxu0
      %v4685 = vadd.f32 0.0, %v4684
      %v4686 = vpop.f32.mrf.mxu0
      %v4687 = vadd.f32 0.0, %v4686
      %4688 = vdwg.mxu0
      %v4689 = vadd.f32 %v4008, %v4610
      %v4690 = vadd.f32 %v4009, %v4612
      %v4691 = vadd.f32 %v4010, %v4615
      %v4692 = vadd.f32 %v4011, %v4617
      %v4693 = vadd.f32 %v4012, %v4620
      %v4694 = vadd.f32 %v4013, %v4622
      %v4695 = vadd.f32 %v4014, %v4625
      %v4696 = vadd.f32 %v4015, %v4627
      %v4697 = vadd.f32 %v4016, %v4630
      %v4698 = vadd.f32 %v4017, %v4632
      %v4699 = vadd.f32 %v4018, %v4635
      %v4700 = vadd.f32 %v4019, %v4637
      %v4701 = vadd.f32 %v4020, %v4640
      %v4702 = vadd.f32 %v4021, %v4642
      %v4703 = vadd.f32 %v4022, %v4645
      %v4704 = vadd.f32 %v4023, %v4647
      %v4705 = vadd.f32 %v4024, %v4650
      %v4706 = vadd.f32 %v4025, %v4652
      %v4707 = vadd.f32 %v4026, %v4655
      %v4708 = vadd.f32 %v4027, %v4657
      %v4709 = vadd.f32 %v4028, %v4660
      %v4710 = vadd.f32 %v4029, %v4662
      %v4711 = vadd.f32 %v4030, %v4665
      %v4712 = vadd.f32 %v4031, %v4667
      %v4713 = vadd.f32 %v4032, %v4670
      %v4714 = vadd.f32 %v4033, %v4672
      %v4715 = vadd.f32 %v4034, %v4675
      %v4716 = vadd.f32 %v4035, %v4677
      %v4717 = vadd.f32 %v4036, %v4680
      %v4718 = vadd.f32 %v4037, %v4682
      %v4719 = vadd.f32 %v4038, %v4685
      %v4720 = vadd.f32 %v4039, %v4687
      %v4721 = vld [vmem:[%s3726] sm:$0xe]
      %v4722 = vld [vmem:[%s3726 + $0xc] sm:$0xe]
      %v4723 = vld [vmem:[%s3726 + $0x18] sm:$0xe]
      %v4724 = vld [vmem:[%s3726 + $0x24] sm:$0xe]
      %v4725 = vld [vmem:[%s3726 + $0x30] sm:$0xe]
      %v4726 = vld [vmem:[%s3726 + $0x3c] sm:$0xe]
      %v4727 = vld [vmem:[%s3726 + $0x48] sm:$0xe]
      %v4728 = vld [vmem:[%s3726 + $0x54] sm:$0xe]
      %v4729 = vld [vmem:[%s3726 + $0x60] sm:$0xe]
      %v4730 = vld [vmem:[%s3726 + $0x6c] sm:$0xe]
      %v4731 = vld [vmem:[%s3726 + $0x78] sm:$0xe]
      %v4732 = vld [vmem:[%s3726 + $0x84] sm:$0xe]
      %v4733 = vld [vmem:[%s3726 + $0x90] sm:$0xe]
      %v4734 = vld [vmem:[%s3726 + $0x9c] sm:$0xe]
      %v4735 = vld [vmem:[%s3726 + $0xa8] sm:$0xe]
      %v4736 = vld [vmem:[%s3726 + $0xb4] sm:$0xe]
      %v4785 = vrot.slane %v4721, 5
      %v4786 = vrot.slane %v4785, 4
      %v4787 = vrot.slane %v4041, 5
      %v4788 = vsel %vm1945, %v4786, %v4787
      %v4789 = vrot.slane %v4787, 4
      %v4790 = vrot.slane %v4042, 5
      %v4791 = vsel %vm1945, %v4789, %v4790
      %v4792 = vrot.slane %v4722, 5
      %v4793 = vrot.slane %v4792, 4
      %v4794 = vrot.slane %v4044, 5
      %v4795 = vsel %vm1945, %v4793, %v4794
      %v4796 = vrot.slane %v4794, 4
      %v4797 = vrot.slane %v4045, 5
      %v4798 = vsel %vm1945, %v4796, %v4797
      %v4799 = vrot.slane %v4723, 5
      %v4800 = vrot.slane %v4799, 4
      %v4801 = vrot.slane %v4047, 5
      %v4802 = vsel %vm1945, %v4800, %v4801
      %v4803 = vrot.slane %v4801, 4
      %v4804 = vrot.slane %v4048, 5
      %v4805 = vsel %vm1945, %v4803, %v4804
      %v4806 = vrot.slane %v4724, 5
      %v4807 = vrot.slane %v4806, 4
      %v4808 = vrot.slane %v4050, 5
      %v4809 = vsel %vm1945, %v4807, %v4808
      %v4810 = vrot.slane %v4808, 4
      %v4811 = vrot.slane %v4051, 5
      %v4812 = vsel %vm1945, %v4810, %v4811
      %v4813 = vrot.slane %v4725, 5
      %v4814 = vrot.slane %v4813, 4
      %v4815 = vrot.slane %v4053, 5
      %v4816 = vsel %vm1945, %v4814, %v4815
      %v4817 = vrot.slane %v4815, 4
      %v4818 = vrot.slane %v4054, 5
      %v4819 = vsel %vm1945, %v4817, %v4818
      %v4820 = vrot.slane %v4726, 5
      %v4821 = vrot.slane %v4820, 4
      %v4822 = vrot.slane %v4056, 5
      %v4823 = vsel %vm1945, %v4821, %v4822
      %v4824 = vrot.slane %v4822, 4
      %v4825 = vrot.slane %v4057, 5
      %v4826 = vsel %vm1945, %v4824, %v4825
      %v4827 = vrot.slane %v4727, 5
      %v4828 = vrot.slane %v4827, 4
      %v4829 = vrot.slane %v4059, 5
      %v4830 = vsel %vm1945, %v4828, %v4829
      %v4831 = vrot.slane %v4829, 4
      %v4832 = vrot.slane %v4060, 5
      %v4833 = vsel %vm1945, %v4831, %v4832
      %v4834 = vrot.slane %v4728, 5
      %v4835 = vrot.slane %v4834, 4
      %v4836 = vrot.slane %v4062, 5
      %v4837 = vsel %vm1945, %v4835, %v4836
      %v4838 = vrot.slane %v4836, 4
      %v4839 = vrot.slane %v4063, 5
      %v4840 = vsel %vm1945, %v4838, %v4839
      %v4841 = vrot.slane %v4729, 5
      %v4842 = vrot.slane %v4841, 4
      %v4843 = vrot.slane %v4065, 5
      %v4844 = vsel %vm1945, %v4842, %v4843
      %v4845 = vrot.slane %v4843, 4
      %v4846 = vrot.slane %v4066, 5
      %v4847 = vsel %vm1945, %v4845, %v4846
      %v4848 = vrot.slane %v4730, 5
      %v4849 = vrot.slane %v4848, 4
      %v4850 = vrot.slane %v4068, 5
      %v4851 = vsel %vm1945, %v4849, %v4850
      %v4852 = vrot.slane %v4850, 4
      %v4853 = vrot.slane %v4069, 5
      %v4854 = vsel %vm1945, %v4852, %v4853
      %v4855 = vrot.slane %v4731, 5
      %v4856 = vrot.slane %v4855, 4
      %v4857 = vrot.slane %v4071, 5
      %v4858 = vsel %vm1945, %v4856, %v4857
      %v4859 = vrot.slane %v4857, 4
      %v4860 = vrot.slane %v4072, 5
      %v4861 = vsel %vm1945, %v4859, %v4860
      %v4862 = vrot.slane %v4732, 5
      %v4863 = vrot.slane %v4862, 4
      %v4864 = vrot.slane %v4074, 5
      %v4865 = vsel %vm1945, %v4863, %v4864
      %v4866 = vrot.slane %v4864, 4
      %v4867 = vrot.slane %v4075, 5
      %v4868 = vsel %vm1945, %v4866, %v4867
      %v4869 = vrot.slane %v4733, 5
      %v4870 = vrot.slane %v4869, 4
      %v4871 = vrot.slane %v4077, 5
      %v4872 = vsel %vm1945, %v4870, %v4871
      %v4873 = vrot.slane %v4871, 4
      %v4874 = vrot.slane %v4078, 5
      %v4875 = vsel %vm1945, %v4873, %v4874
      %v4876 = vrot.slane %v4734, 5
      %v4877 = vrot.slane %v4876, 4
      %v4878 = vrot.slane %v4080, 5
      %v4879 = vsel %vm1945, %v4877, %v4878
      %v4880 = vrot.slane %v4878, 4
      %v4881 = vrot.slane %v4081, 5
      %v4882 = vsel %vm1945, %v4880, %v4881
      %v4883 = vrot.slane %v4735, 5
      %v4884 = vrot.slane %v4883, 4
      %v4885 = vrot.slane %v4083, 5
      %v4886 = vsel %vm1945, %v4884, %v4885
      %v4887 = vrot.slane %v4885, 4
      %v4888 = vrot.slane %v4084, 5
      %v4889 = vsel %vm1945, %v4887, %v4888
      %v4890 = vrot.slane %v4736, 5
      %v4891 = vrot.slane %v4890, 4
      %v4892 = vrot.slane %v4086, 5
      %v4893 = vsel %vm1945, %v4891, %v4892
      %v4894 = vrot.slane %v4892, 4
      %v4895 = vrot.slane %v4087, 5
      %v4896 = vsel %vm1945, %v4894, %v4895
      %v4897 = vld [vmem:[%s3 + $0x200] sm:$0xf]
      %v4898 = vld [vmem:[%s3 + $0x204] sm:$0xf]
      %v4899 = vld [vmem:[%s3 + $0x208] sm:$0xf]
      %v4900 = vld [vmem:[%s3 + $0x20c] sm:$0xf]
      %v4901 = vld [vmem:[%s3 + $0x210] sm:$0xf]
      %v4902 = vld [vmem:[%s3 + $0x214] sm:$0xf]
      %v4903 = vld [vmem:[%s3 + $0x218] sm:$0xf]
      %v4904 = vld [vmem:[%s3 + $0x21c] sm:$0xf]
      %v4905 = vld [vmem:[%s3 + $0x220] sm:$0xf]
      %v4906 = vld [vmem:[%s3 + $0x224] sm:$0xf]
      %v4907 = vld [vmem:[%s3 + $0x228] sm:$0xf]
      %v4908 = vld [vmem:[%s3 + $0x22c] sm:$0xf]
      %v4909 = vld [vmem:[%s3 + $0x230] sm:$0xf]
      %v4910 = vld [vmem:[%s3 + $0x234] sm:$0xf]
      %v4911 = vld [vmem:[%s3 + $0x238] sm:$0xf]
      %v4912 = vld [vmem:[%s3 + $0x23c] sm:$0xf]
      %v4913 = vunpack.c.l.b16 %v4788
      %v4914 = vunpack.c.l.b16 %v4791
      %v4915 = vunpack.c.l.b16 %v4795
      %v4916 = vunpack.c.l.b16 %v4798
      %v4917 = vunpack.c.l.b16 %v4802
      %v4918 = vunpack.c.l.b16 %v4805
      %v4919 = vunpack.c.l.b16 %v4809
      %v4920 = vunpack.c.l.b16 %v4812
      %v4921 = vunpack.c.l.b16 %v4816
      %v4922 = vunpack.c.l.b16 %v4819
      %v4923 = vunpack.c.l.b16 %v4823
      %v4924 = vunpack.c.l.b16 %v4826
      %v4925 = vunpack.c.l.b16 %v4830
      %v4926 = vunpack.c.l.b16 %v4833
      %v4927 = vunpack.c.l.b16 %v4837
      %v4928 = vunpack.c.l.b16 %v4840
      %v4929 = vunpack.c.l.b16 %v4844
      %v4930 = vunpack.c.l.b16 %v4847
      %v4931 = vunpack.c.l.b16 %v4851
      %v4932 = vunpack.c.l.b16 %v4854
      %v4933 = vunpack.c.l.b16 %v4858
      %v4934 = vunpack.c.l.b16 %v4861
      %v4935 = vunpack.c.l.b16 %v4865
      %v4936 = vunpack.c.l.b16 %v4868
      %v4937 = vunpack.c.l.b16 %v4872
      %v4938 = vunpack.c.l.b16 %v4875
      %v4939 = vunpack.c.l.b16 %v4879
      %v4940 = vunpack.c.l.b16 %v4882
      %v4941 = vunpack.c.l.b16 %v4886
      %v4942 = vunpack.c.l.b16 %v4889
      %v4943 = vunpack.c.l.b16 %v4893
      %v4944 = vunpack.c.l.b16 %v4896
      %v4945 = vpack.c.b16 %v4914, %v4913
      %v4946 = vpack.c.b16 %v4916, %v4915
      %v4947 = vpack.c.b16 %v4918, %v4917
      %v4948 = vpack.c.b16 %v4920, %v4919
      %v4949 = vpack.c.b16 %v4922, %v4921
      %v4950 = vpack.c.b16 %v4924, %v4923
      %v4951 = vpack.c.b16 %v4926, %v4925
      %v4952 = vpack.c.b16 %v4928, %v4927
      %v4953 = vpack.c.b16 %v4930, %v4929
      %v4954 = vpack.c.b16 %v4932, %v4931
      %v4955 = vpack.c.b16 %v4934, %v4933
      %v4956 = vpack.c.b16 %v4936, %v4935
      %v4957 = vpack.c.b16 %v4938, %v4937
      %v4958 = vpack.c.b16 %v4940, %v4939
      %v4959 = vpack.c.b16 %v4942, %v4941
      %v4960 = vpack.c.b16 %v4944, %v4943
      %v4993 = vunpack.c.l.b16 %v4897
      %v4994 = vunpack.c.l.b16 %v4898
      %v4995 = vunpack.c.l.b16 %v4899
      %v4996 = vunpack.c.l.b16 %v4900
      %v4997 = vunpack.c.l.b16 %v4901
      %v4998 = vunpack.c.l.b16 %v4902
      %v4999 = vunpack.c.l.b16 %v4903
      %v5000 = vunpack.c.l.b16 %v4904
      %v5001 = vunpack.c.l.b16 %v4905
      %v5002 = vunpack.c.l.b16 %v4906
      %v5003 = vunpack.c.l.b16 %v4907
      %v5004 = vunpack.c.l.b16 %v4908
      %v5005 = vunpack.c.l.b16 %v4909
      %v5006 = vunpack.c.l.b16 %v4910
      %v5007 = vunpack.c.l.b16 %v4911
      %v5008 = vunpack.c.l.b16 %v4912
      %v5009 = vpack.c.b16 %v4994, %v4993
      %v5010 = vpack.c.b16 %v4996, %v4995
      %v5011 = vpack.c.b16 %v4998, %v4997
      %v5012 = vpack.c.b16 %v5000, %v4999
      %v5013 = vpack.c.b16 %v5002, %v5001
      %v5014 = vpack.c.b16 %v5004, %v5003
      %v5015 = vpack.c.b16 %v5006, %v5005
      %v5016 = vpack.c.b16 %v5008, %v5007
      %5025 = vmatpush.bf16.msra.mxu0 %v5016
      %5026 = vmatpush.bf16.msra.mxu0 %v5015
      %5027 = vmatpush.bf16.msra.mxu0 %v5014
      %5028 = vmatpush.bf16.msra.mxu0 %v5013
      %5029 = vmatpush.bf16.msra.mxu0 %v5012
      %5030 = vmatpush.bf16.msra.mxu0 %v5011
      %5031 = vmatpush.bf16.msra.mxu0 %v5010
      %5032 = vmatpush.bf16.msra.mxu0 %v5009
      %5033 = vmatmul.bf16.gmra.mxu0 %v4945
      %v5034 = vpop.f32.mrf.mxu0
      %v5035 = vadd.f32 0.0, %v5034
      %v5036 = vpop.f32.mrf.mxu0
      %v5037 = vadd.f32 0.0, %v5036
      %5038 = vmatmul.bf16.gmra.mxu0 %v4946
      %v5039 = vpop.f32.mrf.mxu0
      %v5040 = vadd.f32 0.0, %v5039
      %v5041 = vpop.f32.mrf.mxu0
      %v5042 = vadd.f32 0.0, %v5041
      %5043 = vmatmul.bf16.gmra.mxu0 %v4947
      %v5044 = vpop.f32.mrf.mxu0
      %v5045 = vadd.f32 0.0, %v5044
      %v5046 = vpop.f32.mrf.mxu0
      %v5047 = vadd.f32 0.0, %v5046
      %5048 = vmatmul.bf16.gmra.mxu0 %v4948
      %v5049 = vpop.f32.mrf.mxu0
      %v5050 = vadd.f32 0.0, %v5049
      %v5051 = vpop.f32.mrf.mxu0
      %v5052 = vadd.f32 0.0, %v5051
      %5053 = vmatmul.bf16.gmra.mxu0 %v4949
      %v5054 = vpop.f32.mrf.mxu0
      %v5055 = vadd.f32 0.0, %v5054
      %v5056 = vpop.f32.mrf.mxu0
      %v5057 = vadd.f32 0.0, %v5056
      %5058 = vmatmul.bf16.gmra.mxu0 %v4950
      %v5059 = vpop.f32.mrf.mxu0
      %v5060 = vadd.f32 0.0, %v5059
      %v5061 = vpop.f32.mrf.mxu0
      %v5062 = vadd.f32 0.0, %v5061
      %5063 = vmatmul.bf16.gmra.mxu0 %v4951
      %v5064 = vpop.f32.mrf.mxu0
      %v5065 = vadd.f32 0.0, %v5064
      %v5066 = vpop.f32.mrf.mxu0
      %v5067 = vadd.f32 0.0, %v5066
      %5068 = vmatmul.bf16.gmra.mxu0 %v4952
      %v5069 = vpop.f32.mrf.mxu0
      %v5070 = vadd.f32 0.0, %v5069
      %v5071 = vpop.f32.mrf.mxu0
      %v5072 = vadd.f32 0.0, %v5071
      %5073 = vmatmul.bf16.gmra.mxu0 %v4953
      %v5074 = vpop.f32.mrf.mxu0
      %v5075 = vadd.f32 0.0, %v5074
      %v5076 = vpop.f32.mrf.mxu0
      %v5077 = vadd.f32 0.0, %v5076
      %5078 = vmatmul.bf16.gmra.mxu0 %v4954
      %v5079 = vpop.f32.mrf.mxu0
      %v5080 = vadd.f32 0.0, %v5079
      %v5081 = vpop.f32.mrf.mxu0
      %v5082 = vadd.f32 0.0, %v5081
      %5083 = vmatmul.bf16.gmra.mxu0 %v4955
      %v5084 = vpop.f32.mrf.mxu0
      %v5085 = vadd.f32 0.0, %v5084
      %v5086 = vpop.f32.mrf.mxu0
      %v5087 = vadd.f32 0.0, %v5086
      %5088 = vmatmul.bf16.gmra.mxu0 %v4956
      %v5089 = vpop.f32.mrf.mxu0
      %v5090 = vadd.f32 0.0, %v5089
      %v5091 = vpop.f32.mrf.mxu0
      %v5092 = vadd.f32 0.0, %v5091
      %5093 = vmatmul.bf16.gmra.mxu0 %v4957
      %v5094 = vpop.f32.mrf.mxu0
      %v5095 = vadd.f32 0.0, %v5094
      %v5096 = vpop.f32.mrf.mxu0
      %v5097 = vadd.f32 0.0, %v5096
      %5098 = vmatmul.bf16.gmra.mxu0 %v4958
      %v5099 = vpop.f32.mrf.mxu0
      %v5100 = vadd.f32 0.0, %v5099
      %v5101 = vpop.f32.mrf.mxu0
      %v5102 = vadd.f32 0.0, %v5101
      %5103 = vmatmul.bf16.gmra.mxu0 %v4959
      %v5104 = vpop.f32.mrf.mxu0
      %v5105 = vadd.f32 0.0, %v5104
      %v5106 = vpop.f32.mrf.mxu0
      %v5107 = vadd.f32 0.0, %v5106
      %5108 = vmatmul.bf16.gmra.mxu0 %v4960
      %v5109 = vpop.f32.mrf.mxu0
      %v5110 = vadd.f32 0.0, %v5109
      %v5111 = vpop.f32.mrf.mxu0
      %v5112 = vadd.f32 0.0, %v5111
      %5113 = vdwg.mxu0
      %v5114 = vadd.f32 %v4689, %v5035
      %v5115 = vadd.f32 %v4690, %v5037
      %v5116 = vadd.f32 %v4691, %v5040
      %v5117 = vadd.f32 %v4692, %v5042
      %v5118 = vadd.f32 %v4693, %v5045
      %v5119 = vadd.f32 %v4694, %v5047
      %v5120 = vadd.f32 %v4695, %v5050
      %v5121 = vadd.f32 %v4696, %v5052
      %v5122 = vadd.f32 %v4697, %v5055
      %v5123 = vadd.f32 %v4698, %v5057
      %v5124 = vadd.f32 %v4699, %v5060
      %v5125 = vadd.f32 %v4700, %v5062
      %v5126 = vadd.f32 %v4701, %v5065
      %v5127 = vadd.f32 %v4702, %v5067
      %v5128 = vadd.f32 %v4703, %v5070
      %v5129 = vadd.f32 %v4704, %v5072
      %v5130 = vadd.f32 %v4705, %v5075
      %v5131 = vadd.f32 %v4706, %v5077
      %v5132 = vadd.f32 %v4707, %v5080
      %v5133 = vadd.f32 %v4708, %v5082
      %v5134 = vadd.f32 %v4709, %v5085
      %v5135 = vadd.f32 %v4710, %v5087
      %v5136 = vadd.f32 %v4711, %v5090
      %v5137 = vadd.f32 %v4712, %v5092
      %v5138 = vadd.f32 %v4713, %v5095
      %v5139 = vadd.f32 %v4714, %v5097
      %v5140 = vadd.f32 %v4715, %v5100
      %v5141 = vadd.f32 %v4716, %v5102
      %v5142 = vadd.f32 %v4717, %v5105
      %v5143 = vadd.f32 %v4718, %v5107
      %v5144 = vadd.f32 %v4719, %v5110
      %v5145 = vadd.f32 %v4720, %v5112
      %v5146 = vpack.c.bf16 %v5114, %v5114
      %v5147 = vpack.c.bf16 %v5115, %v5115
      %v5148 = vpack.c.bf16 %v5116, %v5116
      %v5149 = vpack.c.bf16 %v5117, %v5117
      %v5150 = vpack.c.bf16 %v5118, %v5118
      %v5151 = vpack.c.bf16 %v5119, %v5119
      %v5152 = vpack.c.bf16 %v5120, %v5120
      %v5153 = vpack.c.bf16 %v5121, %v5121
      %v5154 = vpack.c.bf16 %v5122, %v5122
      %v5155 = vpack.c.bf16 %v5123, %v5123
      %v5156 = vpack.c.bf16 %v5124, %v5124
      %v5157 = vpack.c.bf16 %v5125, %v5125
      %v5158 = vpack.c.bf16 %v5126, %v5126
      %v5159 = vpack.c.bf16 %v5127, %v5127
      %v5160 = vpack.c.bf16 %v5128, %v5128
      %v5161 = vpack.c.bf16 %v5129, %v5129
      %v5162 = vpack.c.bf16 %v5130, %v5130
      %v5163 = vpack.c.bf16 %v5131, %v5131
      %v5164 = vpack.c.bf16 %v5132, %v5132
      %v5165 = vpack.c.bf16 %v5133, %v5133
      %v5166 = vpack.c.bf16 %v5134, %v5134
      %v5167 = vpack.c.bf16 %v5135, %v5135
      %v5168 = vpack.c.bf16 %v5136, %v5136
      %v5169 = vpack.c.bf16 %v5137, %v5137
      %v5170 = vpack.c.bf16 %v5138, %v5138
      %v5171 = vpack.c.bf16 %v5139, %v5139
      %v5172 = vpack.c.bf16 %v5140, %v5140
      %v5173 = vpack.c.bf16 %v5141, %v5141
      %v5174 = vpack.c.bf16 %v5142, %v5142
      %v5175 = vpack.c.bf16 %v5143, %v5143
      %v5176 = vpack.c.bf16 %v5144, %v5144
      %v5177 = vpack.c.bf16 %v5145, %v5145
      %5178 = vst [vmem:[%s231] sm:$0xf] %v5146
      %5179 = vst [vmem:[%s231 + $0x4] sm:$0xf] %v5147
      %5180 = vst [vmem:[%s231 + $0x8] sm:$0xf] %v5148
      %5181 = vst [vmem:[%s231 + $0xc] sm:$0xf] %v5149
      %5182 = vst [vmem:[%s231 + $0x10] sm:$0xf] %v5150
      %5183 = vst [vmem:[%s231 + $0x14] sm:$0xf] %v5151
      %5184 = vst [vmem:[%s231 + $0x18] sm:$0xf] %v5152
      %5185 = vst [vmem:[%s231 + $0x1c] sm:$0xf] %v5153
      %5186 = vst [vmem:[%s231 + $0x20] sm:$0xf] %v5154
      %5187 = vst [vmem:[%s231 + $0x24] sm:$0xf] %v5155
      %5188 = vst [vmem:[%s231 + $0x28] sm:$0xf] %v5156
      %5189 = vst [vmem:[%s231 + $0x2c] sm:$0xf] %v5157
      %5190 = vst [vmem:[%s231 + $0x30] sm:$0xf] %v5158
      %5191 = vst [vmem:[%s231 + $0x34] sm:$0xf] %v5159
      %5192 = vst [vmem:[%s231 + $0x38] sm:$0xf] %v5160
      %5193 = vst [vmem:[%s231 + $0x3c] sm:$0xf] %v5161
      %5194 = vst [vmem:[%s231 + $0x40] sm:$0xf] %v5162
      %5195 = vst [vmem:[%s231 + $0x44] sm:$0xf] %v5163
      %5196 = vst [vmem:[%s231 + $0x48] sm:$0xf] %v5164
      %5197 = vst [vmem:[%s231 + $0x4c] sm:$0xf] %v5165
      %5198 = vst [vmem:[%s231 + $0x50] sm:$0xf] %v5166
      %5199 = vst [vmem:[%s231 + $0x54] sm:$0xf] %v5167
      %5200 = vst [vmem:[%s231 + $0x58] sm:$0xf] %v5168
      %5201 = vst [vmem:[%s231 + $0x5c] sm:$0xf] %v5169
      %5202 = vst [vmem:[%s231 + $0x60] sm:$0xf] %v5170
      %5203 = vst [vmem:[%s231 + $0x64] sm:$0xf] %v5171
      %5204 = vst [vmem:[%s231 + $0x68] sm:$0xf] %v5172
      %5205 = vst [vmem:[%s231 + $0x6c] sm:$0xf] %v5173
      %5206 = vst [vmem:[%s231 + $0x70] sm:$0xf] %v5174
      %5207 = vst [vmem:[%s231 + $0x74] sm:$0xf] %v5175
      %5208 = vst [vmem:[%s231 + $0x78] sm:$0xf] %v5176
      %5209 = vst [vmem:[%s231 + $0x7c] sm:$0xf] %v5177
      %v5210 = vadd.f32 %v5114, %v5115
      %v5211 = vadd.f32 %v5210, %v5116
      %v5212 = vadd.f32 %v5211, %v5117
      %v5213 = vadd.f32 %v5212, %v5118
      %v5214 = vadd.f32 %v5213, %v5119
      %v5215 = vadd.f32 %v5214, %v5120
      %v5216 = vadd.f32 %v5215, %v5121
      %v5217 = vadd.f32 %v5216, %v5122
      %v5218 = vadd.f32 %v5217, %v5123
      %v5219 = vadd.f32 %v5218, %v5124
      %v5220 = vadd.f32 %v5219, %v5125
      %v5221 = vadd.f32 %v5220, %v5126
      %v5222 = vadd.f32 %v5221, %v5127
      %v5223 = vadd.f32 %v5222, %v5128
      %v5224 = vadd.f32 %v5223, %v5129
      %v5225 = vadd.f32 %v5224, %v5130
      %v5226 = vadd.f32 %v5225, %v5131
      %v5227 = vadd.f32 %v5226, %v5132
      %v5228 = vadd.f32 %v5227, %v5133
      %v5229 = vadd.f32 %v5228, %v5134
      %v5230 = vadd.f32 %v5229, %v5135
      %v5231 = vadd.f32 %v5230, %v5136
      %v5232 = vadd.f32 %v5231, %v5137
      %v5233 = vadd.f32 %v5232, %v5138
      %v5234 = vadd.f32 %v5233, %v5139
      %v5235 = vadd.f32 %v5234, %v5140
      %v5236 = vadd.f32 %v5235, %v5141
      %v5237 = vadd.f32 %v5236, %v5142
      %v5238 = vadd.f32 %v5237, %v5143
      %v5239 = vadd.f32 %v5238, %v5144
      %v5240 = vadd.f32 %v5239, %v5145
      %v5241 = vrot.slane %v5240, 4
      %v5242 = vadd.f32 %v5240, %v5241
      %v5243 = vrot.slane %v5242, 2
      %v5244 = vadd.f32 %v5242, %v5243
      %v5245 = vrot.slane %v5244, 1
      %v5246 = vadd.f32 %v5244, %v5245
      %v5247 = vrcp.pop 256.0
      %v5248 = vmul.f32 256.0, %v5247
      %v5249 = vsub.f32 1.0, %v5248
      %v5250 = vmul.f32 %v5247, %v5249
      %v5251 = vadd.f32 %v5247, %v5250
      %vm5252 = vweird.f32 %v5247
      %v5253 = vsel %vm5252, %v5247, %v5251
      %v5254 = vmul.f32 %v5246, %v5253
      %v5255 = vsub.f32 %v5114, %v5254
      %v5256 = vsub.f32 %v5115, %v5254
      %v5257 = vsub.f32 %v5116, %v5254
      %v5258 = vsub.f32 %v5117, %v5254
      %v5259 = vsub.f32 %v5118, %v5254
      %v5260 = vsub.f32 %v5119, %v5254
      %v5261 = vsub.f32 %v5120, %v5254
      %v5262 = vsub.f32 %v5121, %v5254
      %v5263 = vsub.f32 %v5122, %v5254
      %v5264 = vsub.f32 %v5123, %v5254
      %v5265 = vsub.f32 %v5124, %v5254
      %v5266 = vsub.f32 %v5125, %v5254
      %v5267 = vsub.f32 %v5126, %v5254
      %v5268 = vsub.f32 %v5127, %v5254
      %v5269 = vsub.f32 %v5128, %v5254
      %v5270 = vsub.f32 %v5129, %v5254
      %v5271 = vsub.f32 %v5130, %v5254
      %v5272 = vsub.f32 %v5131, %v5254
      %v5273 = vsub.f32 %v5132, %v5254
      %v5274 = vsub.f32 %v5133, %v5254
      %v5275 = vsub.f32 %v5134, %v5254
      %v5276 = vsub.f32 %v5135, %v5254
      %v5277 = vsub.f32 %v5136, %v5254
      %v5278 = vsub.f32 %v5137, %v5254
      %v5279 = vsub.f32 %v5138, %v5254
      %v5280 = vsub.f32 %v5139, %v5254
      %v5281 = vsub.f32 %v5140, %v5254
      %v5282 = vsub.f32 %v5141, %v5254
      %v5283 = vsub.f32 %v5142, %v5254
      %v5284 = vsub.f32 %v5143, %v5254
      %v5285 = vsub.f32 %v5144, %v5254
      %v5286 = vsub.f32 %v5145, %v5254
      %v5287 = vmul.f32 %v5255, %v5255
      %v5288 = vmul.f32 %v5256, %v5256
      %v5289 = vmul.f32 %v5257, %v5257
      %v5290 = vmul.f32 %v5258, %v5258
      %v5291 = vmul.f32 %v5259, %v5259
      %v5292 = vmul.f32 %v5260, %v5260
      %v5293 = vmul.f32 %v5261, %v5261
      %v5294 = vmul.f32 %v5262, %v5262
      %v5295 = vmul.f32 %v5263, %v5263
      %v5296 = vmul.f32 %v5264, %v5264
      %v5297 = vmul.f32 %v5265, %v5265
      %v5298 = vmul.f32 %v5266, %v5266
      %v5299 = vmul.f32 %v5267, %v5267
      %v5300 = vmul.f32 %v5268, %v5268
      %v5301 = vmul.f32 %v5269, %v5269
      %v5302 = vmul.f32 %v5270, %v5270
      %v5303 = vmul.f32 %v5271, %v5271
      %v5304 = vmul.f32 %v5272, %v5272
      %v5305 = vmul.f32 %v5273, %v5273
      %v5306 = vmul.f32 %v5274, %v5274
      %v5307 = vmul.f32 %v5275, %v5275
      %v5308 = vmul.f32 %v5276, %v5276
      %v5309 = vmul.f32 %v5277, %v5277
      %v5310 = vmul.f32 %v5278, %v5278
      %v5311 = vmul.f32 %v5279, %v5279
      %v5312 = vmul.f32 %v5280, %v5280
      %v5313 = vmul.f32 %v5281, %v5281
      %v5314 = vmul.f32 %v5282, %v5282
      %v5315 = vmul.f32 %v5283, %v5283
      %v5316 = vmul.f32 %v5284, %v5284
      %v5317 = vmul.f32 %v5285, %v5285
      %v5318 = vmul.f32 %v5286, %v5286
      %v5319 = vadd.f32 %v5287, %v5288
      %v5320 = vadd.f32 %v5319, %v5289
      %v5321 = vadd.f32 %v5320, %v5290
      %v5322 = vadd.f32 %v5321, %v5291
      %v5323 = vadd.f32 %v5322, %v5292
      %v5324 = vadd.f32 %v5323, %v5293
      %v5325 = vadd.f32 %v5324, %v5294
      %v5326 = vadd.f32 %v5325, %v5295
      %v5327 = vadd.f32 %v5326, %v5296
      %v5328 = vadd.f32 %v5327, %v5297
      %v5329 = vadd.f32 %v5328, %v5298
      %v5330 = vadd.f32 %v5329, %v5299
      %v5331 = vadd.f32 %v5330, %v5300
      %v5332 = vadd.f32 %v5331, %v5301
      %v5333 = vadd.f32 %v5332, %v5302
      %v5334 = vadd.f32 %v5333, %v5303
      %v5335 = vadd.f32 %v5334, %v5304
      %v5336 = vadd.f32 %v5335, %v5305
      %v5337 = vadd.f32 %v5336, %v5306
      %v5338 = vadd.f32 %v5337, %v5307
      %v5339 = vadd.f32 %v5338, %v5308
      %v5340 = vadd.f32 %v5339, %v5309
      %v5341 = vadd.f32 %v5340, %v5310
      %v5342 = vadd.f32 %v5341, %v5311
      %v5343 = vadd.f32 %v5342, %v5312
      %v5344 = vadd.f32 %v5343, %v5313
      %v5345 = vadd.f32 %v5344, %v5314
      %v5346 = vadd.f32 %v5345, %v5315
      %v5347 = vadd.f32 %v5346, %v5316
      %v5348 = vadd.f32 %v5347, %v5317
      %v5349 = vadd.f32 %v5348, %v5318
      %v5350 = vrot.slane %v5349, 4
      %v5351 = vadd.f32 %v5349, %v5350
      %v5352 = vrot.slane %v5351, 2
      %v5353 = vadd.f32 %v5351, %v5352
      %v5354 = vrot.slane %v5353, 1
      %v5355 = vadd.f32 %v5353, %v5354
      %vm5356 = vcmask 1040384
      %v5357 = vsel %vm5356, %v5246, %v5355
      %5358 = vst [vmem:[%s235] sm:$0x3] %v5357
      %p5359 = scmp.lt.s32.totalorder %s17, 1
      %s5360 = scalar_select %p5359, %s17, 1
      %s5361 = smul.addr %s5360, 32
      %s5362 = smul.addr %s5361, 4
      %s5363 = scalar_lea.vmem %s4, %s5362
      %p5364 = scmp.lt.s32.totalorder %s17, 1
      %s5365 = scalar_select %p5364, %s17, 1
      %s5366 = smul.addr %s5365, 2
      %s5367 = scalar_lea.vmem %s5, %s5366
      // Predicated region
      $region37: #{conv_block_forward.4} parent=35 // pred_check
        %p5368 = pneg %p124
      $region38: #{conv_block_forward.4} parent=35 // pred_check_branch
        %5370 = sbr.rel (%p5368) target = $region40
      $region39: #{conv_block_forward.4} parent=35 // pred_region
        _
      $region40: #{conv_block_forward.4} parent=35 // pred_fallthru
        _
      // Predicated region
      $region41: #{conv_block_forward.4} parent=35 // pred_check
        %p5371 = pneg %p150
      $region42: #{conv_block_forward.4} parent=35 // pred_check_branch
        %5373 = sbr.rel (%p5371) target = $region44
      $region43: #{conv_block_forward.4} parent=35 // pred_region
        _
      $region44: #{conv_block_forward.4} parent=35 // pred_fallthru
        _
    $region36: #{conv_block_forward.4} parent=5 // pred_fallthru
      _
    %p5374 = scmp.le.s32.totalorder 2, %s12
    // Predicated region
    $region45: #{conv_block_forward.4} parent=5 // pred_check
      %p5375 = pneg %p5374
    $region46: #{conv_block_forward.4} parent=5 // pred_check_branch
      %5377 = sbr.rel (%p5375) target = $region48
    $region47: #{conv_block_forward.4} parent=5 // pred_region
      %s5378 = ssub.s32 %s12, 2
      // Predicated region
      $region49: #{conv_block_forward.4} parent=47 // pred_check
        %p5379 = pneg %p130
      $region50: #{conv_block_forward.4} parent=47 // pred_check_branch
        %5381 = sbr.rel (%p5379) target = $region52
      $region51: #{conv_block_forward.4} parent=47 // pred_region
        %p5382 = scmp.lt.s32.totalorder %s18, 1
        %s5383 = scalar_select %p5382, %s18, 1
        %s5384 = smul.addr %s5383, 32
        %s5385 = smul.addr %s5384, 4
        %s5386 = scalar_lea.vmem %s4, %s5385
      $region52: #{conv_block_forward.4} parent=47 // pred_fallthru
        _
      // Predicated region
      $region53: #{conv_block_forward.4} parent=47 // pred_check
        %p5387 = pneg %p156
      $region54: #{conv_block_forward.4} parent=47 // pred_check_branch
        %5389 = sbr.rel (%p5387) target = $region56
      $region55: #{conv_block_forward.4} parent=47 // pred_region
        %p5390 = scmp.lt.s32.totalorder %s18, 1
        %s5391 = scalar_select %p5390, %s18, 1
        %s5392 = smul.addr %s5391, 2
        %s5393 = scalar_lea.vmem %s5, %s5392
      $region56: #{conv_block_forward.4} parent=47 // pred_fallthru
        _
    $region48: #{conv_block_forward.4} parent=5 // pred_fallthru
      _
  $region6: #{conv_block_forward.4} parent=0 // loop_footer
    %s16 = sadd.s32 1, %s12
  $region7: #{conv_block_forward.4} parent=0 // loop_footer_branch
    %11 = sbr.rel target = $region3
  $region8: #{conv_block_forward.4} parent=0 // loop_exit
    _

</llo_original>
